<compile_context>
chip_gen: v7x
topology: tpu7x:2x2x1
jax: 0.10.0
libtpu: 0.0.40
codegen_flags: <defaults>
</compile_context>

<pallas_src>
import math
import functools

import jax
import jax.numpy as jnp
from jax.experimental import pallas as pl
from jax.experimental.pallas import tpu as pltpu

EPS = 1e-5                          # BatchNorm eps (PyTorch default)
_SQRT_2_OVER_PI = 0.7978845608028654


# ----------------------------------------------------------------------------
# Generation-aware VMEM budget / TensorCore-count detection (defensive).
# ----------------------------------------------------------------------------
def _vmem_capacity_bytes():
    try:
        return int(pltpu.get_tpu_info().vmem_capacity_bytes)
    except Exception:
        return 64 * 1024 * 1024      # conservative fallback (v7x physical)


def _is_multi_tensorcore():
    # v4 / v5p (megacore) and v7x expose 2 TensorCores that "parallel" grid axes
    # can shard across; v5e / v6e are single-TC, where splitting only adds per-step
    # overhead and shrinks the MXU M tile.
    try:
        kind = jax.devices()[0].device_kind.lower()
        return ("v4" in kind) or ("v5p" in kind) or ("v7" in kind)
    except Exception:
        return False


_VMEM_PHYS = _vmem_capacity_bytes()                      # 128 MiB v5e/v6e, 64 MiB v7x
_VMEM_LIMIT = min(int(_VMEM_PHYS * 0.85), 112 * 1024 * 1024)
_TILE_BUDGET = int(_VMEM_LIMIT * 0.6)
_MULTI_TC = _is_multi_tensorcore()


# ----------------------------------------------------------------------------
# Tile selection: footprint model covers A / weight / residual / output blocks
# (double-buffered) plus bias/scale rows.  Prefer the largest tiles that fit;
# only prefer >= 2 grid steps on multi-TC chips.  N is tiled only in 128-multiples.
# ----------------------------------------------------------------------------
def _pick_tiles(m, k, n, a_bytes, o_bytes, has_res, budget, multi_tc):
    tms = [m] + [t for t in (1024, 512, 256, 128, 64, 32, 16, 8)
                 if t < m and m % t == 0]
    tns = [n]
    if n % 128 == 0:
        tns += [t for t in (1024, 512, 256, 128) if t < n and n % t == 0]

    def fits(tm, tn):
        f = 2 * tm * k * a_bytes          # A operand (double buffered)
        f += 2 * k * tn * 2               # weight (bf16)
        f += 2 * tm * tn * o_bytes        # output block
        if has_res:
            f += 2 * tm * tn * 4          # residual block (f32)
        f += 8 * tn * 4 + 4 * k * 4       # bias / per-channel scale rows
        return f <= budget

    cands = [(tm, tn) for tn in tns for tm in tms if fits(tm, tn)]
    if not cands:
        return tms[-1], tns[-1]           # smallest tiles; vmem_limit raised anyway

    def score(c):
        tm, tn = c
        steps = (m // tm) * (n // tn)
        return (1 if (steps >= 2 or not multi_tc) else 0, tn, tm)

    return max(cands, key=score)


# ----------------------------------------------------------------------------
# Pallas kernel 1: fused matmul (bf16 MXU operands, f32 accumulate)
#   prologue: "none" | "leaky" (LeakyReLU 0.2 on A) | "affine" (folded BatchNorm on A)
#   epilogue: optional bias, act in {"none","relu","gelu"(tanh approx)},
#             optional residual add (plain or with folded-BN affine on the residual).
# ----------------------------------------------------------------------------
def _mm_kernel(*refs, prologue, act, has_bias, residual):
    it = iter(refs)
    a_ref = next(it)
    b_ref = next(it)
    if prologue == "affine":
        ps_ref = next(it)
        pt_ref = next(it)
    if has_bias:
        bias_ref = next(it)
    if residual != "none":
        r_ref = next(it)
        if residual == "affine_add":
            rs_ref = next(it)
            rt_ref = next(it)
    o_ref = next(it)

    if prologue == "affine":
        a = (a_ref[...].astype(jnp.float32) * ps_ref[...] + pt_ref[...]
             ).astype(jnp.bfloat16)
    elif prologue == "leaky":
        af = a_ref[...].astype(jnp.float32)
        a = jnp.where(af >= 0.0, af, 0.2 * af).astype(jnp.bfloat16)
    else:
        a = a_ref[...].astype(jnp.bfloat16)

    acc = jnp.dot(a, b_ref[...], preferred_element_type=jnp.float32)

    if has_bias:
        acc = acc + bias_ref[...]
    if act == "relu":
        acc = jnp.maximum(acc, 0.0)
    elif act == "gelu":
        # tanh-approx GELU: tanh/exp go to the EUP (separate VLIW slot).
        inner = _SQRT_2_OVER_PI * (acc + 0.044715 * acc * acc * acc)
        acc = 0.5 * acc * (1.0 + jnp.tanh(inner))
    if residual == "add":
        acc = acc + r_ref[...].astype(jnp.float32)
    elif residual == "affine_add":
        acc = acc + r_ref[...].astype(jnp.float32) * rs_ref[...] + rt_ref[...]
    o_ref[...] = acc.astype(o_ref.dtype)


def fused_matmul(a, w, *, bias=None, prologue="none", p_scale=None, p_shift=None,
                 act="none", residual=None, r_scale=None, r_shift=None,
                 out_dtype=jnp.float32):
    m, k = a.shape
    k2, n = w.shape
    assert k == k2
    a_bytes = jnp.dtype(a.dtype).itemsize
    o_bytes = jnp.dtype(out_dtype).itemsize
    tm, tn = _pick_tiles(m, k, n, a_bytes, o_bytes, residual is not None,
                         _TILE_BUDGET, _MULTI_TC)

    inputs = [a, w.astype(jnp.bfloat16)]
    in_specs = [pl.BlockSpec((tm, k), lambda i, j: (i, 0)),
                pl.BlockSpec((k, tn), lambda i, j: (0, j))]
    if prologue == "affine":
        inputs += [jnp.asarray(p_scale, jnp.float32).reshape(1, k),
                   jnp.asarray(p_shift, jnp.float32).reshape(1, k)]
        in_specs += [pl.BlockSpec((1, k), lambda i, j: (0, 0)),
                     pl.BlockSpec((1, k), lambda i, j: (0, 0))]
    has_bias = bias is not None
    if has_bias:
        inputs.append(jnp.asarray(bias, jnp.float32).reshape(1, n))
        in_specs.append(pl.BlockSpec((1, tn), lambda i, j: (0, j)))
    res_mode = "none"
    if residual is not None:
        res_mode = "affine_add" if r_scale is not None else "add"
        inputs.append(residual)
        in_specs.append(pl.BlockSpec((tm, tn), lambda i, j: (i, j)))
        if res_mode == "affine_add":
            inputs += [jnp.asarray(r_scale, jnp.float32).reshape(1, n),
                       jnp.asarray(r_shift, jnp.float32).reshape(1, n)]
            in_specs += [pl.BlockSpec((1, tn), lambda i, j: (0, j)),
                         pl.BlockSpec((1, tn), lambda i, j: (0, j))]

    kernel = functools.partial(_mm_kernel, prologue=prologue, act=act,
                               has_bias=has_bias, residual=res_mode)
    return pl.pallas_call(
        kernel,
        out_shape=jax.ShapeDtypeStruct((m, n), out_dtype),
        grid=(m // tm, n // tn),
        in_specs=in_specs,
        out_specs=pl.BlockSpec((tm, tn), lambda i, j: (i, j)),
        compiler_params=pltpu.CompilerParams(
            dimension_semantics=("parallel", "parallel"),
            vmem_limit_bytes=_VMEM_LIMIT),
    )(*inputs)


# ----------------------------------------------------------------------------
# Pallas kernel 2: multi-head attention, all heads of one batch element per step.
# qkv is the packed (B, S, 3C) projection (q already pre-scaled by 1/sqrt(head_dim)
# via the in-proj weights); all head outputs are concatenated and written with a
# single (S, C) store.
# ----------------------------------------------------------------------------
def _attn_kernel(qkv_ref, o_ref, *, num_heads, head_dim, embed_dim):
    outs = []
    for h in range(num_heads):
        lo = h * head_dim
        q = qkv_ref[0, :, lo:lo + head_dim].astype(jnp.bfloat16)
        k = qkv_ref[0, :, embed_dim + lo:embed_dim + lo + head_dim].astype(jnp.bfloat16)
        v = qkv_ref[0, :, 2 * embed_dim + lo:2 * embed_dim + lo + head_dim].astype(jnp.bfloat16)
        s = jax.lax.dot_general(q, k, (((1,), (1,)), ((), ())),
                                preferred_element_type=jnp.float32)
        m = jnp.max(s, axis=-1, keepdims=True)
        p = jnp.exp(s - m)
        l = jnp.sum(p, axis=-1, keepdims=True)
        p = p * pl.reciprocal(l, approx=True)
        outs.append(jnp.dot(p.astype(jnp.bfloat16), v,
                            preferred_element_type=jnp.float32))
    o = outs[0] if num_heads == 1 else jnp.concatenate(outs, axis=-1)
    o_ref[0, :, :] = o.astype(o_ref.dtype)


def attention_packed(qkv_bsc, num_heads):
    b, s, three_c = qkv_bsc.shape
    c = three_c // 3
    hd = c // num_heads
    return pl.pallas_call(
        functools.partial(_attn_kernel, num_heads=num_heads, head_dim=hd,
                          embed_dim=c),
        out_shape=jax.ShapeDtypeStruct((b, s, c), jnp.bfloat16),
        grid=(b,),
        in_specs=[pl.BlockSpec((1, s, three_c), lambda i: (i, 0, 0))],
        out_specs=pl.BlockSpec((1, s, c), lambda i: (i, 0, 0)),
        compiler_params=pltpu.CompilerParams(
            dimension_semantics=("parallel",),
            vmem_limit_bytes=_VMEM_LIMIT),
    )(qkv_bsc)


# ----------------------------------------------------------------------------
# Weight rearrangement for ConvTranspose2d(k=4, s=2, p=1) as output-phase matmul:
# output phase (py,px) at (qy,qx) reads input offset (dy,dx) through kernel tap
# kh = -2*dy + py + 1, kw = -2*dx + px + 1 (valid taps only; others are zero).
# ----------------------------------------------------------------------------
def _subpixel_weight(w_t):
    inner, outer = w_t.shape[0], w_t.shape[1]
    wz = jnp.zeros((3, 3, inner, 2, 2, outer), jnp.float32)
    for py in range(2):
        for px in range(2):
            for dy in (-1, 0, 1):
                kh = -2 * dy + py + 1
                if not 0 <= kh < 4:
                    continue
                for dx in (-1, 0, 1):
                    kw = -2 * dx + px + 1
                    if not 0 <= kw < 4:
                        continue
                    wz = wz.at[dy + 1, dx + 1, :, py, px, :].set(
                        w_t[:, :, kh, kw].astype(jnp.float32))
    return wz.reshape(9 * inner, 4 * outer)


# ----------------------------------------------------------------------------
# Forward pass of UnetSkipConnectionBlock (innermost, with attention)
# ----------------------------------------------------------------------------
def unet_skip_block_forward(x, p, *, num_heads):
    b, cin, h, w = x.shape
    inner = p["downconv_w"].shape[0]
    outer = p["upconv_w"].shape[1]
    assert inner == outer, "attention block requires inner_nc == outer_nc (as in PyTorch)"
    c = outer
    s_len = h * w
    ho, wo = h // 2, w // 2

    # ---- down: LeakyReLU(0.2) -> Conv2d(k4,s2,p1); LeakyReLU fused as prologue,
    #      the following ReLU (uprelu) fused as epilogue.  A operand shipped bf16. ----
    x_nhwc = jnp.transpose(x, (0, 2, 3, 1)).astype(jnp.bfloat16)
    xp = jnp.pad(x_nhwc, ((0, 0), (1, 1), (1, 1), (0, 0)))
    taps = [xp[:, kh:kh + 2 * ho:2, kw:kw + 2 * wo:2, :]
            for kh in range(4) for kw in range(4)]
    patches_dn = jnp.stack(taps, axis=3).reshape(b * ho * wo, 16 * cin)
    w_dn = jnp.transpose(p["downconv_w"], (2, 3, 1, 0)).reshape(16 * cin, inner)
    d2 = fused_matmul(patches_dn, w_dn, prologue="leaky", act="relu",
                      out_dtype=jnp.bfloat16)                        # (B*Ho*Wo, inner)

    # ---- up: ConvTranspose2d(k4,s2,p1) via sub-pixel decomposition (4 phases, 1 matmul).
    #      Phases stay interleaved in the row order (pure reshape) until the very end. ----
    d2_nhwc = d2.reshape(b, ho, wo, inner)
    dpad = jnp.pad(d2_nhwc, ((0, 0), (1, 1), (1, 1), (0, 0)))
    taps = [dpad[:, dy:dy + ho, dx:dx + wo, :] for dy in range(3) for dx in range(3)]
    patches_up = jnp.stack(taps, axis=3).reshape(b * ho * wo, 9 * inner)   # bf16
    w_up = _subpixel_weight(p["upconv_w"])                           # (9*inner, 4*outer)
    u4 = fused_matmul(patches_up, w_up, out_dtype=jnp.float32)       # (B*Ho*Wo, 4*outer)
    # pre-BN up output; row order within a batch element is (qy, qx, py, px)
    u2 = u4.reshape(b * s_len, outer)

    # ---- upnorm + norm1 folded analytically into the qkv matmul prologue ----
    # TODO(synk): fold these tiny per-channel reductions into the producing matmul.
    mean_u = jnp.mean(u2, axis=0)
    var_u = jnp.var(u2, axis=0)
    s_up = p["upnorm_g"] / jnp.sqrt(var_u + EPS)
    t_up = p["upnorm_b"] - mean_u * s_up
    mean1 = mean_u * s_up + t_up
    var1 = var_u * s_up * s_up
    s1 = p["norm1_g"] / jnp.sqrt(var1 + EPS)
    t1 = p["norm1_b"] - mean1 * s1

    # fold 1/sqrt(head_dim) into the q rows of the in-projection (zero runtime cost)
    hd = c // num_heads
    scale = 1.0 / math.sqrt(hd)
    q_scale = jnp.concatenate([jnp.full((c,), scale, jnp.float32),
                               jnp.ones((2 * c,), jnp.float32)])
    in_w = p["in_proj_w"] * q_scale[:, None]
    in_b = p["in_proj_b"] * q_scale

    qkv = fused_matmul(u2, in_w.T, bias=in_b,
                       prologue="affine", p_scale=s_up * s1, p_shift=t_up * s1 + t1,
                       out_dtype=jnp.bfloat16)                       # (B*S, 3C)
    attn = attention_packed(qkv.reshape(b, s_len, 3 * c), num_heads)  # (B, S, C)
    # out2 = BN_up(u2) + out_proj(attn)   (BN-affine residual fused into epilogue)
    out2 = fused_matmul(attn.reshape(b * s_len, c), p["out_proj_w"].T,
                        bias=p["out_proj_b"], residual=u2,
                        r_scale=s_up, r_shift=t_up, out_dtype=jnp.float32)

    # ---- norm2 folded into ffn1 prologue; GELU fused; residual fused into ffn2 ----
    mean2 = jnp.mean(out2, axis=0)
    var2 = jnp.var(out2, axis=0)
    s2 = p["norm2_g"] / jnp.sqrt(var2 + EPS)
    t2 = p["norm2_b"] - mean2 * s2
    h1 = fused_matmul(out2, p["ffn_w1"].T, bias=p["ffn_b1"],
                      prologue="affine", p_scale=s2, p_shift=t2,
                      act="gelu", out_dtype=jnp.bfloat16)            # (B*S, 4C)
    out3 = fused_matmul(h1, p["ffn_w2"].T, bias=p["ffn_b2"],
                        residual=out2, out_dtype=jnp.float32)        # (B*S, C)

    # (dropout p=0.0 everywhere -> no-op)
    # undo the sub-pixel row permutation and go to NCHW in a single transpose
    out_nchw = (out3.reshape(b, ho, wo, 2, 2, c)
                    .transpose(0, 5, 1, 3, 2, 4)
                    .reshape(b, c, h, w))
    return jnp.concatenate([x, out_nchw], axis=1)                    # cat([x, out], dim=1)


# ----------------------------------------------------------------------------
# Deterministic parameter construction
# ----------------------------------------------------------------------------
def init_params(key, input_nc, inner_nc, outer_nc):
    ks = jax.random.split(key, 12)
    c = inner_nc
    num_heads = min(8, c // 8)
    if num_heads == 0:
        num_heads = 1
    n = lambda k, shp, sc=0.05: sc * jax.random.normal(k, shp, jnp.float32)
    params = {
        "downconv_w": n(ks[0], (inner_nc, input_nc, 4, 4)),
        "upconv_w": n(ks[1], (inner_nc, outer_nc, 4, 4)),
        "upnorm_g": 1.0 + 0.1 * jax.random.normal(ks[2], (outer_nc,), jnp.float32),
        "upnorm_b": 0.1 * jax.random.normal(ks[3], (outer_nc,), jnp.float32),
        "norm1_g": jnp.ones((c,), jnp.float32),
        "norm1_b": jnp.zeros((c,), jnp.float32),
        "norm2_g": jnp.ones((c,), jnp.float32),
        "norm2_b": jnp.zeros((c,), jnp.float32),
        "in_proj_w": n(ks[4], (3 * c, c)),
        "in_proj_b": n(ks[5], (3 * c,)),
        "out_proj_w": n(ks[6], (c, c)),
        "out_proj_b": n(ks[7], (c,)),
        "ffn_w1": n(ks[8], (4 * c, c)),
        "ffn_b1": n(ks[9], (4 * c,)),
        "ffn_w2": n(ks[10], (c, 4 * c)),
        "ffn_b2": n(ks[11], (c,)),
    }
    return params, num_heads


if __name__ == "__main__":
    key = jax.random.PRNGKey(0)
    k_x, k_p = jax.random.split(key)

    B, C, H, W = 2, 16, 16, 16          # input_nc = inner_nc = outer_nc = 16
    x = jax.random.normal(k_x, (B, C, H, W), jnp.float32)   # NCHW, like PyTorch
    params, num_heads = init_params(k_p, input_nc=C, inner_nc=C, outer_nc=C)

    fwd = jax.jit(functools.partial(unet_skip_block_forward, num_heads=num_heads))
    out = fwd(x, params)
    out = jax.block_until_ready(out)
    assert out.shape == (B, 2 * C, H, W), out.shape
    assert bool(jnp.all(jnp.isfinite(out)))
    print("KERNEL_OK")
</pallas_src>

<mosaic_0001>
module attributes {stable_mosaic.version = 11 : i64} {
  func.func @_mm_kernel(%arg0: i32, %arg1: i32, %arg2: memref<128x256xbf16, #tpu.memory_space<vmem>>, %arg3: memref<256x16xbf16, #tpu.memory_space<vmem>>, %arg4: memref<128x16xbf16, #tpu.memory_space<vmem>>) attributes {dimension_semantics = [#tpu.dimension_semantics<parallel>, #tpu.dimension_semantics<parallel>], iteration_bounds = array<i64: 1, 1>, scalar_prefetch = 0 : i64, scratch_operands = 0 : i64, tpu.core_type = #tpu.core_type<tc>, window_params = [{transform_indices = @transform_0, window_bounds = array<i64: 128, 256>}, {transform_indices = @transform_1, window_bounds = array<i64: 256, 16>}, {transform_indices = @transform_2, window_bounds = array<i64: 128, 16>}]} {
    %c0 = arith.constant 0 : index
    %c0_0 = arith.constant 0 : index
    %0 = vector.load %arg2[%c0, %c0_0] : memref<128x256xbf16, #tpu.memory_space<vmem>>, vector<128x256xbf16>
    %1 = arith.extf %0 : vector<128x256xbf16> to vector<128x256xf32>
    %cst = arith.constant 0.000000e+00 : f32
    %2 = vector.broadcast %cst : f32 to vector<128x256xf32>
    %3 = arith.cmpf oge, %1, %2 : vector<128x256xf32>
    %cst_1 = arith.constant 2.000000e-01 : f32
    %4 = vector.broadcast %cst_1 : f32 to vector<128x256xf32>
    %5 = arith.mulf %4, %1 : vector<128x256xf32>
    %6 = arith.select %3, %1, %5 : vector<128x256xi1>, vector<128x256xf32>
    %7 = arith.truncf %6 : vector<128x256xf32> to vector<128x256xbf16>
    %c0_2 = arith.constant 0 : index
    %c0_3 = arith.constant 0 : index
    %8 = vector.load %arg3[%c0_2, %c0_3] : memref<256x16xbf16, #tpu.memory_space<vmem>>, vector<256x16xbf16>
    %cst_4 = arith.constant dense<0.000000e+00> : vector<128x16xf32>
    %9 = tpu.matmul %7, %8, %cst_4 {dimension_numbers = #tpu.dot_dimension_numbers<[1], [0], [0], [1], [0, 0, 1, 1], [], []>} : vector<128x256xbf16>, vector<256x16xbf16>, vector<128x16xf32> -> vector<128x16xf32>
    %cst_5 = arith.constant 0.000000e+00 : f32
    %10 = vector.broadcast %cst_5 : f32 to vector<128x16xf32>
    %11 = arith.maximumf %9, %10 : vector<128x16xf32>
    %12 = arith.truncf %11 : vector<128x16xf32> to vector<128x16xbf16>
    %c0_6 = arith.constant 0 : index
    %c0_7 = arith.constant 0 : index
    %13 = vector.load %arg4[%c0_6, %c0_7] : memref<128x16xbf16, #tpu.memory_space<vmem>>, vector<128x16xbf16>
    tpu.vector_store %arg4[%c0_6, %c0_7], %12 {strides = array<i32>} : memref<128x16xbf16, #tpu.memory_space<vmem>>, vector<128x16xbf16>,
    return
  }
  func.func @transform_0(%arg0: i32, %arg1: i32) -> (i32, i32) {
    %c0_i32 = arith.constant 0 : i32
    %c0_i32_0 = arith.constant 0 : i32
    return %arg0, %c0_i32 : i32, i32
  }
  func.func @transform_1(%arg0: i32, %arg1: i32) -> (i32, i32) {
    %c0_i32 = arith.constant 0 : i32
    %c0_i32_0 = arith.constant 0 : i32
    return %c0_i32, %arg1 : i32, i32
  }
  func.func @transform_2(%arg0: i32, %arg1: i32) -> (i32, i32) {
    %c0_i32 = arith.constant 0 : i32
    return %arg0, %arg1 : i32, i32
  }
}

module attributes {stable_mosaic.version = 11 : i64} {
  func.func @_mm_kernel(%arg0: i32, %arg1: i32, %arg2: memref<128x144xbf16, #tpu.memory_space<vmem>>, %arg3: memref<144x64xbf16, #tpu.memory_space<vmem>>, %arg4: memref<128x64xf32, #tpu.memory_space<vmem>>) attributes {dimension_semantics = [#tpu.dimension_semantics<parallel>, #tpu.dimension_semantics<parallel>], iteration_bounds = array<i64: 1, 1>, scalar_prefetch = 0 : i64, scratch_operands = 0 : i64, tpu.core_type = #tpu.core_type<tc>, window_params = [{transform_indices = @transform_0, window_bounds = array<i64: 128, 144>}, {transform_indices = @transform_1, window_bounds = array<i64: 144, 64>}, {transform_indices = @transform_2, window_bounds = array<i64: 128, 64>}]} {
    %c0 = arith.constant 0 : index
    %c0_0 = arith.constant 0 : index
    %0 = vector.load %arg2[%c0, %c0_0] : memref<128x144xbf16, #tpu.memory_space<vmem>>, vector<128x144xbf16>
    %c0_1 = arith.constant 0 : index
    %c0_2 = arith.constant 0 : index
    %1 = vector.load %arg3[%c0_1, %c0_2] : memref<144x64xbf16, #tpu.memory_space<vmem>>, vector<144x64xbf16>
    %cst = arith.constant dense<0.000000e+00> : vector<128x64xf32>
    %2 = tpu.matmul %0, %1, %cst {dimension_numbers = #tpu.dot_dimension_numbers<[1], [0], [0], [1], [0, 0, 1, 1], [], []>} : vector<128x144xbf16>, vector<144x64xbf16>, vector<128x64xf32> -> vector<128x64xf32>
    %c0_3 = arith.constant 0 : index
    %c0_4 = arith.constant 0 : index
    %3 = vector.load %arg4[%c0_3, %c0_4] : memref<128x64xf32, #tpu.memory_space<vmem>>, vector<128x64xf32>
    tpu.vector_store %arg4[%c0_3, %c0_4], %2 {strides = array<i32>} : memref<128x64xf32, #tpu.memory_space<vmem>>, vector<128x64xf32>,
    return
  }
  func.func @transform_0(%arg0: i32, %arg1: i32) -> (i32, i32) {
    %c0_i32 = arith.constant 0 : i32
    %c0_i32_0 = arith.constant 0 : i32
    return %arg0, %c0_i32 : i32, i32
  }
  func.func @transform_1(%arg0: i32, %arg1: i32) -> (i32, i32) {
    %c0_i32 = arith.constant 0 : i32
    %c0_i32_0 = arith.constant 0 : i32
    return %c0_i32, %arg1 : i32, i32
  }
  func.func @transform_2(%arg0: i32, %arg1: i32) -> (i32, i32) {
    %c0_i32 = arith.constant 0 : i32
    return %arg0, %arg1 : i32, i32
  }
}

module attributes {stable_mosaic.version = 11 : i64} {
  func.func @_mm_kernel(%arg0: i32, %arg1: i32, %arg2: memref<512x16xf32, #tpu.memory_space<vmem>>, %arg3: memref<16x48xbf16, #tpu.memory_space<vmem>>, %arg4: memref<1x16xf32, #tpu.memory_space<vmem>>, %arg5: memref<1x16xf32, #tpu.memory_space<vmem>>, %arg6: memref<1x48xf32, #tpu.memory_space<vmem>>, %arg7: memref<512x48xbf16, #tpu.memory_space<vmem>>) attributes {dimension_semantics = [#tpu.dimension_semantics<parallel>, #tpu.dimension_semantics<parallel>], iteration_bounds = array<i64: 1, 1>, scalar_prefetch = 0 : i64, scratch_operands = 0 : i64, tpu.core_type = #tpu.core_type<tc>, window_params = [{transform_indices = @transform_0, window_bounds = array<i64: 512, 16>}, {transform_indices = @transform_1, window_bounds = array<i64: 16, 48>}, {pipeline_mode = #tpu.pipeline_mode<synchronous>, transform_indices = @transform_2, window_bounds = array<i64: 1, 16>}, {pipeline_mode = #tpu.pipeline_mode<synchronous>, transform_indices = @transform_3, window_bounds = array<i64: 1, 16>}, {transform_indices = @transform_4, window_bounds = array<i64: 1, 48>}, {transform_indices = @transform_5, window_bounds = array<i64: 512, 48>}]} {
    %c0 = arith.constant 0 : index
    %c0_0 = arith.constant 0 : index
    %0 = vector.load %arg2[%c0, %c0_0] : memref<512x16xf32, #tpu.memory_space<vmem>>, vector<512x16xf32>
    %c0_1 = arith.constant 0 : index
    %c0_2 = arith.constant 0 : index
    %1 = vector.load %arg4[%c0_1, %c0_2] : memref<1x16xf32, #tpu.memory_space<vmem>>, vector<1x16xf32>
    %2 = vector.broadcast %1 : vector<1x16xf32> to vector<512x16xf32>
    %3 = arith.mulf %0, %2 : vector<512x16xf32>
    %c0_3 = arith.constant 0 : index
    %c0_4 = arith.constant 0 : index
    %4 = vector.load %arg5[%c0_3, %c0_4] : memref<1x16xf32, #tpu.memory_space<vmem>>, vector<1x16xf32>
    %5 = vector.broadcast %4 : vector<1x16xf32> to vector<512x16xf32>
    %6 = arith.addf %3, %5 : vector<512x16xf32>
    %7 = arith.truncf %6 : vector<512x16xf32> to vector<512x16xbf16>
    %c0_5 = arith.constant 0 : index
    %c0_6 = arith.constant 0 : index
    %8 = vector.load %arg3[%c0_5, %c0_6] : memref<16x48xbf16, #tpu.memory_space<vmem>>, vector<16x48xbf16>
    %cst = arith.constant dense<0.000000e+00> : vector<512x48xf32>
    %9 = tpu.matmul %7, %8, %cst {dimension_numbers = #tpu.dot_dimension_numbers<[1], [0], [0], [1], [0, 0, 1, 1], [], []>} : vector<512x16xbf16>, vector<16x48xbf16>, vector<512x48xf32> -> vector<512x48xf32>
    %c0_7 = arith.constant 0 : index
    %c0_8 = arith.constant 0 : index
    %10 = vector.load %arg6[%c0_7, %c0_8] : memref<1x48xf32, #tpu.memory_space<vmem>>, vector<1x48xf32>
    %11 = vector.broadcast %10 : vector<1x48xf32> to vector<512x48xf32>
    %12 = arith.addf %9, %11 : vector<512x48xf32>
    %13 = arith.truncf %12 : vector<512x48xf32> to vector<512x48xbf16>
    %c0_9 = arith.constant 0 : index
    %c0_10 = arith.constant 0 : index
    %14 = vector.load %arg7[%c0_9, %c0_10] : memref<512x48xbf16, #tpu.memory_space<vmem>>, vector<512x48xbf16>
    tpu.vector_store %arg7[%c0_9, %c0_10], %13 {strides = array<i32>} : memref<512x48xbf16, #tpu.memory_space<vmem>>, vector<512x48xbf16>,
    return
  }
  func.func @transform_0(%arg0: i32, %arg1: i32) -> (i32, i32) {
    %c0_i32 = arith.constant 0 : i32
    %c0_i32_0 = arith.constant 0 : i32
    return %arg0, %c0_i32 : i32, i32
  }
  func.func @transform_1(%arg0: i32, %arg1: i32) -> (i32, i32) {
    %c0_i32 = arith.constant 0 : i32
    %c0_i32_0 = arith.constant 0 : i32
    return %c0_i32, %arg1 : i32, i32
  }
  func.func @transform_2(%arg0: i32, %arg1: i32) -> (i32, i32) {
    %c0_i32 = arith.constant 0 : i32
    %c0_i32_0 = arith.constant 0 : i32
    %c0_i32_1 = arith.constant 0 : i32
    return %c0_i32, %c0_i32_0 : i32, i32
  }
  func.func @transform_3(%arg0: i32, %arg1: i32) -> (i32, i32) {
    %c0_i32 = arith.constant 0 : i32
    %c0_i32_0 = arith.constant 0 : i32
    %c0_i32_1 = arith.constant 0 : i32
    return %c0_i32, %c0_i32_0 : i32, i32
  }
  func.func @transform_4(%arg0: i32, %arg1: i32) -> (i32, i32) {
    %c0_i32 = arith.constant 0 : i32
    %c0_i32_0 = arith.constant 0 : i32
    return %c0_i32, %arg1 : i32, i32
  }
  func.func @transform_5(%arg0: i32, %arg1: i32) -> (i32, i32) {
    %c0_i32 = arith.constant 0 : i32
    return %arg0, %arg1 : i32, i32
  }
}

module attributes {stable_mosaic.version = 11 : i64} {
  func.func @_attn_kernel(%arg0: i32, %arg1: memref<1x256x48xbf16, #tpu.memory_space<vmem>>, %arg2: memref<1x256x16xbf16, #tpu.memory_space<vmem>>) attributes {dimension_semantics = [#tpu.dimension_semantics<parallel>], iteration_bounds = array<i64: 2>, scalar_prefetch = 0 : i64, scratch_operands = 0 : i64, tpu.core_type = #tpu.core_type<tc>, window_params = [{transform_indices = @transform_0, window_bounds = array<i64: 1, 256, 48>}, {transform_indices = @transform_1, window_bounds = array<i64: 1, 256, 16>}]} {
    %c0 = arith.constant 0 : index
    %c0_0 = arith.constant 0 : index
    %c0_1 = arith.constant 0 : index
    %0 = vector.load %arg1[%c0, %c0_0, %c0_1] : memref<1x256x48xbf16, #tpu.memory_space<vmem>>, vector<1x256x8xbf16>
    %1 = vector.shape_cast %0 : vector<1x256x8xbf16> to vector<256x8xbf16>
    %c0_2 = arith.constant 0 : index
    %c0_3 = arith.constant 0 : index
    %c16 = arith.constant 16 : index
    %2 = vector.load %arg1[%c0_2, %c0_3, %c16] : memref<1x256x48xbf16, #tpu.memory_space<vmem>>, vector<1x256x8xbf16>
    %3 = vector.shape_cast %2 : vector<1x256x8xbf16> to vector<256x8xbf16>
    %c0_4 = arith.constant 0 : index
    %c0_5 = arith.constant 0 : index
    %c32 = arith.constant 32 : index
    %4 = vector.load %arg1[%c0_4, %c0_5, %c32] : memref<1x256x48xbf16, #tpu.memory_space<vmem>>, vector<1x256x8xbf16>
    %5 = vector.shape_cast %4 : vector<1x256x8xbf16> to vector<256x8xbf16>
    %cst = arith.constant dense<0.000000e+00> : vector<256x256xf32>
    %6 = tpu.matmul %1, %3, %cst {dimension_numbers = #tpu.dot_dimension_numbers<[1], [1], [0], [0], [0, 0, 1, 0], [], []>} : vector<256x8xbf16>, vector<256x8xbf16>, vector<256x256xf32> -> vector<256x256xf32>
    %cst_6 = arith.constant dense<0xFF800000> : vector<256xf32>
    %7 = vector.multi_reduction <maximumf>, %6, %cst_6 [1] : vector<256x256xf32> to vector<256xf32>
    %8 = vector.shape_cast %7 : vector<256xf32> to vector<256x1xf32>
    %9 = vector.broadcast %8 : vector<256x1xf32> to vector<256x256xf32>
    %10 = arith.subf %6, %9 : vector<256x256xf32>
    %11 = math.exp %10 : vector<256x256xf32>
    %cst_7 = arith.constant dense<0.000000e+00> : vector<256xf32>
    %12 = vector.multi_reduction <add>, %11, %cst_7 [1] : vector<256x256xf32> to vector<256xf32>
    %13 = vector.shape_cast %12 : vector<256xf32> to vector<256x1xf32>
    %14 = tpu.reciprocal %13 {approx = true} : vector<256x1xf32> -> vector<256x1xf32>
    %15 = vector.broadcast %14 : vector<256x1xf32> to vector<256x256xf32>
    %16 = arith.mulf %11, %15 : vector<256x256xf32>
    %17 = arith.truncf %16 : vector<256x256xf32> to vector<256x256xbf16>
    %cst_8 = arith.constant dense<0.000000e+00> : vector<256x8xf32>
    %18 = tpu.matmul %17, %5, %cst_8 {dimension_numbers = #tpu.dot_dimension_numbers<[1], [0], [0], [1], [0, 0, 1, 1], [], []>} : vector<256x256xbf16>, vector<256x8xbf16>, vector<256x8xf32> -> vector<256x8xf32>
    %c0_9 = arith.constant 0 : index
    %c0_10 = arith.constant 0 : index
    %c8 = arith.constant 8 : index
    %19 = vector.load %arg1[%c0_9, %c0_10, %c8] : memref<1x256x48xbf16, #tpu.memory_space<vmem>>, vector<1x256x8xbf16>
    %20 = vector.shape_cast %19 : vector<1x256x8xbf16> to vector<256x8xbf16>
    %c0_11 = arith.constant 0 : index
    %c0_12 = arith.constant 0 : index
    %c24 = arith.constant 24 : index
    %21 = vector.load %arg1[%c0_11, %c0_12, %c24] : memref<1x256x48xbf16, #tpu.memory_space<vmem>>, vector<1x256x8xbf16>
    %22 = vector.shape_cast %21 : vector<1x256x8xbf16> to vector<256x8xbf16>
    %c0_13 = arith.constant 0 : index
    %c0_14 = arith.constant 0 : index
    %c40 = arith.constant 40 : index
    %23 = vector.load %arg1[%c0_13, %c0_14, %c40] : memref<1x256x48xbf16, #tpu.memory_space<vmem>>, vector<1x256x8xbf16>
    %24 = vector.shape_cast %23 : vector<1x256x8xbf16> to vector<256x8xbf16>
    %cst_15 = arith.constant dense<0.000000e+00> : vector<256x256xf32>
    %25 = tpu.matmul %20, %22, %cst_15 {dimension_numbers = #tpu.dot_dimension_numbers<[1], [1], [0], [0], [0, 0, 1, 0], [], []>} : vector<256x8xbf16>, vector<256x8xbf16>, vector<256x256xf32> -> vector<256x256xf32>
    %cst_16 = arith.constant dense<0xFF800000> : vector<256xf32>
    %26 = vector.multi_reduction <maximumf>, %25, %cst_16 [1] : vector<256x256xf32> to vector<256xf32>
    %27 = vector.shape_cast %26 : vector<256xf32> to vector<256x1xf32>
    %28 = vector.broadcast %27 : vector<256x1xf32> to vector<256x256xf32>
    %29 = arith.subf %25, %28 : vector<256x256xf32>
    %30 = math.exp %29 : vector<256x256xf32>
    %cst_17 = arith.constant dense<0.000000e+00> : vector<256xf32>
    %31 = vector.multi_reduction <add>, %30, %cst_17 [1] : vector<256x256xf32> to vector<256xf32>
    %32 = vector.shape_cast %31 : vector<256xf32> to vector<256x1xf32>
    %33 = tpu.reciprocal %32 {approx = true} : vector<256x1xf32> -> vector<256x1xf32>
    %34 = vector.broadcast %33 : vector<256x1xf32> to vector<256x256xf32>
    %35 = arith.mulf %30, %34 : vector<256x256xf32>
    %36 = arith.truncf %35 : vector<256x256xf32> to vector<256x256xbf16>
    %cst_18 = arith.constant dense<0.000000e+00> : vector<256x8xf32>
    %37 = tpu.matmul %36, %24, %cst_18 {dimension_numbers = #tpu.dot_dimension_numbers<[1], [0], [0], [1], [0, 0, 1, 1], [], []>} : vector<256x256xbf16>, vector<256x8xbf16>, vector<256x8xf32> -> vector<256x8xf32>
    %38 = tpu.concatenate %18, %37 in 1 : vector<256x8xf32>, vector<256x8xf32> -> vector<256x16xf32>
    %39 = arith.truncf %38 : vector<256x16xf32> to vector<256x16xbf16>
    %c0_19 = arith.constant 0 : index
    %c0_20 = arith.constant 0 : index
    %c0_21 = arith.constant 0 : index
    %40 = vector.load %arg2[%c0_19, %c0_20, %c0_21] : memref<1x256x16xbf16, #tpu.memory_space<vmem>>, vector<1x256x16xbf16>
    %41 = vector.shape_cast %40 : vector<1x256x16xbf16> to vector<256x16xbf16>
    %42 = vector.shape_cast %39 : vector<256x16xbf16> to vector<1x256x16xbf16>
    tpu.vector_store %arg2[%c0_19, %c0_20, %c0_21], %42 {strides = array<i32>} : memref<1x256x16xbf16, #tpu.memory_space<vmem>>, vector<1x256x16xbf16>,
    return
  }
  func.func @transform_0(%arg0: i32) -> (i32, i32, i32) {
    %c0_i32 = arith.constant 0 : i32
    %c0_i32_0 = arith.constant 0 : i32
    %c0_i32_1 = arith.constant 0 : i32
    return %arg0, %c0_i32, %c0_i32_0 : i32, i32, i32
  }
  func.func @transform_1(%arg0: i32) -> (i32, i32, i32) {
    %c0_i32 = arith.constant 0 : i32
    %c0_i32_0 = arith.constant 0 : i32
    %c0_i32_1 = arith.constant 0 : i32
    return %arg0, %c0_i32, %c0_i32_0 : i32, i32, i32
  }
}

module attributes {stable_mosaic.version = 11 : i64} {
  func.func @_mm_kernel(%arg0: i32, %arg1: i32, %arg2: memref<512x16xbf16, #tpu.memory_space<vmem>>, %arg3: memref<16x16xbf16, #tpu.memory_space<vmem>>, %arg4: memref<1x16xf32, #tpu.memory_space<vmem>>, %arg5: memref<512x16xf32, #tpu.memory_space<vmem>>, %arg6: memref<1x16xf32, #tpu.memory_space<vmem>>, %arg7: memref<1x16xf32, #tpu.memory_space<vmem>>, %arg8: memref<512x16xf32, #tpu.memory_space<vmem>>) attributes {dimension_semantics = [#tpu.dimension_semantics<parallel>, #tpu.dimension_semantics<parallel>], iteration_bounds = array<i64: 1, 1>, scalar_prefetch = 0 : i64, scratch_operands = 0 : i64, tpu.core_type = #tpu.core_type<tc>, window_params = [{transform_indices = @transform_0, window_bounds = array<i64: 512, 16>}, {transform_indices = @transform_1, window_bounds = array<i64: 16, 16>}, {transform_indices = @transform_2, window_bounds = array<i64: 1, 16>}, {transform_indices = @transform_3, window_bounds = array<i64: 512, 16>}, {transform_indices = @transform_4, window_bounds = array<i64: 1, 16>}, {transform_indices = @transform_5, window_bounds = array<i64: 1, 16>}, {transform_indices = @transform_6, window_bounds = array<i64: 512, 16>}]} {
    %c0 = arith.constant 0 : index
    %c0_0 = arith.constant 0 : index
    %0 = vector.load %arg2[%c0, %c0_0] : memref<512x16xbf16, #tpu.memory_space<vmem>>, vector<512x16xbf16>
    %c0_1 = arith.constant 0 : index
    %c0_2 = arith.constant 0 : index
    %1 = vector.load %arg3[%c0_1, %c0_2] : memref<16x16xbf16, #tpu.memory_space<vmem>>, vector<16x16xbf16>
    %cst = arith.constant dense<0.000000e+00> : vector<512x16xf32>
    %2 = tpu.matmul %0, %1, %cst {dimension_numbers = #tpu.dot_dimension_numbers<[1], [0], [0], [1], [0, 0, 1, 1], [], []>} : vector<512x16xbf16>, vector<16x16xbf16>, vector<512x16xf32> -> vector<512x16xf32>
    %c0_3 = arith.constant 0 : index
    %c0_4 = arith.constant 0 : index
    %3 = vector.load %arg4[%c0_3, %c0_4] : memref<1x16xf32, #tpu.memory_space<vmem>>, vector<1x16xf32>
    %4 = vector.broadcast %3 : vector<1x16xf32> to vector<512x16xf32>
    %5 = arith.addf %2, %4 : vector<512x16xf32>
    %c0_5 = arith.constant 0 : index
    %c0_6 = arith.constant 0 : index
    %6 = vector.load %arg5[%c0_5, %c0_6] : memref<512x16xf32, #tpu.memory_space<vmem>>, vector<512x16xf32>
    %c0_7 = arith.constant 0 : index
    %c0_8 = arith.constant 0 : index
    %7 = vector.load %arg6[%c0_7, %c0_8] : memref<1x16xf32, #tpu.memory_space<vmem>>, vector<1x16xf32>
    %8 = vector.broadcast %7 : vector<1x16xf32> to vector<512x16xf32>
    %9 = arith.mulf %6, %8 : vector<512x16xf32>
    %10 = arith.addf %5, %9 : vector<512x16xf32>
    %c0_9 = arith.constant 0 : index
    %c0_10 = arith.constant 0 : index
    %11 = vector.load %arg7[%c0_9, %c0_10] : memref<1x16xf32, #tpu.memory_space<vmem>>, vector<1x16xf32>
    %12 = vector.broadcast %11 : vector<1x16xf32> to vector<512x16xf32>
    %13 = arith.addf %10, %12 : vector<512x16xf32>
    %c0_11 = arith.constant 0 : index
    %c0_12 = arith.constant 0 : index
    %14 = vector.load %arg8[%c0_11, %c0_12] : memref<512x16xf32, #tpu.memory_space<vmem>>, vector<512x16xf32>
    tpu.vector_store %arg8[%c0_11, %c0_12], %13 {strides = array<i32>} : memref<512x16xf32, #tpu.memory_space<vmem>>, vector<512x16xf32>,
    return
  }
  func.func @transform_0(%arg0: i32, %arg1: i32) -> (i32, i32) {
    %c0_i32 = arith.constant 0 : i32
    %c0_i32_0 = arith.constant 0 : i32
    return %arg0, %c0_i32 : i32, i32
  }
  func.func @transform_1(%arg0: i32, %arg1: i32) -> (i32, i32) {
    %c0_i32 = arith.constant 0 : i32
    %c0_i32_0 = arith.constant 0 : i32
    return %c0_i32, %arg1 : i32, i32
  }
  func.func @transform_2(%arg0: i32, %arg1: i32) -> (i32, i32) {
    %c0_i32 = arith.constant 0 : i32
    %c0_i32_0 = arith.constant 0 : i32
    return %c0_i32, %arg1 : i32, i32
  }
  func.func @transform_3(%arg0: i32, %arg1: i32) -> (i32, i32) {
    %c0_i32 = arith.constant 0 : i32
    return %arg0, %arg1 : i32, i32
  }
  func.func @transform_4(%arg0: i32, %arg1: i32) -> (i32, i32) {
    %c0_i32 = arith.constant 0 : i32
    %c0_i32_0 = arith.constant 0 : i32
    return %c0_i32, %arg1 : i32, i32
  }
  func.func @transform_5(%arg0: i32, %arg1: i32) -> (i32, i32) {
    %c0_i32 = arith.constant 0 : i32
    %c0_i32_0 = arith.constant 0 : i32
    return %c0_i32, %arg1 : i32, i32
  }
  func.func @transform_6(%arg0: i32, %arg1: i32) -> (i32, i32) {
    %c0_i32 = arith.constant 0 : i32
    return %arg0, %arg1 : i32, i32
  }
}

module attributes {stable_mosaic.version = 11 : i64} {
  func.func @_mm_kernel(%arg0: i32, %arg1: i32, %arg2: memref<512x16xf32, #tpu.memory_space<vmem>>, %arg3: memref<16x64xbf16, #tpu.memory_space<vmem>>, %arg4: memref<1x16xf32, #tpu.memory_space<vmem>>, %arg5: memref<1x16xf32, #tpu.memory_space<vmem>>, %arg6: memref<1x64xf32, #tpu.memory_space<vmem>>, %arg7: memref<512x64xbf16, #tpu.memory_space<vmem>>) attributes {dimension_semantics = [#tpu.dimension_semantics<parallel>, #tpu.dimension_semantics<parallel>], iteration_bounds = array<i64: 1, 1>, scalar_prefetch = 0 : i64, scratch_operands = 0 : i64, tpu.core_type = #tpu.core_type<tc>, window_params = [{transform_indices = @transform_0, window_bounds = array<i64: 512, 16>}, {transform_indices = @transform_1, window_bounds = array<i64: 16, 64>}, {pipeline_mode = #tpu.pipeline_mode<synchronous>, transform_indices = @transform_2, window_bounds = array<i64: 1, 16>}, {pipeline_mode = #tpu.pipeline_mode<synchronous>, transform_indices = @transform_3, window_bounds = array<i64: 1, 16>}, {transform_indices = @transform_4, window_bounds = array<i64: 1, 64>}, {transform_indices = @transform_5, window_bounds = array<i64: 512, 64>}]} {
    %c0 = arith.constant 0 : index
    %c0_0 = arith.constant 0 : index
    %0 = vector.load %arg2[%c0, %c0_0] : memref<512x16xf32, #tpu.memory_space<vmem>>, vector<512x16xf32>
    %c0_1 = arith.constant 0 : index
    %c0_2 = arith.constant 0 : index
    %1 = vector.load %arg4[%c0_1, %c0_2] : memref<1x16xf32, #tpu.memory_space<vmem>>, vector<1x16xf32>
    %2 = vector.broadcast %1 : vector<1x16xf32> to vector<512x16xf32>
    %3 = arith.mulf %0, %2 : vector<512x16xf32>
    %c0_3 = arith.constant 0 : index
    %c0_4 = arith.constant 0 : index
    %4 = vector.load %arg5[%c0_3, %c0_4] : memref<1x16xf32, #tpu.memory_space<vmem>>, vector<1x16xf32>
    %5 = vector.broadcast %4 : vector<1x16xf32> to vector<512x16xf32>
    %6 = arith.addf %3, %5 : vector<512x16xf32>
    %7 = arith.truncf %6 : vector<512x16xf32> to vector<512x16xbf16>
    %c0_5 = arith.constant 0 : index
    %c0_6 = arith.constant 0 : index
    %8 = vector.load %arg3[%c0_5, %c0_6] : memref<16x64xbf16, #tpu.memory_space<vmem>>, vector<16x64xbf16>
    %cst = arith.constant dense<0.000000e+00> : vector<512x64xf32>
    %9 = tpu.matmul %7, %8, %cst {dimension_numbers = #tpu.dot_dimension_numbers<[1], [0], [0], [1], [0, 0, 1, 1], [], []>} : vector<512x16xbf16>, vector<16x64xbf16>, vector<512x64xf32> -> vector<512x64xf32>
    %c0_7 = arith.constant 0 : index
    %c0_8 = arith.constant 0 : index
    %10 = vector.load %arg6[%c0_7, %c0_8] : memref<1x64xf32, #tpu.memory_space<vmem>>, vector<1x64xf32>
    %11 = vector.broadcast %10 : vector<1x64xf32> to vector<512x64xf32>
    %12 = arith.addf %9, %11 : vector<512x64xf32>
    %cst_9 = arith.constant 4.471500e-02 : f32
    %13 = vector.broadcast %cst_9 : f32 to vector<512x64xf32>
    %14 = arith.mulf %13, %12 : vector<512x64xf32>
    %15 = arith.mulf %14, %12 : vector<512x64xf32>
    %16 = arith.mulf %15, %12 : vector<512x64xf32>
    %17 = arith.addf %12, %16 : vector<512x64xf32>
    %cst_10 = arith.constant 0.797884583 : f32
    %18 = vector.broadcast %cst_10 : f32 to vector<512x64xf32>
    %19 = arith.mulf %18, %17 : vector<512x64xf32>
    %cst_11 = arith.constant 5.000000e-01 : f32
    %20 = vector.broadcast %cst_11 : f32 to vector<512x64xf32>
    %21 = arith.mulf %20, %12 : vector<512x64xf32>
    %22 = math.tanh %19 : vector<512x64xf32>
    %cst_12 = arith.constant 1.000000e+00 : f32
    %23 = vector.broadcast %cst_12 : f32 to vector<512x64xf32>
    %24 = arith.addf %23, %22 : vector<512x64xf32>
    %25 = arith.mulf %21, %24 : vector<512x64xf32>
    %26 = arith.truncf %25 : vector<512x64xf32> to vector<512x64xbf16>
    %c0_13 = arith.constant 0 : index
    %c0_14 = arith.constant 0 : index
    %27 = vector.load %arg7[%c0_13, %c0_14] : memref<512x64xbf16, #tpu.memory_space<vmem>>, vector<512x64xbf16>
    tpu.vector_store %arg7[%c0_13, %c0_14], %26 {strides = array<i32>} : memref<512x64xbf16, #tpu.memory_space<vmem>>, vector<512x64xbf16>,
    return
  }
  func.func @transform_0(%arg0: i32, %arg1: i32) -> (i32, i32) {
    %c0_i32 = arith.constant 0 : i32
    %c0_i32_0 = arith.constant 0 : i32
    return %arg0, %c0_i32 : i32, i32
  }
  func.func @transform_1(%arg0: i32, %arg1: i32) -> (i32, i32) {
    %c0_i32 = arith.constant 0 : i32
    %c0_i32_0 = arith.constant 0 : i32
    return %c0_i32, %arg1 : i32, i32
  }
  func.func @transform_2(%arg0: i32, %arg1: i32) -> (i32, i32) {
    %c0_i32 = arith.constant 0 : i32
    %c0_i32_0 = arith.constant 0 : i32
    %c0_i32_1 = arith.constant 0 : i32
    return %c0_i32, %c0_i32_0 : i32, i32
  }
  func.func @transform_3(%arg0: i32, %arg1: i32) -> (i32, i32) {
    %c0_i32 = arith.constant 0 : i32
    %c0_i32_0 = arith.constant 0 : i32
    %c0_i32_1 = arith.constant 0 : i32
    return %c0_i32, %c0_i32_0 : i32, i32
  }
  func.func @transform_4(%arg0: i32, %arg1: i32) -> (i32, i32) {
    %c0_i32 = arith.constant 0 : i32
    %c0_i32_0 = arith.constant 0 : i32
    return %c0_i32, %arg1 : i32, i32
  }
  func.func @transform_5(%arg0: i32, %arg1: i32) -> (i32, i32) {
    %c0_i32 = arith.constant 0 : i32
    return %arg0, %arg1 : i32, i32
  }
}

module attributes {stable_mosaic.version = 11 : i64} {
  func.func @_mm_kernel(%arg0: i32, %arg1: i32, %arg2: memref<512x64xbf16, #tpu.memory_space<vmem>>, %arg3: memref<64x16xbf16, #tpu.memory_space<vmem>>, %arg4: memref<1x16xf32, #tpu.memory_space<vmem>>, %arg5: memref<512x16xf32, #tpu.memory_space<vmem>>, %arg6: memref<512x16xf32, #tpu.memory_space<vmem>>) attributes {dimension_semantics = [#tpu.dimension_semantics<parallel>, #tpu.dimension_semantics<parallel>], iteration_bounds = array<i64: 1, 1>, scalar_prefetch = 0 : i64, scratch_operands = 0 : i64, tpu.core_type = #tpu.core_type<tc>, window_params = [{transform_indices = @transform_0, window_bounds = array<i64: 512, 64>}, {transform_indices = @transform_1, window_bounds = array<i64: 64, 16>}, {transform_indices = @transform_2, window_bounds = array<i64: 1, 16>}, {transform_indices = @transform_3, window_bounds = array<i64: 512, 16>}, {transform_indices = @transform_4, window_bounds = array<i64: 512, 16>}]} {
    %c0 = arith.constant 0 : index
    %c0_0 = arith.constant 0 : index
    %0 = vector.load %arg2[%c0, %c0_0] : memref<512x64xbf16, #tpu.memory_space<vmem>>, vector<512x64xbf16>
    %c0_1 = arith.constant 0 : index
    %c0_2 = arith.constant 0 : index
    %1 = vector.load %arg3[%c0_1, %c0_2] : memref<64x16xbf16, #tpu.memory_space<vmem>>, vector<64x16xbf16>
    %cst = arith.constant dense<0.000000e+00> : vector<512x16xf32>
    %2 = tpu.matmul %0, %1, %cst {dimension_numbers = #tpu.dot_dimension_numbers<[1], [0], [0], [1], [0, 0, 1, 1], [], []>} : vector<512x64xbf16>, vector<64x16xbf16>, vector<512x16xf32> -> vector<512x16xf32>
    %c0_3 = arith.constant 0 : index
    %c0_4 = arith.constant 0 : index
    %3 = vector.load %arg4[%c0_3, %c0_4] : memref<1x16xf32, #tpu.memory_space<vmem>>, vector<1x16xf32>
    %4 = vector.broadcast %3 : vector<1x16xf32> to vector<512x16xf32>
    %5 = arith.addf %2, %4 : vector<512x16xf32>
    %c0_5 = arith.constant 0 : index
    %c0_6 = arith.constant 0 : index
    %6 = vector.load %arg5[%c0_5, %c0_6] : memref<512x16xf32, #tpu.memory_space<vmem>>, vector<512x16xf32>
    %7 = arith.addf %5, %6 : vector<512x16xf32>
    %c0_7 = arith.constant 0 : index
    %c0_8 = arith.constant 0 : index
    %8 = vector.load %arg6[%c0_7, %c0_8] : memref<512x16xf32, #tpu.memory_space<vmem>>, vector<512x16xf32>
    tpu.vector_store %arg6[%c0_7, %c0_8], %7 {strides = array<i32>} : memref<512x16xf32, #tpu.memory_space<vmem>>, vector<512x16xf32>,
    return
  }
  func.func @transform_0(%arg0: i32, %arg1: i32) -> (i32, i32) {
    %c0_i32 = arith.constant 0 : i32
    %c0_i32_0 = arith.constant 0 : i32
    return %arg0, %c0_i32 : i32, i32
  }
  func.func @transform_1(%arg0: i32, %arg1: i32) -> (i32, i32) {
    %c0_i32 = arith.constant 0 : i32
    %c0_i32_0 = arith.constant 0 : i32
    return %c0_i32, %arg1 : i32, i32
  }
  func.func @transform_2(%arg0: i32, %arg1: i32) -> (i32, i32) {
    %c0_i32 = arith.constant 0 : i32
    %c0_i32_0 = arith.constant 0 : i32
    return %c0_i32, %arg1 : i32, i32
  }
  func.func @transform_3(%arg0: i32, %arg1: i32) -> (i32, i32) {
    %c0_i32 = arith.constant 0 : i32
    return %arg0, %arg1 : i32, i32
  }
  func.func @transform_4(%arg0: i32, %arg1: i32) -> (i32, i32) {
    %c0_i32 = arith.constant 0 : i32
    return %arg0, %arg1 : i32, i32
  }
}

</mosaic_0001>

<llo_original>
// kernel: unet_skip_block_forward.7
$region0: #{unet_skip_block_forward.7}
  #allocation0 [shape = 'u32[]', space=smem, size = 0x4, offset = 0x4, fixed_abs, tag = 'smem constant byte address 0x4 - core index']
  #allocation1 [shape = 'u32[144,128]{1,0:T(1,128)}', space=vmem, size = 0x12000, scoped, tag = 'internal scratch']
  %s0 = inlined_call_operand.vmem [shape: bf16[128,256], index: 0, kind: input, shape index: {}]
  %s1 = inlined_call_operand.vmem [shape: bf16[256,16], index: 1, kind: input, shape index: {}]
  %s2 = inlined_call_operand.vmem [shape: bf16[128,16], index: 2, kind: output, shape index: {}]
  %s3 = sld [smem:[#allocation0]]
  $region18: #{unet_skip_block_forward.7} parent=0
    _
  %s5 = ssub.s32 1, %s3
  %s6 = scalar_select 0, %s5, %s3
  // Predicated region
  $region2: #{unet_skip_block_forward.7} parent=0 // pred_check
    _
  $region3: #{unet_skip_block_forward.7} parent=0 // pred_check_branch
    %8 = sbr.rel (0) target = $region5
  $region4: #{unet_skip_block_forward.7} parent=0 // pred_region
    _
  $region5: #{unet_skip_block_forward.7} parent=0 // pred_fallthru
    _
  // Predicated region
  $region6: #{unet_skip_block_forward.7} parent=0 // pred_check
    _
  $region7: #{unet_skip_block_forward.7} parent=0 // pred_check_branch
    %10 = sbr.rel (0) target = $region9
  $region8: #{unet_skip_block_forward.7} parent=0 // pred_region
    _
  $region9: #{unet_skip_block_forward.7} parent=0 // pred_fallthru
    _
  %v12 = vld [vmem:[%s0] sm:$0xff]
  %v13 = vld [vmem:[%s0 + $0x8] sm:$0xff]
  %v14 = vld [vmem:[%s0 + $0x10] sm:$0xff]
  %v15 = vld [vmem:[%s0 + $0x18] sm:$0xff]
  %v16 = vld [vmem:[%s0 + $0x20] sm:$0xff]
  %v17 = vld [vmem:[%s0 + $0x28] sm:$0xff]
  %v18 = vld [vmem:[%s0 + $0x30] sm:$0xff]
  %v19 = vld [vmem:[%s0 + $0x38] sm:$0xff]
  %v20 = vld [vmem:[%s0 + $0x40] sm:$0xff]
  %v21 = vld [vmem:[%s0 + $0x48] sm:$0xff]
  %v22 = vld [vmem:[%s0 + $0x50] sm:$0xff]
  %v23 = vld [vmem:[%s0 + $0x58] sm:$0xff]
  %v24 = vld [vmem:[%s0 + $0x60] sm:$0xff]
  %v25 = vld [vmem:[%s0 + $0x68] sm:$0xff]
  %v26 = vld [vmem:[%s0 + $0x70] sm:$0xff]
  %v27 = vld [vmem:[%s0 + $0x78] sm:$0xff]
  %v28 = vunpack.c.l.bf16 %v12
  %v29 = vunpack.c.h.bf16 %v12
  %v30 = vunpack.c.l.bf16 %v13
  %v31 = vunpack.c.h.bf16 %v13
  %v32 = vunpack.c.l.bf16 %v14
  %v33 = vunpack.c.h.bf16 %v14
  %v34 = vunpack.c.l.bf16 %v15
  %v35 = vunpack.c.h.bf16 %v15
  %v36 = vunpack.c.l.bf16 %v16
  %v37 = vunpack.c.h.bf16 %v16
  %v38 = vunpack.c.l.bf16 %v17
  %v39 = vunpack.c.h.bf16 %v17
  %v40 = vunpack.c.l.bf16 %v18
  %v41 = vunpack.c.h.bf16 %v18
  %v42 = vunpack.c.l.bf16 %v19
  %v43 = vunpack.c.h.bf16 %v19
  %v44 = vunpack.c.l.bf16 %v20
  %v45 = vunpack.c.h.bf16 %v20
  %v46 = vunpack.c.l.bf16 %v21
  %v47 = vunpack.c.h.bf16 %v21
  %v48 = vunpack.c.l.bf16 %v22
  %v49 = vunpack.c.h.bf16 %v22
  %v50 = vunpack.c.l.bf16 %v23
  %v51 = vunpack.c.h.bf16 %v23
  %v52 = vunpack.c.l.bf16 %v24
  %v53 = vunpack.c.h.bf16 %v24
  %v54 = vunpack.c.l.bf16 %v25
  %v55 = vunpack.c.h.bf16 %v25
  %v56 = vunpack.c.l.bf16 %v26
  %v57 = vunpack.c.h.bf16 %v26
  %v58 = vunpack.c.l.bf16 %v27
  %v59 = vunpack.c.h.bf16 %v27
  %vm60 = vcmp.ge.f32.partialorder %v28, 0.0
  %vm61 = vcmp.ge.f32.partialorder %v29, 0.0
  %vm62 = vcmp.ge.f32.partialorder %v30, 0.0
  %vm63 = vcmp.ge.f32.partialorder %v31, 0.0
  %vm64 = vcmp.ge.f32.partialorder %v32, 0.0
  %vm65 = vcmp.ge.f32.partialorder %v33, 0.0
  %vm66 = vcmp.ge.f32.partialorder %v34, 0.0
  %vm67 = vcmp.ge.f32.partialorder %v35, 0.0
  %vm68 = vcmp.ge.f32.partialorder %v36, 0.0
  %vm69 = vcmp.ge.f32.partialorder %v37, 0.0
  %vm70 = vcmp.ge.f32.partialorder %v38, 0.0
  %vm71 = vcmp.ge.f32.partialorder %v39, 0.0
  %vm72 = vcmp.ge.f32.partialorder %v40, 0.0
  %vm73 = vcmp.ge.f32.partialorder %v41, 0.0
  %vm74 = vcmp.ge.f32.partialorder %v42, 0.0
  %vm75 = vcmp.ge.f32.partialorder %v43, 0.0
  %vm76 = vcmp.ge.f32.partialorder %v44, 0.0
  %vm77 = vcmp.ge.f32.partialorder %v45, 0.0
  %vm78 = vcmp.ge.f32.partialorder %v46, 0.0
  %vm79 = vcmp.ge.f32.partialorder %v47, 0.0
  %vm80 = vcmp.ge.f32.partialorder %v48, 0.0
  %vm81 = vcmp.ge.f32.partialorder %v49, 0.0
  %vm82 = vcmp.ge.f32.partialorder %v50, 0.0
  %vm83 = vcmp.ge.f32.partialorder %v51, 0.0
  %vm84 = vcmp.ge.f32.partialorder %v52, 0.0
  %vm85 = vcmp.ge.f32.partialorder %v53, 0.0
  %vm86 = vcmp.ge.f32.partialorder %v54, 0.0
  %vm87 = vcmp.ge.f32.partialorder %v55, 0.0
  %vm88 = vcmp.ge.f32.partialorder %v56, 0.0
  %vm89 = vcmp.ge.f32.partialorder %v57, 0.0
  %vm90 = vcmp.ge.f32.partialorder %v58, 0.0
  %vm91 = vcmp.ge.f32.partialorder %v59, 0.0
  %v92 = vmul.f32 %v28, 0.2
  %v93 = vmul.f32 %v29, 0.2
  %v94 = vmul.f32 %v30, 0.2
  %v95 = vmul.f32 %v31, 0.2
  %v96 = vmul.f32 %v32, 0.2
  %v97 = vmul.f32 %v33, 0.2
  %v98 = vmul.f32 %v34, 0.2
  %v99 = vmul.f32 %v35, 0.2
  %v100 = vmul.f32 %v36, 0.2
  %v101 = vmul.f32 %v37, 0.2
  %v102 = vmul.f32 %v38, 0.2
  %v103 = vmul.f32 %v39, 0.2
  %v104 = vmul.f32 %v40, 0.2
  %v105 = vmul.f32 %v41, 0.2
  %v106 = vmul.f32 %v42, 0.2
  %v107 = vmul.f32 %v43, 0.2
  %v108 = vmul.f32 %v44, 0.2
  %v109 = vmul.f32 %v45, 0.2
  %v110 = vmul.f32 %v46, 0.2
  %v111 = vmul.f32 %v47, 0.2
  %v112 = vmul.f32 %v48, 0.2
  %v113 = vmul.f32 %v49, 0.2
  %v114 = vmul.f32 %v50, 0.2
  %v115 = vmul.f32 %v51, 0.2
  %v116 = vmul.f32 %v52, 0.2
  %v117 = vmul.f32 %v53, 0.2
  %v118 = vmul.f32 %v54, 0.2
  %v119 = vmul.f32 %v55, 0.2
  %v120 = vmul.f32 %v56, 0.2
  %v121 = vmul.f32 %v57, 0.2
  %v122 = vmul.f32 %v58, 0.2
  %v123 = vmul.f32 %v59, 0.2
  %v124 = vsel %vm60, %v28, %v92
  %v125 = vsel %vm61, %v29, %v93
  %v126 = vsel %vm62, %v30, %v94
  %v127 = vsel %vm63, %v31, %v95
  %v128 = vsel %vm64, %v32, %v96
  %v129 = vsel %vm65, %v33, %v97
  %v130 = vsel %vm66, %v34, %v98
  %v131 = vsel %vm67, %v35, %v99
  %v132 = vsel %vm68, %v36, %v100
  %v133 = vsel %vm69, %v37, %v101
  %v134 = vsel %vm70, %v38, %v102
  %v135 = vsel %vm71, %v39, %v103
  %v136 = vsel %vm72, %v40, %v104
  %v137 = vsel %vm73, %v41, %v105
  %v138 = vsel %vm74, %v42, %v106
  %v139 = vsel %vm75, %v43, %v107
  %v140 = vsel %vm76, %v44, %v108
  %v141 = vsel %vm77, %v45, %v109
  %v142 = vsel %vm78, %v46, %v110
  %v143 = vsel %vm79, %v47, %v111
  %v144 = vsel %vm80, %v48, %v112
  %v145 = vsel %vm81, %v49, %v113
  %v146 = vsel %vm82, %v50, %v114
  %v147 = vsel %vm83, %v51, %v115
  %v148 = vsel %vm84, %v52, %v116
  %v149 = vsel %vm85, %v53, %v117
  %v150 = vsel %vm86, %v54, %v118
  %v151 = vsel %vm87, %v55, %v119
  %v152 = vsel %vm88, %v56, %v120
  %v153 = vsel %vm89, %v57, %v121
  %v154 = vsel %vm90, %v58, %v122
  %v155 = vsel %vm91, %v59, %v123
  %v156 = vpack.c.bf16 %v126, %v124
  %v157 = vpack.c.bf16 %v127, %v125
  %v158 = vpack.c.bf16 %v130, %v128
  %v159 = vpack.c.bf16 %v131, %v129
  %v160 = vpack.c.bf16 %v134, %v132
  %v161 = vpack.c.bf16 %v135, %v133
  %v162 = vpack.c.bf16 %v138, %v136
  %v163 = vpack.c.bf16 %v139, %v137
  %v164 = vpack.c.bf16 %v142, %v140
  %v165 = vpack.c.bf16 %v143, %v141
  %v166 = vpack.c.bf16 %v146, %v144
  %v167 = vpack.c.bf16 %v147, %v145
  %v168 = vpack.c.bf16 %v150, %v148
  %v169 = vpack.c.bf16 %v151, %v149
  %v170 = vpack.c.bf16 %v154, %v152
  %v171 = vpack.c.bf16 %v155, %v153
  %v172 = vld [vmem:[%s1] sm:$0xf]
  %v173 = vld [vmem:[%s1 + $0x4] sm:$0xf]
  %v174 = vld [vmem:[%s1 + $0x8] sm:$0xf]
  %v175 = vld [vmem:[%s1 + $0xc] sm:$0xf]
  %v176 = vld [vmem:[%s1 + $0x10] sm:$0xf]
  %v177 = vld [vmem:[%s1 + $0x14] sm:$0xf]
  %v178 = vld [vmem:[%s1 + $0x18] sm:$0xf]
  %v179 = vld [vmem:[%s1 + $0x1c] sm:$0xf]
  %v180 = vld [vmem:[%s1 + $0x20] sm:$0xf]
  %v181 = vld [vmem:[%s1 + $0x24] sm:$0xf]
  %v182 = vld [vmem:[%s1 + $0x28] sm:$0xf]
  %v183 = vld [vmem:[%s1 + $0x2c] sm:$0xf]
  %v184 = vld [vmem:[%s1 + $0x30] sm:$0xf]
  %v185 = vld [vmem:[%s1 + $0x34] sm:$0xf]
  %v186 = vld [vmem:[%s1 + $0x38] sm:$0xf]
  %v187 = vld [vmem:[%s1 + $0x3c] sm:$0xf]
  %v188 = vld [vmem:[%s1 + $0x40] sm:$0xf]
  %v189 = vld [vmem:[%s1 + $0x44] sm:$0xf]
  %v190 = vld [vmem:[%s1 + $0x48] sm:$0xf]
  %v191 = vld [vmem:[%s1 + $0x4c] sm:$0xf]
  %v192 = vld [vmem:[%s1 + $0x50] sm:$0xf]
  %v193 = vld [vmem:[%s1 + $0x54] sm:$0xf]
  %v194 = vld [vmem:[%s1 + $0x58] sm:$0xf]
  %v195 = vld [vmem:[%s1 + $0x5c] sm:$0xf]
  %v196 = vld [vmem:[%s1 + $0x60] sm:$0xf]
  %v197 = vld [vmem:[%s1 + $0x64] sm:$0xf]
  %v198 = vld [vmem:[%s1 + $0x68] sm:$0xf]
  %v199 = vld [vmem:[%s1 + $0x6c] sm:$0xf]
  %v200 = vld [vmem:[%s1 + $0x70] sm:$0xf]
  %v201 = vld [vmem:[%s1 + $0x74] sm:$0xf]
  %v202 = vld [vmem:[%s1 + $0x78] sm:$0xf]
  %v203 = vld [vmem:[%s1 + $0x7c] sm:$0xf]
  %v236 = vunpack.c.l.b16 %v172
  %v237 = vunpack.c.l.b16 %v173
  %v238 = vunpack.c.l.b16 %v174
  %v239 = vunpack.c.l.b16 %v175
  %v240 = vunpack.c.l.b16 %v176
  %v241 = vunpack.c.l.b16 %v177
  %v242 = vunpack.c.l.b16 %v178
  %v243 = vunpack.c.l.b16 %v179
  %v244 = vunpack.c.l.b16 %v180
  %v245 = vunpack.c.l.b16 %v181
  %v246 = vunpack.c.l.b16 %v182
  %v247 = vunpack.c.l.b16 %v183
  %v248 = vunpack.c.l.b16 %v184
  %v249 = vunpack.c.l.b16 %v185
  %v250 = vunpack.c.l.b16 %v186
  %v251 = vunpack.c.l.b16 %v187
  %v252 = vunpack.c.l.b16 %v188
  %v253 = vunpack.c.l.b16 %v189
  %v254 = vunpack.c.l.b16 %v190
  %v255 = vunpack.c.l.b16 %v191
  %v256 = vunpack.c.l.b16 %v192
  %v257 = vunpack.c.l.b16 %v193
  %v258 = vunpack.c.l.b16 %v194
  %v259 = vunpack.c.l.b16 %v195
  %v260 = vunpack.c.l.b16 %v196
  %v261 = vunpack.c.l.b16 %v197
  %v262 = vunpack.c.l.b16 %v198
  %v263 = vunpack.c.l.b16 %v199
  %v264 = vunpack.c.l.b16 %v200
  %v265 = vunpack.c.l.b16 %v201
  %v266 = vunpack.c.l.b16 %v202
  %v267 = vunpack.c.l.b16 %v203
  %v268 = vpack.c.b16 %v237, %v236
  %v269 = vpack.c.b16 %v239, %v238
  %v270 = vpack.c.b16 %v241, %v240
  %v271 = vpack.c.b16 %v243, %v242
  %v272 = vpack.c.b16 %v245, %v244
  %v273 = vpack.c.b16 %v247, %v246
  %v274 = vpack.c.b16 %v249, %v248
  %v275 = vpack.c.b16 %v251, %v250
  %v276 = vpack.c.b16 %v253, %v252
  %v277 = vpack.c.b16 %v255, %v254
  %v278 = vpack.c.b16 %v257, %v256
  %v279 = vpack.c.b16 %v259, %v258
  %v280 = vpack.c.b16 %v261, %v260
  %v281 = vpack.c.b16 %v263, %v262
  %v282 = vpack.c.b16 %v265, %v264
  %v283 = vpack.c.b16 %v267, %v266
  %300 = vmatprep.subr.bf16.mxu0 0
  %301 = vmatpush1.bf16.msra.mxu0 %v268
  %302 = vmatprep.subr.bf16.mxu0 0
  %303 = vmatpush1.bf16.msra.mxu0 %v269
  %304 = vmatprep.subr.bf16.mxu0 0
  %305 = vmatpush1.bf16.msra.mxu0 %v270
  %306 = vmatprep.subr.bf16.mxu0 0
  %307 = vmatpush1.bf16.msra.mxu0 %v271
  %308 = vmatprep.subr.bf16.mxu0 0
  %309 = vmatpush1.bf16.msra.mxu0 %v272
  %310 = vmatprep.subr.bf16.mxu0 0
  %311 = vmatpush1.bf16.msra.mxu0 %v273
  %312 = vmatprep.subr.bf16.mxu0 0
  %313 = vmatpush1.bf16.msra.mxu0 %v274
  %314 = vmatprep.subr.bf16.mxu0 0
  %315 = vmatpush1.bf16.msra.mxu0 %v275
  %316 = vmatprep.subr.bf16.mxu0 0
  %317 = vmatpush1.bf16.msra.mxu0 %v276
  %318 = vmatprep.subr.bf16.mxu0 0
  %319 = vmatpush1.bf16.msra.mxu0 %v277
  %320 = vmatprep.subr.bf16.mxu0 0
  %321 = vmatpush1.bf16.msra.mxu0 %v278
  %322 = vmatprep.subr.bf16.mxu0 0
  %323 = vmatpush1.bf16.msra.mxu0 %v279
  %324 = vmatprep.subr.bf16.mxu0 0
  %325 = vmatpush1.bf16.msra.mxu0 %v280
  %326 = vmatprep.subr.bf16.mxu0 0
  %327 = vmatpush1.bf16.msra.mxu0 %v281
  %328 = vmatprep.subr.bf16.mxu0 0
  %329 = vmatpush1.bf16.msra.mxu0 %v282
  %330 = vmatprep.subr.bf16.mxu0 0
  %331 = vmatpush1.bf16.msra.mxu0 %v283
  %332 = vmatprep.mubr.bf16.mxu0 %v157
  %333 = vmatmul.mubr.bf16.gmra.mrb[0].mxu0 %v156
  %v334 = vpop.f32.mrb[0].mxu0
  %v335 = vadd.f32 0.0, %v334
  %v336 = vpop.f32.mrb[0].mxu0
  %v337 = vpop.f32.mrb[0].mxu0
  %v338 = vadd.f32 0.0, %v337
  %v339 = vpop.f32.mrb[0].mxu0
  %340 = vmatprep.mubr.bf16.mxu0 %v159
  %341 = vmatmul.mubr.bf16.gmra.mrb[0].mxu0 %v158
  %v342 = vpop.f32.mrb[0].mxu0
  %v343 = vadd.f32 0.0, %v342
  %v344 = vpop.f32.mrb[0].mxu0
  %v345 = vpop.f32.mrb[0].mxu0
  %v346 = vadd.f32 0.0, %v345
  %v347 = vpop.f32.mrb[0].mxu0
  %348 = vmatprep.mubr.bf16.mxu0 %v161
  %349 = vmatmul.mubr.bf16.gmra.mrb[0].mxu0 %v160
  %v350 = vpop.f32.mrb[0].mxu0
  %v351 = vadd.f32 0.0, %v350
  %v352 = vpop.f32.mrb[0].mxu0
  %v353 = vpop.f32.mrb[0].mxu0
  %v354 = vadd.f32 0.0, %v353
  %v355 = vpop.f32.mrb[0].mxu0
  %356 = vmatprep.mubr.bf16.mxu0 %v163
  %357 = vmatmul.mubr.bf16.gmra.mrb[0].mxu0 %v162
  %v358 = vpop.f32.mrb[0].mxu0
  %v359 = vadd.f32 0.0, %v358
  %v360 = vpop.f32.mrb[0].mxu0
  %v361 = vpop.f32.mrb[0].mxu0
  %v362 = vadd.f32 0.0, %v361
  %v363 = vpop.f32.mrb[0].mxu0
  %364 = vmatprep.mubr.bf16.mxu0 %v165
  %365 = vmatmul.mubr.bf16.gmra.mrb[0].mxu0 %v164
  %v366 = vpop.f32.mrb[0].mxu0
  %v367 = vadd.f32 0.0, %v366
  %v368 = vpop.f32.mrb[0].mxu0
  %v369 = vpop.f32.mrb[0].mxu0
  %v370 = vadd.f32 0.0, %v369
  %v371 = vpop.f32.mrb[0].mxu0
  %372 = vmatprep.mubr.bf16.mxu0 %v167
  %373 = vmatmul.mubr.bf16.gmra.mrb[0].mxu0 %v166
  %v374 = vpop.f32.mrb[0].mxu0
  %v375 = vadd.f32 0.0, %v374
  %v376 = vpop.f32.mrb[0].mxu0
  %v377 = vpop.f32.mrb[0].mxu0
  %v378 = vadd.f32 0.0, %v377
  %v379 = vpop.f32.mrb[0].mxu0
  %380 = vmatprep.mubr.bf16.mxu0 %v169
  %381 = vmatmul.mubr.bf16.gmra.mrb[0].mxu0 %v168
  %v382 = vpop.f32.mrb[0].mxu0
  %v383 = vadd.f32 0.0, %v382
  %v384 = vpop.f32.mrb[0].mxu0
  %v385 = vpop.f32.mrb[0].mxu0
  %v386 = vadd.f32 0.0, %v385
  %v387 = vpop.f32.mrb[0].mxu0
  %388 = vmatprep.mubr.bf16.mxu0 %v171
  %389 = vmatmul.mubr.bf16.gmra.mrb[0].mxu0 %v170
  %v390 = vpop.f32.mrb[0].mxu0
  %v391 = vadd.f32 0.0, %v390
  %v392 = vpop.f32.mrb[0].mxu0
  %v393 = vpop.f32.mrb[0].mxu0
  %v394 = vadd.f32 0.0, %v393
  %v395 = vpop.f32.mrb[0].mxu0
  %396 = vdwg.mxu0
  %v397 = vmax.f32 %v335, 0.0
  %v398 = vmax.f32 %v338, 0.0
  %v399 = vmax.f32 %v343, 0.0
  %v400 = vmax.f32 %v346, 0.0
  %v401 = vmax.f32 %v351, 0.0
  %v402 = vmax.f32 %v354, 0.0
  %v403 = vmax.f32 %v359, 0.0
  %v404 = vmax.f32 %v362, 0.0
  %v405 = vmax.f32 %v367, 0.0
  %v406 = vmax.f32 %v370, 0.0
  %v407 = vmax.f32 %v375, 0.0
  %v408 = vmax.f32 %v378, 0.0
  %v409 = vmax.f32 %v383, 0.0
  %v410 = vmax.f32 %v386, 0.0
  %v411 = vmax.f32 %v391, 0.0
  %v412 = vmax.f32 %v394, 0.0
  %v413 = vpack.c.bf16 %v398, %v397
  %v414 = vpack.c.bf16 %v400, %v399
  %v415 = vpack.c.bf16 %v402, %v401
  %v416 = vpack.c.bf16 %v404, %v403
  %v417 = vpack.c.bf16 %v406, %v405
  %v418 = vpack.c.bf16 %v408, %v407
  %v419 = vpack.c.bf16 %v410, %v409
  %v420 = vpack.c.bf16 %v412, %v411
  %v429 = vunpack.c.l.b16 %v413
  %v430 = vunpack.c.h.b16 %v413
  %v431 = vunpack.c.l.b16 %v414
  %v432 = vunpack.c.h.b16 %v414
  %v433 = vunpack.c.l.b16 %v415
  %v434 = vunpack.c.h.b16 %v415
  %v435 = vunpack.c.l.b16 %v416
  %v436 = vunpack.c.h.b16 %v416
  %v437 = vunpack.c.l.b16 %v417
  %v438 = vunpack.c.h.b16 %v417
  %v439 = vunpack.c.l.b16 %v418
  %v440 = vunpack.c.h.b16 %v418
  %v441 = vunpack.c.l.b16 %v419
  %v442 = vunpack.c.h.b16 %v419
  %v443 = vunpack.c.l.b16 %v420
  %v444 = vunpack.c.h.b16 %v420
  %v445 = vpack.c.b16 %v429, %v429
  %v446 = vpack.c.b16 %v430, %v430
  %v447 = vpack.c.b16 %v431, %v431
  %v448 = vpack.c.b16 %v432, %v432
  %v449 = vpack.c.b16 %v433, %v433
  %v450 = vpack.c.b16 %v434, %v434
  %v451 = vpack.c.b16 %v435, %v435
  %v452 = vpack.c.b16 %v436, %v436
  %v453 = vpack.c.b16 %v437, %v437
  %v454 = vpack.c.b16 %v438, %v438
  %v455 = vpack.c.b16 %v439, %v439
  %v456 = vpack.c.b16 %v440, %v440
  %v457 = vpack.c.b16 %v441, %v441
  %v458 = vpack.c.b16 %v442, %v442
  %v459 = vpack.c.b16 %v443, %v443
  %v460 = vpack.c.b16 %v444, %v444
  %vm477 = vcmask 125952
  %478 = vst.msk [vmem:[%s2] sm:$0xf] %vm477, %v445
  %479 = vst.msk [vmem:[%s2 + $0x4] sm:$0xf] %vm477, %v446
  %480 = vst.msk [vmem:[%s2 + $0x8] sm:$0xf] %vm477, %v447
  %481 = vst.msk [vmem:[%s2 + $0xc] sm:$0xf] %vm477, %v448
  %482 = vst.msk [vmem:[%s2 + $0x10] sm:$0xf] %vm477, %v449
  %483 = vst.msk [vmem:[%s2 + $0x14] sm:$0xf] %vm477, %v450
  %484 = vst.msk [vmem:[%s2 + $0x18] sm:$0xf] %vm477, %v451
  %485 = vst.msk [vmem:[%s2 + $0x1c] sm:$0xf] %vm477, %v452
  %486 = vst.msk [vmem:[%s2 + $0x20] sm:$0xf] %vm477, %v453
  %487 = vst.msk [vmem:[%s2 + $0x24] sm:$0xf] %vm477, %v454
  %488 = vst.msk [vmem:[%s2 + $0x28] sm:$0xf] %vm477, %v455
  %489 = vst.msk [vmem:[%s2 + $0x2c] sm:$0xf] %vm477, %v456
  %490 = vst.msk [vmem:[%s2 + $0x30] sm:$0xf] %vm477, %v457
  %491 = vst.msk [vmem:[%s2 + $0x34] sm:$0xf] %vm477, %v458
  %492 = vst.msk [vmem:[%s2 + $0x38] sm:$0xf] %vm477, %v459
  %493 = vst.msk [vmem:[%s2 + $0x3c] sm:$0xf] %vm477, %v460
  // Predicated region
  $region10: #{unet_skip_block_forward.7} parent=0 // pred_check
    _
  $region11: #{unet_skip_block_forward.7} parent=0 // pred_check_branch
    %495 = sbr.rel (0) target = $region13
  $region12: #{unet_skip_block_forward.7} parent=0 // pred_region
    _
  $region13: #{unet_skip_block_forward.7} parent=0 // pred_fallthru
    _
  // Predicated region
  $region14: #{unet_skip_block_forward.7} parent=0 // pred_check
    _
  $region15: #{unet_skip_block_forward.7} parent=0 // pred_check_branch
    %497 = sbr.rel (0) target = $region17
  $region16: #{unet_skip_block_forward.7} parent=0 // pred_region
    _
  $region17: #{unet_skip_block_forward.7} parent=0 // pred_fallthru
    _

// kernel: unet_skip_block_forward.8
$region0: #{unet_skip_block_forward.8}
  #allocation0 [shape = 'u32[]', space=smem, size = 0x4, offset = 0x4, fixed_abs, tag = 'smem constant byte address 0x4 - core index']
  #allocation1 [shape = 'u32[144,128]{1,0:T(1,128)}', space=vmem, size = 0x12000, scoped, tag = 'internal scratch']
  %s0 = inlined_call_operand.vmem [shape: bf16[128,144], index: 0, kind: input, shape index: {}]
  %s1 = inlined_call_operand.vmem [shape: bf16[144,64], index: 1, kind: input, shape index: {}]
  %s2 = inlined_call_operand.vmem [shape: f32[128,64], index: 2, kind: output, shape index: {}]
  %s3 = sld [smem:[#allocation0]]
  $region18: #{unet_skip_block_forward.8} parent=0
    _
  %s5 = ssub.s32 1, %s3
  %s6 = scalar_select 0, %s5, %s3
  // Predicated region
  $region2: #{unet_skip_block_forward.8} parent=0 // pred_check
    _
  $region3: #{unet_skip_block_forward.8} parent=0 // pred_check_branch
    %8 = sbr.rel (0) target = $region5
  $region4: #{unet_skip_block_forward.8} parent=0 // pred_region
    _
  $region5: #{unet_skip_block_forward.8} parent=0 // pred_fallthru
    _
  // Predicated region
  $region6: #{unet_skip_block_forward.8} parent=0 // pred_check
    _
  $region7: #{unet_skip_block_forward.8} parent=0 // pred_check_branch
    %10 = sbr.rel (0) target = $region9
  $region8: #{unet_skip_block_forward.8} parent=0 // pred_region
    _
  $region9: #{unet_skip_block_forward.8} parent=0 // pred_fallthru
    _
  %v12 = vld [vmem:[%s0] sm:$0xff]
  %v13 = vld [vmem:[%s0 + $0x8] sm:$0xff]
  %v14 = vld [vmem:[%s0 + $0x10] sm:$0xff]
  %v15 = vld [vmem:[%s0 + $0x18] sm:$0xff]
  %v16 = vld [vmem:[%s0 + $0x20] sm:$0xff]
  %v17 = vld [vmem:[%s0 + $0x28] sm:$0xff]
  %v18 = vld [vmem:[%s0 + $0x30] sm:$0xff]
  %v19 = vld [vmem:[%s0 + $0x38] sm:$0xff]
  %v20 = vld [vmem:[%s0 + $0x40] sm:$0xff]
  %v21 = vld [vmem:[%s0 + $0x48] sm:$0xff]
  %v22 = vld [vmem:[%s0 + $0x50] sm:$0xff]
  %v23 = vld [vmem:[%s0 + $0x58] sm:$0xff]
  %v24 = vld [vmem:[%s0 + $0x60] sm:$0xff]
  %v25 = vld [vmem:[%s0 + $0x68] sm:$0xff]
  %v26 = vld [vmem:[%s0 + $0x70] sm:$0xff]
  %v27 = vld [vmem:[%s0 + $0x78] sm:$0xff]
  %v28 = vld [vmem:[%s1] sm:$0xf]
  %v29 = vld [vmem:[%s1 + $0x4] sm:$0xf]
  %v30 = vld [vmem:[%s1 + $0x8] sm:$0xf]
  %v31 = vld [vmem:[%s1 + $0xc] sm:$0xf]
  %v32 = vld [vmem:[%s1 + $0x10] sm:$0xf]
  %v33 = vld [vmem:[%s1 + $0x14] sm:$0xf]
  %v34 = vld [vmem:[%s1 + $0x18] sm:$0xf]
  %v35 = vld [vmem:[%s1 + $0x1c] sm:$0xf]
  %v36 = vld [vmem:[%s1 + $0x20] sm:$0xf]
  %v37 = vld [vmem:[%s1 + $0x24] sm:$0xf]
  %v38 = vld [vmem:[%s1 + $0x28] sm:$0xf]
  %v39 = vld [vmem:[%s1 + $0x2c] sm:$0xf]
  %v40 = vld [vmem:[%s1 + $0x30] sm:$0xf]
  %v41 = vld [vmem:[%s1 + $0x34] sm:$0xf]
  %v42 = vld [vmem:[%s1 + $0x38] sm:$0xf]
  %v43 = vld [vmem:[%s1 + $0x3c] sm:$0xf]
  %v44 = vld [vmem:[%s1 + $0x40] sm:$0xf]
  %v45 = vld [vmem:[%s1 + $0x44] sm:$0xf]
  %v62 = vunpack.c.l.b16 %v12
  %v63 = vunpack.c.h.b16 %v12
  %v64 = vunpack.c.l.b16 %v13
  %v65 = vunpack.c.h.b16 %v13
  %v66 = vunpack.c.l.b16 %v14
  %v67 = vunpack.c.h.b16 %v14
  %v68 = vunpack.c.l.b16 %v15
  %v69 = vunpack.c.h.b16 %v15
  %v70 = vunpack.c.l.b16 %v16
  %v71 = vunpack.c.h.b16 %v16
  %v72 = vunpack.c.l.b16 %v17
  %v73 = vunpack.c.h.b16 %v17
  %v74 = vunpack.c.l.b16 %v18
  %v75 = vunpack.c.h.b16 %v18
  %v76 = vunpack.c.l.b16 %v19
  %v77 = vunpack.c.h.b16 %v19
  %v78 = vunpack.c.l.b16 %v20
  %v79 = vunpack.c.h.b16 %v20
  %v80 = vunpack.c.l.b16 %v21
  %v81 = vunpack.c.h.b16 %v21
  %v82 = vunpack.c.l.b16 %v22
  %v83 = vunpack.c.h.b16 %v22
  %v84 = vunpack.c.l.b16 %v23
  %v85 = vunpack.c.h.b16 %v23
  %v86 = vunpack.c.l.b16 %v24
  %v87 = vunpack.c.h.b16 %v24
  %v88 = vunpack.c.l.b16 %v25
  %v89 = vunpack.c.h.b16 %v25
  %v90 = vunpack.c.l.b16 %v26
  %v91 = vunpack.c.h.b16 %v26
  %v92 = vunpack.c.l.b16 %v27
  %v93 = vunpack.c.h.b16 %v27
  %v94 = vpack.c.b16 %v64, %v62
  %v95 = vpack.c.b16 %v65, %v63
  %v96 = vpack.c.b16 %v68, %v66
  %v97 = vpack.c.b16 %v69, %v67
  %v98 = vpack.c.b16 %v72, %v70
  %v99 = vpack.c.b16 %v73, %v71
  %v100 = vpack.c.b16 %v76, %v74
  %v101 = vpack.c.b16 %v77, %v75
  %v102 = vpack.c.b16 %v80, %v78
  %v103 = vpack.c.b16 %v81, %v79
  %v104 = vpack.c.b16 %v84, %v82
  %v105 = vpack.c.b16 %v85, %v83
  %v106 = vpack.c.b16 %v88, %v86
  %v107 = vpack.c.b16 %v89, %v87
  %v108 = vpack.c.b16 %v92, %v90
  %v109 = vpack.c.b16 %v93, %v91
  %v136 = vunpack.c.l.b16 %v28
  %v137 = vunpack.c.l.b16 %v29
  %v138 = vunpack.c.l.b16 %v30
  %v139 = vunpack.c.l.b16 %v31
  %v140 = vunpack.c.l.b16 %v32
  %v141 = vunpack.c.l.b16 %v33
  %v142 = vunpack.c.l.b16 %v34
  %v143 = vunpack.c.l.b16 %v35
  %v144 = vunpack.c.l.b16 %v36
  %v145 = vunpack.c.l.b16 %v37
  %v146 = vunpack.c.l.b16 %v38
  %v147 = vunpack.c.l.b16 %v39
  %v148 = vunpack.c.l.b16 %v40
  %v149 = vunpack.c.l.b16 %v41
  %v150 = vunpack.c.l.b16 %v42
  %v151 = vunpack.c.l.b16 %v43
  %v152 = vunpack.c.l.b16 %v44
  %v153 = vunpack.c.l.b16 %v45
  %v154 = vpack.c.b16 %v137, %v136
  %v155 = vpack.c.b16 %v139, %v138
  %v156 = vpack.c.b16 %v141, %v140
  %v157 = vpack.c.b16 %v143, %v142
  %v158 = vpack.c.b16 %v145, %v144
  %v159 = vpack.c.b16 %v147, %v146
  %v160 = vpack.c.b16 %v149, %v148
  %v161 = vpack.c.b16 %v151, %v150
  %v162 = vpack.c.b16 %v153, %v152
  %vm172 = vcmask 130048
  %v174 = vsel %vm172, %v95, 0
  %v177 = vsel %vm172, %v97, 0
  %v180 = vsel %vm172, %v99, 0
  %v183 = vsel %vm172, %v101, 0
  %v186 = vsel %vm172, %v103, 0
  %v189 = vsel %vm172, %v105, 0
  %v192 = vsel %vm172, %v107, 0
  %v195 = vsel %vm172, %v109, 0
  %197 = vmatprep.subr.bf16.mxu0 0
  %198 = vmatpush1.bf16.msra.mxu0 %v154
  %199 = vmatprep.subr.bf16.mxu0 0
  %200 = vmatpush1.bf16.msra.mxu0 %v155
  %201 = vmatprep.subr.bf16.mxu0 0
  %202 = vmatpush1.bf16.msra.mxu0 %v156
  %203 = vmatprep.subr.bf16.mxu0 0
  %204 = vmatpush1.bf16.msra.mxu0 %v157
  %205 = vmatprep.subr.bf16.mxu0 0
  %206 = vmatpush1.bf16.msra.mxu0 %v158
  %207 = vmatprep.subr.bf16.mxu0 0
  %208 = vmatpush1.bf16.msra.mxu0 %v159
  %209 = vmatprep.subr.bf16.mxu0 0
  %210 = vmatpush1.bf16.msra.mxu0 %v160
  %211 = vmatprep.subr.bf16.mxu0 0
  %212 = vmatpush1.bf16.msra.mxu0 %v161
  %213 = vmatprep.subr.bf16.mxu0 0
  %214 = vmatpush1.bf16.msra.mxu0 %v162
  %215 = vmatprep.subr.bf16.mxu0 0
  %216 = vmatpush1.bf16.msra.mxu0 0
  %217 = vmatprep.subr.bf16.mxu0 0
  %218 = vmatpush1.bf16.msra.mxu0 0
  %219 = vmatprep.subr.bf16.mxu0 0
  %220 = vmatpush1.bf16.msra.mxu0 0
  %221 = vmatprep.subr.bf16.mxu0 0
  %222 = vmatpush1.bf16.msra.mxu0 0
  %223 = vmatprep.subr.bf16.mxu0 0
  %224 = vmatpush1.bf16.msra.mxu0 0
  %225 = vmatprep.subr.bf16.mxu0 0
  %226 = vmatpush1.bf16.msra.mxu0 0
  %227 = vmatprep.subr.bf16.mxu0 0
  %228 = vmatpush1.bf16.msra.mxu0 0
  %229 = vmatprep.mubr.bf16.mxu0 %v174
  %230 = vmatmul.mubr.bf16.gmra.mrb[0].mxu0 %v94
  %v231 = vpop.f32.mrb[0].mxu0
  %v232 = vadd.f32 0.0, %v231
  %v233 = vpop.f32.mrb[0].mxu0
  %v234 = vpop.f32.mrb[0].mxu0
  %v235 = vadd.f32 0.0, %v234
  %v236 = vpop.f32.mrb[0].mxu0
  %237 = vmatprep.mubr.bf16.mxu0 %v177
  %238 = vmatmul.mubr.bf16.gmra.mrb[0].mxu0 %v96
  %v239 = vpop.f32.mrb[0].mxu0
  %v240 = vadd.f32 0.0, %v239
  %v241 = vpop.f32.mrb[0].mxu0
  %v242 = vpop.f32.mrb[0].mxu0
  %v243 = vadd.f32 0.0, %v242
  %v244 = vpop.f32.mrb[0].mxu0
  %245 = vmatprep.mubr.bf16.mxu0 %v180
  %246 = vmatmul.mubr.bf16.gmra.mrb[0].mxu0 %v98
  %v247 = vpop.f32.mrb[0].mxu0
  %v248 = vadd.f32 0.0, %v247
  %v249 = vpop.f32.mrb[0].mxu0
  %v250 = vpop.f32.mrb[0].mxu0
  %v251 = vadd.f32 0.0, %v250
  %v252 = vpop.f32.mrb[0].mxu0
  %253 = vmatprep.mubr.bf16.mxu0 %v183
  %254 = vmatmul.mubr.bf16.gmra.mrb[0].mxu0 %v100
  %v255 = vpop.f32.mrb[0].mxu0
  %v256 = vadd.f32 0.0, %v255
  %v257 = vpop.f32.mrb[0].mxu0
  %v258 = vpop.f32.mrb[0].mxu0
  %v259 = vadd.f32 0.0, %v258
  %v260 = vpop.f32.mrb[0].mxu0
  %261 = vmatprep.mubr.bf16.mxu0 %v186
  %262 = vmatmul.mubr.bf16.gmra.mrb[0].mxu0 %v102
  %v263 = vpop.f32.mrb[0].mxu0
  %v264 = vadd.f32 0.0, %v263
  %v265 = vpop.f32.mrb[0].mxu0
  %v266 = vpop.f32.mrb[0].mxu0
  %v267 = vadd.f32 0.0, %v266
  %v268 = vpop.f32.mrb[0].mxu0
  %269 = vmatprep.mubr.bf16.mxu0 %v189
  %270 = vmatmul.mubr.bf16.gmra.mrb[0].mxu0 %v104
  %v271 = vpop.f32.mrb[0].mxu0
  %v272 = vadd.f32 0.0, %v271
  %v273 = vpop.f32.mrb[0].mxu0
  %v274 = vpop.f32.mrb[0].mxu0
  %v275 = vadd.f32 0.0, %v274
  %v276 = vpop.f32.mrb[0].mxu0
  %277 = vmatprep.mubr.bf16.mxu0 %v192
  %278 = vmatmul.mubr.bf16.gmra.mrb[0].mxu0 %v106
  %v279 = vpop.f32.mrb[0].mxu0
  %v280 = vadd.f32 0.0, %v279
  %v281 = vpop.f32.mrb[0].mxu0
  %v282 = vpop.f32.mrb[0].mxu0
  %v283 = vadd.f32 0.0, %v282
  %v284 = vpop.f32.mrb[0].mxu0
  %285 = vmatprep.mubr.bf16.mxu0 %v195
  %286 = vmatmul.mubr.bf16.gmra.mrb[0].mxu0 %v108
  %v287 = vpop.f32.mrb[0].mxu0
  %v288 = vadd.f32 0.0, %v287
  %v289 = vpop.f32.mrb[0].mxu0
  %v290 = vpop.f32.mrb[0].mxu0
  %v291 = vadd.f32 0.0, %v290
  %v292 = vpop.f32.mrb[0].mxu0
  %293 = vdwg.mxu0
  %vm294 = vcmask 523264
  %295 = vst.msk [vmem:[%s2] sm:$0xff] %vm294, %v232
  %296 = vst.msk [vmem:[%s2 + $0x8] sm:$0xff] %vm294, %v235
  %297 = vst.msk [vmem:[%s2 + $0x10] sm:$0xff] %vm294, %v240
  %298 = vst.msk [vmem:[%s2 + $0x18] sm:$0xff] %vm294, %v243
  %299 = vst.msk [vmem:[%s2 + $0x20] sm:$0xff] %vm294, %v248
  %300 = vst.msk [vmem:[%s2 + $0x28] sm:$0xff] %vm294, %v251
  %301 = vst.msk [vmem:[%s2 + $0x30] sm:$0xff] %vm294, %v256
  %302 = vst.msk [vmem:[%s2 + $0x38] sm:$0xff] %vm294, %v259
  %303 = vst.msk [vmem:[%s2 + $0x40] sm:$0xff] %vm294, %v264
  %304 = vst.msk [vmem:[%s2 + $0x48] sm:$0xff] %vm294, %v267
  %305 = vst.msk [vmem:[%s2 + $0x50] sm:$0xff] %vm294, %v272
  %306 = vst.msk [vmem:[%s2 + $0x58] sm:$0xff] %vm294, %v275
  %307 = vst.msk [vmem:[%s2 + $0x60] sm:$0xff] %vm294, %v280
  %308 = vst.msk [vmem:[%s2 + $0x68] sm:$0xff] %vm294, %v283
  %309 = vst.msk [vmem:[%s2 + $0x70] sm:$0xff] %vm294, %v288
  %310 = vst.msk [vmem:[%s2 + $0x78] sm:$0xff] %vm294, %v291
  // Predicated region
  $region10: #{unet_skip_block_forward.8} parent=0 // pred_check
    _
  $region11: #{unet_skip_block_forward.8} parent=0 // pred_check_branch
    %312 = sbr.rel (0) target = $region13
  $region12: #{unet_skip_block_forward.8} parent=0 // pred_region
    _
  $region13: #{unet_skip_block_forward.8} parent=0 // pred_fallthru
    _
  // Predicated region
  $region14: #{unet_skip_block_forward.8} parent=0 // pred_check
    _
  $region15: #{unet_skip_block_forward.8} parent=0 // pred_check_branch
    %314 = sbr.rel (0) target = $region17
  $region16: #{unet_skip_block_forward.8} parent=0 // pred_region
    _
  $region17: #{unet_skip_block_forward.8} parent=0 // pred_fallthru
    _

// kernel: unet_skip_block_forward.9
$region0: #{unet_skip_block_forward.9}
  #allocation0 [shape = 'u32[]', space=smem, size = 0x4, offset = 0x4, fixed_abs, tag = 'smem constant byte address 0x4 - core index']
  #allocation1 [shape = 'u32[144,128]{1,0:T(1,128)}', space=vmem, size = 0x12000, scoped, tag = 'internal scratch']
  %s0 = inlined_call_operand.vmem [shape: f32[512,16], index: 0, kind: input, shape index: {}]
  %s1 = inlined_call_operand.vmem [shape: bf16[16,48], index: 1, kind: input, shape index: {}]
  %s2 = inlined_call_operand.vmem [shape: f32[1,16], index: 2, kind: input, shape index: {}]
  %s3 = inlined_call_operand.vmem [shape: f32[1,16], index: 3, kind: input, shape index: {}]
  %s4 = inlined_call_operand.vmem [shape: f32[1,48], index: 4, kind: input, shape index: {}]
  %s5 = inlined_call_operand.vmem [shape: bf16[512,48], index: 5, kind: output, shape index: {}]
  %s6 = sld [smem:[#allocation0]]
  $region30: #{unet_skip_block_forward.9} parent=0
    _
  %s8 = ssub.s32 1, %s6
  %s9 = scalar_select 0, %s8, %s6
  // Predicated region
  $region2: #{unet_skip_block_forward.9} parent=0 // pred_check
    _
  $region3: #{unet_skip_block_forward.9} parent=0 // pred_check_branch
    %11 = sbr.rel (0) target = $region5
  $region4: #{unet_skip_block_forward.9} parent=0 // pred_region
    _
  $region5: #{unet_skip_block_forward.9} parent=0 // pred_fallthru
    _
  // Predicated region
  $region6: #{unet_skip_block_forward.9} parent=0 // pred_check
    _
  $region7: #{unet_skip_block_forward.9} parent=0 // pred_check_branch
    %13 = sbr.rel (0) target = $region9
  $region8: #{unet_skip_block_forward.9} parent=0 // pred_region
    _
  $region9: #{unet_skip_block_forward.9} parent=0 // pred_fallthru
    _
  // Predicated region
  $region10: #{unet_skip_block_forward.9} parent=0 // pred_check
    _
  $region11: #{unet_skip_block_forward.9} parent=0 // pred_check_branch
    %15 = sbr.rel (0) target = $region13
  $region12: #{unet_skip_block_forward.9} parent=0 // pred_region
    _
  $region13: #{unet_skip_block_forward.9} parent=0 // pred_fallthru
    _
  // Predicated region
  $region14: #{unet_skip_block_forward.9} parent=0 // pred_check
    _
  $region15: #{unet_skip_block_forward.9} parent=0 // pred_check_branch
    %17 = sbr.rel (0) target = $region17
  $region16: #{unet_skip_block_forward.9} parent=0 // pred_region
    _
  $region17: #{unet_skip_block_forward.9} parent=0 // pred_fallthru
    _
  // Predicated region
  $region18: #{unet_skip_block_forward.9} parent=0 // pred_check
    _
  $region19: #{unet_skip_block_forward.9} parent=0 // pred_check_branch
    %19 = sbr.rel (0) target = $region21
  $region20: #{unet_skip_block_forward.9} parent=0 // pred_region
    _
  $region21: #{unet_skip_block_forward.9} parent=0 // pred_fallthru
    _
  %v21 = vld [vmem:[%s0] sm:$0xff]
  %v22 = vld [vmem:[%s0 + $0x8] sm:$0xff]
  %v23 = vld [vmem:[%s0 + $0x10] sm:$0xff]
  %v24 = vld [vmem:[%s0 + $0x18] sm:$0xff]
  %v25 = vld [vmem:[%s0 + $0x20] sm:$0xff]
  %v26 = vld [vmem:[%s0 + $0x28] sm:$0xff]
  %v27 = vld [vmem:[%s0 + $0x30] sm:$0xff]
  %v28 = vld [vmem:[%s0 + $0x38] sm:$0xff]
  %v29 = vld [vmem:[%s0 + $0x40] sm:$0xff]
  %v30 = vld [vmem:[%s0 + $0x48] sm:$0xff]
  %v31 = vld [vmem:[%s0 + $0x50] sm:$0xff]
  %v32 = vld [vmem:[%s0 + $0x58] sm:$0xff]
  %v33 = vld [vmem:[%s0 + $0x60] sm:$0xff]
  %v34 = vld [vmem:[%s0 + $0x68] sm:$0xff]
  %v35 = vld [vmem:[%s0 + $0x70] sm:$0xff]
  %v36 = vld [vmem:[%s0 + $0x78] sm:$0xff]
  %v37 = vld [vmem:[%s0 + $0x80] sm:$0xff]
  %v38 = vld [vmem:[%s0 + $0x88] sm:$0xff]
  %v39 = vld [vmem:[%s0 + $0x90] sm:$0xff]
  %v40 = vld [vmem:[%s0 + $0x98] sm:$0xff]
  %v41 = vld [vmem:[%s0 + $0xa0] sm:$0xff]
  %v42 = vld [vmem:[%s0 + $0xa8] sm:$0xff]
  %v43 = vld [vmem:[%s0 + $0xb0] sm:$0xff]
  %v44 = vld [vmem:[%s0 + $0xb8] sm:$0xff]
  %v45 = vld [vmem:[%s0 + $0xc0] sm:$0xff]
  %v46 = vld [vmem:[%s0 + $0xc8] sm:$0xff]
  %v47 = vld [vmem:[%s0 + $0xd0] sm:$0xff]
  %v48 = vld [vmem:[%s0 + $0xd8] sm:$0xff]
  %v49 = vld [vmem:[%s0 + $0xe0] sm:$0xff]
  %v50 = vld [vmem:[%s0 + $0xe8] sm:$0xff]
  %v51 = vld [vmem:[%s0 + $0xf0] sm:$0xff]
  %v52 = vld [vmem:[%s0 + $0xf8] sm:$0xff]
  %v53 = vld [vmem:[%s0 + $0x100] sm:$0xff]
  %v54 = vld [vmem:[%s0 + $0x108] sm:$0xff]
  %v55 = vld [vmem:[%s0 + $0x110] sm:$0xff]
  %v56 = vld [vmem:[%s0 + $0x118] sm:$0xff]
  %v57 = vld [vmem:[%s0 + $0x120] sm:$0xff]
  %v58 = vld [vmem:[%s0 + $0x128] sm:$0xff]
  %v59 = vld [vmem:[%s0 + $0x130] sm:$0xff]
  %v60 = vld [vmem:[%s0 + $0x138] sm:$0xff]
  %v61 = vld [vmem:[%s0 + $0x140] sm:$0xff]
  %v62 = vld [vmem:[%s0 + $0x148] sm:$0xff]
  %v63 = vld [vmem:[%s0 + $0x150] sm:$0xff]
  %v64 = vld [vmem:[%s0 + $0x158] sm:$0xff]
  %v65 = vld [vmem:[%s0 + $0x160] sm:$0xff]
  %v66 = vld [vmem:[%s0 + $0x168] sm:$0xff]
  %v67 = vld [vmem:[%s0 + $0x170] sm:$0xff]
  %v68 = vld [vmem:[%s0 + $0x178] sm:$0xff]
  %v69 = vld [vmem:[%s0 + $0x180] sm:$0xff]
  %v70 = vld [vmem:[%s0 + $0x188] sm:$0xff]
  %v71 = vld [vmem:[%s0 + $0x190] sm:$0xff]
  %v72 = vld [vmem:[%s0 + $0x198] sm:$0xff]
  %v73 = vld [vmem:[%s0 + $0x1a0] sm:$0xff]
  %v74 = vld [vmem:[%s0 + $0x1a8] sm:$0xff]
  %v75 = vld [vmem:[%s0 + $0x1b0] sm:$0xff]
  %v76 = vld [vmem:[%s0 + $0x1b8] sm:$0xff]
  %v77 = vld [vmem:[%s0 + $0x1c0] sm:$0xff]
  %v78 = vld [vmem:[%s0 + $0x1c8] sm:$0xff]
  %v79 = vld [vmem:[%s0 + $0x1d0] sm:$0xff]
  %v80 = vld [vmem:[%s0 + $0x1d8] sm:$0xff]
  %v81 = vld [vmem:[%s0 + $0x1e0] sm:$0xff]
  %v82 = vld [vmem:[%s0 + $0x1e8] sm:$0xff]
  %v83 = vld [vmem:[%s0 + $0x1f0] sm:$0xff]
  %v84 = vld [vmem:[%s0 + $0x1f8] sm:$0xff]
  %v85 = vld [vmem:[%s2] sm:$0x1]
  %v87 = vlaneseq
  %v88 = vshrl.u32 %v87, 7
  %v89 = vsub.s32 0, %v88
  %v90 = vrot.slane %v85, %v89
  %v92 = vmul.f32 %v21, %v90
  %v93 = vmul.f32 %v22, %v90
  %v94 = vmul.f32 %v23, %v90
  %v95 = vmul.f32 %v24, %v90
  %v96 = vmul.f32 %v25, %v90
  %v97 = vmul.f32 %v26, %v90
  %v98 = vmul.f32 %v27, %v90
  %v99 = vmul.f32 %v28, %v90
  %v100 = vmul.f32 %v29, %v90
  %v101 = vmul.f32 %v30, %v90
  %v102 = vmul.f32 %v31, %v90
  %v103 = vmul.f32 %v32, %v90
  %v104 = vmul.f32 %v33, %v90
  %v105 = vmul.f32 %v34, %v90
  %v106 = vmul.f32 %v35, %v90
  %v107 = vmul.f32 %v36, %v90
  %v108 = vmul.f32 %v37, %v90
  %v109 = vmul.f32 %v38, %v90
  %v110 = vmul.f32 %v39, %v90
  %v111 = vmul.f32 %v40, %v90
  %v112 = vmul.f32 %v41, %v90
  %v113 = vmul.f32 %v42, %v90
  %v114 = vmul.f32 %v43, %v90
  %v115 = vmul.f32 %v44, %v90
  %v116 = vmul.f32 %v45, %v90
  %v117 = vmul.f32 %v46, %v90
  %v118 = vmul.f32 %v47, %v90
  %v119 = vmul.f32 %v48, %v90
  %v120 = vmul.f32 %v49, %v90
  %v121 = vmul.f32 %v50, %v90
  %v122 = vmul.f32 %v51, %v90
  %v123 = vmul.f32 %v52, %v90
  %v124 = vmul.f32 %v53, %v90
  %v125 = vmul.f32 %v54, %v90
  %v126 = vmul.f32 %v55, %v90
  %v127 = vmul.f32 %v56, %v90
  %v128 = vmul.f32 %v57, %v90
  %v129 = vmul.f32 %v58, %v90
  %v130 = vmul.f32 %v59, %v90
  %v131 = vmul.f32 %v60, %v90
  %v132 = vmul.f32 %v61, %v90
  %v133 = vmul.f32 %v62, %v90
  %v134 = vmul.f32 %v63, %v90
  %v135 = vmul.f32 %v64, %v90
  %v136 = vmul.f32 %v65, %v90
  %v137 = vmul.f32 %v66, %v90
  %v138 = vmul.f32 %v67, %v90
  %v139 = vmul.f32 %v68, %v90
  %v140 = vmul.f32 %v69, %v90
  %v141 = vmul.f32 %v70, %v90
  %v142 = vmul.f32 %v71, %v90
  %v143 = vmul.f32 %v72, %v90
  %v144 = vmul.f32 %v73, %v90
  %v145 = vmul.f32 %v74, %v90
  %v146 = vmul.f32 %v75, %v90
  %v147 = vmul.f32 %v76, %v90
  %v148 = vmul.f32 %v77, %v90
  %v149 = vmul.f32 %v78, %v90
  %v150 = vmul.f32 %v79, %v90
  %v151 = vmul.f32 %v80, %v90
  %v152 = vmul.f32 %v81, %v90
  %v153 = vmul.f32 %v82, %v90
  %v154 = vmul.f32 %v83, %v90
  %v155 = vmul.f32 %v84, %v90
  %v156 = vld [vmem:[%s3] sm:$0x1]
  %v158 = vlaneseq
  %v159 = vshrl.u32 %v158, 7
  %v160 = vsub.s32 0, %v159
  %v161 = vrot.slane %v156, %v160
  %v163 = vadd.f32 %v92, %v161
  %v164 = vadd.f32 %v93, %v161
  %v165 = vadd.f32 %v94, %v161
  %v166 = vadd.f32 %v95, %v161
  %v167 = vadd.f32 %v96, %v161
  %v168 = vadd.f32 %v97, %v161
  %v169 = vadd.f32 %v98, %v161
  %v170 = vadd.f32 %v99, %v161
  %v171 = vadd.f32 %v100, %v161
  %v172 = vadd.f32 %v101, %v161
  %v173 = vadd.f32 %v102, %v161
  %v174 = vadd.f32 %v103, %v161
  %v175 = vadd.f32 %v104, %v161
  %v176 = vadd.f32 %v105, %v161
  %v177 = vadd.f32 %v106, %v161
  %v178 = vadd.f32 %v107, %v161
  %v179 = vadd.f32 %v108, %v161
  %v180 = vadd.f32 %v109, %v161
  %v181 = vadd.f32 %v110, %v161
  %v182 = vadd.f32 %v111, %v161
  %v183 = vadd.f32 %v112, %v161
  %v184 = vadd.f32 %v113, %v161
  %v185 = vadd.f32 %v114, %v161
  %v186 = vadd.f32 %v115, %v161
  %v187 = vadd.f32 %v116, %v161
  %v188 = vadd.f32 %v117, %v161
  %v189 = vadd.f32 %v118, %v161
  %v190 = vadd.f32 %v119, %v161
  %v191 = vadd.f32 %v120, %v161
  %v192 = vadd.f32 %v121, %v161
  %v193 = vadd.f32 %v122, %v161
  %v194 = vadd.f32 %v123, %v161
  %v195 = vadd.f32 %v124, %v161
  %v196 = vadd.f32 %v125, %v161
  %v197 = vadd.f32 %v126, %v161
  %v198 = vadd.f32 %v127, %v161
  %v199 = vadd.f32 %v128, %v161
  %v200 = vadd.f32 %v129, %v161
  %v201 = vadd.f32 %v130, %v161
  %v202 = vadd.f32 %v131, %v161
  %v203 = vadd.f32 %v132, %v161
  %v204 = vadd.f32 %v133, %v161
  %v205 = vadd.f32 %v134, %v161
  %v206 = vadd.f32 %v135, %v161
  %v207 = vadd.f32 %v136, %v161
  %v208 = vadd.f32 %v137, %v161
  %v209 = vadd.f32 %v138, %v161
  %v210 = vadd.f32 %v139, %v161
  %v211 = vadd.f32 %v140, %v161
  %v212 = vadd.f32 %v141, %v161
  %v213 = vadd.f32 %v142, %v161
  %v214 = vadd.f32 %v143, %v161
  %v215 = vadd.f32 %v144, %v161
  %v216 = vadd.f32 %v145, %v161
  %v217 = vadd.f32 %v146, %v161
  %v218 = vadd.f32 %v147, %v161
  %v219 = vadd.f32 %v148, %v161
  %v220 = vadd.f32 %v149, %v161
  %v221 = vadd.f32 %v150, %v161
  %v222 = vadd.f32 %v151, %v161
  %v223 = vadd.f32 %v152, %v161
  %v224 = vadd.f32 %v153, %v161
  %v225 = vadd.f32 %v154, %v161
  %v226 = vadd.f32 %v155, %v161
  %v227 = vpack.c.bf16 %v164, %v163
  %v228 = vpack.c.bf16 %v166, %v165
  %v229 = vpack.c.bf16 %v168, %v167
  %v230 = vpack.c.bf16 %v170, %v169
  %v231 = vpack.c.bf16 %v172, %v171
  %v232 = vpack.c.bf16 %v174, %v173
  %v233 = vpack.c.bf16 %v176, %v175
  %v234 = vpack.c.bf16 %v178, %v177
  %v235 = vpack.c.bf16 %v180, %v179
  %v236 = vpack.c.bf16 %v182, %v181
  %v237 = vpack.c.bf16 %v184, %v183
  %v238 = vpack.c.bf16 %v186, %v185
  %v239 = vpack.c.bf16 %v188, %v187
  %v240 = vpack.c.bf16 %v190, %v189
  %v241 = vpack.c.bf16 %v192, %v191
  %v242 = vpack.c.bf16 %v194, %v193
  %v243 = vpack.c.bf16 %v196, %v195
  %v244 = vpack.c.bf16 %v198, %v197
  %v245 = vpack.c.bf16 %v200, %v199
  %v246 = vpack.c.bf16 %v202, %v201
  %v247 = vpack.c.bf16 %v204, %v203
  %v248 = vpack.c.bf16 %v206, %v205
  %v249 = vpack.c.bf16 %v208, %v207
  %v250 = vpack.c.bf16 %v210, %v209
  %v251 = vpack.c.bf16 %v212, %v211
  %v252 = vpack.c.bf16 %v214, %v213
  %v253 = vpack.c.bf16 %v216, %v215
  %v254 = vpack.c.bf16 %v218, %v217
  %v255 = vpack.c.bf16 %v220, %v219
  %v256 = vpack.c.bf16 %v222, %v221
  %v257 = vpack.c.bf16 %v224, %v223
  %v258 = vpack.c.bf16 %v226, %v225
  %v259 = vld [vmem:[%s1] sm:$0xf]
  %v260 = vld [vmem:[%s1 + $0x4] sm:$0xf]
  %v261 = vld [vmem:[%s4] sm:$0x1]
  %v263 = vlaneseq
  %v264 = vshrl.u32 %v263, 7
  %v265 = vsub.s32 0, %v264
  %v266 = vrot.slane %v261, %v265
  %v270 = vunpack.c.l.b16 %v259
  %v271 = vunpack.c.l.b16 %v260
  %v272 = vpack.c.b16 %v271, %v270
  %vm274 = vcmask 130048
  %v276 = vsel %vm274, %v227, 0
  %v279 = vsel %vm274, %v228, 0
  %v282 = vsel %vm274, %v229, 0
  %v285 = vsel %vm274, %v230, 0
  %v288 = vsel %vm274, %v231, 0
  %v291 = vsel %vm274, %v232, 0
  %v294 = vsel %vm274, %v233, 0
  %v297 = vsel %vm274, %v234, 0
  %v300 = vsel %vm274, %v235, 0
  %v303 = vsel %vm274, %v236, 0
  %v306 = vsel %vm274, %v237, 0
  %v309 = vsel %vm274, %v238, 0
  %v312 = vsel %vm274, %v239, 0
  %v315 = vsel %vm274, %v240, 0
  %v318 = vsel %vm274, %v241, 0
  %v321 = vsel %vm274, %v242, 0
  %v324 = vsel %vm274, %v243, 0
  %v327 = vsel %vm274, %v244, 0
  %v330 = vsel %vm274, %v245, 0
  %v333 = vsel %vm274, %v246, 0
  %v336 = vsel %vm274, %v247, 0
  %v339 = vsel %vm274, %v248, 0
  %v342 = vsel %vm274, %v249, 0
  %v345 = vsel %vm274, %v250, 0
  %v348 = vsel %vm274, %v251, 0
  %v351 = vsel %vm274, %v252, 0
  %v354 = vsel %vm274, %v253, 0
  %v357 = vsel %vm274, %v254, 0
  %v360 = vsel %vm274, %v255, 0
  %v363 = vsel %vm274, %v256, 0
  %v366 = vsel %vm274, %v257, 0
  %v369 = vsel %vm274, %v258, 0
  %371 = vmatprep.subr.bf16.mxu0 0
  %372 = vmatpush1.bf16.msra.mxu0 %v272
  %373 = vmatprep.subr.bf16.mxu0 0
  %374 = vmatpush1.bf16.msra.mxu0 0
  %375 = vmatprep.subr.bf16.mxu0 0
  %376 = vmatpush1.bf16.msra.mxu0 0
  %377 = vmatprep.subr.bf16.mxu0 0
  %378 = vmatpush1.bf16.msra.mxu0 0
  %379 = vmatprep.subr.bf16.mxu0 0
  %380 = vmatpush1.bf16.msra.mxu0 0
  %381 = vmatprep.subr.bf16.mxu0 0
  %382 = vmatpush1.bf16.msra.mxu0 0
  %383 = vmatprep.subr.bf16.mxu0 0
  %384 = vmatpush1.bf16.msra.mxu0 0
  %385 = vmatprep.subr.bf16.mxu0 0
  %386 = vmatpush1.bf16.msra.mxu0 0
  %387 = vmatprep.subr.bf16.mxu0 0
  %388 = vmatpush1.bf16.msra.mxu0 0
  %389 = vmatprep.subr.bf16.mxu0 0
  %390 = vmatpush1.bf16.msra.mxu0 0
  %391 = vmatprep.subr.bf16.mxu0 0
  %392 = vmatpush1.bf16.msra.mxu0 0
  %393 = vmatprep.subr.bf16.mxu0 0
  %394 = vmatpush1.bf16.msra.mxu0 0
  %395 = vmatprep.subr.bf16.mxu0 0
  %396 = vmatpush1.bf16.msra.mxu0 0
  %397 = vmatprep.subr.bf16.mxu0 0
  %398 = vmatpush1.bf16.msra.mxu0 0
  %399 = vmatprep.subr.bf16.mxu0 0
  %400 = vmatpush1.bf16.msra.mxu0 0
  %401 = vmatprep.subr.bf16.mxu0 0
  %402 = vmatpush1.bf16.msra.mxu0 0
  %403 = vmatprep.mubr.bf16.mxu0 0
  %404 = vmatmul.mubr.bf16.gmra.mrb[0].mxu0 %v276
  %v405 = vpop.f32.mrb[0].mxu0
  %v406 = vadd.f32 %v266, %v405
  %v407 = vpop.f32.mrb[0].mxu0
  %v408 = vpop.f32.mrb[0].mxu0
  %v409 = vadd.f32 %v266, %v408
  %v410 = vpop.f32.mrb[0].mxu0
  %411 = vmatprep.mubr.bf16.mxu0 0
  %412 = vmatmul.mubr.bf16.gmra.mrb[0].mxu0 %v279
  %v413 = vpop.f32.mrb[0].mxu0
  %v414 = vadd.f32 %v266, %v413
  %v415 = vpop.f32.mrb[0].mxu0
  %v416 = vpop.f32.mrb[0].mxu0
  %v417 = vadd.f32 %v266, %v416
  %v418 = vpop.f32.mrb[0].mxu0
  %419 = vmatprep.mubr.bf16.mxu0 0
  %420 = vmatmul.mubr.bf16.gmra.mrb[0].mxu0 %v282
  %v421 = vpop.f32.mrb[0].mxu0
  %v422 = vadd.f32 %v266, %v421
  %v423 = vpop.f32.mrb[0].mxu0
  %v424 = vpop.f32.mrb[0].mxu0
  %v425 = vadd.f32 %v266, %v424
  %v426 = vpop.f32.mrb[0].mxu0
  %427 = vmatprep.mubr.bf16.mxu0 0
  %428 = vmatmul.mubr.bf16.gmra.mrb[0].mxu0 %v285
  %v429 = vpop.f32.mrb[0].mxu0
  %v430 = vadd.f32 %v266, %v429
  %v431 = vpop.f32.mrb[0].mxu0
  %v432 = vpop.f32.mrb[0].mxu0
  %v433 = vadd.f32 %v266, %v432
  %v434 = vpop.f32.mrb[0].mxu0
  %435 = vmatprep.mubr.bf16.mxu0 0
  %436 = vmatmul.mubr.bf16.gmra.mrb[0].mxu0 %v288
  %v437 = vpop.f32.mrb[0].mxu0
  %v438 = vadd.f32 %v266, %v437
  %v439 = vpop.f32.mrb[0].mxu0
  %v440 = vpop.f32.mrb[0].mxu0
  %v441 = vadd.f32 %v266, %v440
  %v442 = vpop.f32.mrb[0].mxu0
  %443 = vmatprep.mubr.bf16.mxu0 0
  %444 = vmatmul.mubr.bf16.gmra.mrb[0].mxu0 %v291
  %v445 = vpop.f32.mrb[0].mxu0
  %v446 = vadd.f32 %v266, %v445
  %v447 = vpop.f32.mrb[0].mxu0
  %v448 = vpop.f32.mrb[0].mxu0
  %v449 = vadd.f32 %v266, %v448
  %v450 = vpop.f32.mrb[0].mxu0
  %451 = vmatprep.mubr.bf16.mxu0 0
  %452 = vmatmul.mubr.bf16.gmra.mrb[0].mxu0 %v294
  %v453 = vpop.f32.mrb[0].mxu0
  %v454 = vadd.f32 %v266, %v453
  %v455 = vpop.f32.mrb[0].mxu0
  %v456 = vpop.f32.mrb[0].mxu0
  %v457 = vadd.f32 %v266, %v456
  %v458 = vpop.f32.mrb[0].mxu0
  %459 = vmatprep.mubr.bf16.mxu0 0
  %460 = vmatmul.mubr.bf16.gmra.mrb[0].mxu0 %v297
  %v461 = vpop.f32.mrb[0].mxu0
  %v462 = vadd.f32 %v266, %v461
  %v463 = vpop.f32.mrb[0].mxu0
  %v464 = vpop.f32.mrb[0].mxu0
  %v465 = vadd.f32 %v266, %v464
  %v466 = vpop.f32.mrb[0].mxu0
  %467 = vmatprep.mubr.bf16.mxu0 0
  %468 = vmatmul.mubr.bf16.gmra.mrb[0].mxu0 %v300
  %v469 = vpop.f32.mrb[0].mxu0
  %v470 = vadd.f32 %v266, %v469
  %v471 = vpop.f32.mrb[0].mxu0
  %v472 = vpop.f32.mrb[0].mxu0
  %v473 = vadd.f32 %v266, %v472
  %v474 = vpop.f32.mrb[0].mxu0
  %475 = vmatprep.mubr.bf16.mxu0 0
  %476 = vmatmul.mubr.bf16.gmra.mrb[0].mxu0 %v303
  %v477 = vpop.f32.mrb[0].mxu0
  %v478 = vadd.f32 %v266, %v477
  %v479 = vpop.f32.mrb[0].mxu0
  %v480 = vpop.f32.mrb[0].mxu0
  %v481 = vadd.f32 %v266, %v480
  %v482 = vpop.f32.mrb[0].mxu0
  %483 = vmatprep.mubr.bf16.mxu0 0
  %484 = vmatmul.mubr.bf16.gmra.mrb[0].mxu0 %v306
  %v485 = vpop.f32.mrb[0].mxu0
  %v486 = vadd.f32 %v266, %v485
  %v487 = vpop.f32.mrb[0].mxu0
  %v488 = vpop.f32.mrb[0].mxu0
  %v489 = vadd.f32 %v266, %v488
  %v490 = vpop.f32.mrb[0].mxu0
  %491 = vmatprep.mubr.bf16.mxu0 0
  %492 = vmatmul.mubr.bf16.gmra.mrb[0].mxu0 %v309
  %v493 = vpop.f32.mrb[0].mxu0
  %v494 = vadd.f32 %v266, %v493
  %v495 = vpop.f32.mrb[0].mxu0
  %v496 = vpop.f32.mrb[0].mxu0
  %v497 = vadd.f32 %v266, %v496
  %v498 = vpop.f32.mrb[0].mxu0
  %499 = vmatprep.mubr.bf16.mxu0 0
  %500 = vmatmul.mubr.bf16.gmra.mrb[0].mxu0 %v312
  %v501 = vpop.f32.mrb[0].mxu0
  %v502 = vadd.f32 %v266, %v501
  %v503 = vpop.f32.mrb[0].mxu0
  %v504 = vpop.f32.mrb[0].mxu0
  %v505 = vadd.f32 %v266, %v504
  %v506 = vpop.f32.mrb[0].mxu0
  %507 = vmatprep.mubr.bf16.mxu0 0
  %508 = vmatmul.mubr.bf16.gmra.mrb[0].mxu0 %v315
  %v509 = vpop.f32.mrb[0].mxu0
  %v510 = vadd.f32 %v266, %v509
  %v511 = vpop.f32.mrb[0].mxu0
  %v512 = vpop.f32.mrb[0].mxu0
  %v513 = vadd.f32 %v266, %v512
  %v514 = vpop.f32.mrb[0].mxu0
  %515 = vmatprep.mubr.bf16.mxu0 0
  %516 = vmatmul.mubr.bf16.gmra.mrb[0].mxu0 %v318
  %v517 = vpop.f32.mrb[0].mxu0
  %v518 = vadd.f32 %v266, %v517
  %v519 = vpop.f32.mrb[0].mxu0
  %v520 = vpop.f32.mrb[0].mxu0
  %v521 = vadd.f32 %v266, %v520
  %v522 = vpop.f32.mrb[0].mxu0
  %523 = vmatprep.mubr.bf16.mxu0 0
  %524 = vmatmul.mubr.bf16.gmra.mrb[0].mxu0 %v321
  %v525 = vpop.f32.mrb[0].mxu0
  %v526 = vadd.f32 %v266, %v525
  %v527 = vpop.f32.mrb[0].mxu0
  %v528 = vpop.f32.mrb[0].mxu0
  %v529 = vadd.f32 %v266, %v528
  %v530 = vpop.f32.mrb[0].mxu0
  %531 = vmatprep.mubr.bf16.mxu0 0
  %532 = vmatmul.mubr.bf16.gmra.mrb[0].mxu0 %v324
  %v533 = vpop.f32.mrb[0].mxu0
  %v534 = vadd.f32 %v266, %v533
  %v535 = vpop.f32.mrb[0].mxu0
  %v536 = vpop.f32.mrb[0].mxu0
  %v537 = vadd.f32 %v266, %v536
  %v538 = vpop.f32.mrb[0].mxu0
  %539 = vmatprep.mubr.bf16.mxu0 0
  %540 = vmatmul.mubr.bf16.gmra.mrb[0].mxu0 %v327
  %v541 = vpop.f32.mrb[0].mxu0
  %v542 = vadd.f32 %v266, %v541
  %v543 = vpop.f32.mrb[0].mxu0
  %v544 = vpop.f32.mrb[0].mxu0
  %v545 = vadd.f32 %v266, %v544
  %v546 = vpop.f32.mrb[0].mxu0
  %547 = vmatprep.mubr.bf16.mxu0 0
  %548 = vmatmul.mubr.bf16.gmra.mrb[0].mxu0 %v330
  %v549 = vpop.f32.mrb[0].mxu0
  %v550 = vadd.f32 %v266, %v549
  %v551 = vpop.f32.mrb[0].mxu0
  %v552 = vpop.f32.mrb[0].mxu0
  %v553 = vadd.f32 %v266, %v552
  %v554 = vpop.f32.mrb[0].mxu0
  %555 = vmatprep.mubr.bf16.mxu0 0
  %556 = vmatmul.mubr.bf16.gmra.mrb[0].mxu0 %v333
  %v557 = vpop.f32.mrb[0].mxu0
  %v558 = vadd.f32 %v266, %v557
  %v559 = vpop.f32.mrb[0].mxu0
  %v560 = vpop.f32.mrb[0].mxu0
  %v561 = vadd.f32 %v266, %v560
  %v562 = vpop.f32.mrb[0].mxu0
  %563 = vmatprep.mubr.bf16.mxu0 0
  %564 = vmatmul.mubr.bf16.gmra.mrb[0].mxu0 %v336
  %v565 = vpop.f32.mrb[0].mxu0
  %v566 = vadd.f32 %v266, %v565
  %v567 = vpop.f32.mrb[0].mxu0
  %v568 = vpop.f32.mrb[0].mxu0
  %v569 = vadd.f32 %v266, %v568
  %v570 = vpop.f32.mrb[0].mxu0
  %571 = vmatprep.mubr.bf16.mxu0 0
  %572 = vmatmul.mubr.bf16.gmra.mrb[0].mxu0 %v339
  %v573 = vpop.f32.mrb[0].mxu0
  %v574 = vadd.f32 %v266, %v573
  %v575 = vpop.f32.mrb[0].mxu0
  %v576 = vpop.f32.mrb[0].mxu0
  %v577 = vadd.f32 %v266, %v576
  %v578 = vpop.f32.mrb[0].mxu0
  %579 = vmatprep.mubr.bf16.mxu0 0
  %580 = vmatmul.mubr.bf16.gmra.mrb[0].mxu0 %v342
  %v581 = vpop.f32.mrb[0].mxu0
  %v582 = vadd.f32 %v266, %v581
  %v583 = vpop.f32.mrb[0].mxu0
  %v584 = vpop.f32.mrb[0].mxu0
  %v585 = vadd.f32 %v266, %v584
  %v586 = vpop.f32.mrb[0].mxu0
  %587 = vmatprep.mubr.bf16.mxu0 0
  %588 = vmatmul.mubr.bf16.gmra.mrb[0].mxu0 %v345
  %v589 = vpop.f32.mrb[0].mxu0
  %v590 = vadd.f32 %v266, %v589
  %v591 = vpop.f32.mrb[0].mxu0
  %v592 = vpop.f32.mrb[0].mxu0
  %v593 = vadd.f32 %v266, %v592
  %v594 = vpop.f32.mrb[0].mxu0
  %595 = vmatprep.mubr.bf16.mxu0 0
  %596 = vmatmul.mubr.bf16.gmra.mrb[0].mxu0 %v348
  %v597 = vpop.f32.mrb[0].mxu0
  %v598 = vadd.f32 %v266, %v597
  %v599 = vpop.f32.mrb[0].mxu0
  %v600 = vpop.f32.mrb[0].mxu0
  %v601 = vadd.f32 %v266, %v600
  %v602 = vpop.f32.mrb[0].mxu0
  %603 = vmatprep.mubr.bf16.mxu0 0
  %604 = vmatmul.mubr.bf16.gmra.mrb[0].mxu0 %v351
  %v605 = vpop.f32.mrb[0].mxu0
  %v606 = vadd.f32 %v266, %v605
  %v607 = vpop.f32.mrb[0].mxu0
  %v608 = vpop.f32.mrb[0].mxu0
  %v609 = vadd.f32 %v266, %v608
  %v610 = vpop.f32.mrb[0].mxu0
  %611 = vmatprep.mubr.bf16.mxu0 0
  %612 = vmatmul.mubr.bf16.gmra.mrb[0].mxu0 %v354
  %v613 = vpop.f32.mrb[0].mxu0
  %v614 = vadd.f32 %v266, %v613
  %v615 = vpop.f32.mrb[0].mxu0
  %v616 = vpop.f32.mrb[0].mxu0
  %v617 = vadd.f32 %v266, %v616
  %v618 = vpop.f32.mrb[0].mxu0
  %619 = vmatprep.mubr.bf16.mxu0 0
  %620 = vmatmul.mubr.bf16.gmra.mrb[0].mxu0 %v357
  %v621 = vpop.f32.mrb[0].mxu0
  %v622 = vadd.f32 %v266, %v621
  %v623 = vpop.f32.mrb[0].mxu0
  %v624 = vpop.f32.mrb[0].mxu0
  %v625 = vadd.f32 %v266, %v624
  %v626 = vpop.f32.mrb[0].mxu0
  %627 = vmatprep.mubr.bf16.mxu0 0
  %628 = vmatmul.mubr.bf16.gmra.mrb[0].mxu0 %v360
  %v629 = vpop.f32.mrb[0].mxu0
  %v630 = vadd.f32 %v266, %v629
  %v631 = vpop.f32.mrb[0].mxu0
  %v632 = vpop.f32.mrb[0].mxu0
  %v633 = vadd.f32 %v266, %v632
  %v634 = vpop.f32.mrb[0].mxu0
  %635 = vmatprep.mubr.bf16.mxu0 0
  %636 = vmatmul.mubr.bf16.gmra.mrb[0].mxu0 %v363
  %v637 = vpop.f32.mrb[0].mxu0
  %v638 = vadd.f32 %v266, %v637
  %v639 = vpop.f32.mrb[0].mxu0
  %v640 = vpop.f32.mrb[0].mxu0
  %v641 = vadd.f32 %v266, %v640
  %v642 = vpop.f32.mrb[0].mxu0
  %643 = vmatprep.mubr.bf16.mxu0 0
  %644 = vmatmul.mubr.bf16.gmra.mrb[0].mxu0 %v366
  %v645 = vpop.f32.mrb[0].mxu0
  %v646 = vadd.f32 %v266, %v645
  %v647 = vpop.f32.mrb[0].mxu0
  %v648 = vpop.f32.mrb[0].mxu0
  %v649 = vadd.f32 %v266, %v648
  %v650 = vpop.f32.mrb[0].mxu0
  %651 = vmatprep.mubr.bf16.mxu0 0
  %652 = vmatmul.mubr.bf16.gmra.mrb[0].mxu0 %v369
  %v653 = vpop.f32.mrb[0].mxu0
  %v654 = vadd.f32 %v266, %v653
  %v655 = vpop.f32.mrb[0].mxu0
  %v656 = vpop.f32.mrb[0].mxu0
  %v657 = vadd.f32 %v266, %v656
  %v658 = vpop.f32.mrb[0].mxu0
  %659 = vdwg.mxu0
  %v660 = vpack.c.bf16 %v409, %v406
  %v661 = vpack.c.bf16 %v417, %v414
  %v662 = vpack.c.bf16 %v425, %v422
  %v663 = vpack.c.bf16 %v433, %v430
  %v664 = vpack.c.bf16 %v441, %v438
  %v665 = vpack.c.bf16 %v449, %v446
  %v666 = vpack.c.bf16 %v457, %v454
  %v667 = vpack.c.bf16 %v465, %v462
  %v668 = vpack.c.bf16 %v473, %v470
  %v669 = vpack.c.bf16 %v481, %v478
  %v670 = vpack.c.bf16 %v489, %v486
  %v671 = vpack.c.bf16 %v497, %v494
  %v672 = vpack.c.bf16 %v505, %v502
  %v673 = vpack.c.bf16 %v513, %v510
  %v674 = vpack.c.bf16 %v521, %v518
  %v675 = vpack.c.bf16 %v529, %v526
  %v676 = vpack.c.bf16 %v537, %v534
  %v677 = vpack.c.bf16 %v545, %v542
  %v678 = vpack.c.bf16 %v553, %v550
  %v679 = vpack.c.bf16 %v561, %v558
  %v680 = vpack.c.bf16 %v569, %v566
  %v681 = vpack.c.bf16 %v577, %v574
  %v682 = vpack.c.bf16 %v585, %v582
  %v683 = vpack.c.bf16 %v593, %v590
  %v684 = vpack.c.bf16 %v601, %v598
  %v685 = vpack.c.bf16 %v609, %v606
  %v686 = vpack.c.bf16 %v617, %v614
  %v687 = vpack.c.bf16 %v625, %v622
  %v688 = vpack.c.bf16 %v633, %v630
  %v689 = vpack.c.bf16 %v641, %v638
  %v690 = vpack.c.bf16 %v649, %v646
  %v691 = vpack.c.bf16 %v657, %v654
  %v724 = vunpack.c.l.b16 %v660
  %v725 = vunpack.c.h.b16 %v660
  %v726 = vunpack.c.l.b16 %v661
  %v727 = vunpack.c.h.b16 %v661
  %v728 = vunpack.c.l.b16 %v662
  %v729 = vunpack.c.h.b16 %v662
  %v730 = vunpack.c.l.b16 %v663
  %v731 = vunpack.c.h.b16 %v663
  %v732 = vunpack.c.l.b16 %v664
  %v733 = vunpack.c.h.b16 %v664
  %v734 = vunpack.c.l.b16 %v665
  %v735 = vunpack.c.h.b16 %v665
  %v736 = vunpack.c.l.b16 %v666
  %v737 = vunpack.c.h.b16 %v666
  %v738 = vunpack.c.l.b16 %v667
  %v739 = vunpack.c.h.b16 %v667
  %v740 = vunpack.c.l.b16 %v668
  %v741 = vunpack.c.h.b16 %v668
  %v742 = vunpack.c.l.b16 %v669
  %v743 = vunpack.c.h.b16 %v669
  %v744 = vunpack.c.l.b16 %v670
  %v745 = vunpack.c.h.b16 %v670
  %v746 = vunpack.c.l.b16 %v671
  %v747 = vunpack.c.h.b16 %v671
  %v748 = vunpack.c.l.b16 %v672
  %v749 = vunpack.c.h.b16 %v672
  %v750 = vunpack.c.l.b16 %v673
  %v751 = vunpack.c.h.b16 %v673
  %v752 = vunpack.c.l.b16 %v674
  %v753 = vunpack.c.h.b16 %v674
  %v754 = vunpack.c.l.b16 %v675
  %v755 = vunpack.c.h.b16 %v675
  %v756 = vunpack.c.l.b16 %v676
  %v757 = vunpack.c.h.b16 %v676
  %v758 = vunpack.c.l.b16 %v677
  %v759 = vunpack.c.h.b16 %v677
  %v760 = vunpack.c.l.b16 %v678
  %v761 = vunpack.c.h.b16 %v678
  %v762 = vunpack.c.l.b16 %v679
  %v763 = vunpack.c.h.b16 %v679
  %v764 = vunpack.c.l.b16 %v680
  %v765 = vunpack.c.h.b16 %v680
  %v766 = vunpack.c.l.b16 %v681
  %v767 = vunpack.c.h.b16 %v681
  %v768 = vunpack.c.l.b16 %v682
  %v769 = vunpack.c.h.b16 %v682
  %v770 = vunpack.c.l.b16 %v683
  %v771 = vunpack.c.h.b16 %v683
  %v772 = vunpack.c.l.b16 %v684
  %v773 = vunpack.c.h.b16 %v684
  %v774 = vunpack.c.l.b16 %v685
  %v775 = vunpack.c.h.b16 %v685
  %v776 = vunpack.c.l.b16 %v686
  %v777 = vunpack.c.h.b16 %v686
  %v778 = vunpack.c.l.b16 %v687
  %v779 = vunpack.c.h.b16 %v687
  %v780 = vunpack.c.l.b16 %v688
  %v781 = vunpack.c.h.b16 %v688
  %v782 = vunpack.c.l.b16 %v689
  %v783 = vunpack.c.h.b16 %v689
  %v784 = vunpack.c.l.b16 %v690
  %v785 = vunpack.c.h.b16 %v690
  %v786 = vunpack.c.l.b16 %v691
  %v787 = vunpack.c.h.b16 %v691
  %v788 = vpack.c.b16 %v724, %v724
  %v789 = vpack.c.b16 %v725, %v725
  %v790 = vpack.c.b16 %v726, %v726
  %v791 = vpack.c.b16 %v727, %v727
  %v792 = vpack.c.b16 %v728, %v728
  %v793 = vpack.c.b16 %v729, %v729
  %v794 = vpack.c.b16 %v730, %v730
  %v795 = vpack.c.b16 %v731, %v731
  %v796 = vpack.c.b16 %v732, %v732
  %v797 = vpack.c.b16 %v733, %v733
  %v798 = vpack.c.b16 %v734, %v734
  %v799 = vpack.c.b16 %v735, %v735
  %v800 = vpack.c.b16 %v736, %v736
  %v801 = vpack.c.b16 %v737, %v737
  %v802 = vpack.c.b16 %v738, %v738
  %v803 = vpack.c.b16 %v739, %v739
  %v804 = vpack.c.b16 %v740, %v740
  %v805 = vpack.c.b16 %v741, %v741
  %v806 = vpack.c.b16 %v742, %v742
  %v807 = vpack.c.b16 %v743, %v743
  %v808 = vpack.c.b16 %v744, %v744
  %v809 = vpack.c.b16 %v745, %v745
  %v810 = vpack.c.b16 %v746, %v746
  %v811 = vpack.c.b16 %v747, %v747
  %v812 = vpack.c.b16 %v748, %v748
  %v813 = vpack.c.b16 %v749, %v749
  %v814 = vpack.c.b16 %v750, %v750
  %v815 = vpack.c.b16 %v751, %v751
  %v816 = vpack.c.b16 %v752, %v752
  %v817 = vpack.c.b16 %v753, %v753
  %v818 = vpack.c.b16 %v754, %v754
  %v819 = vpack.c.b16 %v755, %v755
  %v820 = vpack.c.b16 %v756, %v756
  %v821 = vpack.c.b16 %v757, %v757
  %v822 = vpack.c.b16 %v758, %v758
  %v823 = vpack.c.b16 %v759, %v759
  %v824 = vpack.c.b16 %v760, %v760
  %v825 = vpack.c.b16 %v761, %v761
  %v826 = vpack.c.b16 %v762, %v762
  %v827 = vpack.c.b16 %v763, %v763
  %v828 = vpack.c.b16 %v764, %v764
  %v829 = vpack.c.b16 %v765, %v765
  %v830 = vpack.c.b16 %v766, %v766
  %v831 = vpack.c.b16 %v767, %v767
  %v832 = vpack.c.b16 %v768, %v768
  %v833 = vpack.c.b16 %v769, %v769
  %v834 = vpack.c.b16 %v770, %v770
  %v835 = vpack.c.b16 %v771, %v771
  %v836 = vpack.c.b16 %v772, %v772
  %v837 = vpack.c.b16 %v773, %v773
  %v838 = vpack.c.b16 %v774, %v774
  %v839 = vpack.c.b16 %v775, %v775
  %v840 = vpack.c.b16 %v776, %v776
  %v841 = vpack.c.b16 %v777, %v777
  %v842 = vpack.c.b16 %v778, %v778
  %v843 = vpack.c.b16 %v779, %v779
  %v844 = vpack.c.b16 %v780, %v780
  %v845 = vpack.c.b16 %v781, %v781
  %v846 = vpack.c.b16 %v782, %v782
  %v847 = vpack.c.b16 %v783, %v783
  %v848 = vpack.c.b16 %v784, %v784
  %v849 = vpack.c.b16 %v785, %v785
  %v850 = vpack.c.b16 %v786, %v786
  %v851 = vpack.c.b16 %v787, %v787
  %vm916 = vcmask 388096
  %917 = vst.msk [vmem:[%s5] sm:$0xf] %vm916, %v788
  %918 = vst.msk [vmem:[%s5 + $0x4] sm:$0xf] %vm916, %v789
  %919 = vst.msk [vmem:[%s5 + $0x8] sm:$0xf] %vm916, %v790
  %920 = vst.msk [vmem:[%s5 + $0xc] sm:$0xf] %vm916, %v791
  %921 = vst.msk [vmem:[%s5 + $0x10] sm:$0xf] %vm916, %v792
  %922 = vst.msk [vmem:[%s5 + $0x14] sm:$0xf] %vm916, %v793
  %923 = vst.msk [vmem:[%s5 + $0x18] sm:$0xf] %vm916, %v794
  %924 = vst.msk [vmem:[%s5 + $0x1c] sm:$0xf] %vm916, %v795
  %925 = vst.msk [vmem:[%s5 + $0x20] sm:$0xf] %vm916, %v796
  %926 = vst.msk [vmem:[%s5 + $0x24] sm:$0xf] %vm916, %v797
  %927 = vst.msk [vmem:[%s5 + $0x28] sm:$0xf] %vm916, %v798
  %928 = vst.msk [vmem:[%s5 + $0x2c] sm:$0xf] %vm916, %v799
  %929 = vst.msk [vmem:[%s5 + $0x30] sm:$0xf] %vm916, %v800
  %930 = vst.msk [vmem:[%s5 + $0x34] sm:$0xf] %vm916, %v801
  %931 = vst.msk [vmem:[%s5 + $0x38] sm:$0xf] %vm916, %v802
  %932 = vst.msk [vmem:[%s5 + $0x3c] sm:$0xf] %vm916, %v803
  %933 = vst.msk [vmem:[%s5 + $0x40] sm:$0xf] %vm916, %v804
  %934 = vst.msk [vmem:[%s5 + $0x44] sm:$0xf] %vm916, %v805
  %935 = vst.msk [vmem:[%s5 + $0x48] sm:$0xf] %vm916, %v806
  %936 = vst.msk [vmem:[%s5 + $0x4c] sm:$0xf] %vm916, %v807
  %937 = vst.msk [vmem:[%s5 + $0x50] sm:$0xf] %vm916, %v808
  %938 = vst.msk [vmem:[%s5 + $0x54] sm:$0xf] %vm916, %v809
  %939 = vst.msk [vmem:[%s5 + $0x58] sm:$0xf] %vm916, %v810
  %940 = vst.msk [vmem:[%s5 + $0x5c] sm:$0xf] %vm916, %v811
  %941 = vst.msk [vmem:[%s5 + $0x60] sm:$0xf] %vm916, %v812
  %942 = vst.msk [vmem:[%s5 + $0x64] sm:$0xf] %vm916, %v813
  %943 = vst.msk [vmem:[%s5 + $0x68] sm:$0xf] %vm916, %v814
  %944 = vst.msk [vmem:[%s5 + $0x6c] sm:$0xf] %vm916, %v815
  %945 = vst.msk [vmem:[%s5 + $0x70] sm:$0xf] %vm916, %v816
  %946 = vst.msk [vmem:[%s5 + $0x74] sm:$0xf] %vm916, %v817
  %947 = vst.msk [vmem:[%s5 + $0x78] sm:$0xf] %vm916, %v818
  %948 = vst.msk [vmem:[%s5 + $0x7c] sm:$0xf] %vm916, %v819
  %949 = vst.msk [vmem:[%s5 + $0x80] sm:$0xf] %vm916, %v820
  %950 = vst.msk [vmem:[%s5 + $0x84] sm:$0xf] %vm916, %v821
  %951 = vst.msk [vmem:[%s5 + $0x88] sm:$0xf] %vm916, %v822
  %952 = vst.msk [vmem:[%s5 + $0x8c] sm:$0xf] %vm916, %v823
  %953 = vst.msk [vmem:[%s5 + $0x90] sm:$0xf] %vm916, %v824
  %954 = vst.msk [vmem:[%s5 + $0x94] sm:$0xf] %vm916, %v825
  %955 = vst.msk [vmem:[%s5 + $0x98] sm:$0xf] %vm916, %v826
  %956 = vst.msk [vmem:[%s5 + $0x9c] sm:$0xf] %vm916, %v827
  %957 = vst.msk [vmem:[%s5 + $0xa0] sm:$0xf] %vm916, %v828
  %958 = vst.msk [vmem:[%s5 + $0xa4] sm:$0xf] %vm916, %v829
  %959 = vst.msk [vmem:[%s5 + $0xa8] sm:$0xf] %vm916, %v830
  %960 = vst.msk [vmem:[%s5 + $0xac] sm:$0xf] %vm916, %v831
  %961 = vst.msk [vmem:[%s5 + $0xb0] sm:$0xf] %vm916, %v832
  %962 = vst.msk [vmem:[%s5 + $0xb4] sm:$0xf] %vm916, %v833
  %963 = vst.msk [vmem:[%s5 + $0xb8] sm:$0xf] %vm916, %v834
  %964 = vst.msk [vmem:[%s5 + $0xbc] sm:$0xf] %vm916, %v835
  %965 = vst.msk [vmem:[%s5 + $0xc0] sm:$0xf] %vm916, %v836
  %966 = vst.msk [vmem:[%s5 + $0xc4] sm:$0xf] %vm916, %v837
  %967 = vst.msk [vmem:[%s5 + $0xc8] sm:$0xf] %vm916, %v838
  %968 = vst.msk [vmem:[%s5 + $0xcc] sm:$0xf] %vm916, %v839
  %969 = vst.msk [vmem:[%s5 + $0xd0] sm:$0xf] %vm916, %v840
  %970 = vst.msk [vmem:[%s5 + $0xd4] sm:$0xf] %vm916, %v841
  %971 = vst.msk [vmem:[%s5 + $0xd8] sm:$0xf] %vm916, %v842
  %972 = vst.msk [vmem:[%s5 + $0xdc] sm:$0xf] %vm916, %v843
  %973 = vst.msk [vmem:[%s5 + $0xe0] sm:$0xf] %vm916, %v844
  %974 = vst.msk [vmem:[%s5 + $0xe4] sm:$0xf] %vm916, %v845
  %975 = vst.msk [vmem:[%s5 + $0xe8] sm:$0xf] %vm916, %v846
  %976 = vst.msk [vmem:[%s5 + $0xec] sm:$0xf] %vm916, %v847
  %977 = vst.msk [vmem:[%s5 + $0xf0] sm:$0xf] %vm916, %v848
  %978 = vst.msk [vmem:[%s5 + $0xf4] sm:$0xf] %vm916, %v849
  %979 = vst.msk [vmem:[%s5 + $0xf8] sm:$0xf] %vm916, %v850
  %980 = vst.msk [vmem:[%s5 + $0xfc] sm:$0xf] %vm916, %v851
  // Predicated region
  $region22: #{unet_skip_block_forward.9} parent=0 // pred_check
    _
  $region23: #{unet_skip_block_forward.9} parent=0 // pred_check_branch
    %982 = sbr.rel (0) target = $region25
  $region24: #{unet_skip_block_forward.9} parent=0 // pred_region
    _
  $region25: #{unet_skip_block_forward.9} parent=0 // pred_fallthru
    _
  // Predicated region
  $region26: #{unet_skip_block_forward.9} parent=0 // pred_check
    _
  $region27: #{unet_skip_block_forward.9} parent=0 // pred_check_branch
    %984 = sbr.rel (0) target = $region29
  $region28: #{unet_skip_block_forward.9} parent=0 // pred_region
    _
  $region29: #{unet_skip_block_forward.9} parent=0 // pred_fallthru
    _

// kernel: unet_skip_block_forward.11
$region0: #{unet_skip_block_forward.11}
  #allocation0 [shape = 'u32[]', space=smem, size = 0x4, offset = 0x4, fixed_abs, tag = 'smem constant byte address 0x4 - core index']
  #allocation1 [shape = 'u32[144,128]{1,0:T(1,128)}', space=vmem, size = 0x12000, scoped, tag = 'internal scratch']
  %s0 = inlined_call_operand.vmem [shape: bf16[512,16], index: 0, kind: input, shape index: {}]
  %s1 = inlined_call_operand.vmem [shape: bf16[16,16], index: 1, kind: input, shape index: {}]
  %s2 = inlined_call_operand.vmem [shape: f32[1,16], index: 2, kind: input, shape index: {}]
  %s3 = inlined_call_operand.vmem [shape: f32[512,16], index: 3, kind: input, shape index: {}]
  %s4 = inlined_call_operand.vmem [shape: f32[1,16], index: 4, kind: input, shape index: {}]
  %s5 = inlined_call_operand.vmem [shape: f32[1,16], index: 5, kind: input, shape index: {}]
  %s6 = inlined_call_operand.vmem [shape: f32[512,16], index: 6, kind: output, shape index: {}]
  %s7 = sld [smem:[#allocation0]]
  $region34: #{unet_skip_block_forward.11} parent=0
    _
  %s9 = ssub.s32 1, %s7
  %s10 = scalar_select 0, %s9, %s7
  // Predicated region
  $region2: #{unet_skip_block_forward.11} parent=0 // pred_check
    _
  $region3: #{unet_skip_block_forward.11} parent=0 // pred_check_branch
    %12 = sbr.rel (0) target = $region5
  $region4: #{unet_skip_block_forward.11} parent=0 // pred_region
    _
  $region5: #{unet_skip_block_forward.11} parent=0 // pred_fallthru
    _
  // Predicated region
  $region6: #{unet_skip_block_forward.11} parent=0 // pred_check
    _
  $region7: #{unet_skip_block_forward.11} parent=0 // pred_check_branch
    %14 = sbr.rel (0) target = $region9
  $region8: #{unet_skip_block_forward.11} parent=0 // pred_region
    _
  $region9: #{unet_skip_block_forward.11} parent=0 // pred_fallthru
    _
  // Predicated region
  $region10: #{unet_skip_block_forward.11} parent=0 // pred_check
    _
  $region11: #{unet_skip_block_forward.11} parent=0 // pred_check_branch
    %16 = sbr.rel (0) target = $region13
  $region12: #{unet_skip_block_forward.11} parent=0 // pred_region
    _
  $region13: #{unet_skip_block_forward.11} parent=0 // pred_fallthru
    _
  // Predicated region
  $region14: #{unet_skip_block_forward.11} parent=0 // pred_check
    _
  $region15: #{unet_skip_block_forward.11} parent=0 // pred_check_branch
    %18 = sbr.rel (0) target = $region17
  $region16: #{unet_skip_block_forward.11} parent=0 // pred_region
    _
  $region17: #{unet_skip_block_forward.11} parent=0 // pred_fallthru
    _
  // Predicated region
  $region18: #{unet_skip_block_forward.11} parent=0 // pred_check
    _
  $region19: #{unet_skip_block_forward.11} parent=0 // pred_check_branch
    %20 = sbr.rel (0) target = $region21
  $region20: #{unet_skip_block_forward.11} parent=0 // pred_region
    _
  $region21: #{unet_skip_block_forward.11} parent=0 // pred_fallthru
    _
  // Predicated region
  $region22: #{unet_skip_block_forward.11} parent=0 // pred_check
    _
  $region23: #{unet_skip_block_forward.11} parent=0 // pred_check_branch
    %22 = sbr.rel (0) target = $region25
  $region24: #{unet_skip_block_forward.11} parent=0 // pred_region
    _
  $region25: #{unet_skip_block_forward.11} parent=0 // pred_fallthru
    _
  %v24 = vld [vmem:[%s0] sm:$0xf]
  %v25 = vld [vmem:[%s0 + $0x4] sm:$0xf]
  %v26 = vld [vmem:[%s0 + $0x8] sm:$0xf]
  %v27 = vld [vmem:[%s0 + $0xc] sm:$0xf]
  %v28 = vld [vmem:[%s0 + $0x10] sm:$0xf]
  %v29 = vld [vmem:[%s0 + $0x14] sm:$0xf]
  %v30 = vld [vmem:[%s0 + $0x18] sm:$0xf]
  %v31 = vld [vmem:[%s0 + $0x1c] sm:$0xf]
  %v32 = vld [vmem:[%s0 + $0x20] sm:$0xf]
  %v33 = vld [vmem:[%s0 + $0x24] sm:$0xf]
  %v34 = vld [vmem:[%s0 + $0x28] sm:$0xf]
  %v35 = vld [vmem:[%s0 + $0x2c] sm:$0xf]
  %v36 = vld [vmem:[%s0 + $0x30] sm:$0xf]
  %v37 = vld [vmem:[%s0 + $0x34] sm:$0xf]
  %v38 = vld [vmem:[%s0 + $0x38] sm:$0xf]
  %v39 = vld [vmem:[%s0 + $0x3c] sm:$0xf]
  %v40 = vld [vmem:[%s0 + $0x40] sm:$0xf]
  %v41 = vld [vmem:[%s0 + $0x44] sm:$0xf]
  %v42 = vld [vmem:[%s0 + $0x48] sm:$0xf]
  %v43 = vld [vmem:[%s0 + $0x4c] sm:$0xf]
  %v44 = vld [vmem:[%s0 + $0x50] sm:$0xf]
  %v45 = vld [vmem:[%s0 + $0x54] sm:$0xf]
  %v46 = vld [vmem:[%s0 + $0x58] sm:$0xf]
  %v47 = vld [vmem:[%s0 + $0x5c] sm:$0xf]
  %v48 = vld [vmem:[%s0 + $0x60] sm:$0xf]
  %v49 = vld [vmem:[%s0 + $0x64] sm:$0xf]
  %v50 = vld [vmem:[%s0 + $0x68] sm:$0xf]
  %v51 = vld [vmem:[%s0 + $0x6c] sm:$0xf]
  %v52 = vld [vmem:[%s0 + $0x70] sm:$0xf]
  %v53 = vld [vmem:[%s0 + $0x74] sm:$0xf]
  %v54 = vld [vmem:[%s0 + $0x78] sm:$0xf]
  %v55 = vld [vmem:[%s0 + $0x7c] sm:$0xf]
  %v56 = vld [vmem:[%s0 + $0x80] sm:$0xf]
  %v57 = vld [vmem:[%s0 + $0x84] sm:$0xf]
  %v58 = vld [vmem:[%s0 + $0x88] sm:$0xf]
  %v59 = vld [vmem:[%s0 + $0x8c] sm:$0xf]
  %v60 = vld [vmem:[%s0 + $0x90] sm:$0xf]
  %v61 = vld [vmem:[%s0 + $0x94] sm:$0xf]
  %v62 = vld [vmem:[%s0 + $0x98] sm:$0xf]
  %v63 = vld [vmem:[%s0 + $0x9c] sm:$0xf]
  %v64 = vld [vmem:[%s0 + $0xa0] sm:$0xf]
  %v65 = vld [vmem:[%s0 + $0xa4] sm:$0xf]
  %v66 = vld [vmem:[%s0 + $0xa8] sm:$0xf]
  %v67 = vld [vmem:[%s0 + $0xac] sm:$0xf]
  %v68 = vld [vmem:[%s0 + $0xb0] sm:$0xf]
  %v69 = vld [vmem:[%s0 + $0xb4] sm:$0xf]
  %v70 = vld [vmem:[%s0 + $0xb8] sm:$0xf]
  %v71 = vld [vmem:[%s0 + $0xbc] sm:$0xf]
  %v72 = vld [vmem:[%s0 + $0xc0] sm:$0xf]
  %v73 = vld [vmem:[%s0 + $0xc4] sm:$0xf]
  %v74 = vld [vmem:[%s0 + $0xc8] sm:$0xf]
  %v75 = vld [vmem:[%s0 + $0xcc] sm:$0xf]
  %v76 = vld [vmem:[%s0 + $0xd0] sm:$0xf]
  %v77 = vld [vmem:[%s0 + $0xd4] sm:$0xf]
  %v78 = vld [vmem:[%s0 + $0xd8] sm:$0xf]
  %v79 = vld [vmem:[%s0 + $0xdc] sm:$0xf]
  %v80 = vld [vmem:[%s0 + $0xe0] sm:$0xf]
  %v81 = vld [vmem:[%s0 + $0xe4] sm:$0xf]
  %v82 = vld [vmem:[%s0 + $0xe8] sm:$0xf]
  %v83 = vld [vmem:[%s0 + $0xec] sm:$0xf]
  %v84 = vld [vmem:[%s0 + $0xf0] sm:$0xf]
  %v85 = vld [vmem:[%s0 + $0xf4] sm:$0xf]
  %v86 = vld [vmem:[%s0 + $0xf8] sm:$0xf]
  %v87 = vld [vmem:[%s0 + $0xfc] sm:$0xf]
  %v88 = vld [vmem:[%s1] sm:$0xf]
  %v89 = vld [vmem:[%s1 + $0x4] sm:$0xf]
  %v90 = vld [vmem:[%s2] sm:$0x1]
  %v92 = vlaneseq
  %v93 = vshrl.u32 %v92, 7
  %v94 = vsub.s32 0, %v93
  %v95 = vrot.slane %v90, %v94
  %v161 = vunpack.c.l.b16 %v24
  %v162 = vunpack.c.l.b16 %v25
  %v163 = vunpack.c.l.b16 %v26
  %v164 = vunpack.c.l.b16 %v27
  %v165 = vunpack.c.l.b16 %v28
  %v166 = vunpack.c.l.b16 %v29
  %v167 = vunpack.c.l.b16 %v30
  %v168 = vunpack.c.l.b16 %v31
  %v169 = vunpack.c.l.b16 %v32
  %v170 = vunpack.c.l.b16 %v33
  %v171 = vunpack.c.l.b16 %v34
  %v172 = vunpack.c.l.b16 %v35
  %v173 = vunpack.c.l.b16 %v36
  %v174 = vunpack.c.l.b16 %v37
  %v175 = vunpack.c.l.b16 %v38
  %v176 = vunpack.c.l.b16 %v39
  %v177 = vunpack.c.l.b16 %v40
  %v178 = vunpack.c.l.b16 %v41
  %v179 = vunpack.c.l.b16 %v42
  %v180 = vunpack.c.l.b16 %v43
  %v181 = vunpack.c.l.b16 %v44
  %v182 = vunpack.c.l.b16 %v45
  %v183 = vunpack.c.l.b16 %v46
  %v184 = vunpack.c.l.b16 %v47
  %v185 = vunpack.c.l.b16 %v48
  %v186 = vunpack.c.l.b16 %v49
  %v187 = vunpack.c.l.b16 %v50
  %v188 = vunpack.c.l.b16 %v51
  %v189 = vunpack.c.l.b16 %v52
  %v190 = vunpack.c.l.b16 %v53
  %v191 = vunpack.c.l.b16 %v54
  %v192 = vunpack.c.l.b16 %v55
  %v193 = vunpack.c.l.b16 %v56
  %v194 = vunpack.c.l.b16 %v57
  %v195 = vunpack.c.l.b16 %v58
  %v196 = vunpack.c.l.b16 %v59
  %v197 = vunpack.c.l.b16 %v60
  %v198 = vunpack.c.l.b16 %v61
  %v199 = vunpack.c.l.b16 %v62
  %v200 = vunpack.c.l.b16 %v63
  %v201 = vunpack.c.l.b16 %v64
  %v202 = vunpack.c.l.b16 %v65
  %v203 = vunpack.c.l.b16 %v66
  %v204 = vunpack.c.l.b16 %v67
  %v205 = vunpack.c.l.b16 %v68
  %v206 = vunpack.c.l.b16 %v69
  %v207 = vunpack.c.l.b16 %v70
  %v208 = vunpack.c.l.b16 %v71
  %v209 = vunpack.c.l.b16 %v72
  %v210 = vunpack.c.l.b16 %v73
  %v211 = vunpack.c.l.b16 %v74
  %v212 = vunpack.c.l.b16 %v75
  %v213 = vunpack.c.l.b16 %v76
  %v214 = vunpack.c.l.b16 %v77
  %v215 = vunpack.c.l.b16 %v78
  %v216 = vunpack.c.l.b16 %v79
  %v217 = vunpack.c.l.b16 %v80
  %v218 = vunpack.c.l.b16 %v81
  %v219 = vunpack.c.l.b16 %v82
  %v220 = vunpack.c.l.b16 %v83
  %v221 = vunpack.c.l.b16 %v84
  %v222 = vunpack.c.l.b16 %v85
  %v223 = vunpack.c.l.b16 %v86
  %v224 = vunpack.c.l.b16 %v87
  %v225 = vpack.c.b16 %v162, %v161
  %v226 = vpack.c.b16 %v164, %v163
  %v227 = vpack.c.b16 %v166, %v165
  %v228 = vpack.c.b16 %v168, %v167
  %v229 = vpack.c.b16 %v170, %v169
  %v230 = vpack.c.b16 %v172, %v171
  %v231 = vpack.c.b16 %v174, %v173
  %v232 = vpack.c.b16 %v176, %v175
  %v233 = vpack.c.b16 %v178, %v177
  %v234 = vpack.c.b16 %v180, %v179
  %v235 = vpack.c.b16 %v182, %v181
  %v236 = vpack.c.b16 %v184, %v183
  %v237 = vpack.c.b16 %v186, %v185
  %v238 = vpack.c.b16 %v188, %v187
  %v239 = vpack.c.b16 %v190, %v189
  %v240 = vpack.c.b16 %v192, %v191
  %v241 = vpack.c.b16 %v194, %v193
  %v242 = vpack.c.b16 %v196, %v195
  %v243 = vpack.c.b16 %v198, %v197
  %v244 = vpack.c.b16 %v200, %v199
  %v245 = vpack.c.b16 %v202, %v201
  %v246 = vpack.c.b16 %v204, %v203
  %v247 = vpack.c.b16 %v206, %v205
  %v248 = vpack.c.b16 %v208, %v207
  %v249 = vpack.c.b16 %v210, %v209
  %v250 = vpack.c.b16 %v212, %v211
  %v251 = vpack.c.b16 %v214, %v213
  %v252 = vpack.c.b16 %v216, %v215
  %v253 = vpack.c.b16 %v218, %v217
  %v254 = vpack.c.b16 %v220, %v219
  %v255 = vpack.c.b16 %v222, %v221
  %v256 = vpack.c.b16 %v224, %v223
  %v259 = vunpack.c.l.b16 %v88
  %v260 = vunpack.c.l.b16 %v89
  %v261 = vpack.c.b16 %v260, %v259
  %vm263 = vcmask 130048
  %v265 = vsel %vm263, %v225, 0
  %v268 = vsel %vm263, %v226, 0
  %v271 = vsel %vm263, %v227, 0
  %v274 = vsel %vm263, %v228, 0
  %v277 = vsel %vm263, %v229, 0
  %v280 = vsel %vm263, %v230, 0
  %v283 = vsel %vm263, %v231, 0
  %v286 = vsel %vm263, %v232, 0
  %v289 = vsel %vm263, %v233, 0
  %v292 = vsel %vm263, %v234, 0
  %v295 = vsel %vm263, %v235, 0
  %v298 = vsel %vm263, %v236, 0
  %v301 = vsel %vm263, %v237, 0
  %v304 = vsel %vm263, %v238, 0
  %v307 = vsel %vm263, %v239, 0
  %v310 = vsel %vm263, %v240, 0
  %v313 = vsel %vm263, %v241, 0
  %v316 = vsel %vm263, %v242, 0
  %v319 = vsel %vm263, %v243, 0
  %v322 = vsel %vm263, %v244, 0
  %v325 = vsel %vm263, %v245, 0
  %v328 = vsel %vm263, %v246, 0
  %v331 = vsel %vm263, %v247, 0
  %v334 = vsel %vm263, %v248, 0
  %v337 = vsel %vm263, %v249, 0
  %v340 = vsel %vm263, %v250, 0
  %v343 = vsel %vm263, %v251, 0
  %v346 = vsel %vm263, %v252, 0
  %v349 = vsel %vm263, %v253, 0
  %v352 = vsel %vm263, %v254, 0
  %v355 = vsel %vm263, %v255, 0
  %v358 = vsel %vm263, %v256, 0
  %360 = vmatprep.subr.bf16.mxu0 0
  %361 = vmatpush1.bf16.msra.mxu0 %v261
  %362 = vmatprep.subr.bf16.mxu0 0
  %363 = vmatpush1.bf16.msra.mxu0 0
  %364 = vmatprep.subr.bf16.mxu0 0
  %365 = vmatpush1.bf16.msra.mxu0 0
  %366 = vmatprep.subr.bf16.mxu0 0
  %367 = vmatpush1.bf16.msra.mxu0 0
  %368 = vmatprep.subr.bf16.mxu0 0
  %369 = vmatpush1.bf16.msra.mxu0 0
  %370 = vmatprep.subr.bf16.mxu0 0
  %371 = vmatpush1.bf16.msra.mxu0 0
  %372 = vmatprep.subr.bf16.mxu0 0
  %373 = vmatpush1.bf16.msra.mxu0 0
  %374 = vmatprep.subr.bf16.mxu0 0
  %375 = vmatpush1.bf16.msra.mxu0 0
  %376 = vmatprep.subr.bf16.mxu0 0
  %377 = vmatpush1.bf16.msra.mxu0 0
  %378 = vmatprep.subr.bf16.mxu0 0
  %379 = vmatpush1.bf16.msra.mxu0 0
  %380 = vmatprep.subr.bf16.mxu0 0
  %381 = vmatpush1.bf16.msra.mxu0 0
  %382 = vmatprep.subr.bf16.mxu0 0
  %383 = vmatpush1.bf16.msra.mxu0 0
  %384 = vmatprep.subr.bf16.mxu0 0
  %385 = vmatpush1.bf16.msra.mxu0 0
  %386 = vmatprep.subr.bf16.mxu0 0
  %387 = vmatpush1.bf16.msra.mxu0 0
  %388 = vmatprep.subr.bf16.mxu0 0
  %389 = vmatpush1.bf16.msra.mxu0 0
  %390 = vmatprep.subr.bf16.mxu0 0
  %391 = vmatpush1.bf16.msra.mxu0 0
  %392 = vmatprep.mubr.bf16.mxu0 0
  %393 = vmatmul.mubr.bf16.gmra.mrb[0].mxu0 %v265
  %v394 = vpop.f32.mrb[0].mxu0
  %v395 = vadd.f32 %v95, %v394
  %v396 = vpop.f32.mrb[0].mxu0
  %v397 = vpop.f32.mrb[0].mxu0
  %v398 = vadd.f32 %v95, %v397
  %v399 = vpop.f32.mrb[0].mxu0
  %400 = vmatprep.mubr.bf16.mxu0 0
  %401 = vmatmul.mubr.bf16.gmra.mrb[0].mxu0 %v268
  %v402 = vpop.f32.mrb[0].mxu0
  %v403 = vadd.f32 %v95, %v402
  %v404 = vpop.f32.mrb[0].mxu0
  %v405 = vpop.f32.mrb[0].mxu0
  %v406 = vadd.f32 %v95, %v405
  %v407 = vpop.f32.mrb[0].mxu0
  %408 = vmatprep.mubr.bf16.mxu0 0
  %409 = vmatmul.mubr.bf16.gmra.mrb[0].mxu0 %v271
  %v410 = vpop.f32.mrb[0].mxu0
  %v411 = vadd.f32 %v95, %v410
  %v412 = vpop.f32.mrb[0].mxu0
  %v413 = vpop.f32.mrb[0].mxu0
  %v414 = vadd.f32 %v95, %v413
  %v415 = vpop.f32.mrb[0].mxu0
  %416 = vmatprep.mubr.bf16.mxu0 0
  %417 = vmatmul.mubr.bf16.gmra.mrb[0].mxu0 %v274
  %v418 = vpop.f32.mrb[0].mxu0
  %v419 = vadd.f32 %v95, %v418
  %v420 = vpop.f32.mrb[0].mxu0
  %v421 = vpop.f32.mrb[0].mxu0
  %v422 = vadd.f32 %v95, %v421
  %v423 = vpop.f32.mrb[0].mxu0
  %424 = vmatprep.mubr.bf16.mxu0 0
  %425 = vmatmul.mubr.bf16.gmra.mrb[0].mxu0 %v277
  %v426 = vpop.f32.mrb[0].mxu0
  %v427 = vadd.f32 %v95, %v426
  %v428 = vpop.f32.mrb[0].mxu0
  %v429 = vpop.f32.mrb[0].mxu0
  %v430 = vadd.f32 %v95, %v429
  %v431 = vpop.f32.mrb[0].mxu0
  %432 = vmatprep.mubr.bf16.mxu0 0
  %433 = vmatmul.mubr.bf16.gmra.mrb[0].mxu0 %v280
  %v434 = vpop.f32.mrb[0].mxu0
  %v435 = vadd.f32 %v95, %v434
  %v436 = vpop.f32.mrb[0].mxu0
  %v437 = vpop.f32.mrb[0].mxu0
  %v438 = vadd.f32 %v95, %v437
  %v439 = vpop.f32.mrb[0].mxu0
  %440 = vmatprep.mubr.bf16.mxu0 0
  %441 = vmatmul.mubr.bf16.gmra.mrb[0].mxu0 %v283
  %v442 = vpop.f32.mrb[0].mxu0
  %v443 = vadd.f32 %v95, %v442
  %v444 = vpop.f32.mrb[0].mxu0
  %v445 = vpop.f32.mrb[0].mxu0
  %v446 = vadd.f32 %v95, %v445
  %v447 = vpop.f32.mrb[0].mxu0
  %448 = vmatprep.mubr.bf16.mxu0 0
  %449 = vmatmul.mubr.bf16.gmra.mrb[0].mxu0 %v286
  %v450 = vpop.f32.mrb[0].mxu0
  %v451 = vadd.f32 %v95, %v450
  %v452 = vpop.f32.mrb[0].mxu0
  %v453 = vpop.f32.mrb[0].mxu0
  %v454 = vadd.f32 %v95, %v453
  %v455 = vpop.f32.mrb[0].mxu0
  %456 = vmatprep.mubr.bf16.mxu0 0
  %457 = vmatmul.mubr.bf16.gmra.mrb[0].mxu0 %v289
  %v458 = vpop.f32.mrb[0].mxu0
  %v459 = vadd.f32 %v95, %v458
  %v460 = vpop.f32.mrb[0].mxu0
  %v461 = vpop.f32.mrb[0].mxu0
  %v462 = vadd.f32 %v95, %v461
  %v463 = vpop.f32.mrb[0].mxu0
  %464 = vmatprep.mubr.bf16.mxu0 0
  %465 = vmatmul.mubr.bf16.gmra.mrb[0].mxu0 %v292
  %v466 = vpop.f32.mrb[0].mxu0
  %v467 = vadd.f32 %v95, %v466
  %v468 = vpop.f32.mrb[0].mxu0
  %v469 = vpop.f32.mrb[0].mxu0
  %v470 = vadd.f32 %v95, %v469
  %v471 = vpop.f32.mrb[0].mxu0
  %472 = vmatprep.mubr.bf16.mxu0 0
  %473 = vmatmul.mubr.bf16.gmra.mrb[0].mxu0 %v295
  %v474 = vpop.f32.mrb[0].mxu0
  %v475 = vadd.f32 %v95, %v474
  %v476 = vpop.f32.mrb[0].mxu0
  %v477 = vpop.f32.mrb[0].mxu0
  %v478 = vadd.f32 %v95, %v477
  %v479 = vpop.f32.mrb[0].mxu0
  %480 = vmatprep.mubr.bf16.mxu0 0
  %481 = vmatmul.mubr.bf16.gmra.mrb[0].mxu0 %v298
  %v482 = vpop.f32.mrb[0].mxu0
  %v483 = vadd.f32 %v95, %v482
  %v484 = vpop.f32.mrb[0].mxu0
  %v485 = vpop.f32.mrb[0].mxu0
  %v486 = vadd.f32 %v95, %v485
  %v487 = vpop.f32.mrb[0].mxu0
  %488 = vmatprep.mubr.bf16.mxu0 0
  %489 = vmatmul.mubr.bf16.gmra.mrb[0].mxu0 %v301
  %v490 = vpop.f32.mrb[0].mxu0
  %v491 = vadd.f32 %v95, %v490
  %v492 = vpop.f32.mrb[0].mxu0
  %v493 = vpop.f32.mrb[0].mxu0
  %v494 = vadd.f32 %v95, %v493
  %v495 = vpop.f32.mrb[0].mxu0
  %496 = vmatprep.mubr.bf16.mxu0 0
  %497 = vmatmul.mubr.bf16.gmra.mrb[0].mxu0 %v304
  %v498 = vpop.f32.mrb[0].mxu0
  %v499 = vadd.f32 %v95, %v498
  %v500 = vpop.f32.mrb[0].mxu0
  %v501 = vpop.f32.mrb[0].mxu0
  %v502 = vadd.f32 %v95, %v501
  %v503 = vpop.f32.mrb[0].mxu0
  %504 = vmatprep.mubr.bf16.mxu0 0
  %505 = vmatmul.mubr.bf16.gmra.mrb[0].mxu0 %v307
  %v506 = vpop.f32.mrb[0].mxu0
  %v507 = vadd.f32 %v95, %v506
  %v508 = vpop.f32.mrb[0].mxu0
  %v509 = vpop.f32.mrb[0].mxu0
  %v510 = vadd.f32 %v95, %v509
  %v511 = vpop.f32.mrb[0].mxu0
  %512 = vmatprep.mubr.bf16.mxu0 0
  %513 = vmatmul.mubr.bf16.gmra.mrb[0].mxu0 %v310
  %v514 = vpop.f32.mrb[0].mxu0
  %v515 = vadd.f32 %v95, %v514
  %v516 = vpop.f32.mrb[0].mxu0
  %v517 = vpop.f32.mrb[0].mxu0
  %v518 = vadd.f32 %v95, %v517
  %v519 = vpop.f32.mrb[0].mxu0
  %520 = vmatprep.mubr.bf16.mxu0 0
  %521 = vmatmul.mubr.bf16.gmra.mrb[0].mxu0 %v313
  %v522 = vpop.f32.mrb[0].mxu0
  %v523 = vadd.f32 %v95, %v522
  %v524 = vpop.f32.mrb[0].mxu0
  %v525 = vpop.f32.mrb[0].mxu0
  %v526 = vadd.f32 %v95, %v525
  %v527 = vpop.f32.mrb[0].mxu0
  %528 = vmatprep.mubr.bf16.mxu0 0
  %529 = vmatmul.mubr.bf16.gmra.mrb[0].mxu0 %v316
  %v530 = vpop.f32.mrb[0].mxu0
  %v531 = vadd.f32 %v95, %v530
  %v532 = vpop.f32.mrb[0].mxu0
  %v533 = vpop.f32.mrb[0].mxu0
  %v534 = vadd.f32 %v95, %v533
  %v535 = vpop.f32.mrb[0].mxu0
  %536 = vmatprep.mubr.bf16.mxu0 0
  %537 = vmatmul.mubr.bf16.gmra.mrb[0].mxu0 %v319
  %v538 = vpop.f32.mrb[0].mxu0
  %v539 = vadd.f32 %v95, %v538
  %v540 = vpop.f32.mrb[0].mxu0
  %v541 = vpop.f32.mrb[0].mxu0
  %v542 = vadd.f32 %v95, %v541
  %v543 = vpop.f32.mrb[0].mxu0
  %544 = vmatprep.mubr.bf16.mxu0 0
  %545 = vmatmul.mubr.bf16.gmra.mrb[0].mxu0 %v322
  %v546 = vpop.f32.mrb[0].mxu0
  %v547 = vadd.f32 %v95, %v546
  %v548 = vpop.f32.mrb[0].mxu0
  %v549 = vpop.f32.mrb[0].mxu0
  %v550 = vadd.f32 %v95, %v549
  %v551 = vpop.f32.mrb[0].mxu0
  %552 = vmatprep.mubr.bf16.mxu0 0
  %553 = vmatmul.mubr.bf16.gmra.mrb[0].mxu0 %v325
  %v554 = vpop.f32.mrb[0].mxu0
  %v555 = vadd.f32 %v95, %v554
  %v556 = vpop.f32.mrb[0].mxu0
  %v557 = vpop.f32.mrb[0].mxu0
  %v558 = vadd.f32 %v95, %v557
  %v559 = vpop.f32.mrb[0].mxu0
  %560 = vmatprep.mubr.bf16.mxu0 0
  %561 = vmatmul.mubr.bf16.gmra.mrb[0].mxu0 %v328
  %v562 = vpop.f32.mrb[0].mxu0
  %v563 = vadd.f32 %v95, %v562
  %v564 = vpop.f32.mrb[0].mxu0
  %v565 = vpop.f32.mrb[0].mxu0
  %v566 = vadd.f32 %v95, %v565
  %v567 = vpop.f32.mrb[0].mxu0
  %568 = vmatprep.mubr.bf16.mxu0 0
  %569 = vmatmul.mubr.bf16.gmra.mrb[0].mxu0 %v331
  %v570 = vpop.f32.mrb[0].mxu0
  %v571 = vadd.f32 %v95, %v570
  %v572 = vpop.f32.mrb[0].mxu0
  %v573 = vpop.f32.mrb[0].mxu0
  %v574 = vadd.f32 %v95, %v573
  %v575 = vpop.f32.mrb[0].mxu0
  %576 = vmatprep.mubr.bf16.mxu0 0
  %577 = vmatmul.mubr.bf16.gmra.mrb[0].mxu0 %v334
  %v578 = vpop.f32.mrb[0].mxu0
  %v579 = vadd.f32 %v95, %v578
  %v580 = vpop.f32.mrb[0].mxu0
  %v581 = vpop.f32.mrb[0].mxu0
  %v582 = vadd.f32 %v95, %v581
  %v583 = vpop.f32.mrb[0].mxu0
  %584 = vmatprep.mubr.bf16.mxu0 0
  %585 = vmatmul.mubr.bf16.gmra.mrb[0].mxu0 %v337
  %v586 = vpop.f32.mrb[0].mxu0
  %v587 = vadd.f32 %v95, %v586
  %v588 = vpop.f32.mrb[0].mxu0
  %v589 = vpop.f32.mrb[0].mxu0
  %v590 = vadd.f32 %v95, %v589
  %v591 = vpop.f32.mrb[0].mxu0
  %592 = vmatprep.mubr.bf16.mxu0 0
  %593 = vmatmul.mubr.bf16.gmra.mrb[0].mxu0 %v340
  %v594 = vpop.f32.mrb[0].mxu0
  %v595 = vadd.f32 %v95, %v594
  %v596 = vpop.f32.mrb[0].mxu0
  %v597 = vpop.f32.mrb[0].mxu0
  %v598 = vadd.f32 %v95, %v597
  %v599 = vpop.f32.mrb[0].mxu0
  %600 = vmatprep.mubr.bf16.mxu0 0
  %601 = vmatmul.mubr.bf16.gmra.mrb[0].mxu0 %v343
  %v602 = vpop.f32.mrb[0].mxu0
  %v603 = vadd.f32 %v95, %v602
  %v604 = vpop.f32.mrb[0].mxu0
  %v605 = vpop.f32.mrb[0].mxu0
  %v606 = vadd.f32 %v95, %v605
  %v607 = vpop.f32.mrb[0].mxu0
  %608 = vmatprep.mubr.bf16.mxu0 0
  %609 = vmatmul.mubr.bf16.gmra.mrb[0].mxu0 %v346
  %v610 = vpop.f32.mrb[0].mxu0
  %v611 = vadd.f32 %v95, %v610
  %v612 = vpop.f32.mrb[0].mxu0
  %v613 = vpop.f32.mrb[0].mxu0
  %v614 = vadd.f32 %v95, %v613
  %v615 = vpop.f32.mrb[0].mxu0
  %616 = vmatprep.mubr.bf16.mxu0 0
  %617 = vmatmul.mubr.bf16.gmra.mrb[0].mxu0 %v349
  %v618 = vpop.f32.mrb[0].mxu0
  %v619 = vadd.f32 %v95, %v618
  %v620 = vpop.f32.mrb[0].mxu0
  %v621 = vpop.f32.mrb[0].mxu0
  %v622 = vadd.f32 %v95, %v621
  %v623 = vpop.f32.mrb[0].mxu0
  %624 = vmatprep.mubr.bf16.mxu0 0
  %625 = vmatmul.mubr.bf16.gmra.mrb[0].mxu0 %v352
  %v626 = vpop.f32.mrb[0].mxu0
  %v627 = vadd.f32 %v95, %v626
  %v628 = vpop.f32.mrb[0].mxu0
  %v629 = vpop.f32.mrb[0].mxu0
  %v630 = vadd.f32 %v95, %v629
  %v631 = vpop.f32.mrb[0].mxu0
  %632 = vmatprep.mubr.bf16.mxu0 0
  %633 = vmatmul.mubr.bf16.gmra.mrb[0].mxu0 %v355
  %v634 = vpop.f32.mrb[0].mxu0
  %v635 = vadd.f32 %v95, %v634
  %v636 = vpop.f32.mrb[0].mxu0
  %v637 = vpop.f32.mrb[0].mxu0
  %v638 = vadd.f32 %v95, %v637
  %v639 = vpop.f32.mrb[0].mxu0
  %640 = vmatprep.mubr.bf16.mxu0 0
  %641 = vmatmul.mubr.bf16.gmra.mrb[0].mxu0 %v358
  %v642 = vpop.f32.mrb[0].mxu0
  %v643 = vadd.f32 %v95, %v642
  %v644 = vpop.f32.mrb[0].mxu0
  %v645 = vpop.f32.mrb[0].mxu0
  %v646 = vadd.f32 %v95, %v645
  %v647 = vpop.f32.mrb[0].mxu0
  %648 = vdwg.mxu0
  %v649 = vld [vmem:[%s3] sm:$0xff]
  %v650 = vld [vmem:[%s3 + $0x8] sm:$0xff]
  %v651 = vld [vmem:[%s3 + $0x10] sm:$0xff]
  %v652 = vld [vmem:[%s3 + $0x18] sm:$0xff]
  %v653 = vld [vmem:[%s3 + $0x20] sm:$0xff]
  %v654 = vld [vmem:[%s3 + $0x28] sm:$0xff]
  %v655 = vld [vmem:[%s3 + $0x30] sm:$0xff]
  %v656 = vld [vmem:[%s3 + $0x38] sm:$0xff]
  %v657 = vld [vmem:[%s3 + $0x40] sm:$0xff]
  %v658 = vld [vmem:[%s3 + $0x48] sm:$0xff]
  %v659 = vld [vmem:[%s3 + $0x50] sm:$0xff]
  %v660 = vld [vmem:[%s3 + $0x58] sm:$0xff]
  %v661 = vld [vmem:[%s3 + $0x60] sm:$0xff]
  %v662 = vld [vmem:[%s3 + $0x68] sm:$0xff]
  %v663 = vld [vmem:[%s3 + $0x70] sm:$0xff]
  %v664 = vld [vmem:[%s3 + $0x78] sm:$0xff]
  %v665 = vld [vmem:[%s3 + $0x80] sm:$0xff]
  %v666 = vld [vmem:[%s3 + $0x88] sm:$0xff]
  %v667 = vld [vmem:[%s3 + $0x90] sm:$0xff]
  %v668 = vld [vmem:[%s3 + $0x98] sm:$0xff]
  %v669 = vld [vmem:[%s3 + $0xa0] sm:$0xff]
  %v670 = vld [vmem:[%s3 + $0xa8] sm:$0xff]
  %v671 = vld [vmem:[%s3 + $0xb0] sm:$0xff]
  %v672 = vld [vmem:[%s3 + $0xb8] sm:$0xff]
  %v673 = vld [vmem:[%s3 + $0xc0] sm:$0xff]
  %v674 = vld [vmem:[%s3 + $0xc8] sm:$0xff]
  %v675 = vld [vmem:[%s3 + $0xd0] sm:$0xff]
  %v676 = vld [vmem:[%s3 + $0xd8] sm:$0xff]
  %v677 = vld [vmem:[%s3 + $0xe0] sm:$0xff]
  %v678 = vld [vmem:[%s3 + $0xe8] sm:$0xff]
  %v679 = vld [vmem:[%s3 + $0xf0] sm:$0xff]
  %v680 = vld [vmem:[%s3 + $0xf8] sm:$0xff]
  %v681 = vld [vmem:[%s3 + $0x100] sm:$0xff]
  %v682 = vld [vmem:[%s3 + $0x108] sm:$0xff]
  %v683 = vld [vmem:[%s3 + $0x110] sm:$0xff]
  %v684 = vld [vmem:[%s3 + $0x118] sm:$0xff]
  %v685 = vld [vmem:[%s3 + $0x120] sm:$0xff]
  %v686 = vld [vmem:[%s3 + $0x128] sm:$0xff]
  %v687 = vld [vmem:[%s3 + $0x130] sm:$0xff]
  %v688 = vld [vmem:[%s3 + $0x138] sm:$0xff]
  %v689 = vld [vmem:[%s3 + $0x140] sm:$0xff]
  %v690 = vld [vmem:[%s3 + $0x148] sm:$0xff]
  %v691 = vld [vmem:[%s3 + $0x150] sm:$0xff]
  %v692 = vld [vmem:[%s3 + $0x158] sm:$0xff]
  %v693 = vld [vmem:[%s3 + $0x160] sm:$0xff]
  %v694 = vld [vmem:[%s3 + $0x168] sm:$0xff]
  %v695 = vld [vmem:[%s3 + $0x170] sm:$0xff]
  %v696 = vld [vmem:[%s3 + $0x178] sm:$0xff]
  %v697 = vld [vmem:[%s3 + $0x180] sm:$0xff]
  %v698 = vld [vmem:[%s3 + $0x188] sm:$0xff]
  %v699 = vld [vmem:[%s3 + $0x190] sm:$0xff]
  %v700 = vld [vmem:[%s3 + $0x198] sm:$0xff]
  %v701 = vld [vmem:[%s3 + $0x1a0] sm:$0xff]
  %v702 = vld [vmem:[%s3 + $0x1a8] sm:$0xff]
  %v703 = vld [vmem:[%s3 + $0x1b0] sm:$0xff]
  %v704 = vld [vmem:[%s3 + $0x1b8] sm:$0xff]
  %v705 = vld [vmem:[%s3 + $0x1c0] sm:$0xff]
  %v706 = vld [vmem:[%s3 + $0x1c8] sm:$0xff]
  %v707 = vld [vmem:[%s3 + $0x1d0] sm:$0xff]
  %v708 = vld [vmem:[%s3 + $0x1d8] sm:$0xff]
  %v709 = vld [vmem:[%s3 + $0x1e0] sm:$0xff]
  %v710 = vld [vmem:[%s3 + $0x1e8] sm:$0xff]
  %v711 = vld [vmem:[%s3 + $0x1f0] sm:$0xff]
  %v712 = vld [vmem:[%s3 + $0x1f8] sm:$0xff]
  %v713 = vld [vmem:[%s4] sm:$0x1]
  %v715 = vlaneseq
  %v716 = vshrl.u32 %v715, 7
  %v717 = vsub.s32 0, %v716
  %v718 = vrot.slane %v713, %v717
  %v720 = vmul.f32 %v649, %v718
  %v721 = vmul.f32 %v650, %v718
  %v722 = vmul.f32 %v651, %v718
  %v723 = vmul.f32 %v652, %v718
  %v724 = vmul.f32 %v653, %v718
  %v725 = vmul.f32 %v654, %v718
  %v726 = vmul.f32 %v655, %v718
  %v727 = vmul.f32 %v656, %v718
  %v728 = vmul.f32 %v657, %v718
  %v729 = vmul.f32 %v658, %v718
  %v730 = vmul.f32 %v659, %v718
  %v731 = vmul.f32 %v660, %v718
  %v732 = vmul.f32 %v661, %v718
  %v733 = vmul.f32 %v662, %v718
  %v734 = vmul.f32 %v663, %v718
  %v735 = vmul.f32 %v664, %v718
  %v736 = vmul.f32 %v665, %v718
  %v737 = vmul.f32 %v666, %v718
  %v738 = vmul.f32 %v667, %v718
  %v739 = vmul.f32 %v668, %v718
  %v740 = vmul.f32 %v669, %v718
  %v741 = vmul.f32 %v670, %v718
  %v742 = vmul.f32 %v671, %v718
  %v743 = vmul.f32 %v672, %v718
  %v744 = vmul.f32 %v673, %v718
  %v745 = vmul.f32 %v674, %v718
  %v746 = vmul.f32 %v675, %v718
  %v747 = vmul.f32 %v676, %v718
  %v748 = vmul.f32 %v677, %v718
  %v749 = vmul.f32 %v678, %v718
  %v750 = vmul.f32 %v679, %v718
  %v751 = vmul.f32 %v680, %v718
  %v752 = vmul.f32 %v681, %v718
  %v753 = vmul.f32 %v682, %v718
  %v754 = vmul.f32 %v683, %v718
  %v755 = vmul.f32 %v684, %v718
  %v756 = vmul.f32 %v685, %v718
  %v757 = vmul.f32 %v686, %v718
  %v758 = vmul.f32 %v687, %v718
  %v759 = vmul.f32 %v688, %v718
  %v760 = vmul.f32 %v689, %v718
  %v761 = vmul.f32 %v690, %v718
  %v762 = vmul.f32 %v691, %v718
  %v763 = vmul.f32 %v692, %v718
  %v764 = vmul.f32 %v693, %v718
  %v765 = vmul.f32 %v694, %v718
  %v766 = vmul.f32 %v695, %v718
  %v767 = vmul.f32 %v696, %v718
  %v768 = vmul.f32 %v697, %v718
  %v769 = vmul.f32 %v698, %v718
  %v770 = vmul.f32 %v699, %v718
  %v771 = vmul.f32 %v700, %v718
  %v772 = vmul.f32 %v701, %v718
  %v773 = vmul.f32 %v702, %v718
  %v774 = vmul.f32 %v703, %v718
  %v775 = vmul.f32 %v704, %v718
  %v776 = vmul.f32 %v705, %v718
  %v777 = vmul.f32 %v706, %v718
  %v778 = vmul.f32 %v707, %v718
  %v779 = vmul.f32 %v708, %v718
  %v780 = vmul.f32 %v709, %v718
  %v781 = vmul.f32 %v710, %v718
  %v782 = vmul.f32 %v711, %v718
  %v783 = vmul.f32 %v712, %v718
  %v784 = vadd.f32 %v395, %v720
  %v785 = vadd.f32 %v398, %v721
  %v786 = vadd.f32 %v403, %v722
  %v787 = vadd.f32 %v406, %v723
  %v788 = vadd.f32 %v411, %v724
  %v789 = vadd.f32 %v414, %v725
  %v790 = vadd.f32 %v419, %v726
  %v791 = vadd.f32 %v422, %v727
  %v792 = vadd.f32 %v427, %v728
  %v793 = vadd.f32 %v430, %v729
  %v794 = vadd.f32 %v435, %v730
  %v795 = vadd.f32 %v438, %v731
  %v796 = vadd.f32 %v443, %v732
  %v797 = vadd.f32 %v446, %v733
  %v798 = vadd.f32 %v451, %v734
  %v799 = vadd.f32 %v454, %v735
  %v800 = vadd.f32 %v459, %v736
  %v801 = vadd.f32 %v462, %v737
  %v802 = vadd.f32 %v467, %v738
  %v803 = vadd.f32 %v470, %v739
  %v804 = vadd.f32 %v475, %v740
  %v805 = vadd.f32 %v478, %v741
  %v806 = vadd.f32 %v483, %v742
  %v807 = vadd.f32 %v486, %v743
  %v808 = vadd.f32 %v491, %v744
  %v809 = vadd.f32 %v494, %v745
  %v810 = vadd.f32 %v499, %v746
  %v811 = vadd.f32 %v502, %v747
  %v812 = vadd.f32 %v507, %v748
  %v813 = vadd.f32 %v510, %v749
  %v814 = vadd.f32 %v515, %v750
  %v815 = vadd.f32 %v518, %v751
  %v816 = vadd.f32 %v523, %v752
  %v817 = vadd.f32 %v526, %v753
  %v818 = vadd.f32 %v531, %v754
  %v819 = vadd.f32 %v534, %v755
  %v820 = vadd.f32 %v539, %v756
  %v821 = vadd.f32 %v542, %v757
  %v822 = vadd.f32 %v547, %v758
  %v823 = vadd.f32 %v550, %v759
  %v824 = vadd.f32 %v555, %v760
  %v825 = vadd.f32 %v558, %v761
  %v826 = vadd.f32 %v563, %v762
  %v827 = vadd.f32 %v566, %v763
  %v828 = vadd.f32 %v571, %v764
  %v829 = vadd.f32 %v574, %v765
  %v830 = vadd.f32 %v579, %v766
  %v831 = vadd.f32 %v582, %v767
  %v832 = vadd.f32 %v587, %v768
  %v833 = vadd.f32 %v590, %v769
  %v834 = vadd.f32 %v595, %v770
  %v835 = vadd.f32 %v598, %v771
  %v836 = vadd.f32 %v603, %v772
  %v837 = vadd.f32 %v606, %v773
  %v838 = vadd.f32 %v611, %v774
  %v839 = vadd.f32 %v614, %v775
  %v840 = vadd.f32 %v619, %v776
  %v841 = vadd.f32 %v622, %v777
  %v842 = vadd.f32 %v627, %v778
  %v843 = vadd.f32 %v630, %v779
  %v844 = vadd.f32 %v635, %v780
  %v845 = vadd.f32 %v638, %v781
  %v846 = vadd.f32 %v643, %v782
  %v847 = vadd.f32 %v646, %v783
  %v848 = vld [vmem:[%s5] sm:$0x1]
  %v850 = vlaneseq
  %v851 = vshrl.u32 %v850, 7
  %v852 = vsub.s32 0, %v851
  %v853 = vrot.slane %v848, %v852
  %v855 = vadd.f32 %v784, %v853
  %v856 = vadd.f32 %v785, %v853
  %v857 = vadd.f32 %v786, %v853
  %v858 = vadd.f32 %v787, %v853
  %v859 = vadd.f32 %v788, %v853
  %v860 = vadd.f32 %v789, %v853
  %v861 = vadd.f32 %v790, %v853
  %v862 = vadd.f32 %v791, %v853
  %v863 = vadd.f32 %v792, %v853
  %v864 = vadd.f32 %v793, %v853
  %v865 = vadd.f32 %v794, %v853
  %v866 = vadd.f32 %v795, %v853
  %v867 = vadd.f32 %v796, %v853
  %v868 = vadd.f32 %v797, %v853
  %v869 = vadd.f32 %v798, %v853
  %v870 = vadd.f32 %v799, %v853
  %v871 = vadd.f32 %v800, %v853
  %v872 = vadd.f32 %v801, %v853
  %v873 = vadd.f32 %v802, %v853
  %v874 = vadd.f32 %v803, %v853
  %v875 = vadd.f32 %v804, %v853
  %v876 = vadd.f32 %v805, %v853
  %v877 = vadd.f32 %v806, %v853
  %v878 = vadd.f32 %v807, %v853
  %v879 = vadd.f32 %v808, %v853
  %v880 = vadd.f32 %v809, %v853
  %v881 = vadd.f32 %v810, %v853
  %v882 = vadd.f32 %v811, %v853
  %v883 = vadd.f32 %v812, %v853
  %v884 = vadd.f32 %v813, %v853
  %v885 = vadd.f32 %v814, %v853
  %v886 = vadd.f32 %v815, %v853
  %v887 = vadd.f32 %v816, %v853
  %v888 = vadd.f32 %v817, %v853
  %v889 = vadd.f32 %v818, %v853
  %v890 = vadd.f32 %v819, %v853
  %v891 = vadd.f32 %v820, %v853
  %v892 = vadd.f32 %v821, %v853
  %v893 = vadd.f32 %v822, %v853
  %v894 = vadd.f32 %v823, %v853
  %v895 = vadd.f32 %v824, %v853
  %v896 = vadd.f32 %v825, %v853
  %v897 = vadd.f32 %v826, %v853
  %v898 = vadd.f32 %v827, %v853
  %v899 = vadd.f32 %v828, %v853
  %v900 = vadd.f32 %v829, %v853
  %v901 = vadd.f32 %v830, %v853
  %v902 = vadd.f32 %v831, %v853
  %v903 = vadd.f32 %v832, %v853
  %v904 = vadd.f32 %v833, %v853
  %v905 = vadd.f32 %v834, %v853
  %v906 = vadd.f32 %v835, %v853
  %v907 = vadd.f32 %v836, %v853
  %v908 = vadd.f32 %v837, %v853
  %v909 = vadd.f32 %v838, %v853
  %v910 = vadd.f32 %v839, %v853
  %v911 = vadd.f32 %v840, %v853
  %v912 = vadd.f32 %v841, %v853
  %v913 = vadd.f32 %v842, %v853
  %v914 = vadd.f32 %v843, %v853
  %v915 = vadd.f32 %v844, %v853
  %v916 = vadd.f32 %v845, %v853
  %v917 = vadd.f32 %v846, %v853
  %v918 = vadd.f32 %v847, %v853
  %919 = vst.msk [vmem:[%s6] sm:$0xff] %vm263, %v855
  %920 = vst.msk [vmem:[%s6 + $0x8] sm:$0xff] %vm263, %v856
  %921 = vst.msk [vmem:[%s6 + $0x10] sm:$0xff] %vm263, %v857
  %922 = vst.msk [vmem:[%s6 + $0x18] sm:$0xff] %vm263, %v858
  %923 = vst.msk [vmem:[%s6 + $0x20] sm:$0xff] %vm263, %v859
  %924 = vst.msk [vmem:[%s6 + $0x28] sm:$0xff] %vm263, %v860
  %925 = vst.msk [vmem:[%s6 + $0x30] sm:$0xff] %vm263, %v861
  %926 = vst.msk [vmem:[%s6 + $0x38] sm:$0xff] %vm263, %v862
  %927 = vst.msk [vmem:[%s6 + $0x40] sm:$0xff] %vm263, %v863
  %928 = vst.msk [vmem:[%s6 + $0x48] sm:$0xff] %vm263, %v864
  %929 = vst.msk [vmem:[%s6 + $0x50] sm:$0xff] %vm263, %v865
  %930 = vst.msk [vmem:[%s6 + $0x58] sm:$0xff] %vm263, %v866
  %931 = vst.msk [vmem:[%s6 + $0x60] sm:$0xff] %vm263, %v867
  %932 = vst.msk [vmem:[%s6 + $0x68] sm:$0xff] %vm263, %v868
  %933 = vst.msk [vmem:[%s6 + $0x70] sm:$0xff] %vm263, %v869
  %934 = vst.msk [vmem:[%s6 + $0x78] sm:$0xff] %vm263, %v870
  %935 = vst.msk [vmem:[%s6 + $0x80] sm:$0xff] %vm263, %v871
  %936 = vst.msk [vmem:[%s6 + $0x88] sm:$0xff] %vm263, %v872
  %937 = vst.msk [vmem:[%s6 + $0x90] sm:$0xff] %vm263, %v873
  %938 = vst.msk [vmem:[%s6 + $0x98] sm:$0xff] %vm263, %v874
  %939 = vst.msk [vmem:[%s6 + $0xa0] sm:$0xff] %vm263, %v875
  %940 = vst.msk [vmem:[%s6 + $0xa8] sm:$0xff] %vm263, %v876
  %941 = vst.msk [vmem:[%s6 + $0xb0] sm:$0xff] %vm263, %v877
  %942 = vst.msk [vmem:[%s6 + $0xb8] sm:$0xff] %vm263, %v878
  %943 = vst.msk [vmem:[%s6 + $0xc0] sm:$0xff] %vm263, %v879
  %944 = vst.msk [vmem:[%s6 + $0xc8] sm:$0xff] %vm263, %v880
  %945 = vst.msk [vmem:[%s6 + $0xd0] sm:$0xff] %vm263, %v881
  %946 = vst.msk [vmem:[%s6 + $0xd8] sm:$0xff] %vm263, %v882
  %947 = vst.msk [vmem:[%s6 + $0xe0] sm:$0xff] %vm263, %v883
  %948 = vst.msk [vmem:[%s6 + $0xe8] sm:$0xff] %vm263, %v884
  %949 = vst.msk [vmem:[%s6 + $0xf0] sm:$0xff] %vm263, %v885
  %950 = vst.msk [vmem:[%s6 + $0xf8] sm:$0xff] %vm263, %v886
  %951 = vst.msk [vmem:[%s6 + $0x100] sm:$0xff] %vm263, %v887
  %952 = vst.msk [vmem:[%s6 + $0x108] sm:$0xff] %vm263, %v888
  %953 = vst.msk [vmem:[%s6 + $0x110] sm:$0xff] %vm263, %v889
  %954 = vst.msk [vmem:[%s6 + $0x118] sm:$0xff] %vm263, %v890
  %955 = vst.msk [vmem:[%s6 + $0x120] sm:$0xff] %vm263, %v891
  %956 = vst.msk [vmem:[%s6 + $0x128] sm:$0xff] %vm263, %v892
  %957 = vst.msk [vmem:[%s6 + $0x130] sm:$0xff] %vm263, %v893
  %958 = vst.msk [vmem:[%s6 + $0x138] sm:$0xff] %vm263, %v894
  %959 = vst.msk [vmem:[%s6 + $0x140] sm:$0xff] %vm263, %v895
  %960 = vst.msk [vmem:[%s6 + $0x148] sm:$0xff] %vm263, %v896
  %961 = vst.msk [vmem:[%s6 + $0x150] sm:$0xff] %vm263, %v897
  %962 = vst.msk [vmem:[%s6 + $0x158] sm:$0xff] %vm263, %v898
  %963 = vst.msk [vmem:[%s6 + $0x160] sm:$0xff] %vm263, %v899
  %964 = vst.msk [vmem:[%s6 + $0x168] sm:$0xff] %vm263, %v900
  %965 = vst.msk [vmem:[%s6 + $0x170] sm:$0xff] %vm263, %v901
  %966 = vst.msk [vmem:[%s6 + $0x178] sm:$0xff] %vm263, %v902
  %967 = vst.msk [vmem:[%s6 + $0x180] sm:$0xff] %vm263, %v903
  %968 = vst.msk [vmem:[%s6 + $0x188] sm:$0xff] %vm263, %v904
  %969 = vst.msk [vmem:[%s6 + $0x190] sm:$0xff] %vm263, %v905
  %970 = vst.msk [vmem:[%s6 + $0x198] sm:$0xff] %vm263, %v906
  %971 = vst.msk [vmem:[%s6 + $0x1a0] sm:$0xff] %vm263, %v907
  %972 = vst.msk [vmem:[%s6 + $0x1a8] sm:$0xff] %vm263, %v908
  %973 = vst.msk [vmem:[%s6 + $0x1b0] sm:$0xff] %vm263, %v909
  %974 = vst.msk [vmem:[%s6 + $0x1b8] sm:$0xff] %vm263, %v910
  %975 = vst.msk [vmem:[%s6 + $0x1c0] sm:$0xff] %vm263, %v911
  %976 = vst.msk [vmem:[%s6 + $0x1c8] sm:$0xff] %vm263, %v912
  %977 = vst.msk [vmem:[%s6 + $0x1d0] sm:$0xff] %vm263, %v913
  %978 = vst.msk [vmem:[%s6 + $0x1d8] sm:$0xff] %vm263, %v914
  %979 = vst.msk [vmem:[%s6 + $0x1e0] sm:$0xff] %vm263, %v915
  %980 = vst.msk [vmem:[%s6 + $0x1e8] sm:$0xff] %vm263, %v916
  %981 = vst.msk [vmem:[%s6 + $0x1f0] sm:$0xff] %vm263, %v917
  %982 = vst.msk [vmem:[%s6 + $0x1f8] sm:$0xff] %vm263, %v918
  // Predicated region
  $region26: #{unet_skip_block_forward.11} parent=0 // pred_check
    _
  $region27: #{unet_skip_block_forward.11} parent=0 // pred_check_branch
    %984 = sbr.rel (0) target = $region29
  $region28: #{unet_skip_block_forward.11} parent=0 // pred_region
    _
  $region29: #{unet_skip_block_forward.11} parent=0 // pred_fallthru
    _
  // Predicated region
  $region30: #{unet_skip_block_forward.11} parent=0 // pred_check
    _
  $region31: #{unet_skip_block_forward.11} parent=0 // pred_check_branch
    %986 = sbr.rel (0) target = $region33
  $region32: #{unet_skip_block_forward.11} parent=0 // pred_region
    _
  $region33: #{unet_skip_block_forward.11} parent=0 // pred_fallthru
    _

// kernel: unet_skip_block_forward.10
$region0: #{unet_skip_block_forward.10}
  #allocation0 [shape = 'u32[]', space=smem, size = 0x4, offset = 0x4, fixed_abs, tag = 'smem constant byte address 0x4 - core index']
  #allocation1 [shape = 'u32[144,128]{1,0:T(1,128)}', space=vmem, size = 0x12000, scoped, tag = 'internal scratch']
  %s0 = inlined_call_operand.vmem [shape: bf16[2,256,48], index: 0, kind: input, shape index: {}]
  %s1 = inlined_call_operand.vmem [shape: bf16[2,256,16], index: 1, kind: output, shape index: {}]
  %s2 = sld [smem:[#allocation0]]
  $region37: #{unet_skip_block_forward.10} parent=0
    _
  %s4 = ssub.s32 1, %s2
  %s5 = scalar_select 0, %s4, %s2
  loop: start=0, step=1, limit=4
  $region2: #{unet_skip_block_forward.10} parent=0 // loop_pre_header
    _
  $region3: #{unet_skip_block_forward.10} parent=0 // loop_header
    %s7 = sphi 0, %s11
    %p8 = scmp.ge.s32.totalorder %s7, 4
    %s17 = sphi 0, %s19
    %s20 = sphi 0, %s17
    %s21 = sphi 0, %s20
    %s37 = sphi 0, %s21
    %s43 = sphi 0, %s45
    %s46 = sphi 0, %s43
    %s47 = sphi 0, %s46
    %s63 = sphi 0, %s47
  $region4: #{unet_skip_block_forward.10} parent=0 // loop_header_branch
    %10 = sbr.rel (%p8) target = $region8
  $region5: #{unet_skip_block_forward.10} parent=0 // loop_body
    %s12 = ssub.s32 %s7, 1
    %s13 = ssub.s32 %s7, 2
    %s14 = sadd.s32 %s7, 1
    %s15 = ssub.s32 %s7, %s14
    %p16 = scmp.eq.s32.totalorder %s15, 0
    %s18 = sadd.s32 %s17, 1
    %s19 = scalar_select %p16, %s17, %s18
    %p22 = pneg %p16
    %p23 = scmp.eq.s32.totalorder %s7, 1
    %p24 = por %p22, %p23
    %p25 = scmp.ne.s32.totalorder %s17, %s20
    %p26 = scmp.eq.s32.totalorder %s7, 0
    %p27 = por %p25, %p26
    %p28 = scmp.ne.s32.totalorder %s17, %s20
    %p29 = scmp.eq.s32.totalorder %s12, 1
    %p30 = por %p28, %p29
    %p31 = scmp.ne.s32.totalorder %s20, %s21
    %p32 = scmp.eq.s32.totalorder %s12, 0
    %p33 = por %p31, %p32
    %p34 = scmp.ne.s32.totalorder %s20, %s21
    %p35 = scmp.eq.s32.totalorder %s13, 1
    %p36 = por %p34, %p35
    %p38 = scmp.ne.s32.totalorder %s21, %s37
    %p39 = scmp.eq.s32.totalorder %s13, 0
    %p40 = por %p38, %p39
    %s41 = ssub.s32 %s7, %s14
    %p42 = scmp.eq.s32.totalorder %s41, 0
    %s44 = sadd.s32 %s43, 1
    %s45 = scalar_select %p42, %s43, %s44
    %p48 = pneg %p42
    %p49 = scmp.eq.s32.totalorder %s7, 1
    %p50 = por %p48, %p49
    %p51 = scmp.ne.s32.totalorder %s43, %s46
    %p52 = scmp.eq.s32.totalorder %s7, 0
    %p53 = por %p51, %p52
    %p54 = scmp.ne.s32.totalorder %s43, %s46
    %p55 = scmp.eq.s32.totalorder %s12, 1
    %p56 = por %p54, %p55
    %p57 = scmp.ne.s32.totalorder %s46, %s47
    %p58 = scmp.eq.s32.totalorder %s12, 0
    %p59 = por %p57, %p58
    %p60 = scmp.ne.s32.totalorder %s46, %s47
    %p61 = scmp.eq.s32.totalorder %s13, 1
    %p62 = por %p60, %p61
    %p64 = scmp.ne.s32.totalorder %s47, %s63
    %p65 = scmp.eq.s32.totalorder %s13, 0
    %p66 = por %p64, %p65
    %p67 = scmp.le.s32.totalorder 1, %s7
    %p68 = scmp.lt.s32.totalorder %s7, 3
    %p69 = pnand %p67, %p68
    %p70 = pneg %p69
    // Predicated region
    $region9: #{unet_skip_block_forward.10} parent=5 // pred_check
      _
    $region10: #{unet_skip_block_forward.10} parent=5 // pred_check_branch
      %72 = sbr.rel (%p69) target = $region12
    $region11: #{unet_skip_block_forward.10} parent=5 // pred_region
      %s73 = ssub.s32 %s7, 1
    $region12: #{unet_skip_block_forward.10} parent=5 // pred_fallthru
      _
    %p74 = scmp.lt.s32.totalorder %s7, 2
    // Predicated region
    $region13: #{unet_skip_block_forward.10} parent=5 // pred_check
      %p75 = pneg %p74
    $region14: #{unet_skip_block_forward.10} parent=5 // pred_check_branch
      %77 = sbr.rel (%p75) target = $region16
    $region15: #{unet_skip_block_forward.10} parent=5 // pred_region
      // Predicated region
      $region17: #{unet_skip_block_forward.10} parent=15 // pred_check
        %p78 = pneg %p27
      $region18: #{unet_skip_block_forward.10} parent=15 // pred_check_branch
        %80 = sbr.rel (%p78) target = $region20
      $region19: #{unet_skip_block_forward.10} parent=15 // pred_region
        %p81 = scmp.lt.s32.totalorder %s7, 1
        %s82 = scalar_select %p81, %s7, 1
        %s83 = smul.addr %s82, 32
        %s84 = smul.addr %s83, 4
        %s85 = scalar_lea.vmem %s0, %s84
      $region20: #{unet_skip_block_forward.10} parent=15 // pred_fallthru
        _
    $region16: #{unet_skip_block_forward.10} parent=5 // pred_fallthru
      _
    %p86 = scmp.le.s32.totalorder 1, %s7
    %p87 = scmp.lt.s32.totalorder %s7, 3
    %p88 = pnand %p86, %p87
    %p89 = pneg %p88
    // Predicated region
    $region21: #{unet_skip_block_forward.10} parent=5 // pred_check
      _
    $region22: #{unet_skip_block_forward.10} parent=5 // pred_check_branch
      %91 = sbr.rel (%p88) target = $region24
    $region23: #{unet_skip_block_forward.10} parent=5 // pred_region
      %s92 = ssub.s32 %s7, 1
      %p93 = scmp.lt.s32.totalorder %s12, 1
      %s94 = scalar_select %p93, %s12, 1
      %s95 = smul.addr %s94, 32
      %s96 = smul.addr %s95, 4
      %s97 = scalar_lea.vmem %s0, %s96
      %p98 = pneg %p33
      %p99 = pneg %p30
      %p100 = pneg %p59
      %p101 = pneg %p56
      %p102 = scmp.lt.s32.totalorder %s12, 1
      %s103 = scalar_select %p102, %s12, 1
      %s104 = smul.addr %s103, 32
      %s105 = smul.addr %s104, 4
      %s106 = scalar_lea.vmem %s1, %s105
      %p107 = scmp.lt.s32.totalorder %s12, 1
      %s108 = scalar_select %p107, %s12, 1
      %s109 = smul.addr %s108, 32
      %s110 = smul.addr %s109, 4
      %s111 = scalar_lea.vmem %s0, %s110
      %p112 = scmp.lt.s32.totalorder %s12, 1
      %s113 = scalar_select %p112, %s12, 1
      %s114 = smul.addr %s113, 32
      %s115 = smul.addr %s114, 4
      %s116 = scalar_lea.vmem %s1, %s115
      %v118 = vld [vmem:[%s111] sm:$0xf]
      %v119 = vld [vmem:[%s111 + $0x4] sm:$0xf]
      %v120 = vld [vmem:[%s111 + $0x8] sm:$0xf]
      %v121 = vld [vmem:[%s111 + $0xc] sm:$0xf]
      %v122 = vld [vmem:[%s111 + $0x10] sm:$0xf]
      %v123 = vld [vmem:[%s111 + $0x14] sm:$0xf]
      %v124 = vld [vmem:[%s111 + $0x18] sm:$0xf]
      %v125 = vld [vmem:[%s111 + $0x1c] sm:$0xf]
      %v126 = vld [vmem:[%s111 + $0x20] sm:$0xf]
      %v127 = vld [vmem:[%s111 + $0x24] sm:$0xf]
      %v128 = vld [vmem:[%s111 + $0x28] sm:$0xf]
      %v129 = vld [vmem:[%s111 + $0x2c] sm:$0xf]
      %v130 = vld [vmem:[%s111 + $0x30] sm:$0xf]
      %v131 = vld [vmem:[%s111 + $0x34] sm:$0xf]
      %v132 = vld [vmem:[%s111 + $0x38] sm:$0xf]
      %v133 = vld [vmem:[%s111 + $0x3c] sm:$0xf]
      %v134 = vld [vmem:[%s111 + $0x40] sm:$0xf]
      %v135 = vld [vmem:[%s111 + $0x44] sm:$0xf]
      %v136 = vld [vmem:[%s111 + $0x48] sm:$0xf]
      %v137 = vld [vmem:[%s111 + $0x4c] sm:$0xf]
      %v138 = vld [vmem:[%s111 + $0x50] sm:$0xf]
      %v139 = vld [vmem:[%s111 + $0x54] sm:$0xf]
      %v140 = vld [vmem:[%s111 + $0x58] sm:$0xf]
      %v141 = vld [vmem:[%s111 + $0x5c] sm:$0xf]
      %v142 = vld [vmem:[%s111 + $0x60] sm:$0xf]
      %v143 = vld [vmem:[%s111 + $0x64] sm:$0xf]
      %v144 = vld [vmem:[%s111 + $0x68] sm:$0xf]
      %v145 = vld [vmem:[%s111 + $0x6c] sm:$0xf]
      %v146 = vld [vmem:[%s111 + $0x70] sm:$0xf]
      %v147 = vld [vmem:[%s111 + $0x74] sm:$0xf]
      %v148 = vld [vmem:[%s111 + $0x78] sm:$0xf]
      %v149 = vld [vmem:[%s111 + $0x7c] sm:$0xf]
      %v182 = vunpack.c.l.b16 %v118
      %v183 = vunpack.c.l.b16 %v119
      %v184 = vunpack.c.l.b16 %v120
      %v185 = vunpack.c.l.b16 %v121
      %v186 = vunpack.c.l.b16 %v122
      %v187 = vunpack.c.l.b16 %v123
      %v188 = vunpack.c.l.b16 %v124
      %v189 = vunpack.c.l.b16 %v125
      %v190 = vunpack.c.l.b16 %v126
      %v191 = vunpack.c.l.b16 %v127
      %v192 = vunpack.c.l.b16 %v128
      %v193 = vunpack.c.l.b16 %v129
      %v194 = vunpack.c.l.b16 %v130
      %v195 = vunpack.c.l.b16 %v131
      %v196 = vunpack.c.l.b16 %v132
      %v197 = vunpack.c.l.b16 %v133
      %v198 = vunpack.c.l.b16 %v134
      %v199 = vunpack.c.l.b16 %v135
      %v200 = vunpack.c.l.b16 %v136
      %v201 = vunpack.c.l.b16 %v137
      %v202 = vunpack.c.l.b16 %v138
      %v203 = vunpack.c.l.b16 %v139
      %v204 = vunpack.c.l.b16 %v140
      %v205 = vunpack.c.l.b16 %v141
      %v206 = vunpack.c.l.b16 %v142
      %v207 = vunpack.c.l.b16 %v143
      %v208 = vunpack.c.l.b16 %v144
      %v209 = vunpack.c.l.b16 %v145
      %v210 = vunpack.c.l.b16 %v146
      %v211 = vunpack.c.l.b16 %v147
      %v212 = vunpack.c.l.b16 %v148
      %v213 = vunpack.c.l.b16 %v149
      %v214 = vpack.c.b16 %v183, %v182
      %v215 = vpack.c.b16 %v185, %v184
      %v216 = vpack.c.b16 %v187, %v186
      %v217 = vpack.c.b16 %v189, %v188
      %v218 = vpack.c.b16 %v191, %v190
      %v219 = vpack.c.b16 %v193, %v192
      %v220 = vpack.c.b16 %v195, %v194
      %v221 = vpack.c.b16 %v197, %v196
      %v222 = vpack.c.b16 %v199, %v198
      %v223 = vpack.c.b16 %v201, %v200
      %v224 = vpack.c.b16 %v203, %v202
      %v225 = vpack.c.b16 %v205, %v204
      %v226 = vpack.c.b16 %v207, %v206
      %v227 = vpack.c.b16 %v209, %v208
      %v228 = vpack.c.b16 %v211, %v210
      %v229 = vpack.c.b16 %v213, %v212
      %230 = vrot.lane.b32.xlu0 %v214, 112
      %v231 = vpop.permute.xlu0 %230
      %232 = vrot.lane.b32.xlu0 %v215, 112
      %v233 = vpop.permute.xlu0 %232
      %234 = vrot.lane.b32.xlu0 %v216, 112
      %v235 = vpop.permute.xlu0 %234
      %236 = vrot.lane.b32.xlu0 %v217, 112
      %v237 = vpop.permute.xlu0 %236
      %238 = vrot.lane.b32.xlu0 %v218, 112
      %v239 = vpop.permute.xlu0 %238
      %240 = vrot.lane.b32.xlu0 %v219, 112
      %v241 = vpop.permute.xlu0 %240
      %242 = vrot.lane.b32.xlu0 %v220, 112
      %v243 = vpop.permute.xlu0 %242
      %244 = vrot.lane.b32.xlu0 %v221, 112
      %v245 = vpop.permute.xlu0 %244
      %246 = vrot.lane.b32.xlu0 %v222, 112
      %v247 = vpop.permute.xlu0 %246
      %248 = vrot.lane.b32.xlu0 %v223, 112
      %v249 = vpop.permute.xlu0 %248
      %250 = vrot.lane.b32.xlu0 %v224, 112
      %v251 = vpop.permute.xlu0 %250
      %252 = vrot.lane.b32.xlu0 %v225, 112
      %v253 = vpop.permute.xlu0 %252
      %254 = vrot.lane.b32.xlu0 %v226, 112
      %v255 = vpop.permute.xlu0 %254
      %256 = vrot.lane.b32.xlu0 %v227, 112
      %v257 = vpop.permute.xlu0 %256
      %258 = vrot.lane.b32.xlu0 %v228, 112
      %v259 = vpop.permute.xlu0 %258
      %260 = vrot.lane.b32.xlu0 %v229, 112
      %v261 = vpop.permute.xlu0 %260
      %vm262 = vcmask 64512
      %v264 = vsel %vm262, %v214, 0
      %v267 = vsel %vm262, %v215, 0
      %v270 = vsel %vm262, %v216, 0
      %v273 = vsel %vm262, %v217, 0
      %v276 = vsel %vm262, %v218, 0
      %v279 = vsel %vm262, %v219, 0
      %v282 = vsel %vm262, %v220, 0
      %v285 = vsel %vm262, %v221, 0
      %v288 = vsel %vm262, %v222, 0
      %v291 = vsel %vm262, %v223, 0
      %v294 = vsel %vm262, %v224, 0
      %v297 = vsel %vm262, %v225, 0
      %v300 = vsel %vm262, %v226, 0
      %v303 = vsel %vm262, %v227, 0
      %v306 = vsel %vm262, %v228, 0
      %v309 = vsel %vm262, %v229, 0
      %v312 = vsel %vm262, %v231, 0
      %v315 = vsel %vm262, %v233, 0
      %v318 = vsel %vm262, %v235, 0
      %v321 = vsel %vm262, %v237, 0
      %v324 = vsel %vm262, %v239, 0
      %v327 = vsel %vm262, %v241, 0
      %v330 = vsel %vm262, %v243, 0
      %v333 = vsel %vm262, %v245, 0
      %v336 = vsel %vm262, %v247, 0
      %v339 = vsel %vm262, %v249, 0
      %v342 = vsel %vm262, %v251, 0
      %v345 = vsel %vm262, %v253, 0
      %v348 = vsel %vm262, %v255, 0
      %v351 = vsel %vm262, %v257, 0
      %v354 = vsel %vm262, %v259, 0
      %v357 = vsel %vm262, %v261, 0
      %359 = vmatprep.subr.bf16.mxu0 0
      %360 = vmatpush1.bf16.xpose.msra.mxu0 %v312
      %361 = vmatprep.subr.bf16.mxu0 0
      %362 = vmatpush1.bf16.xpose.msra.mxu0 %v315
      %363 = vmatprep.subr.bf16.mxu0 0
      %364 = vmatpush1.bf16.xpose.msra.mxu0 %v318
      %365 = vmatprep.subr.bf16.mxu0 0
      %366 = vmatpush1.bf16.xpose.msra.mxu0 %v321
      %367 = vmatprep.subr.bf16.mxu0 0
      %368 = vmatpush1.bf16.xpose.msra.mxu0 %v324
      %369 = vmatprep.subr.bf16.mxu0 0
      %370 = vmatpush1.bf16.xpose.msra.mxu0 %v327
      %371 = vmatprep.subr.bf16.mxu0 0
      %372 = vmatpush1.bf16.xpose.msra.mxu0 %v330
      %373 = vmatprep.subr.bf16.mxu0 0
      %374 = vmatpush1.bf16.xpose.msra.mxu0 %v333
      %375 = vmatprep.subr.bf16.mxu0 0
      %376 = vmatpush1.bf16.xpose.msra.mxu0 %v336
      %377 = vmatprep.subr.bf16.mxu0 0
      %378 = vmatpush1.bf16.xpose.msra.mxu0 %v339
      %379 = vmatprep.subr.bf16.mxu0 0
      %380 = vmatpush1.bf16.xpose.msra.mxu0 %v342
      %381 = vmatprep.subr.bf16.mxu0 0
      %382 = vmatpush1.bf16.xpose.msra.mxu0 %v345
      %383 = vmatprep.subr.bf16.mxu0 0
      %384 = vmatpush1.bf16.xpose.msra.mxu0 %v348
      %385 = vmatprep.subr.bf16.mxu0 0
      %386 = vmatpush1.bf16.xpose.msra.mxu0 %v351
      %387 = vmatprep.subr.bf16.mxu0 0
      %388 = vmatpush1.bf16.xpose.msra.mxu0 %v354
      %389 = vmatprep.subr.bf16.mxu0 0
      %390 = vmatpush1.bf16.xpose.msra.mxu0 %v357
      %391 = vmatprep.mubr.bf16.mxu0 0
      %392 = vmatmul.mubr.bf16.gmra.mrb[0].mxu0 %v264
      %v393 = vpop.f32.mrb[0].mxu0
      %v394 = vadd.f32 0.0, %v393
      %v395 = vpop.f32.mrb[0].mxu0
      %v396 = vadd.f32 0.0, %v395
      %v397 = vpop.f32.mrb[0].mxu0
      %v398 = vadd.f32 0.0, %v397
      %v399 = vpop.f32.mrb[0].mxu0
      %v400 = vadd.f32 0.0, %v399
      %401 = vmatprep.mubr.bf16.mxu0 0
      %402 = vmatmul.mubr.bf16.gmra.mrb[0].mxu0 %v267
      %v403 = vpop.f32.mrb[0].mxu0
      %v404 = vadd.f32 0.0, %v403
      %v405 = vpop.f32.mrb[0].mxu0
      %v406 = vadd.f32 0.0, %v405
      %v407 = vpop.f32.mrb[0].mxu0
      %v408 = vadd.f32 0.0, %v407
      %v409 = vpop.f32.mrb[0].mxu0
      %v410 = vadd.f32 0.0, %v409
      %411 = vmatprep.mubr.bf16.mxu0 0
      %412 = vmatmul.mubr.bf16.gmra.mrb[0].mxu0 %v270
      %v413 = vpop.f32.mrb[0].mxu0
      %v414 = vadd.f32 0.0, %v413
      %v415 = vpop.f32.mrb[0].mxu0
      %v416 = vadd.f32 0.0, %v415
      %v417 = vpop.f32.mrb[0].mxu0
      %v418 = vadd.f32 0.0, %v417
      %v419 = vpop.f32.mrb[0].mxu0
      %v420 = vadd.f32 0.0, %v419
      %421 = vmatprep.mubr.bf16.mxu0 0
      %422 = vmatmul.mubr.bf16.gmra.mrb[0].mxu0 %v273
      %v423 = vpop.f32.mrb[0].mxu0
      %v424 = vadd.f32 0.0, %v423
      %v425 = vpop.f32.mrb[0].mxu0
      %v426 = vadd.f32 0.0, %v425
      %v427 = vpop.f32.mrb[0].mxu0
      %v428 = vadd.f32 0.0, %v427
      %v429 = vpop.f32.mrb[0].mxu0
      %v430 = vadd.f32 0.0, %v429
      %431 = vmatprep.mubr.bf16.mxu0 0
      %432 = vmatmul.mubr.bf16.gmra.mrb[0].mxu0 %v276
      %v433 = vpop.f32.mrb[0].mxu0
      %v434 = vadd.f32 0.0, %v433
      %v435 = vpop.f32.mrb[0].mxu0
      %v436 = vadd.f32 0.0, %v435
      %v437 = vpop.f32.mrb[0].mxu0
      %v438 = vadd.f32 0.0, %v437
      %v439 = vpop.f32.mrb[0].mxu0
      %v440 = vadd.f32 0.0, %v439
      %441 = vmatprep.mubr.bf16.mxu0 0
      %442 = vmatmul.mubr.bf16.gmra.mrb[0].mxu0 %v279
      %v443 = vpop.f32.mrb[0].mxu0
      %v444 = vadd.f32 0.0, %v443
      %v445 = vpop.f32.mrb[0].mxu0
      %v446 = vadd.f32 0.0, %v445
      %v447 = vpop.f32.mrb[0].mxu0
      %v448 = vadd.f32 0.0, %v447
      %v449 = vpop.f32.mrb[0].mxu0
      %v450 = vadd.f32 0.0, %v449
      %451 = vmatprep.mubr.bf16.mxu0 0
      %452 = vmatmul.mubr.bf16.gmra.mrb[0].mxu0 %v282
      %v453 = vpop.f32.mrb[0].mxu0
      %v454 = vadd.f32 0.0, %v453
      %v455 = vpop.f32.mrb[0].mxu0
      %v456 = vadd.f32 0.0, %v455
      %v457 = vpop.f32.mrb[0].mxu0
      %v458 = vadd.f32 0.0, %v457
      %v459 = vpop.f32.mrb[0].mxu0
      %v460 = vadd.f32 0.0, %v459
      %461 = vmatprep.mubr.bf16.mxu0 0
      %462 = vmatmul.mubr.bf16.gmra.mrb[0].mxu0 %v285
      %v463 = vpop.f32.mrb[0].mxu0
      %v464 = vadd.f32 0.0, %v463
      %v465 = vpop.f32.mrb[0].mxu0
      %v466 = vadd.f32 0.0, %v465
      %v467 = vpop.f32.mrb[0].mxu0
      %v468 = vadd.f32 0.0, %v467
      %v469 = vpop.f32.mrb[0].mxu0
      %v470 = vadd.f32 0.0, %v469
      %471 = vmatprep.mubr.bf16.mxu0 0
      %472 = vmatmul.mubr.bf16.gmra.mrb[0].mxu0 %v288
      %v473 = vpop.f32.mrb[0].mxu0
      %v474 = vadd.f32 0.0, %v473
      %v475 = vpop.f32.mrb[0].mxu0
      %v476 = vadd.f32 0.0, %v475
      %v477 = vpop.f32.mrb[0].mxu0
      %v478 = vadd.f32 0.0, %v477
      %v479 = vpop.f32.mrb[0].mxu0
      %v480 = vadd.f32 0.0, %v479
      %481 = vmatprep.mubr.bf16.mxu0 0
      %482 = vmatmul.mubr.bf16.gmra.mrb[0].mxu0 %v291
      %v483 = vpop.f32.mrb[0].mxu0
      %v484 = vadd.f32 0.0, %v483
      %v485 = vpop.f32.mrb[0].mxu0
      %v486 = vadd.f32 0.0, %v485
      %v487 = vpop.f32.mrb[0].mxu0
      %v488 = vadd.f32 0.0, %v487
      %v489 = vpop.f32.mrb[0].mxu0
      %v490 = vadd.f32 0.0, %v489
      %491 = vmatprep.mubr.bf16.mxu0 0
      %492 = vmatmul.mubr.bf16.gmra.mrb[0].mxu0 %v294
      %v493 = vpop.f32.mrb[0].mxu0
      %v494 = vadd.f32 0.0, %v493
      %v495 = vpop.f32.mrb[0].mxu0
      %v496 = vadd.f32 0.0, %v495
      %v497 = vpop.f32.mrb[0].mxu0
      %v498 = vadd.f32 0.0, %v497
      %v499 = vpop.f32.mrb[0].mxu0
      %v500 = vadd.f32 0.0, %v499
      %501 = vmatprep.mubr.bf16.mxu0 0
      %502 = vmatmul.mubr.bf16.gmra.mrb[0].mxu0 %v297
      %v503 = vpop.f32.mrb[0].mxu0
      %v504 = vadd.f32 0.0, %v503
      %v505 = vpop.f32.mrb[0].mxu0
      %v506 = vadd.f32 0.0, %v505
      %v507 = vpop.f32.mrb[0].mxu0
      %v508 = vadd.f32 0.0, %v507
      %v509 = vpop.f32.mrb[0].mxu0
      %v510 = vadd.f32 0.0, %v509
      %511 = vmatprep.mubr.bf16.mxu0 0
      %512 = vmatmul.mubr.bf16.gmra.mrb[0].mxu0 %v300
      %v513 = vpop.f32.mrb[0].mxu0
      %v514 = vadd.f32 0.0, %v513
      %v515 = vpop.f32.mrb[0].mxu0
      %v516 = vadd.f32 0.0, %v515
      %v517 = vpop.f32.mrb[0].mxu0
      %v518 = vadd.f32 0.0, %v517
      %v519 = vpop.f32.mrb[0].mxu0
      %v520 = vadd.f32 0.0, %v519
      %521 = vmatprep.mubr.bf16.mxu0 0
      %522 = vmatmul.mubr.bf16.gmra.mrb[0].mxu0 %v303
      %v523 = vpop.f32.mrb[0].mxu0
      %v524 = vadd.f32 0.0, %v523
      %v525 = vpop.f32.mrb[0].mxu0
      %v526 = vadd.f32 0.0, %v525
      %v527 = vpop.f32.mrb[0].mxu0
      %v528 = vadd.f32 0.0, %v527
      %v529 = vpop.f32.mrb[0].mxu0
      %v530 = vadd.f32 0.0, %v529
      %531 = vmatprep.mubr.bf16.mxu0 0
      %532 = vmatmul.mubr.bf16.gmra.mrb[0].mxu0 %v306
      %v533 = vpop.f32.mrb[0].mxu0
      %v534 = vadd.f32 0.0, %v533
      %v535 = vpop.f32.mrb[0].mxu0
      %v536 = vadd.f32 0.0, %v535
      %v537 = vpop.f32.mrb[0].mxu0
      %v538 = vadd.f32 0.0, %v537
      %v539 = vpop.f32.mrb[0].mxu0
      %v540 = vadd.f32 0.0, %v539
      %541 = vmatprep.mubr.bf16.mxu0 0
      %542 = vmatmul.mubr.bf16.gmra.mrb[0].mxu0 %v309
      %v543 = vpop.f32.mrb[0].mxu0
      %v544 = vadd.f32 0.0, %v543
      %v545 = vpop.f32.mrb[0].mxu0
      %v546 = vadd.f32 0.0, %v545
      %v547 = vpop.f32.mrb[0].mxu0
      %v548 = vadd.f32 0.0, %v547
      %v549 = vpop.f32.mrb[0].mxu0
      %v550 = vadd.f32 0.0, %v549
      %551 = vdwg.mxu0
      %v552 = vmax.f32 %v394, %v396
      %553 = vmax.xlane.f32.xlu0 %v552
      %v554 = vpop.xlane.xlu0 %553
      %v555 = vmax.f32 %v398, %v400
      %556 = vmax.xlane.f32.xlu0 %v555
      %v557 = vpop.xlane.xlu0 %556
      %v558 = vmax.f32 %v404, %v406
      %559 = vmax.xlane.f32.xlu0 %v558
      %v560 = vpop.xlane.xlu0 %559
      %v561 = vmax.f32 %v408, %v410
      %562 = vmax.xlane.f32.xlu0 %v561
      %v563 = vpop.xlane.xlu0 %562
      %v564 = vmax.f32 %v414, %v416
      %565 = vmax.xlane.f32.xlu0 %v564
      %v566 = vpop.xlane.xlu0 %565
      %v567 = vmax.f32 %v418, %v420
      %568 = vmax.xlane.f32.xlu0 %v567
      %v569 = vpop.xlane.xlu0 %568
      %v570 = vmax.f32 %v424, %v426
      %571 = vmax.xlane.f32.xlu0 %v570
      %v572 = vpop.xlane.xlu0 %571
      %v573 = vmax.f32 %v428, %v430
      %574 = vmax.xlane.f32.xlu0 %v573
      %v575 = vpop.xlane.xlu0 %574
      %v576 = vmax.f32 %v434, %v436
      %577 = vmax.xlane.f32.xlu0 %v576
      %v578 = vpop.xlane.xlu0 %577
      %v579 = vmax.f32 %v438, %v440
      %580 = vmax.xlane.f32.xlu0 %v579
      %v581 = vpop.xlane.xlu0 %580
      %v582 = vmax.f32 %v444, %v446
      %583 = vmax.xlane.f32.xlu0 %v582
      %v584 = vpop.xlane.xlu0 %583
      %v585 = vmax.f32 %v448, %v450
      %586 = vmax.xlane.f32.xlu0 %v585
      %v587 = vpop.xlane.xlu0 %586
      %v588 = vmax.f32 %v454, %v456
      %589 = vmax.xlane.f32.xlu0 %v588
      %v590 = vpop.xlane.xlu0 %589
      %v591 = vmax.f32 %v458, %v460
      %592 = vmax.xlane.f32.xlu0 %v591
      %v593 = vpop.xlane.xlu0 %592
      %v594 = vmax.f32 %v464, %v466
      %595 = vmax.xlane.f32.xlu0 %v594
      %v596 = vpop.xlane.xlu0 %595
      %v597 = vmax.f32 %v468, %v470
      %598 = vmax.xlane.f32.xlu0 %v597
      %v599 = vpop.xlane.xlu0 %598
      %v600 = vmax.f32 %v474, %v476
      %601 = vmax.xlane.f32.xlu0 %v600
      %v602 = vpop.xlane.xlu0 %601
      %v603 = vmax.f32 %v478, %v480
      %604 = vmax.xlane.f32.xlu0 %v603
      %v605 = vpop.xlane.xlu0 %604
      %v606 = vmax.f32 %v484, %v486
      %607 = vmax.xlane.f32.xlu0 %v606
      %v608 = vpop.xlane.xlu0 %607
      %v609 = vmax.f32 %v488, %v490
      %610 = vmax.xlane.f32.xlu0 %v609
      %v611 = vpop.xlane.xlu0 %610
      %v612 = vmax.f32 %v494, %v496
      %613 = vmax.xlane.f32.xlu0 %v612
      %v614 = vpop.xlane.xlu0 %613
      %v615 = vmax.f32 %v498, %v500
      %616 = vmax.xlane.f32.xlu0 %v615
      %v617 = vpop.xlane.xlu0 %616
      %v618 = vmax.f32 %v504, %v506
      %619 = vmax.xlane.f32.xlu0 %v618
      %v620 = vpop.xlane.xlu0 %619
      %v621 = vmax.f32 %v508, %v510
      %622 = vmax.xlane.f32.xlu0 %v621
      %v623 = vpop.xlane.xlu0 %622
      %v624 = vmax.f32 %v514, %v516
      %625 = vmax.xlane.f32.xlu0 %v624
      %v626 = vpop.xlane.xlu0 %625
      %v627 = vmax.f32 %v518, %v520
      %628 = vmax.xlane.f32.xlu0 %v627
      %v629 = vpop.xlane.xlu0 %628
      %v630 = vmax.f32 %v524, %v526
      %631 = vmax.xlane.f32.xlu0 %v630
      %v632 = vpop.xlane.xlu0 %631
      %v633 = vmax.f32 %v528, %v530
      %634 = vmax.xlane.f32.xlu0 %v633
      %v635 = vpop.xlane.xlu0 %634
      %v636 = vmax.f32 %v534, %v536
      %637 = vmax.xlane.f32.xlu0 %v636
      %v638 = vpop.xlane.xlu0 %637
      %v639 = vmax.f32 %v538, %v540
      %640 = vmax.xlane.f32.xlu0 %v639
      %v641 = vpop.xlane.xlu0 %640
      %v642 = vmax.f32 %v544, %v546
      %643 = vmax.xlane.f32.xlu0 %v642
      %v644 = vpop.xlane.xlu0 %643
      %v645 = vmax.f32 %v548, %v550
      %646 = vmax.xlane.f32.xlu0 %v645
      %v647 = vpop.xlane.xlu0 %646
      %v648 = vsub.f32 %v394, %v554
      %v649 = vsub.f32 %v396, %v554
      %v650 = vsub.f32 %v398, %v557
      %v651 = vsub.f32 %v400, %v557
      %v652 = vsub.f32 %v404, %v560
      %v653 = vsub.f32 %v406, %v560
      %v654 = vsub.f32 %v408, %v563
      %v655 = vsub.f32 %v410, %v563
      %v656 = vsub.f32 %v414, %v566
      %v657 = vsub.f32 %v416, %v566
      %v658 = vsub.f32 %v418, %v569
      %v659 = vsub.f32 %v420, %v569
      %v660 = vsub.f32 %v424, %v572
      %v661 = vsub.f32 %v426, %v572
      %v662 = vsub.f32 %v428, %v575
      %v663 = vsub.f32 %v430, %v575
      %v664 = vsub.f32 %v434, %v578
      %v665 = vsub.f32 %v436, %v578
      %v666 = vsub.f32 %v438, %v581
      %v667 = vsub.f32 %v440, %v581
      %v668 = vsub.f32 %v444, %v584
      %v669 = vsub.f32 %v446, %v584
      %v670 = vsub.f32 %v448, %v587
      %v671 = vsub.f32 %v450, %v587
      %v672 = vsub.f32 %v454, %v590
      %v673 = vsub.f32 %v456, %v590
      %v674 = vsub.f32 %v458, %v593
      %v675 = vsub.f32 %v460, %v593
      %v676 = vsub.f32 %v464, %v596
      %v677 = vsub.f32 %v466, %v596
      %v678 = vsub.f32 %v468, %v599
      %v679 = vsub.f32 %v470, %v599
      %v680 = vsub.f32 %v474, %v602
      %v681 = vsub.f32 %v476, %v602
      %v682 = vsub.f32 %v478, %v605
      %v683 = vsub.f32 %v480, %v605
      %v684 = vsub.f32 %v484, %v608
      %v685 = vsub.f32 %v486, %v608
      %v686 = vsub.f32 %v488, %v611
      %v687 = vsub.f32 %v490, %v611
      %v688 = vsub.f32 %v494, %v614
      %v689 = vsub.f32 %v496, %v614
      %v690 = vsub.f32 %v498, %v617
      %v691 = vsub.f32 %v500, %v617
      %v692 = vsub.f32 %v504, %v620
      %v693 = vsub.f32 %v506, %v620
      %v694 = vsub.f32 %v508, %v623
      %v695 = vsub.f32 %v510, %v623
      %v696 = vsub.f32 %v514, %v626
      %v697 = vsub.f32 %v516, %v626
      %v698 = vsub.f32 %v518, %v629
      %v699 = vsub.f32 %v520, %v629
      %v700 = vsub.f32 %v524, %v632
      %v701 = vsub.f32 %v526, %v632
      %v702 = vsub.f32 %v528, %v635
      %v703 = vsub.f32 %v530, %v635
      %v704 = vsub.f32 %v534, %v638
      %v705 = vsub.f32 %v536, %v638
      %v706 = vsub.f32 %v538, %v641
      %v707 = vsub.f32 %v540, %v641
      %v708 = vsub.f32 %v544, %v644
      %v709 = vsub.f32 %v546, %v644
      %v710 = vsub.f32 %v548, %v647
      %v711 = vsub.f32 %v550, %v647
      %v712 = vmul.f32 %v648, 1.442695
      %v713 = vpow.pop %v712
      %v714 = vmul.f32 %v649, 1.442695
      %v715 = vpow.pop %v714
      %v716 = vmul.f32 %v650, 1.442695
      %v717 = vpow.pop %v716
      %v718 = vmul.f32 %v651, 1.442695
      %v719 = vpow.pop %v718
      %v720 = vmul.f32 %v652, 1.442695
      %v721 = vpow.pop %v720
      %v722 = vmul.f32 %v653, 1.442695
      %v723 = vpow.pop %v722
      %v724 = vmul.f32 %v654, 1.442695
      %v725 = vpow.pop %v724
      %v726 = vmul.f32 %v655, 1.442695
      %v727 = vpow.pop %v726
      %v728 = vmul.f32 %v656, 1.442695
      %v729 = vpow.pop %v728
      %v730 = vmul.f32 %v657, 1.442695
      %v731 = vpow.pop %v730
      %v732 = vmul.f32 %v658, 1.442695
      %v733 = vpow.pop %v732
      %v734 = vmul.f32 %v659, 1.442695
      %v735 = vpow.pop %v734
      %v736 = vmul.f32 %v660, 1.442695
      %v737 = vpow.pop %v736
      %v738 = vmul.f32 %v661, 1.442695
      %v739 = vpow.pop %v738
      %v740 = vmul.f32 %v662, 1.442695
      %v741 = vpow.pop %v740
      %v742 = vmul.f32 %v663, 1.442695
      %v743 = vpow.pop %v742
      %v744 = vmul.f32 %v664, 1.442695
      %v745 = vpow.pop %v744
      %v746 = vmul.f32 %v665, 1.442695
      %v747 = vpow.pop %v746
      %v748 = vmul.f32 %v666, 1.442695
      %v749 = vpow.pop %v748
      %v750 = vmul.f32 %v667, 1.442695
      %v751 = vpow.pop %v750
      %v752 = vmul.f32 %v668, 1.442695
      %v753 = vpow.pop %v752
      %v754 = vmul.f32 %v669, 1.442695
      %v755 = vpow.pop %v754
      %v756 = vmul.f32 %v670, 1.442695
      %v757 = vpow.pop %v756
      %v758 = vmul.f32 %v671, 1.442695
      %v759 = vpow.pop %v758
      %v760 = vmul.f32 %v672, 1.442695
      %v761 = vpow.pop %v760
      %v762 = vmul.f32 %v673, 1.442695
      %v763 = vpow.pop %v762
      %v764 = vmul.f32 %v674, 1.442695
      %v765 = vpow.pop %v764
      %v766 = vmul.f32 %v675, 1.442695
      %v767 = vpow.pop %v766
      %v768 = vmul.f32 %v676, 1.442695
      %v769 = vpow.pop %v768
      %v770 = vmul.f32 %v677, 1.442695
      %v771 = vpow.pop %v770
      %v772 = vmul.f32 %v678, 1.442695
      %v773 = vpow.pop %v772
      %v774 = vmul.f32 %v679, 1.442695
      %v775 = vpow.pop %v774
      %v776 = vmul.f32 %v680, 1.442695
      %v777 = vpow.pop %v776
      %v778 = vmul.f32 %v681, 1.442695
      %v779 = vpow.pop %v778
      %v780 = vmul.f32 %v682, 1.442695
      %v781 = vpow.pop %v780
      %v782 = vmul.f32 %v683, 1.442695
      %v783 = vpow.pop %v782
      %v784 = vmul.f32 %v684, 1.442695
      %v785 = vpow.pop %v784
      %v786 = vmul.f32 %v685, 1.442695
      %v787 = vpow.pop %v786
      %v788 = vmul.f32 %v686, 1.442695
      %v789 = vpow.pop %v788
      %v790 = vmul.f32 %v687, 1.442695
      %v791 = vpow.pop %v790
      %v792 = vmul.f32 %v688, 1.442695
      %v793 = vpow.pop %v792
      %v794 = vmul.f32 %v689, 1.442695
      %v795 = vpow.pop %v794
      %v796 = vmul.f32 %v690, 1.442695
      %v797 = vpow.pop %v796
      %v798 = vmul.f32 %v691, 1.442695
      %v799 = vpow.pop %v798
      %v800 = vmul.f32 %v692, 1.442695
      %v801 = vpow.pop %v800
      %v802 = vmul.f32 %v693, 1.442695
      %v803 = vpow.pop %v802
      %v804 = vmul.f32 %v694, 1.442695
      %v805 = vpow.pop %v804
      %v806 = vmul.f32 %v695, 1.442695
      %v807 = vpow.pop %v806
      %v808 = vmul.f32 %v696, 1.442695
      %v809 = vpow.pop %v808
      %v810 = vmul.f32 %v697, 1.442695
      %v811 = vpow.pop %v810
      %v812 = vmul.f32 %v698, 1.442695
      %v813 = vpow.pop %v812
      %v814 = vmul.f32 %v699, 1.442695
      %v815 = vpow.pop %v814
      %v816 = vmul.f32 %v700, 1.442695
      %v817 = vpow.pop %v816
      %v818 = vmul.f32 %v701, 1.442695
      %v819 = vpow.pop %v818
      %v820 = vmul.f32 %v702, 1.442695
      %v821 = vpow.pop %v820
      %v822 = vmul.f32 %v703, 1.442695
      %v823 = vpow.pop %v822
      %v824 = vmul.f32 %v704, 1.442695
      %v825 = vpow.pop %v824
      %v826 = vmul.f32 %v705, 1.442695
      %v827 = vpow.pop %v826
      %v828 = vmul.f32 %v706, 1.442695
      %v829 = vpow.pop %v828
      %v830 = vmul.f32 %v707, 1.442695
      %v831 = vpow.pop %v830
      %v832 = vmul.f32 %v708, 1.442695
      %v833 = vpow.pop %v832
      %v834 = vmul.f32 %v709, 1.442695
      %v835 = vpow.pop %v834
      %v836 = vmul.f32 %v710, 1.442695
      %v837 = vpow.pop %v836
      %v838 = vmul.f32 %v711, 1.442695
      %v839 = vpow.pop %v838
      %v840 = vadd.f32 %v713, %v715
      %841 = vadd.xlane.f32.xlu0 %v840
      %v842 = vpop.xlane.xlu0 %841
      %v843 = vadd.f32 %v717, %v719
      %844 = vadd.xlane.f32.xlu0 %v843
      %v845 = vpop.xlane.xlu0 %844
      %v846 = vadd.f32 %v721, %v723
      %847 = vadd.xlane.f32.xlu0 %v846
      %v848 = vpop.xlane.xlu0 %847
      %v849 = vadd.f32 %v725, %v727
      %850 = vadd.xlane.f32.xlu0 %v849
      %v851 = vpop.xlane.xlu0 %850
      %v852 = vadd.f32 %v729, %v731
      %853 = vadd.xlane.f32.xlu0 %v852
      %v854 = vpop.xlane.xlu0 %853
      %v855 = vadd.f32 %v733, %v735
      %856 = vadd.xlane.f32.xlu0 %v855
      %v857 = vpop.xlane.xlu0 %856
      %v858 = vadd.f32 %v737, %v739
      %859 = vadd.xlane.f32.xlu0 %v858
      %v860 = vpop.xlane.xlu0 %859
      %v861 = vadd.f32 %v741, %v743
      %862 = vadd.xlane.f32.xlu0 %v861
      %v863 = vpop.xlane.xlu0 %862
      %v864 = vadd.f32 %v745, %v747
      %865 = vadd.xlane.f32.xlu0 %v864
      %v866 = vpop.xlane.xlu0 %865
      %v867 = vadd.f32 %v749, %v751
      %868 = vadd.xlane.f32.xlu0 %v867
      %v869 = vpop.xlane.xlu0 %868
      %v870 = vadd.f32 %v753, %v755
      %871 = vadd.xlane.f32.xlu0 %v870
      %v872 = vpop.xlane.xlu0 %871
      %v873 = vadd.f32 %v757, %v759
      %874 = vadd.xlane.f32.xlu0 %v873
      %v875 = vpop.xlane.xlu0 %874
      %v876 = vadd.f32 %v761, %v763
      %877 = vadd.xlane.f32.xlu0 %v876
      %v878 = vpop.xlane.xlu0 %877
      %v879 = vadd.f32 %v765, %v767
      %880 = vadd.xlane.f32.xlu0 %v879
      %v881 = vpop.xlane.xlu0 %880
      %v882 = vadd.f32 %v769, %v771
      %883 = vadd.xlane.f32.xlu0 %v882
      %v884 = vpop.xlane.xlu0 %883
      %v885 = vadd.f32 %v773, %v775
      %886 = vadd.xlane.f32.xlu0 %v885
      %v887 = vpop.xlane.xlu0 %886
      %v888 = vadd.f32 %v777, %v779
      %889 = vadd.xlane.f32.xlu0 %v888
      %v890 = vpop.xlane.xlu0 %889
      %v891 = vadd.f32 %v781, %v783
      %892 = vadd.xlane.f32.xlu0 %v891
      %v893 = vpop.xlane.xlu0 %892
      %v894 = vadd.f32 %v785, %v787
      %895 = vadd.xlane.f32.xlu0 %v894
      %v896 = vpop.xlane.xlu0 %895
      %v897 = vadd.f32 %v789, %v791
      %898 = vadd.xlane.f32.xlu0 %v897
      %v899 = vpop.xlane.xlu0 %898
      %v900 = vadd.f32 %v793, %v795
      %901 = vadd.xlane.f32.xlu0 %v900
      %v902 = vpop.xlane.xlu0 %901
      %v903 = vadd.f32 %v797, %v799
      %904 = vadd.xlane.f32.xlu0 %v903
      %v905 = vpop.xlane.xlu0 %904
      %v906 = vadd.f32 %v801, %v803
      %907 = vadd.xlane.f32.xlu0 %v906
      %v908 = vpop.xlane.xlu0 %907
      %v909 = vadd.f32 %v805, %v807
      %910 = vadd.xlane.f32.xlu0 %v909
      %v911 = vpop.xlane.xlu0 %910
      %v912 = vadd.f32 %v809, %v811
      %913 = vadd.xlane.f32.xlu0 %v912
      %v914 = vpop.xlane.xlu0 %913
      %v915 = vadd.f32 %v813, %v815
      %916 = vadd.xlane.f32.xlu0 %v915
      %v917 = vpop.xlane.xlu0 %916
      %v918 = vadd.f32 %v817, %v819
      %919 = vadd.xlane.f32.xlu0 %v918
      %v920 = vpop.xlane.xlu0 %919
      %v921 = vadd.f32 %v821, %v823
      %922 = vadd.xlane.f32.xlu0 %v921
      %v923 = vpop.xlane.xlu0 %922
      %v924 = vadd.f32 %v825, %v827
      %925 = vadd.xlane.f32.xlu0 %v924
      %v926 = vpop.xlane.xlu0 %925
      %v927 = vadd.f32 %v829, %v831
      %928 = vadd.xlane.f32.xlu0 %v927
      %v929 = vpop.xlane.xlu0 %928
      %v930 = vadd.f32 %v833, %v835
      %931 = vadd.xlane.f32.xlu0 %v930
      %v932 = vpop.xlane.xlu0 %931
      %v933 = vadd.f32 %v837, %v839
      %934 = vadd.xlane.f32.xlu0 %v933
      %v935 = vpop.xlane.xlu0 %934
      %v936 = vrcp.pop %v842
      %v937 = vrcp.pop %v845
      %v938 = vrcp.pop %v848
      %v939 = vrcp.pop %v851
      %v940 = vrcp.pop %v854
      %v941 = vrcp.pop %v857
      %v942 = vrcp.pop %v860
      %v943 = vrcp.pop %v863
      %v944 = vrcp.pop %v866
      %v945 = vrcp.pop %v869
      %v946 = vrcp.pop %v872
      %v947 = vrcp.pop %v875
      %v948 = vrcp.pop %v878
      %v949 = vrcp.pop %v881
      %v950 = vrcp.pop %v884
      %v951 = vrcp.pop %v887
      %v952 = vrcp.pop %v890
      %v953 = vrcp.pop %v893
      %v954 = vrcp.pop %v896
      %v955 = vrcp.pop %v899
      %v956 = vrcp.pop %v902
      %v957 = vrcp.pop %v905
      %v958 = vrcp.pop %v908
      %v959 = vrcp.pop %v911
      %v960 = vrcp.pop %v914
      %v961 = vrcp.pop %v917
      %v962 = vrcp.pop %v920
      %v963 = vrcp.pop %v923
      %v964 = vrcp.pop %v926
      %v965 = vrcp.pop %v929
      %v966 = vrcp.pop %v932
      %v967 = vrcp.pop %v935
      %v968 = vmul.f32 %v713, %v936
      %v969 = vmul.f32 %v715, %v936
      %v970 = vmul.f32 %v717, %v937
      %v971 = vmul.f32 %v719, %v937
      %v972 = vmul.f32 %v721, %v938
      %v973 = vmul.f32 %v723, %v938
      %v974 = vmul.f32 %v725, %v939
      %v975 = vmul.f32 %v727, %v939
      %v976 = vmul.f32 %v729, %v940
      %v977 = vmul.f32 %v731, %v940
      %v978 = vmul.f32 %v733, %v941
      %v979 = vmul.f32 %v735, %v941
      %v980 = vmul.f32 %v737, %v942
      %v981 = vmul.f32 %v739, %v942
      %v982 = vmul.f32 %v741, %v943
      %v983 = vmul.f32 %v743, %v943
      %v984 = vmul.f32 %v745, %v944
      %v985 = vmul.f32 %v747, %v944
      %v986 = vmul.f32 %v749, %v945
      %v987 = vmul.f32 %v751, %v945
      %v988 = vmul.f32 %v753, %v946
      %v989 = vmul.f32 %v755, %v946
      %v990 = vmul.f32 %v757, %v947
      %v991 = vmul.f32 %v759, %v947
      %v992 = vmul.f32 %v761, %v948
      %v993 = vmul.f32 %v763, %v948
      %v994 = vmul.f32 %v765, %v949
      %v995 = vmul.f32 %v767, %v949
      %v996 = vmul.f32 %v769, %v950
      %v997 = vmul.f32 %v771, %v950
      %v998 = vmul.f32 %v773, %v951
      %v999 = vmul.f32 %v775, %v951
      %v1000 = vmul.f32 %v777, %v952
      %v1001 = vmul.f32 %v779, %v952
      %v1002 = vmul.f32 %v781, %v953
      %v1003 = vmul.f32 %v783, %v953
      %v1004 = vmul.f32 %v785, %v954
      %v1005 = vmul.f32 %v787, %v954
      %v1006 = vmul.f32 %v789, %v955
      %v1007 = vmul.f32 %v791, %v955
      %v1008 = vmul.f32 %v793, %v956
      %v1009 = vmul.f32 %v795, %v956
      %v1010 = vmul.f32 %v797, %v957
      %v1011 = vmul.f32 %v799, %v957
      %v1012 = vmul.f32 %v801, %v958
      %v1013 = vmul.f32 %v803, %v958
      %v1014 = vmul.f32 %v805, %v959
      %v1015 = vmul.f32 %v807, %v959
      %v1016 = vmul.f32 %v809, %v960
      %v1017 = vmul.f32 %v811, %v960
      %v1018 = vmul.f32 %v813, %v961
      %v1019 = vmul.f32 %v815, %v961
      %v1020 = vmul.f32 %v817, %v962
      %v1021 = vmul.f32 %v819, %v962
      %v1022 = vmul.f32 %v821, %v963
      %v1023 = vmul.f32 %v823, %v963
      %v1024 = vmul.f32 %v825, %v964
      %v1025 = vmul.f32 %v827, %v964
      %v1026 = vmul.f32 %v829, %v965
      %v1027 = vmul.f32 %v831, %v965
      %v1028 = vmul.f32 %v833, %v966
      %v1029 = vmul.f32 %v835, %v966
      %v1030 = vmul.f32 %v837, %v967
      %v1031 = vmul.f32 %v839, %v967
      %v1032 = vpack.c.bf16 %v970, %v968
      %v1033 = vpack.c.bf16 %v971, %v969
      %v1034 = vpack.c.bf16 %v974, %v972
      %v1035 = vpack.c.bf16 %v975, %v973
      %v1036 = vpack.c.bf16 %v978, %v976
      %v1037 = vpack.c.bf16 %v979, %v977
      %v1038 = vpack.c.bf16 %v982, %v980
      %v1039 = vpack.c.bf16 %v983, %v981
      %v1040 = vpack.c.bf16 %v986, %v984
      %v1041 = vpack.c.bf16 %v987, %v985
      %v1042 = vpack.c.bf16 %v990, %v988
      %v1043 = vpack.c.bf16 %v991, %v989
      %v1044 = vpack.c.bf16 %v994, %v992
      %v1045 = vpack.c.bf16 %v995, %v993
      %v1046 = vpack.c.bf16 %v998, %v996
      %v1047 = vpack.c.bf16 %v999, %v997
      %v1048 = vpack.c.bf16 %v1002, %v1000
      %v1049 = vpack.c.bf16 %v1003, %v1001
      %v1050 = vpack.c.bf16 %v1006, %v1004
      %v1051 = vpack.c.bf16 %v1007, %v1005
      %v1052 = vpack.c.bf16 %v1010, %v1008
      %v1053 = vpack.c.bf16 %v1011, %v1009
      %v1054 = vpack.c.bf16 %v1014, %v1012
      %v1055 = vpack.c.bf16 %v1015, %v1013
      %v1056 = vpack.c.bf16 %v1018, %v1016
      %v1057 = vpack.c.bf16 %v1019, %v1017
      %v1058 = vpack.c.bf16 %v1022, %v1020
      %v1059 = vpack.c.bf16 %v1023, %v1021
      %v1060 = vpack.c.bf16 %v1026, %v1024
      %v1061 = vpack.c.bf16 %v1027, %v1025
      %v1062 = vpack.c.bf16 %v1030, %v1028
      %v1063 = vpack.c.bf16 %v1031, %v1029
      %1064 = vrot.lane.b32.xlu0 %v214, 96
      %v1065 = vpop.permute.xlu0 %1064
      %1066 = vrot.lane.b32.xlu0 %v215, 96
      %v1067 = vpop.permute.xlu0 %1066
      %1068 = vrot.lane.b32.xlu0 %v216, 96
      %v1069 = vpop.permute.xlu0 %1068
      %1070 = vrot.lane.b32.xlu0 %v217, 96
      %v1071 = vpop.permute.xlu0 %1070
      %1072 = vrot.lane.b32.xlu0 %v218, 96
      %v1073 = vpop.permute.xlu0 %1072
      %1074 = vrot.lane.b32.xlu0 %v219, 96
      %v1075 = vpop.permute.xlu0 %1074
      %1076 = vrot.lane.b32.xlu0 %v220, 96
      %v1077 = vpop.permute.xlu0 %1076
      %1078 = vrot.lane.b32.xlu0 %v221, 96
      %v1079 = vpop.permute.xlu0 %1078
      %1080 = vrot.lane.b32.xlu0 %v222, 96
      %v1081 = vpop.permute.xlu0 %1080
      %1082 = vrot.lane.b32.xlu0 %v223, 96
      %v1083 = vpop.permute.xlu0 %1082
      %1084 = vrot.lane.b32.xlu0 %v224, 96
      %v1085 = vpop.permute.xlu0 %1084
      %1086 = vrot.lane.b32.xlu0 %v225, 96
      %v1087 = vpop.permute.xlu0 %1086
      %1088 = vrot.lane.b32.xlu0 %v226, 96
      %v1089 = vpop.permute.xlu0 %1088
      %1090 = vrot.lane.b32.xlu0 %v227, 96
      %v1091 = vpop.permute.xlu0 %1090
      %1092 = vrot.lane.b32.xlu0 %v228, 96
      %v1093 = vpop.permute.xlu0 %1092
      %1094 = vrot.lane.b32.xlu0 %v229, 96
      %v1095 = vpop.permute.xlu0 %1094
      %1112 = vmatprep.subr.bf16.mxu0 0
      %1113 = vmatpush1.bf16.msra.mxu0 %v1065
      %1114 = vmatprep.subr.bf16.mxu0 0
      %1115 = vmatpush1.bf16.msra.mxu0 %v1067
      %1116 = vmatprep.subr.bf16.mxu0 0
      %1117 = vmatpush1.bf16.msra.mxu0 %v1069
      %1118 = vmatprep.subr.bf16.mxu0 0
      %1119 = vmatpush1.bf16.msra.mxu0 %v1071
      %1120 = vmatprep.subr.bf16.mxu0 0
      %1121 = vmatpush1.bf16.msra.mxu0 %v1073
      %1122 = vmatprep.subr.bf16.mxu0 0
      %1123 = vmatpush1.bf16.msra.mxu0 %v1075
      %1124 = vmatprep.subr.bf16.mxu0 0
      %1125 = vmatpush1.bf16.msra.mxu0 %v1077
      %1126 = vmatprep.subr.bf16.mxu0 0
      %1127 = vmatpush1.bf16.msra.mxu0 %v1079
      %1128 = vmatprep.subr.bf16.mxu0 0
      %1129 = vmatpush1.bf16.msra.mxu0 %v1081
      %1130 = vmatprep.subr.bf16.mxu0 0
      %1131 = vmatpush1.bf16.msra.mxu0 %v1083
      %1132 = vmatprep.subr.bf16.mxu0 0
      %1133 = vmatpush1.bf16.msra.mxu0 %v1085
      %1134 = vmatprep.subr.bf16.mxu0 0
      %1135 = vmatpush1.bf16.msra.mxu0 %v1087
      %1136 = vmatprep.subr.bf16.mxu0 0
      %1137 = vmatpush1.bf16.msra.mxu0 %v1089
      %1138 = vmatprep.subr.bf16.mxu0 0
      %1139 = vmatpush1.bf16.msra.mxu0 %v1091
      %1140 = vmatprep.subr.bf16.mxu0 0
      %1141 = vmatpush1.bf16.msra.mxu0 %v1093
      %1142 = vmatprep.subr.bf16.mxu0 0
      %1143 = vmatpush1.bf16.msra.mxu0 %v1095
      %1144 = vmatprep.mubr.bf16.mxu0 %v1033
      %1145 = vmatmul.mubr.bf16.gmra.mrb[0].mxu0 %v1032
      %v1146 = vpop.f32.mrb[0].mxu0
      %v1147 = vadd.f32 0.0, %v1146
      %v1148 = vpop.f32.mrb[0].mxu0
      %v1149 = vpop.f32.mrb[0].mxu0
      %v1150 = vadd.f32 0.0, %v1149
      %v1151 = vpop.f32.mrb[0].mxu0
      %1152 = vmatprep.mubr.bf16.mxu0 %v1035
      %1153 = vmatmul.mubr.bf16.gmra.mrb[0].mxu0 %v1034
      %v1154 = vpop.f32.mrb[0].mxu0
      %v1155 = vadd.f32 0.0, %v1154
      %v1156 = vpop.f32.mrb[0].mxu0
      %v1157 = vpop.f32.mrb[0].mxu0
      %v1158 = vadd.f32 0.0, %v1157
      %v1159 = vpop.f32.mrb[0].mxu0
      %1160 = vmatprep.mubr.bf16.mxu0 %v1037
      %1161 = vmatmul.mubr.bf16.gmra.mrb[0].mxu0 %v1036
      %v1162 = vpop.f32.mrb[0].mxu0
      %v1163 = vadd.f32 0.0, %v1162
      %v1164 = vpop.f32.mrb[0].mxu0
      %v1165 = vpop.f32.mrb[0].mxu0
      %v1166 = vadd.f32 0.0, %v1165
      %v1167 = vpop.f32.mrb[0].mxu0
      %1168 = vmatprep.mubr.bf16.mxu0 %v1039
      %1169 = vmatmul.mubr.bf16.gmra.mrb[0].mxu0 %v1038
      %v1170 = vpop.f32.mrb[0].mxu0
      %v1171 = vadd.f32 0.0, %v1170
      %v1172 = vpop.f32.mrb[0].mxu0
      %v1173 = vpop.f32.mrb[0].mxu0
      %v1174 = vadd.f32 0.0, %v1173
      %v1175 = vpop.f32.mrb[0].mxu0
      %1176 = vmatprep.mubr.bf16.mxu0 %v1041
      %1177 = vmatmul.mubr.bf16.gmra.mrb[0].mxu0 %v1040
      %v1178 = vpop.f32.mrb[0].mxu0
      %v1179 = vadd.f32 0.0, %v1178
      %v1180 = vpop.f32.mrb[0].mxu0
      %v1181 = vpop.f32.mrb[0].mxu0
      %v1182 = vadd.f32 0.0, %v1181
      %v1183 = vpop.f32.mrb[0].mxu0
      %1184 = vmatprep.mubr.bf16.mxu0 %v1043
      %1185 = vmatmul.mubr.bf16.gmra.mrb[0].mxu0 %v1042
      %v1186 = vpop.f32.mrb[0].mxu0
      %v1187 = vadd.f32 0.0, %v1186
      %v1188 = vpop.f32.mrb[0].mxu0
      %v1189 = vpop.f32.mrb[0].mxu0
      %v1190 = vadd.f32 0.0, %v1189
      %v1191 = vpop.f32.mrb[0].mxu0
      %1192 = vmatprep.mubr.bf16.mxu0 %v1045
      %1193 = vmatmul.mubr.bf16.gmra.mrb[0].mxu0 %v1044
      %v1194 = vpop.f32.mrb[0].mxu0
      %v1195 = vadd.f32 0.0, %v1194
      %v1196 = vpop.f32.mrb[0].mxu0
      %v1197 = vpop.f32.mrb[0].mxu0
      %v1198 = vadd.f32 0.0, %v1197
      %v1199 = vpop.f32.mrb[0].mxu0
      %1200 = vmatprep.mubr.bf16.mxu0 %v1047
      %1201 = vmatmul.mubr.bf16.gmra.mrb[0].mxu0 %v1046
      %v1202 = vpop.f32.mrb[0].mxu0
      %v1203 = vadd.f32 0.0, %v1202
      %v1204 = vpop.f32.mrb[0].mxu0
      %v1205 = vpop.f32.mrb[0].mxu0
      %v1206 = vadd.f32 0.0, %v1205
      %v1207 = vpop.f32.mrb[0].mxu0
      %1208 = vmatprep.mubr.bf16.mxu0 %v1049
      %1209 = vmatmul.mubr.bf16.gmra.mrb[0].mxu0 %v1048
      %v1210 = vpop.f32.mrb[0].mxu0
      %v1211 = vadd.f32 0.0, %v1210
      %v1212 = vpop.f32.mrb[0].mxu0
      %v1213 = vpop.f32.mrb[0].mxu0
      %v1214 = vadd.f32 0.0, %v1213
      %v1215 = vpop.f32.mrb[0].mxu0
      %1216 = vmatprep.mubr.bf16.mxu0 %v1051
      %1217 = vmatmul.mubr.bf16.gmra.mrb[0].mxu0 %v1050
      %v1218 = vpop.f32.mrb[0].mxu0
      %v1219 = vadd.f32 0.0, %v1218
      %v1220 = vpop.f32.mrb[0].mxu0
      %v1221 = vpop.f32.mrb[0].mxu0
      %v1222 = vadd.f32 0.0, %v1221
      %v1223 = vpop.f32.mrb[0].mxu0
      %1224 = vmatprep.mubr.bf16.mxu0 %v1053
      %1225 = vmatmul.mubr.bf16.gmra.mrb[0].mxu0 %v1052
      %v1226 = vpop.f32.mrb[0].mxu0
      %v1227 = vadd.f32 0.0, %v1226
      %v1228 = vpop.f32.mrb[0].mxu0
      %v1229 = vpop.f32.mrb[0].mxu0
      %v1230 = vadd.f32 0.0, %v1229
      %v1231 = vpop.f32.mrb[0].mxu0
      %1232 = vmatprep.mubr.bf16.mxu0 %v1055
      %1233 = vmatmul.mubr.bf16.gmra.mrb[0].mxu0 %v1054
      %v1234 = vpop.f32.mrb[0].mxu0
      %v1235 = vadd.f32 0.0, %v1234
      %v1236 = vpop.f32.mrb[0].mxu0
      %v1237 = vpop.f32.mrb[0].mxu0
      %v1238 = vadd.f32 0.0, %v1237
      %v1239 = vpop.f32.mrb[0].mxu0
      %1240 = vmatprep.mubr.bf16.mxu0 %v1057
      %1241 = vmatmul.mubr.bf16.gmra.mrb[0].mxu0 %v1056
      %v1242 = vpop.f32.mrb[0].mxu0
      %v1243 = vadd.f32 0.0, %v1242
      %v1244 = vpop.f32.mrb[0].mxu0
      %v1245 = vpop.f32.mrb[0].mxu0
      %v1246 = vadd.f32 0.0, %v1245
      %v1247 = vpop.f32.mrb[0].mxu0
      %1248 = vmatprep.mubr.bf16.mxu0 %v1059
      %1249 = vmatmul.mubr.bf16.gmra.mrb[0].mxu0 %v1058
      %v1250 = vpop.f32.mrb[0].mxu0
      %v1251 = vadd.f32 0.0, %v1250
      %v1252 = vpop.f32.mrb[0].mxu0
      %v1253 = vpop.f32.mrb[0].mxu0
      %v1254 = vadd.f32 0.0, %v1253
      %v1255 = vpop.f32.mrb[0].mxu0
      %1256 = vmatprep.mubr.bf16.mxu0 %v1061
      %1257 = vmatmul.mubr.bf16.gmra.mrb[0].mxu0 %v1060
      %v1258 = vpop.f32.mrb[0].mxu0
      %v1259 = vadd.f32 0.0, %v1258
      %v1260 = vpop.f32.mrb[0].mxu0
      %v1261 = vpop.f32.mrb[0].mxu0
      %v1262 = vadd.f32 0.0, %v1261
      %v1263 = vpop.f32.mrb[0].mxu0
      %1264 = vmatprep.mubr.bf16.mxu0 %v1063
      %1265 = vmatmul.mubr.bf16.gmra.mrb[0].mxu0 %v1062
      %v1266 = vpop.f32.mrb[0].mxu0
      %v1267 = vadd.f32 0.0, %v1266
      %v1268 = vpop.f32.mrb[0].mxu0
      %v1269 = vpop.f32.mrb[0].mxu0
      %v1270 = vadd.f32 0.0, %v1269
      %v1271 = vpop.f32.mrb[0].mxu0
      %1272 = vdwg.mxu0
      %1273 = vrot.lane.b32.xlu0 %v214, 120
      %v1274 = vpop.permute.xlu0 %1273
      %1275 = vrot.lane.b32.xlu0 %v215, 120
      %v1276 = vpop.permute.xlu0 %1275
      %1277 = vrot.lane.b32.xlu0 %v216, 120
      %v1278 = vpop.permute.xlu0 %1277
      %1279 = vrot.lane.b32.xlu0 %v217, 120
      %v1280 = vpop.permute.xlu0 %1279
      %1281 = vrot.lane.b32.xlu0 %v218, 120
      %v1282 = vpop.permute.xlu0 %1281
      %1283 = vrot.lane.b32.xlu0 %v219, 120
      %v1284 = vpop.permute.xlu0 %1283
      %1285 = vrot.lane.b32.xlu0 %v220, 120
      %v1286 = vpop.permute.xlu0 %1285
      %1287 = vrot.lane.b32.xlu0 %v221, 120
      %v1288 = vpop.permute.xlu0 %1287
      %1289 = vrot.lane.b32.xlu0 %v222, 120
      %v1290 = vpop.permute.xlu0 %1289
      %1291 = vrot.lane.b32.xlu0 %v223, 120
      %v1292 = vpop.permute.xlu0 %1291
      %1293 = vrot.lane.b32.xlu0 %v224, 120
      %v1294 = vpop.permute.xlu0 %1293
      %1295 = vrot.lane.b32.xlu0 %v225, 120
      %v1296 = vpop.permute.xlu0 %1295
      %1297 = vrot.lane.b32.xlu0 %v226, 120
      %v1298 = vpop.permute.xlu0 %1297
      %1299 = vrot.lane.b32.xlu0 %v227, 120
      %v1300 = vpop.permute.xlu0 %1299
      %1301 = vrot.lane.b32.xlu0 %v228, 120
      %v1302 = vpop.permute.xlu0 %1301
      %1303 = vrot.lane.b32.xlu0 %v229, 120
      %v1304 = vpop.permute.xlu0 %1303
      %1305 = vrot.lane.b32.xlu0 %v214, 104
      %v1306 = vpop.permute.xlu0 %1305
      %1307 = vrot.lane.b32.xlu0 %v215, 104
      %v1308 = vpop.permute.xlu0 %1307
      %1309 = vrot.lane.b32.xlu0 %v216, 104
      %v1310 = vpop.permute.xlu0 %1309
      %1311 = vrot.lane.b32.xlu0 %v217, 104
      %v1312 = vpop.permute.xlu0 %1311
      %1313 = vrot.lane.b32.xlu0 %v218, 104
      %v1314 = vpop.permute.xlu0 %1313
      %1315 = vrot.lane.b32.xlu0 %v219, 104
      %v1316 = vpop.permute.xlu0 %1315
      %1317 = vrot.lane.b32.xlu0 %v220, 104
      %v1318 = vpop.permute.xlu0 %1317
      %1319 = vrot.lane.b32.xlu0 %v221, 104
      %v1320 = vpop.permute.xlu0 %1319
      %1321 = vrot.lane.b32.xlu0 %v222, 104
      %v1322 = vpop.permute.xlu0 %1321
      %1323 = vrot.lane.b32.xlu0 %v223, 104
      %v1324 = vpop.permute.xlu0 %1323
      %1325 = vrot.lane.b32.xlu0 %v224, 104
      %v1326 = vpop.permute.xlu0 %1325
      %1327 = vrot.lane.b32.xlu0 %v225, 104
      %v1328 = vpop.permute.xlu0 %1327
      %1329 = vrot.lane.b32.xlu0 %v226, 104
      %v1330 = vpop.permute.xlu0 %1329
      %1331 = vrot.lane.b32.xlu0 %v227, 104
      %v1332 = vpop.permute.xlu0 %1331
      %1333 = vrot.lane.b32.xlu0 %v228, 104
      %v1334 = vpop.permute.xlu0 %1333
      %1335 = vrot.lane.b32.xlu0 %v229, 104
      %v1336 = vpop.permute.xlu0 %1335
      %v1338 = vsel %vm262, %v1274, 0
      %v1341 = vsel %vm262, %v1276, 0
      %v1344 = vsel %vm262, %v1278, 0
      %v1347 = vsel %vm262, %v1280, 0
      %v1350 = vsel %vm262, %v1282, 0
      %v1353 = vsel %vm262, %v1284, 0
      %v1356 = vsel %vm262, %v1286, 0
      %v1359 = vsel %vm262, %v1288, 0
      %v1362 = vsel %vm262, %v1290, 0
      %v1365 = vsel %vm262, %v1292, 0
      %v1368 = vsel %vm262, %v1294, 0
      %v1371 = vsel %vm262, %v1296, 0
      %v1374 = vsel %vm262, %v1298, 0
      %v1377 = vsel %vm262, %v1300, 0
      %v1380 = vsel %vm262, %v1302, 0
      %v1383 = vsel %vm262, %v1304, 0
      %v1386 = vsel %vm262, %v1306, 0
      %v1389 = vsel %vm262, %v1308, 0
      %v1392 = vsel %vm262, %v1310, 0
      %v1395 = vsel %vm262, %v1312, 0
      %v1398 = vsel %vm262, %v1314, 0
      %v1401 = vsel %vm262, %v1316, 0
      %v1404 = vsel %vm262, %v1318, 0
      %v1407 = vsel %vm262, %v1320, 0
      %v1410 = vsel %vm262, %v1322, 0
      %v1413 = vsel %vm262, %v1324, 0
      %v1416 = vsel %vm262, %v1326, 0
      %v1419 = vsel %vm262, %v1328, 0
      %v1422 = vsel %vm262, %v1330, 0
      %v1425 = vsel %vm262, %v1332, 0
      %v1428 = vsel %vm262, %v1334, 0
      %v1431 = vsel %vm262, %v1336, 0
      %1433 = vmatprep.subr.bf16.mxu0 0
      %1434 = vmatpush1.bf16.xpose.msra.mxu0 %v1386
      %1435 = vmatprep.subr.bf16.mxu0 0
      %1436 = vmatpush1.bf16.xpose.msra.mxu0 %v1389
      %1437 = vmatprep.subr.bf16.mxu0 0
      %1438 = vmatpush1.bf16.xpose.msra.mxu0 %v1392
      %1439 = vmatprep.subr.bf16.mxu0 0
      %1440 = vmatpush1.bf16.xpose.msra.mxu0 %v1395
      %1441 = vmatprep.subr.bf16.mxu0 0
      %1442 = vmatpush1.bf16.xpose.msra.mxu0 %v1398
      %1443 = vmatprep.subr.bf16.mxu0 0
      %1444 = vmatpush1.bf16.xpose.msra.mxu0 %v1401
      %1445 = vmatprep.subr.bf16.mxu0 0
      %1446 = vmatpush1.bf16.xpose.msra.mxu0 %v1404
      %1447 = vmatprep.subr.bf16.mxu0 0
      %1448 = vmatpush1.bf16.xpose.msra.mxu0 %v1407
      %1449 = vmatprep.subr.bf16.mxu0 0
      %1450 = vmatpush1.bf16.xpose.msra.mxu0 %v1410
      %1451 = vmatprep.subr.bf16.mxu0 0
      %1452 = vmatpush1.bf16.xpose.msra.mxu0 %v1413
      %1453 = vmatprep.subr.bf16.mxu0 0
      %1454 = vmatpush1.bf16.xpose.msra.mxu0 %v1416
      %1455 = vmatprep.subr.bf16.mxu0 0
      %1456 = vmatpush1.bf16.xpose.msra.mxu0 %v1419
      %1457 = vmatprep.subr.bf16.mxu0 0
      %1458 = vmatpush1.bf16.xpose.msra.mxu0 %v1422
      %1459 = vmatprep.subr.bf16.mxu0 0
      %1460 = vmatpush1.bf16.xpose.msra.mxu0 %v1425
      %1461 = vmatprep.subr.bf16.mxu0 0
      %1462 = vmatpush1.bf16.xpose.msra.mxu0 %v1428
      %1463 = vmatprep.subr.bf16.mxu0 0
      %1464 = vmatpush1.bf16.xpose.msra.mxu0 %v1431
      %1465 = vmatprep.mubr.bf16.mxu0 0
      %1466 = vmatmul.mubr.bf16.gmra.mrb[0].mxu0 %v1338
      %v1467 = vpop.f32.mrb[0].mxu0
      %v1468 = vadd.f32 0.0, %v1467
      %v1469 = vpop.f32.mrb[0].mxu0
      %v1470 = vadd.f32 0.0, %v1469
      %v1471 = vpop.f32.mrb[0].mxu0
      %v1472 = vadd.f32 0.0, %v1471
      %v1473 = vpop.f32.mrb[0].mxu0
      %v1474 = vadd.f32 0.0, %v1473
      %1475 = vmatprep.mubr.bf16.mxu0 0
      %1476 = vmatmul.mubr.bf16.gmra.mrb[0].mxu0 %v1341
      %v1477 = vpop.f32.mrb[0].mxu0
      %v1478 = vadd.f32 0.0, %v1477
      %v1479 = vpop.f32.mrb[0].mxu0
      %v1480 = vadd.f32 0.0, %v1479
      %v1481 = vpop.f32.mrb[0].mxu0
      %v1482 = vadd.f32 0.0, %v1481
      %v1483 = vpop.f32.mrb[0].mxu0
      %v1484 = vadd.f32 0.0, %v1483
      %1485 = vmatprep.mubr.bf16.mxu0 0
      %1486 = vmatmul.mubr.bf16.gmra.mrb[0].mxu0 %v1344
      %v1487 = vpop.f32.mrb[0].mxu0
      %v1488 = vadd.f32 0.0, %v1487
      %v1489 = vpop.f32.mrb[0].mxu0
      %v1490 = vadd.f32 0.0, %v1489
      %v1491 = vpop.f32.mrb[0].mxu0
      %v1492 = vadd.f32 0.0, %v1491
      %v1493 = vpop.f32.mrb[0].mxu0
      %v1494 = vadd.f32 0.0, %v1493
      %1495 = vmatprep.mubr.bf16.mxu0 0
      %1496 = vmatmul.mubr.bf16.gmra.mrb[0].mxu0 %v1347
      %v1497 = vpop.f32.mrb[0].mxu0
      %v1498 = vadd.f32 0.0, %v1497
      %v1499 = vpop.f32.mrb[0].mxu0
      %v1500 = vadd.f32 0.0, %v1499
      %v1501 = vpop.f32.mrb[0].mxu0
      %v1502 = vadd.f32 0.0, %v1501
      %v1503 = vpop.f32.mrb[0].mxu0
      %v1504 = vadd.f32 0.0, %v1503
      %1505 = vmatprep.mubr.bf16.mxu0 0
      %1506 = vmatmul.mubr.bf16.gmra.mrb[0].mxu0 %v1350
      %v1507 = vpop.f32.mrb[0].mxu0
      %v1508 = vadd.f32 0.0, %v1507
      %v1509 = vpop.f32.mrb[0].mxu0
      %v1510 = vadd.f32 0.0, %v1509
      %v1511 = vpop.f32.mrb[0].mxu0
      %v1512 = vadd.f32 0.0, %v1511
      %v1513 = vpop.f32.mrb[0].mxu0
      %v1514 = vadd.f32 0.0, %v1513
      %1515 = vmatprep.mubr.bf16.mxu0 0
      %1516 = vmatmul.mubr.bf16.gmra.mrb[0].mxu0 %v1353
      %v1517 = vpop.f32.mrb[0].mxu0
      %v1518 = vadd.f32 0.0, %v1517
      %v1519 = vpop.f32.mrb[0].mxu0
      %v1520 = vadd.f32 0.0, %v1519
      %v1521 = vpop.f32.mrb[0].mxu0
      %v1522 = vadd.f32 0.0, %v1521
      %v1523 = vpop.f32.mrb[0].mxu0
      %v1524 = vadd.f32 0.0, %v1523
      %1525 = vmatprep.mubr.bf16.mxu0 0
      %1526 = vmatmul.mubr.bf16.gmra.mrb[0].mxu0 %v1356
      %v1527 = vpop.f32.mrb[0].mxu0
      %v1528 = vadd.f32 0.0, %v1527
      %v1529 = vpop.f32.mrb[0].mxu0
      %v1530 = vadd.f32 0.0, %v1529
      %v1531 = vpop.f32.mrb[0].mxu0
      %v1532 = vadd.f32 0.0, %v1531
      %v1533 = vpop.f32.mrb[0].mxu0
      %v1534 = vadd.f32 0.0, %v1533
      %1535 = vmatprep.mubr.bf16.mxu0 0
      %1536 = vmatmul.mubr.bf16.gmra.mrb[0].mxu0 %v1359
      %v1537 = vpop.f32.mrb[0].mxu0
      %v1538 = vadd.f32 0.0, %v1537
      %v1539 = vpop.f32.mrb[0].mxu0
      %v1540 = vadd.f32 0.0, %v1539
      %v1541 = vpop.f32.mrb[0].mxu0
      %v1542 = vadd.f32 0.0, %v1541
      %v1543 = vpop.f32.mrb[0].mxu0
      %v1544 = vadd.f32 0.0, %v1543
      %1545 = vmatprep.mubr.bf16.mxu0 0
      %1546 = vmatmul.mubr.bf16.gmra.mrb[0].mxu0 %v1362
      %v1547 = vpop.f32.mrb[0].mxu0
      %v1548 = vadd.f32 0.0, %v1547
      %v1549 = vpop.f32.mrb[0].mxu0
      %v1550 = vadd.f32 0.0, %v1549
      %v1551 = vpop.f32.mrb[0].mxu0
      %v1552 = vadd.f32 0.0, %v1551
      %v1553 = vpop.f32.mrb[0].mxu0
      %v1554 = vadd.f32 0.0, %v1553
      %1555 = vmatprep.mubr.bf16.mxu0 0
      %1556 = vmatmul.mubr.bf16.gmra.mrb[0].mxu0 %v1365
      %v1557 = vpop.f32.mrb[0].mxu0
      %v1558 = vadd.f32 0.0, %v1557
      %v1559 = vpop.f32.mrb[0].mxu0
      %v1560 = vadd.f32 0.0, %v1559
      %v1561 = vpop.f32.mrb[0].mxu0
      %v1562 = vadd.f32 0.0, %v1561
      %v1563 = vpop.f32.mrb[0].mxu0
      %v1564 = vadd.f32 0.0, %v1563
      %1565 = vmatprep.mubr.bf16.mxu0 0
      %1566 = vmatmul.mubr.bf16.gmra.mrb[0].mxu0 %v1368
      %v1567 = vpop.f32.mrb[0].mxu0
      %v1568 = vadd.f32 0.0, %v1567
      %v1569 = vpop.f32.mrb[0].mxu0
      %v1570 = vadd.f32 0.0, %v1569
      %v1571 = vpop.f32.mrb[0].mxu0
      %v1572 = vadd.f32 0.0, %v1571
      %v1573 = vpop.f32.mrb[0].mxu0
      %v1574 = vadd.f32 0.0, %v1573
      %1575 = vmatprep.mubr.bf16.mxu0 0
      %1576 = vmatmul.mubr.bf16.gmra.mrb[0].mxu0 %v1371
      %v1577 = vpop.f32.mrb[0].mxu0
      %v1578 = vadd.f32 0.0, %v1577
      %v1579 = vpop.f32.mrb[0].mxu0
      %v1580 = vadd.f32 0.0, %v1579
      %v1581 = vpop.f32.mrb[0].mxu0
      %v1582 = vadd.f32 0.0, %v1581
      %v1583 = vpop.f32.mrb[0].mxu0
      %v1584 = vadd.f32 0.0, %v1583
      %1585 = vmatprep.mubr.bf16.mxu0 0
      %1586 = vmatmul.mubr.bf16.gmra.mrb[0].mxu0 %v1374
      %v1587 = vpop.f32.mrb[0].mxu0
      %v1588 = vadd.f32 0.0, %v1587
      %v1589 = vpop.f32.mrb[0].mxu0
      %v1590 = vadd.f32 0.0, %v1589
      %v1591 = vpop.f32.mrb[0].mxu0
      %v1592 = vadd.f32 0.0, %v1591
      %v1593 = vpop.f32.mrb[0].mxu0
      %v1594 = vadd.f32 0.0, %v1593
      %1595 = vmatprep.mubr.bf16.mxu0 0
      %1596 = vmatmul.mubr.bf16.gmra.mrb[0].mxu0 %v1377
      %v1597 = vpop.f32.mrb[0].mxu0
      %v1598 = vadd.f32 0.0, %v1597
      %v1599 = vpop.f32.mrb[0].mxu0
      %v1600 = vadd.f32 0.0, %v1599
      %v1601 = vpop.f32.mrb[0].mxu0
      %v1602 = vadd.f32 0.0, %v1601
      %v1603 = vpop.f32.mrb[0].mxu0
      %v1604 = vadd.f32 0.0, %v1603
      %1605 = vmatprep.mubr.bf16.mxu0 0
      %1606 = vmatmul.mubr.bf16.gmra.mrb[0].mxu0 %v1380
      %v1607 = vpop.f32.mrb[0].mxu0
      %v1608 = vadd.f32 0.0, %v1607
      %v1609 = vpop.f32.mrb[0].mxu0
      %v1610 = vadd.f32 0.0, %v1609
      %v1611 = vpop.f32.mrb[0].mxu0
      %v1612 = vadd.f32 0.0, %v1611
      %v1613 = vpop.f32.mrb[0].mxu0
      %v1614 = vadd.f32 0.0, %v1613
      %1615 = vmatprep.mubr.bf16.mxu0 0
      %1616 = vmatmul.mubr.bf16.gmra.mrb[0].mxu0 %v1383
      %v1617 = vpop.f32.mrb[0].mxu0
      %v1618 = vadd.f32 0.0, %v1617
      %v1619 = vpop.f32.mrb[0].mxu0
      %v1620 = vadd.f32 0.0, %v1619
      %v1621 = vpop.f32.mrb[0].mxu0
      %v1622 = vadd.f32 0.0, %v1621
      %v1623 = vpop.f32.mrb[0].mxu0
      %v1624 = vadd.f32 0.0, %v1623
      %1625 = vdwg.mxu0
      %v1626 = vmax.f32 %v1468, %v1470
      %1627 = vmax.xlane.f32.xlu0 %v1626
      %v1628 = vpop.xlane.xlu0 %1627
      %v1629 = vmax.f32 %v1472, %v1474
      %1630 = vmax.xlane.f32.xlu0 %v1629
      %v1631 = vpop.xlane.xlu0 %1630
      %v1632 = vmax.f32 %v1478, %v1480
      %1633 = vmax.xlane.f32.xlu0 %v1632
      %v1634 = vpop.xlane.xlu0 %1633
      %v1635 = vmax.f32 %v1482, %v1484
      %1636 = vmax.xlane.f32.xlu0 %v1635
      %v1637 = vpop.xlane.xlu0 %1636
      %v1638 = vmax.f32 %v1488, %v1490
      %1639 = vmax.xlane.f32.xlu0 %v1638
      %v1640 = vpop.xlane.xlu0 %1639
      %v1641 = vmax.f32 %v1492, %v1494
      %1642 = vmax.xlane.f32.xlu0 %v1641
      %v1643 = vpop.xlane.xlu0 %1642
      %v1644 = vmax.f32 %v1498, %v1500
      %1645 = vmax.xlane.f32.xlu0 %v1644
      %v1646 = vpop.xlane.xlu0 %1645
      %v1647 = vmax.f32 %v1502, %v1504
      %1648 = vmax.xlane.f32.xlu0 %v1647
      %v1649 = vpop.xlane.xlu0 %1648
      %v1650 = vmax.f32 %v1508, %v1510
      %1651 = vmax.xlane.f32.xlu0 %v1650
      %v1652 = vpop.xlane.xlu0 %1651
      %v1653 = vmax.f32 %v1512, %v1514
      %1654 = vmax.xlane.f32.xlu0 %v1653
      %v1655 = vpop.xlane.xlu0 %1654
      %v1656 = vmax.f32 %v1518, %v1520
      %1657 = vmax.xlane.f32.xlu0 %v1656
      %v1658 = vpop.xlane.xlu0 %1657
      %v1659 = vmax.f32 %v1522, %v1524
      %1660 = vmax.xlane.f32.xlu0 %v1659
      %v1661 = vpop.xlane.xlu0 %1660
      %v1662 = vmax.f32 %v1528, %v1530
      %1663 = vmax.xlane.f32.xlu0 %v1662
      %v1664 = vpop.xlane.xlu0 %1663
      %v1665 = vmax.f32 %v1532, %v1534
      %1666 = vmax.xlane.f32.xlu0 %v1665
      %v1667 = vpop.xlane.xlu0 %1666
      %v1668 = vmax.f32 %v1538, %v1540
      %1669 = vmax.xlane.f32.xlu0 %v1668
      %v1670 = vpop.xlane.xlu0 %1669
      %v1671 = vmax.f32 %v1542, %v1544
      %1672 = vmax.xlane.f32.xlu0 %v1671
      %v1673 = vpop.xlane.xlu0 %1672
      %v1674 = vmax.f32 %v1548, %v1550
      %1675 = vmax.xlane.f32.xlu0 %v1674
      %v1676 = vpop.xlane.xlu0 %1675
      %v1677 = vmax.f32 %v1552, %v1554
      %1678 = vmax.xlane.f32.xlu0 %v1677
      %v1679 = vpop.xlane.xlu0 %1678
      %v1680 = vmax.f32 %v1558, %v1560
      %1681 = vmax.xlane.f32.xlu0 %v1680
      %v1682 = vpop.xlane.xlu0 %1681
      %v1683 = vmax.f32 %v1562, %v1564
      %1684 = vmax.xlane.f32.xlu0 %v1683
      %v1685 = vpop.xlane.xlu0 %1684
      %v1686 = vmax.f32 %v1568, %v1570
      %1687 = vmax.xlane.f32.xlu0 %v1686
      %v1688 = vpop.xlane.xlu0 %1687
      %v1689 = vmax.f32 %v1572, %v1574
      %1690 = vmax.xlane.f32.xlu0 %v1689
      %v1691 = vpop.xlane.xlu0 %1690
      %v1692 = vmax.f32 %v1578, %v1580
      %1693 = vmax.xlane.f32.xlu0 %v1692
      %v1694 = vpop.xlane.xlu0 %1693
      %v1695 = vmax.f32 %v1582, %v1584
      %1696 = vmax.xlane.f32.xlu0 %v1695
      %v1697 = vpop.xlane.xlu0 %1696
      %v1698 = vmax.f32 %v1588, %v1590
      %1699 = vmax.xlane.f32.xlu0 %v1698
      %v1700 = vpop.xlane.xlu0 %1699
      %v1701 = vmax.f32 %v1592, %v1594
      %1702 = vmax.xlane.f32.xlu0 %v1701
      %v1703 = vpop.xlane.xlu0 %1702
      %v1704 = vmax.f32 %v1598, %v1600
      %1705 = vmax.xlane.f32.xlu0 %v1704
      %v1706 = vpop.xlane.xlu0 %1705
      %v1707 = vmax.f32 %v1602, %v1604
      %1708 = vmax.xlane.f32.xlu0 %v1707
      %v1709 = vpop.xlane.xlu0 %1708
      %v1710 = vmax.f32 %v1608, %v1610
      %1711 = vmax.xlane.f32.xlu0 %v1710
      %v1712 = vpop.xlane.xlu0 %1711
      %v1713 = vmax.f32 %v1612, %v1614
      %1714 = vmax.xlane.f32.xlu0 %v1713
      %v1715 = vpop.xlane.xlu0 %1714
      %v1716 = vmax.f32 %v1618, %v1620
      %1717 = vmax.xlane.f32.xlu0 %v1716
      %v1718 = vpop.xlane.xlu0 %1717
      %v1719 = vmax.f32 %v1622, %v1624
      %1720 = vmax.xlane.f32.xlu0 %v1719
      %v1721 = vpop.xlane.xlu0 %1720
      %v1722 = vsub.f32 %v1468, %v1628
      %v1723 = vsub.f32 %v1470, %v1628
      %v1724 = vsub.f32 %v1472, %v1631
      %v1725 = vsub.f32 %v1474, %v1631
      %v1726 = vsub.f32 %v1478, %v1634
      %v1727 = vsub.f32 %v1480, %v1634
      %v1728 = vsub.f32 %v1482, %v1637
      %v1729 = vsub.f32 %v1484, %v1637
      %v1730 = vsub.f32 %v1488, %v1640
      %v1731 = vsub.f32 %v1490, %v1640
      %v1732 = vsub.f32 %v1492, %v1643
      %v1733 = vsub.f32 %v1494, %v1643
      %v1734 = vsub.f32 %v1498, %v1646
      %v1735 = vsub.f32 %v1500, %v1646
      %v1736 = vsub.f32 %v1502, %v1649
      %v1737 = vsub.f32 %v1504, %v1649
      %v1738 = vsub.f32 %v1508, %v1652
      %v1739 = vsub.f32 %v1510, %v1652
      %v1740 = vsub.f32 %v1512, %v1655
      %v1741 = vsub.f32 %v1514, %v1655
      %v1742 = vsub.f32 %v1518, %v1658
      %v1743 = vsub.f32 %v1520, %v1658
      %v1744 = vsub.f32 %v1522, %v1661
      %v1745 = vsub.f32 %v1524, %v1661
      %v1746 = vsub.f32 %v1528, %v1664
      %v1747 = vsub.f32 %v1530, %v1664
      %v1748 = vsub.f32 %v1532, %v1667
      %v1749 = vsub.f32 %v1534, %v1667
      %v1750 = vsub.f32 %v1538, %v1670
      %v1751 = vsub.f32 %v1540, %v1670
      %v1752 = vsub.f32 %v1542, %v1673
      %v1753 = vsub.f32 %v1544, %v1673
      %v1754 = vsub.f32 %v1548, %v1676
      %v1755 = vsub.f32 %v1550, %v1676
      %v1756 = vsub.f32 %v1552, %v1679
      %v1757 = vsub.f32 %v1554, %v1679
      %v1758 = vsub.f32 %v1558, %v1682
      %v1759 = vsub.f32 %v1560, %v1682
      %v1760 = vsub.f32 %v1562, %v1685
      %v1761 = vsub.f32 %v1564, %v1685
      %v1762 = vsub.f32 %v1568, %v1688
      %v1763 = vsub.f32 %v1570, %v1688
      %v1764 = vsub.f32 %v1572, %v1691
      %v1765 = vsub.f32 %v1574, %v1691
      %v1766 = vsub.f32 %v1578, %v1694
      %v1767 = vsub.f32 %v1580, %v1694
      %v1768 = vsub.f32 %v1582, %v1697
      %v1769 = vsub.f32 %v1584, %v1697
      %v1770 = vsub.f32 %v1588, %v1700
      %v1771 = vsub.f32 %v1590, %v1700
      %v1772 = vsub.f32 %v1592, %v1703
      %v1773 = vsub.f32 %v1594, %v1703
      %v1774 = vsub.f32 %v1598, %v1706
      %v1775 = vsub.f32 %v1600, %v1706
      %v1776 = vsub.f32 %v1602, %v1709
      %v1777 = vsub.f32 %v1604, %v1709
      %v1778 = vsub.f32 %v1608, %v1712
      %v1779 = vsub.f32 %v1610, %v1712
      %v1780 = vsub.f32 %v1612, %v1715
      %v1781 = vsub.f32 %v1614, %v1715
      %v1782 = vsub.f32 %v1618, %v1718
      %v1783 = vsub.f32 %v1620, %v1718
      %v1784 = vsub.f32 %v1622, %v1721
      %v1785 = vsub.f32 %v1624, %v1721
      %v1786 = vmul.f32 %v1722, 1.442695
      %v1787 = vpow.pop %v1786
      %v1788 = vmul.f32 %v1723, 1.442695
      %v1789 = vpow.pop %v1788
      %v1790 = vmul.f32 %v1724, 1.442695
      %v1791 = vpow.pop %v1790
      %v1792 = vmul.f32 %v1725, 1.442695
      %v1793 = vpow.pop %v1792
      %v1794 = vmul.f32 %v1726, 1.442695
      %v1795 = vpow.pop %v1794
      %v1796 = vmul.f32 %v1727, 1.442695
      %v1797 = vpow.pop %v1796
      %v1798 = vmul.f32 %v1728, 1.442695
      %v1799 = vpow.pop %v1798
      %v1800 = vmul.f32 %v1729, 1.442695
      %v1801 = vpow.pop %v1800
      %v1802 = vmul.f32 %v1730, 1.442695
      %v1803 = vpow.pop %v1802
      %v1804 = vmul.f32 %v1731, 1.442695
      %v1805 = vpow.pop %v1804
      %v1806 = vmul.f32 %v1732, 1.442695
      %v1807 = vpow.pop %v1806
      %v1808 = vmul.f32 %v1733, 1.442695
      %v1809 = vpow.pop %v1808
      %v1810 = vmul.f32 %v1734, 1.442695
      %v1811 = vpow.pop %v1810
      %v1812 = vmul.f32 %v1735, 1.442695
      %v1813 = vpow.pop %v1812
      %v1814 = vmul.f32 %v1736, 1.442695
      %v1815 = vpow.pop %v1814
      %v1816 = vmul.f32 %v1737, 1.442695
      %v1817 = vpow.pop %v1816
      %v1818 = vmul.f32 %v1738, 1.442695
      %v1819 = vpow.pop %v1818
      %v1820 = vmul.f32 %v1739, 1.442695
      %v1821 = vpow.pop %v1820
      %v1822 = vmul.f32 %v1740, 1.442695
      %v1823 = vpow.pop %v1822
      %v1824 = vmul.f32 %v1741, 1.442695
      %v1825 = vpow.pop %v1824
      %v1826 = vmul.f32 %v1742, 1.442695
      %v1827 = vpow.pop %v1826
      %v1828 = vmul.f32 %v1743, 1.442695
      %v1829 = vpow.pop %v1828
      %v1830 = vmul.f32 %v1744, 1.442695
      %v1831 = vpow.pop %v1830
      %v1832 = vmul.f32 %v1745, 1.442695
      %v1833 = vpow.pop %v1832
      %v1834 = vmul.f32 %v1746, 1.442695
      %v1835 = vpow.pop %v1834
      %v1836 = vmul.f32 %v1747, 1.442695
      %v1837 = vpow.pop %v1836
      %v1838 = vmul.f32 %v1748, 1.442695
      %v1839 = vpow.pop %v1838
      %v1840 = vmul.f32 %v1749, 1.442695
      %v1841 = vpow.pop %v1840
      %v1842 = vmul.f32 %v1750, 1.442695
      %v1843 = vpow.pop %v1842
      %v1844 = vmul.f32 %v1751, 1.442695
      %v1845 = vpow.pop %v1844
      %v1846 = vmul.f32 %v1752, 1.442695
      %v1847 = vpow.pop %v1846
      %v1848 = vmul.f32 %v1753, 1.442695
      %v1849 = vpow.pop %v1848
      %v1850 = vmul.f32 %v1754, 1.442695
      %v1851 = vpow.pop %v1850
      %v1852 = vmul.f32 %v1755, 1.442695
      %v1853 = vpow.pop %v1852
      %v1854 = vmul.f32 %v1756, 1.442695
      %v1855 = vpow.pop %v1854
      %v1856 = vmul.f32 %v1757, 1.442695
      %v1857 = vpow.pop %v1856
      %v1858 = vmul.f32 %v1758, 1.442695
      %v1859 = vpow.pop %v1858
      %v1860 = vmul.f32 %v1759, 1.442695
      %v1861 = vpow.pop %v1860
      %v1862 = vmul.f32 %v1760, 1.442695
      %v1863 = vpow.pop %v1862
      %v1864 = vmul.f32 %v1761, 1.442695
      %v1865 = vpow.pop %v1864
      %v1866 = vmul.f32 %v1762, 1.442695
      %v1867 = vpow.pop %v1866
      %v1868 = vmul.f32 %v1763, 1.442695
      %v1869 = vpow.pop %v1868
      %v1870 = vmul.f32 %v1764, 1.442695
      %v1871 = vpow.pop %v1870
      %v1872 = vmul.f32 %v1765, 1.442695
      %v1873 = vpow.pop %v1872
      %v1874 = vmul.f32 %v1766, 1.442695
      %v1875 = vpow.pop %v1874
      %v1876 = vmul.f32 %v1767, 1.442695
      %v1877 = vpow.pop %v1876
      %v1878 = vmul.f32 %v1768, 1.442695
      %v1879 = vpow.pop %v1878
      %v1880 = vmul.f32 %v1769, 1.442695
      %v1881 = vpow.pop %v1880
      %v1882 = vmul.f32 %v1770, 1.442695
      %v1883 = vpow.pop %v1882
      %v1884 = vmul.f32 %v1771, 1.442695
      %v1885 = vpow.pop %v1884
      %v1886 = vmul.f32 %v1772, 1.442695
      %v1887 = vpow.pop %v1886
      %v1888 = vmul.f32 %v1773, 1.442695
      %v1889 = vpow.pop %v1888
      %v1890 = vmul.f32 %v1774, 1.442695
      %v1891 = vpow.pop %v1890
      %v1892 = vmul.f32 %v1775, 1.442695
      %v1893 = vpow.pop %v1892
      %v1894 = vmul.f32 %v1776, 1.442695
      %v1895 = vpow.pop %v1894
      %v1896 = vmul.f32 %v1777, 1.442695
      %v1897 = vpow.pop %v1896
      %v1898 = vmul.f32 %v1778, 1.442695
      %v1899 = vpow.pop %v1898
      %v1900 = vmul.f32 %v1779, 1.442695
      %v1901 = vpow.pop %v1900
      %v1902 = vmul.f32 %v1780, 1.442695
      %v1903 = vpow.pop %v1902
      %v1904 = vmul.f32 %v1781, 1.442695
      %v1905 = vpow.pop %v1904
      %v1906 = vmul.f32 %v1782, 1.442695
      %v1907 = vpow.pop %v1906
      %v1908 = vmul.f32 %v1783, 1.442695
      %v1909 = vpow.pop %v1908
      %v1910 = vmul.f32 %v1784, 1.442695
      %v1911 = vpow.pop %v1910
      %v1912 = vmul.f32 %v1785, 1.442695
      %v1913 = vpow.pop %v1912
      %v1914 = vadd.f32 %v1787, %v1789
      %1915 = vadd.xlane.f32.xlu0 %v1914
      %v1916 = vpop.xlane.xlu0 %1915
      %v1917 = vadd.f32 %v1791, %v1793
      %1918 = vadd.xlane.f32.xlu0 %v1917
      %v1919 = vpop.xlane.xlu0 %1918
      %v1920 = vadd.f32 %v1795, %v1797
      %1921 = vadd.xlane.f32.xlu0 %v1920
      %v1922 = vpop.xlane.xlu0 %1921
      %v1923 = vadd.f32 %v1799, %v1801
      %1924 = vadd.xlane.f32.xlu0 %v1923
      %v1925 = vpop.xlane.xlu0 %1924
      %v1926 = vadd.f32 %v1803, %v1805
      %1927 = vadd.xlane.f32.xlu0 %v1926
      %v1928 = vpop.xlane.xlu0 %1927
      %v1929 = vadd.f32 %v1807, %v1809
      %1930 = vadd.xlane.f32.xlu0 %v1929
      %v1931 = vpop.xlane.xlu0 %1930
      %v1932 = vadd.f32 %v1811, %v1813
      %1933 = vadd.xlane.f32.xlu0 %v1932
      %v1934 = vpop.xlane.xlu0 %1933
      %v1935 = vadd.f32 %v1815, %v1817
      %1936 = vadd.xlane.f32.xlu0 %v1935
      %v1937 = vpop.xlane.xlu0 %1936
      %v1938 = vadd.f32 %v1819, %v1821
      %1939 = vadd.xlane.f32.xlu0 %v1938
      %v1940 = vpop.xlane.xlu0 %1939
      %v1941 = vadd.f32 %v1823, %v1825
      %1942 = vadd.xlane.f32.xlu0 %v1941
      %v1943 = vpop.xlane.xlu0 %1942
      %v1944 = vadd.f32 %v1827, %v1829
      %1945 = vadd.xlane.f32.xlu0 %v1944
      %v1946 = vpop.xlane.xlu0 %1945
      %v1947 = vadd.f32 %v1831, %v1833
      %1948 = vadd.xlane.f32.xlu0 %v1947
      %v1949 = vpop.xlane.xlu0 %1948
      %v1950 = vadd.f32 %v1835, %v1837
      %1951 = vadd.xlane.f32.xlu0 %v1950
      %v1952 = vpop.xlane.xlu0 %1951
      %v1953 = vadd.f32 %v1839, %v1841
      %1954 = vadd.xlane.f32.xlu0 %v1953
      %v1955 = vpop.xlane.xlu0 %1954
      %v1956 = vadd.f32 %v1843, %v1845
      %1957 = vadd.xlane.f32.xlu0 %v1956
      %v1958 = vpop.xlane.xlu0 %1957
      %v1959 = vadd.f32 %v1847, %v1849
      %1960 = vadd.xlane.f32.xlu0 %v1959
      %v1961 = vpop.xlane.xlu0 %1960
      %v1962 = vadd.f32 %v1851, %v1853
      %1963 = vadd.xlane.f32.xlu0 %v1962
      %v1964 = vpop.xlane.xlu0 %1963
      %v1965 = vadd.f32 %v1855, %v1857
      %1966 = vadd.xlane.f32.xlu0 %v1965
      %v1967 = vpop.xlane.xlu0 %1966
      %v1968 = vadd.f32 %v1859, %v1861
      %1969 = vadd.xlane.f32.xlu0 %v1968
      %v1970 = vpop.xlane.xlu0 %1969
      %v1971 = vadd.f32 %v1863, %v1865
      %1972 = vadd.xlane.f32.xlu0 %v1971
      %v1973 = vpop.xlane.xlu0 %1972
      %v1974 = vadd.f32 %v1867, %v1869
      %1975 = vadd.xlane.f32.xlu0 %v1974
      %v1976 = vpop.xlane.xlu0 %1975
      %v1977 = vadd.f32 %v1871, %v1873
      %1978 = vadd.xlane.f32.xlu0 %v1977
      %v1979 = vpop.xlane.xlu0 %1978
      %v1980 = vadd.f32 %v1875, %v1877
      %1981 = vadd.xlane.f32.xlu0 %v1980
      %v1982 = vpop.xlane.xlu0 %1981
      %v1983 = vadd.f32 %v1879, %v1881
      %1984 = vadd.xlane.f32.xlu0 %v1983
      %v1985 = vpop.xlane.xlu0 %1984
      %v1986 = vadd.f32 %v1883, %v1885
      %1987 = vadd.xlane.f32.xlu0 %v1986
      %v1988 = vpop.xlane.xlu0 %1987
      %v1989 = vadd.f32 %v1887, %v1889
      %1990 = vadd.xlane.f32.xlu0 %v1989
      %v1991 = vpop.xlane.xlu0 %1990
      %v1992 = vadd.f32 %v1891, %v1893
      %1993 = vadd.xlane.f32.xlu0 %v1992
      %v1994 = vpop.xlane.xlu0 %1993
      %v1995 = vadd.f32 %v1895, %v1897
      %1996 = vadd.xlane.f32.xlu0 %v1995
      %v1997 = vpop.xlane.xlu0 %1996
      %v1998 = vadd.f32 %v1899, %v1901
      %1999 = vadd.xlane.f32.xlu0 %v1998
      %v2000 = vpop.xlane.xlu0 %1999
      %v2001 = vadd.f32 %v1903, %v1905
      %2002 = vadd.xlane.f32.xlu0 %v2001
      %v2003 = vpop.xlane.xlu0 %2002
      %v2004 = vadd.f32 %v1907, %v1909
      %2005 = vadd.xlane.f32.xlu0 %v2004
      %v2006 = vpop.xlane.xlu0 %2005
      %v2007 = vadd.f32 %v1911, %v1913
      %2008 = vadd.xlane.f32.xlu0 %v2007
      %v2009 = vpop.xlane.xlu0 %2008
      %v2010 = vrcp.pop %v1916
      %v2011 = vrcp.pop %v1919
      %v2012 = vrcp.pop %v1922
      %v2013 = vrcp.pop %v1925
      %v2014 = vrcp.pop %v1928
      %v2015 = vrcp.pop %v1931
      %v2016 = vrcp.pop %v1934
      %v2017 = vrcp.pop %v1937
      %v2018 = vrcp.pop %v1940
      %v2019 = vrcp.pop %v1943
      %v2020 = vrcp.pop %v1946
      %v2021 = vrcp.pop %v1949
      %v2022 = vrcp.pop %v1952
      %v2023 = vrcp.pop %v1955
      %v2024 = vrcp.pop %v1958
      %v2025 = vrcp.pop %v1961
      %v2026 = vrcp.pop %v1964
      %v2027 = vrcp.pop %v1967
      %v2028 = vrcp.pop %v1970
      %v2029 = vrcp.pop %v1973
      %v2030 = vrcp.pop %v1976
      %v2031 = vrcp.pop %v1979
      %v2032 = vrcp.pop %v1982
      %v2033 = vrcp.pop %v1985
      %v2034 = vrcp.pop %v1988
      %v2035 = vrcp.pop %v1991
      %v2036 = vrcp.pop %v1994
      %v2037 = vrcp.pop %v1997
      %v2038 = vrcp.pop %v2000
      %v2039 = vrcp.pop %v2003
      %v2040 = vrcp.pop %v2006
      %v2041 = vrcp.pop %v2009
      %v2042 = vmul.f32 %v1787, %v2010
      %v2043 = vmul.f32 %v1789, %v2010
      %v2044 = vmul.f32 %v1791, %v2011
      %v2045 = vmul.f32 %v1793, %v2011
      %v2046 = vmul.f32 %v1795, %v2012
      %v2047 = vmul.f32 %v1797, %v2012
      %v2048 = vmul.f32 %v1799, %v2013
      %v2049 = vmul.f32 %v1801, %v2013
      %v2050 = vmul.f32 %v1803, %v2014
      %v2051 = vmul.f32 %v1805, %v2014
      %v2052 = vmul.f32 %v1807, %v2015
      %v2053 = vmul.f32 %v1809, %v2015
      %v2054 = vmul.f32 %v1811, %v2016
      %v2055 = vmul.f32 %v1813, %v2016
      %v2056 = vmul.f32 %v1815, %v2017
      %v2057 = vmul.f32 %v1817, %v2017
      %v2058 = vmul.f32 %v1819, %v2018
      %v2059 = vmul.f32 %v1821, %v2018
      %v2060 = vmul.f32 %v1823, %v2019
      %v2061 = vmul.f32 %v1825, %v2019
      %v2062 = vmul.f32 %v1827, %v2020
      %v2063 = vmul.f32 %v1829, %v2020
      %v2064 = vmul.f32 %v1831, %v2021
      %v2065 = vmul.f32 %v1833, %v2021
      %v2066 = vmul.f32 %v1835, %v2022
      %v2067 = vmul.f32 %v1837, %v2022
      %v2068 = vmul.f32 %v1839, %v2023
      %v2069 = vmul.f32 %v1841, %v2023
      %v2070 = vmul.f32 %v1843, %v2024
      %v2071 = vmul.f32 %v1845, %v2024
      %v2072 = vmul.f32 %v1847, %v2025
      %v2073 = vmul.f32 %v1849, %v2025
      %v2074 = vmul.f32 %v1851, %v2026
      %v2075 = vmul.f32 %v1853, %v2026
      %v2076 = vmul.f32 %v1855, %v2027
      %v2077 = vmul.f32 %v1857, %v2027
      %v2078 = vmul.f32 %v1859, %v2028
      %v2079 = vmul.f32 %v1861, %v2028
      %v2080 = vmul.f32 %v1863, %v2029
      %v2081 = vmul.f32 %v1865, %v2029
      %v2082 = vmul.f32 %v1867, %v2030
      %v2083 = vmul.f32 %v1869, %v2030
      %v2084 = vmul.f32 %v1871, %v2031
      %v2085 = vmul.f32 %v1873, %v2031
      %v2086 = vmul.f32 %v1875, %v2032
      %v2087 = vmul.f32 %v1877, %v2032
      %v2088 = vmul.f32 %v1879, %v2033
      %v2089 = vmul.f32 %v1881, %v2033
      %v2090 = vmul.f32 %v1883, %v2034
      %v2091 = vmul.f32 %v1885, %v2034
      %v2092 = vmul.f32 %v1887, %v2035
      %v2093 = vmul.f32 %v1889, %v2035
      %v2094 = vmul.f32 %v1891, %v2036
      %v2095 = vmul.f32 %v1893, %v2036
      %v2096 = vmul.f32 %v1895, %v2037
      %v2097 = vmul.f32 %v1897, %v2037
      %v2098 = vmul.f32 %v1899, %v2038
      %v2099 = vmul.f32 %v1901, %v2038
      %v2100 = vmul.f32 %v1903, %v2039
      %v2101 = vmul.f32 %v1905, %v2039
      %v2102 = vmul.f32 %v1907, %v2040
      %v2103 = vmul.f32 %v1909, %v2040
      %v2104 = vmul.f32 %v1911, %v2041
      %v2105 = vmul.f32 %v1913, %v2041
      %v2106 = vpack.c.bf16 %v2044, %v2042
      %v2107 = vpack.c.bf16 %v2045, %v2043
      %v2108 = vpack.c.bf16 %v2048, %v2046
      %v2109 = vpack.c.bf16 %v2049, %v2047
      %v2110 = vpack.c.bf16 %v2052, %v2050
      %v2111 = vpack.c.bf16 %v2053, %v2051
      %v2112 = vpack.c.bf16 %v2056, %v2054
      %v2113 = vpack.c.bf16 %v2057, %v2055
      %v2114 = vpack.c.bf16 %v2060, %v2058
      %v2115 = vpack.c.bf16 %v2061, %v2059
      %v2116 = vpack.c.bf16 %v2064, %v2062
      %v2117 = vpack.c.bf16 %v2065, %v2063
      %v2118 = vpack.c.bf16 %v2068, %v2066
      %v2119 = vpack.c.bf16 %v2069, %v2067
      %v2120 = vpack.c.bf16 %v2072, %v2070
      %v2121 = vpack.c.bf16 %v2073, %v2071
      %v2122 = vpack.c.bf16 %v2076, %v2074
      %v2123 = vpack.c.bf16 %v2077, %v2075
      %v2124 = vpack.c.bf16 %v2080, %v2078
      %v2125 = vpack.c.bf16 %v2081, %v2079
      %v2126 = vpack.c.bf16 %v2084, %v2082
      %v2127 = vpack.c.bf16 %v2085, %v2083
      %v2128 = vpack.c.bf16 %v2088, %v2086
      %v2129 = vpack.c.bf16 %v2089, %v2087
      %v2130 = vpack.c.bf16 %v2092, %v2090
      %v2131 = vpack.c.bf16 %v2093, %v2091
      %v2132 = vpack.c.bf16 %v2096, %v2094
      %v2133 = vpack.c.bf16 %v2097, %v2095
      %v2134 = vpack.c.bf16 %v2100, %v2098
      %v2135 = vpack.c.bf16 %v2101, %v2099
      %v2136 = vpack.c.bf16 %v2104, %v2102
      %v2137 = vpack.c.bf16 %v2105, %v2103
      %2138 = vrot.lane.b32.xlu0 %v214, 88
      %v2139 = vpop.permute.xlu0 %2138
      %2140 = vrot.lane.b32.xlu0 %v215, 88
      %v2141 = vpop.permute.xlu0 %2140
      %2142 = vrot.lane.b32.xlu0 %v216, 88
      %v2143 = vpop.permute.xlu0 %2142
      %2144 = vrot.lane.b32.xlu0 %v217, 88
      %v2145 = vpop.permute.xlu0 %2144
      %2146 = vrot.lane.b32.xlu0 %v218, 88
      %v2147 = vpop.permute.xlu0 %2146
      %2148 = vrot.lane.b32.xlu0 %v219, 88
      %v2149 = vpop.permute.xlu0 %2148
      %2150 = vrot.lane.b32.xlu0 %v220, 88
      %v2151 = vpop.permute.xlu0 %2150
      %2152 = vrot.lane.b32.xlu0 %v221, 88
      %v2153 = vpop.permute.xlu0 %2152
      %2154 = vrot.lane.b32.xlu0 %v222, 88
      %v2155 = vpop.permute.xlu0 %2154
      %2156 = vrot.lane.b32.xlu0 %v223, 88
      %v2157 = vpop.permute.xlu0 %2156
      %2158 = vrot.lane.b32.xlu0 %v224, 88
      %v2159 = vpop.permute.xlu0 %2158
      %2160 = vrot.lane.b32.xlu0 %v225, 88
      %v2161 = vpop.permute.xlu0 %2160
      %2162 = vrot.lane.b32.xlu0 %v226, 88
      %v2163 = vpop.permute.xlu0 %2162
      %2164 = vrot.lane.b32.xlu0 %v227, 88
      %v2165 = vpop.permute.xlu0 %2164
      %2166 = vrot.lane.b32.xlu0 %v228, 88
      %v2167 = vpop.permute.xlu0 %2166
      %2168 = vrot.lane.b32.xlu0 %v229, 88
      %v2169 = vpop.permute.xlu0 %2168
      %2186 = vmatprep.subr.bf16.mxu0 0
      %2187 = vmatpush1.bf16.msra.mxu0 %v2139
      %2188 = vmatprep.subr.bf16.mxu0 0
      %2189 = vmatpush1.bf16.msra.mxu0 %v2141
      %2190 = vmatprep.subr.bf16.mxu0 0
      %2191 = vmatpush1.bf16.msra.mxu0 %v2143
      %2192 = vmatprep.subr.bf16.mxu0 0
      %2193 = vmatpush1.bf16.msra.mxu0 %v2145
      %2194 = vmatprep.subr.bf16.mxu0 0
      %2195 = vmatpush1.bf16.msra.mxu0 %v2147
      %2196 = vmatprep.subr.bf16.mxu0 0
      %2197 = vmatpush1.bf16.msra.mxu0 %v2149
      %2198 = vmatprep.subr.bf16.mxu0 0
      %2199 = vmatpush1.bf16.msra.mxu0 %v2151
      %2200 = vmatprep.subr.bf16.mxu0 0
      %2201 = vmatpush1.bf16.msra.mxu0 %v2153
      %2202 = vmatprep.subr.bf16.mxu0 0
      %2203 = vmatpush1.bf16.msra.mxu0 %v2155
      %2204 = vmatprep.subr.bf16.mxu0 0
      %2205 = vmatpush1.bf16.msra.mxu0 %v2157
      %2206 = vmatprep.subr.bf16.mxu0 0
      %2207 = vmatpush1.bf16.msra.mxu0 %v2159
      %2208 = vmatprep.subr.bf16.mxu0 0
      %2209 = vmatpush1.bf16.msra.mxu0 %v2161
      %2210 = vmatprep.subr.bf16.mxu0 0
      %2211 = vmatpush1.bf16.msra.mxu0 %v2163
      %2212 = vmatprep.subr.bf16.mxu0 0
      %2213 = vmatpush1.bf16.msra.mxu0 %v2165
      %2214 = vmatprep.subr.bf16.mxu0 0
      %2215 = vmatpush1.bf16.msra.mxu0 %v2167
      %2216 = vmatprep.subr.bf16.mxu0 0
      %2217 = vmatpush1.bf16.msra.mxu0 %v2169
      %2218 = vmatprep.mubr.bf16.mxu0 %v2107
      %2219 = vmatmul.mubr.bf16.gmra.mrb[0].mxu0 %v2106
      %v2220 = vpop.f32.mrb[0].mxu0
      %v2221 = vadd.f32 0.0, %v2220
      %v2222 = vpop.f32.mrb[0].mxu0
      %v2223 = vpop.f32.mrb[0].mxu0
      %v2224 = vadd.f32 0.0, %v2223
      %v2225 = vpop.f32.mrb[0].mxu0
      %2226 = vmatprep.mubr.bf16.mxu0 %v2109
      %2227 = vmatmul.mubr.bf16.gmra.mrb[0].mxu0 %v2108
      %v2228 = vpop.f32.mrb[0].mxu0
      %v2229 = vadd.f32 0.0, %v2228
      %v2230 = vpop.f32.mrb[0].mxu0
      %v2231 = vpop.f32.mrb[0].mxu0
      %v2232 = vadd.f32 0.0, %v2231
      %v2233 = vpop.f32.mrb[0].mxu0
      %2234 = vmatprep.mubr.bf16.mxu0 %v2111
      %2235 = vmatmul.mubr.bf16.gmra.mrb[0].mxu0 %v2110
      %v2236 = vpop.f32.mrb[0].mxu0
      %v2237 = vadd.f32 0.0, %v2236
      %v2238 = vpop.f32.mrb[0].mxu0
      %v2239 = vpop.f32.mrb[0].mxu0
      %v2240 = vadd.f32 0.0, %v2239
      %v2241 = vpop.f32.mrb[0].mxu0
      %2242 = vmatprep.mubr.bf16.mxu0 %v2113
      %2243 = vmatmul.mubr.bf16.gmra.mrb[0].mxu0 %v2112
      %v2244 = vpop.f32.mrb[0].mxu0
      %v2245 = vadd.f32 0.0, %v2244
      %v2246 = vpop.f32.mrb[0].mxu0
      %v2247 = vpop.f32.mrb[0].mxu0
      %v2248 = vadd.f32 0.0, %v2247
      %v2249 = vpop.f32.mrb[0].mxu0
      %2250 = vmatprep.mubr.bf16.mxu0 %v2115
      %2251 = vmatmul.mubr.bf16.gmra.mrb[0].mxu0 %v2114
      %v2252 = vpop.f32.mrb[0].mxu0
      %v2253 = vadd.f32 0.0, %v2252
      %v2254 = vpop.f32.mrb[0].mxu0
      %v2255 = vpop.f32.mrb[0].mxu0
      %v2256 = vadd.f32 0.0, %v2255
      %v2257 = vpop.f32.mrb[0].mxu0
      %2258 = vmatprep.mubr.bf16.mxu0 %v2117
      %2259 = vmatmul.mubr.bf16.gmra.mrb[0].mxu0 %v2116
      %v2260 = vpop.f32.mrb[0].mxu0
      %v2261 = vadd.f32 0.0, %v2260
      %v2262 = vpop.f32.mrb[0].mxu0
      %v2263 = vpop.f32.mrb[0].mxu0
      %v2264 = vadd.f32 0.0, %v2263
      %v2265 = vpop.f32.mrb[0].mxu0
      %2266 = vmatprep.mubr.bf16.mxu0 %v2119
      %2267 = vmatmul.mubr.bf16.gmra.mrb[0].mxu0 %v2118
      %v2268 = vpop.f32.mrb[0].mxu0
      %v2269 = vadd.f32 0.0, %v2268
      %v2270 = vpop.f32.mrb[0].mxu0
      %v2271 = vpop.f32.mrb[0].mxu0
      %v2272 = vadd.f32 0.0, %v2271
      %v2273 = vpop.f32.mrb[0].mxu0
      %2274 = vmatprep.mubr.bf16.mxu0 %v2121
      %2275 = vmatmul.mubr.bf16.gmra.mrb[0].mxu0 %v2120
      %v2276 = vpop.f32.mrb[0].mxu0
      %v2277 = vadd.f32 0.0, %v2276
      %v2278 = vpop.f32.mrb[0].mxu0
      %v2279 = vpop.f32.mrb[0].mxu0
      %v2280 = vadd.f32 0.0, %v2279
      %v2281 = vpop.f32.mrb[0].mxu0
      %2282 = vmatprep.mubr.bf16.mxu0 %v2123
      %2283 = vmatmul.mubr.bf16.gmra.mrb[0].mxu0 %v2122
      %v2284 = vpop.f32.mrb[0].mxu0
      %v2285 = vadd.f32 0.0, %v2284
      %v2286 = vpop.f32.mrb[0].mxu0
      %v2287 = vpop.f32.mrb[0].mxu0
      %v2288 = vadd.f32 0.0, %v2287
      %v2289 = vpop.f32.mrb[0].mxu0
      %2290 = vmatprep.mubr.bf16.mxu0 %v2125
      %2291 = vmatmul.mubr.bf16.gmra.mrb[0].mxu0 %v2124
      %v2292 = vpop.f32.mrb[0].mxu0
      %v2293 = vadd.f32 0.0, %v2292
      %v2294 = vpop.f32.mrb[0].mxu0
      %v2295 = vpop.f32.mrb[0].mxu0
      %v2296 = vadd.f32 0.0, %v2295
      %v2297 = vpop.f32.mrb[0].mxu0
      %2298 = vmatprep.mubr.bf16.mxu0 %v2127
      %2299 = vmatmul.mubr.bf16.gmra.mrb[0].mxu0 %v2126
      %v2300 = vpop.f32.mrb[0].mxu0
      %v2301 = vadd.f32 0.0, %v2300
      %v2302 = vpop.f32.mrb[0].mxu0
      %v2303 = vpop.f32.mrb[0].mxu0
      %v2304 = vadd.f32 0.0, %v2303
      %v2305 = vpop.f32.mrb[0].mxu0
      %2306 = vmatprep.mubr.bf16.mxu0 %v2129
      %2307 = vmatmul.mubr.bf16.gmra.mrb[0].mxu0 %v2128
      %v2308 = vpop.f32.mrb[0].mxu0
      %v2309 = vadd.f32 0.0, %v2308
      %v2310 = vpop.f32.mrb[0].mxu0
      %v2311 = vpop.f32.mrb[0].mxu0
      %v2312 = vadd.f32 0.0, %v2311
      %v2313 = vpop.f32.mrb[0].mxu0
      %2314 = vmatprep.mubr.bf16.mxu0 %v2131
      %2315 = vmatmul.mubr.bf16.gmra.mrb[0].mxu0 %v2130
      %v2316 = vpop.f32.mrb[0].mxu0
      %v2317 = vadd.f32 0.0, %v2316
      %v2318 = vpop.f32.mrb[0].mxu0
      %v2319 = vpop.f32.mrb[0].mxu0
      %v2320 = vadd.f32 0.0, %v2319
      %v2321 = vpop.f32.mrb[0].mxu0
      %2322 = vmatprep.mubr.bf16.mxu0 %v2133
      %2323 = vmatmul.mubr.bf16.gmra.mrb[0].mxu0 %v2132
      %v2324 = vpop.f32.mrb[0].mxu0
      %v2325 = vadd.f32 0.0, %v2324
      %v2326 = vpop.f32.mrb[0].mxu0
      %v2327 = vpop.f32.mrb[0].mxu0
      %v2328 = vadd.f32 0.0, %v2327
      %v2329 = vpop.f32.mrb[0].mxu0
      %2330 = vmatprep.mubr.bf16.mxu0 %v2135
      %2331 = vmatmul.mubr.bf16.gmra.mrb[0].mxu0 %v2134
      %v2332 = vpop.f32.mrb[0].mxu0
      %v2333 = vadd.f32 0.0, %v2332
      %v2334 = vpop.f32.mrb[0].mxu0
      %v2335 = vpop.f32.mrb[0].mxu0
      %v2336 = vadd.f32 0.0, %v2335
      %v2337 = vpop.f32.mrb[0].mxu0
      %2338 = vmatprep.mubr.bf16.mxu0 %v2137
      %2339 = vmatmul.mubr.bf16.gmra.mrb[0].mxu0 %v2136
      %v2340 = vpop.f32.mrb[0].mxu0
      %v2341 = vadd.f32 0.0, %v2340
      %v2342 = vpop.f32.mrb[0].mxu0
      %v2343 = vpop.f32.mrb[0].mxu0
      %v2344 = vadd.f32 0.0, %v2343
      %v2345 = vpop.f32.mrb[0].mxu0
      %2346 = vdwg.mxu0
      %2379 = vrot.lane.b32.xlu0 %v2221, 8
      %v2380 = vpop.permute.xlu0 %2379
      %2381 = vrot.lane.b32.xlu0 %v2224, 8
      %v2382 = vpop.permute.xlu0 %2381
      %2383 = vrot.lane.b32.xlu0 %v2229, 8
      %v2384 = vpop.permute.xlu0 %2383
      %2385 = vrot.lane.b32.xlu0 %v2232, 8
      %v2386 = vpop.permute.xlu0 %2385
      %2387 = vrot.lane.b32.xlu0 %v2237, 8
      %v2388 = vpop.permute.xlu0 %2387
      %2389 = vrot.lane.b32.xlu0 %v2240, 8
      %v2390 = vpop.permute.xlu0 %2389
      %2391 = vrot.lane.b32.xlu0 %v2245, 8
      %v2392 = vpop.permute.xlu0 %2391
      %2393 = vrot.lane.b32.xlu0 %v2248, 8
      %v2394 = vpop.permute.xlu0 %2393
      %2395 = vrot.lane.b32.xlu0 %v2253, 8
      %v2396 = vpop.permute.xlu0 %2395
      %2397 = vrot.lane.b32.xlu0 %v2256, 8
      %v2398 = vpop.permute.xlu0 %2397
      %2399 = vrot.lane.b32.xlu0 %v2261, 8
      %v2400 = vpop.permute.xlu0 %2399
      %2401 = vrot.lane.b32.xlu0 %v2264, 8
      %v2402 = vpop.permute.xlu0 %2401
      %2403 = vrot.lane.b32.xlu0 %v2269, 8
      %v2404 = vpop.permute.xlu0 %2403
      %2405 = vrot.lane.b32.xlu0 %v2272, 8
      %v2406 = vpop.permute.xlu0 %2405
      %2407 = vrot.lane.b32.xlu0 %v2277, 8
      %v2408 = vpop.permute.xlu0 %2407
      %2409 = vrot.lane.b32.xlu0 %v2280, 8
      %v2410 = vpop.permute.xlu0 %2409
      %2411 = vrot.lane.b32.xlu0 %v2285, 8
      %v2412 = vpop.permute.xlu0 %2411
      %2413 = vrot.lane.b32.xlu0 %v2288, 8
      %v2414 = vpop.permute.xlu0 %2413
      %2415 = vrot.lane.b32.xlu0 %v2293, 8
      %v2416 = vpop.permute.xlu0 %2415
      %2417 = vrot.lane.b32.xlu0 %v2296, 8
      %v2418 = vpop.permute.xlu0 %2417
      %2419 = vrot.lane.b32.xlu0 %v2301, 8
      %v2420 = vpop.permute.xlu0 %2419
      %2421 = vrot.lane.b32.xlu0 %v2304, 8
      %v2422 = vpop.permute.xlu0 %2421
      %2423 = vrot.lane.b32.xlu0 %v2309, 8
      %v2424 = vpop.permute.xlu0 %2423
      %2425 = vrot.lane.b32.xlu0 %v2312, 8
      %v2426 = vpop.permute.xlu0 %2425
      %2427 = vrot.lane.b32.xlu0 %v2317, 8
      %v2428 = vpop.permute.xlu0 %2427
      %2429 = vrot.lane.b32.xlu0 %v2320, 8
      %v2430 = vpop.permute.xlu0 %2429
      %2431 = vrot.lane.b32.xlu0 %v2325, 8
      %v2432 = vpop.permute.xlu0 %2431
      %2433 = vrot.lane.b32.xlu0 %v2328, 8
      %v2434 = vpop.permute.xlu0 %2433
      %2435 = vrot.lane.b32.xlu0 %v2333, 8
      %v2436 = vpop.permute.xlu0 %2435
      %2437 = vrot.lane.b32.xlu0 %v2336, 8
      %v2438 = vpop.permute.xlu0 %2437
      %2439 = vrot.lane.b32.xlu0 %v2341, 8
      %v2440 = vpop.permute.xlu0 %2439
      %2441 = vrot.lane.b32.xlu0 %v2344, 8
      %v2442 = vpop.permute.xlu0 %2441
      %v2475 = vsel %vm262, %v1147, %v2380
      %v2476 = vsel %vm262, %v1150, %v2382
      %v2477 = vsel %vm262, %v1155, %v2384
      %v2478 = vsel %vm262, %v1158, %v2386
      %v2479 = vsel %vm262, %v1163, %v2388
      %v2480 = vsel %vm262, %v1166, %v2390
      %v2481 = vsel %vm262, %v1171, %v2392
      %v2482 = vsel %vm262, %v1174, %v2394
      %v2483 = vsel %vm262, %v1179, %v2396
      %v2484 = vsel %vm262, %v1182, %v2398
      %v2485 = vsel %vm262, %v1187, %v2400
      %v2486 = vsel %vm262, %v1190, %v2402
      %v2487 = vsel %vm262, %v1195, %v2404
      %v2488 = vsel %vm262, %v1198, %v2406
      %v2489 = vsel %vm262, %v1203, %v2408
      %v2490 = vsel %vm262, %v1206, %v2410
      %v2491 = vsel %vm262, %v1211, %v2412
      %v2492 = vsel %vm262, %v1214, %v2414
      %v2493 = vsel %vm262, %v1219, %v2416
      %v2494 = vsel %vm262, %v1222, %v2418
      %v2495 = vsel %vm262, %v1227, %v2420
      %v2496 = vsel %vm262, %v1230, %v2422
      %v2497 = vsel %vm262, %v1235, %v2424
      %v2498 = vsel %vm262, %v1238, %v2426
      %v2499 = vsel %vm262, %v1243, %v2428
      %v2500 = vsel %vm262, %v1246, %v2430
      %v2501 = vsel %vm262, %v1251, %v2432
      %v2502 = vsel %vm262, %v1254, %v2434
      %v2503 = vsel %vm262, %v1259, %v2436
      %v2504 = vsel %vm262, %v1262, %v2438
      %v2505 = vsel %vm262, %v1267, %v2440
      %v2506 = vsel %vm262, %v1270, %v2442
      %v2507 = vpack.c.bf16 %v2476, %v2475
      %v2508 = vpack.c.bf16 %v2478, %v2477
      %v2509 = vpack.c.bf16 %v2480, %v2479
      %v2510 = vpack.c.bf16 %v2482, %v2481
      %v2511 = vpack.c.bf16 %v2484, %v2483
      %v2512 = vpack.c.bf16 %v2486, %v2485
      %v2513 = vpack.c.bf16 %v2488, %v2487
      %v2514 = vpack.c.bf16 %v2490, %v2489
      %v2515 = vpack.c.bf16 %v2492, %v2491
      %v2516 = vpack.c.bf16 %v2494, %v2493
      %v2517 = vpack.c.bf16 %v2496, %v2495
      %v2518 = vpack.c.bf16 %v2498, %v2497
      %v2519 = vpack.c.bf16 %v2500, %v2499
      %v2520 = vpack.c.bf16 %v2502, %v2501
      %v2521 = vpack.c.bf16 %v2504, %v2503
      %v2522 = vpack.c.bf16 %v2506, %v2505
      %v2539 = vunpack.c.l.b16 %v2507
      %v2540 = vunpack.c.h.b16 %v2507
      %v2541 = vunpack.c.l.b16 %v2508
      %v2542 = vunpack.c.h.b16 %v2508
      %v2543 = vunpack.c.l.b16 %v2509
      %v2544 = vunpack.c.h.b16 %v2509
      %v2545 = vunpack.c.l.b16 %v2510
      %v2546 = vunpack.c.h.b16 %v2510
      %v2547 = vunpack.c.l.b16 %v2511
      %v2548 = vunpack.c.h.b16 %v2511
      %v2549 = vunpack.c.l.b16 %v2512
      %v2550 = vunpack.c.h.b16 %v2512
      %v2551 = vunpack.c.l.b16 %v2513
      %v2552 = vunpack.c.h.b16 %v2513
      %v2553 = vunpack.c.l.b16 %v2514
      %v2554 = vunpack.c.h.b16 %v2514
      %v2555 = vunpack.c.l.b16 %v2515
      %v2556 = vunpack.c.h.b16 %v2515
      %v2557 = vunpack.c.l.b16 %v2516
      %v2558 = vunpack.c.h.b16 %v2516
      %v2559 = vunpack.c.l.b16 %v2517
      %v2560 = vunpack.c.h.b16 %v2517
      %v2561 = vunpack.c.l.b16 %v2518
      %v2562 = vunpack.c.h.b16 %v2518
      %v2563 = vunpack.c.l.b16 %v2519
      %v2564 = vunpack.c.h.b16 %v2519
      %v2565 = vunpack.c.l.b16 %v2520
      %v2566 = vunpack.c.h.b16 %v2520
      %v2567 = vunpack.c.l.b16 %v2521
      %v2568 = vunpack.c.h.b16 %v2521
      %v2569 = vunpack.c.l.b16 %v2522
      %v2570 = vunpack.c.h.b16 %v2522
      %v2571 = vpack.c.b16 %v2539, %v2539
      %v2572 = vpack.c.b16 %v2540, %v2540
      %v2573 = vpack.c.b16 %v2541, %v2541
      %v2574 = vpack.c.b16 %v2542, %v2542
      %v2575 = vpack.c.b16 %v2543, %v2543
      %v2576 = vpack.c.b16 %v2544, %v2544
      %v2577 = vpack.c.b16 %v2545, %v2545
      %v2578 = vpack.c.b16 %v2546, %v2546
      %v2579 = vpack.c.b16 %v2547, %v2547
      %v2580 = vpack.c.b16 %v2548, %v2548
      %v2581 = vpack.c.b16 %v2549, %v2549
      %v2582 = vpack.c.b16 %v2550, %v2550
      %v2583 = vpack.c.b16 %v2551, %v2551
      %v2584 = vpack.c.b16 %v2552, %v2552
      %v2585 = vpack.c.b16 %v2553, %v2553
      %v2586 = vpack.c.b16 %v2554, %v2554
      %v2587 = vpack.c.b16 %v2555, %v2555
      %v2588 = vpack.c.b16 %v2556, %v2556
      %v2589 = vpack.c.b16 %v2557, %v2557
      %v2590 = vpack.c.b16 %v2558, %v2558
      %v2591 = vpack.c.b16 %v2559, %v2559
      %v2592 = vpack.c.b16 %v2560, %v2560
      %v2593 = vpack.c.b16 %v2561, %v2561
      %v2594 = vpack.c.b16 %v2562, %v2562
      %v2595 = vpack.c.b16 %v2563, %v2563
      %v2596 = vpack.c.b16 %v2564, %v2564
      %v2597 = vpack.c.b16 %v2565, %v2565
      %v2598 = vpack.c.b16 %v2566, %v2566
      %v2599 = vpack.c.b16 %v2567, %v2567
      %v2600 = vpack.c.b16 %v2568, %v2568
      %v2601 = vpack.c.b16 %v2569, %v2569
      %v2602 = vpack.c.b16 %v2570, %v2570
      %vm2635 = vcmask 125952
      %2636 = vst.msk [vmem:[%s116] sm:$0xf] %vm2635, %v2571
      %2637 = vst.msk [vmem:[%s116 + $0x4] sm:$0xf] %vm2635, %v2572
      %2638 = vst.msk [vmem:[%s116 + $0x8] sm:$0xf] %vm2635, %v2573
      %2639 = vst.msk [vmem:[%s116 + $0xc] sm:$0xf] %vm2635, %v2574
      %2640 = vst.msk [vmem:[%s116 + $0x10] sm:$0xf] %vm2635, %v2575
      %2641 = vst.msk [vmem:[%s116 + $0x14] sm:$0xf] %vm2635, %v2576
      %2642 = vst.msk [vmem:[%s116 + $0x18] sm:$0xf] %vm2635, %v2577
      %2643 = vst.msk [vmem:[%s116 + $0x1c] sm:$0xf] %vm2635, %v2578
      %2644 = vst.msk [vmem:[%s116 + $0x20] sm:$0xf] %vm2635, %v2579
      %2645 = vst.msk [vmem:[%s116 + $0x24] sm:$0xf] %vm2635, %v2580
      %2646 = vst.msk [vmem:[%s116 + $0x28] sm:$0xf] %vm2635, %v2581
      %2647 = vst.msk [vmem:[%s116 + $0x2c] sm:$0xf] %vm2635, %v2582
      %2648 = vst.msk [vmem:[%s116 + $0x30] sm:$0xf] %vm2635, %v2583
      %2649 = vst.msk [vmem:[%s116 + $0x34] sm:$0xf] %vm2635, %v2584
      %2650 = vst.msk [vmem:[%s116 + $0x38] sm:$0xf] %vm2635, %v2585
      %2651 = vst.msk [vmem:[%s116 + $0x3c] sm:$0xf] %vm2635, %v2586
      %2652 = vst.msk [vmem:[%s116 + $0x40] sm:$0xf] %vm2635, %v2587
      %2653 = vst.msk [vmem:[%s116 + $0x44] sm:$0xf] %vm2635, %v2588
      %2654 = vst.msk [vmem:[%s116 + $0x48] sm:$0xf] %vm2635, %v2589
      %2655 = vst.msk [vmem:[%s116 + $0x4c] sm:$0xf] %vm2635, %v2590
      %2656 = vst.msk [vmem:[%s116 + $0x50] sm:$0xf] %vm2635, %v2591
      %2657 = vst.msk [vmem:[%s116 + $0x54] sm:$0xf] %vm2635, %v2592
      %2658 = vst.msk [vmem:[%s116 + $0x58] sm:$0xf] %vm2635, %v2593
      %2659 = vst.msk [vmem:[%s116 + $0x5c] sm:$0xf] %vm2635, %v2594
      %2660 = vst.msk [vmem:[%s116 + $0x60] sm:$0xf] %vm2635, %v2595
      %2661 = vst.msk [vmem:[%s116 + $0x64] sm:$0xf] %vm2635, %v2596
      %2662 = vst.msk [vmem:[%s116 + $0x68] sm:$0xf] %vm2635, %v2597
      %2663 = vst.msk [vmem:[%s116 + $0x6c] sm:$0xf] %vm2635, %v2598
      %2664 = vst.msk [vmem:[%s116 + $0x70] sm:$0xf] %vm2635, %v2599
      %2665 = vst.msk [vmem:[%s116 + $0x74] sm:$0xf] %vm2635, %v2600
      %2666 = vst.msk [vmem:[%s116 + $0x78] sm:$0xf] %vm2635, %v2601
      %2667 = vst.msk [vmem:[%s116 + $0x7c] sm:$0xf] %vm2635, %v2602
      %p2668 = scmp.lt.s32.totalorder %s12, 1
      %s2669 = scalar_select %p2668, %s12, 1
      %s2670 = smul.addr %s2669, 32
      %s2671 = smul.addr %s2670, 4
      %s2672 = scalar_lea.vmem %s1, %s2671
      // Predicated region
      $region25: #{unet_skip_block_forward.10} parent=23 // pred_check
        %p2673 = pneg %p56
      $region26: #{unet_skip_block_forward.10} parent=23 // pred_check_branch
        %2675 = sbr.rel (%p2673) target = $region28
      $region27: #{unet_skip_block_forward.10} parent=23 // pred_region
        _
      $region28: #{unet_skip_block_forward.10} parent=23 // pred_fallthru
        _
    $region24: #{unet_skip_block_forward.10} parent=5 // pred_fallthru
      _
    %p2676 = scmp.le.s32.totalorder 2, %s7
    // Predicated region
    $region29: #{unet_skip_block_forward.10} parent=5 // pred_check
      %p2677 = pneg %p2676
    $region30: #{unet_skip_block_forward.10} parent=5 // pred_check_branch
      %2679 = sbr.rel (%p2677) target = $region32
    $region31: #{unet_skip_block_forward.10} parent=5 // pred_region
      %s2680 = ssub.s32 %s7, 2
      // Predicated region
      $region33: #{unet_skip_block_forward.10} parent=31 // pred_check
        %p2681 = pneg %p62
      $region34: #{unet_skip_block_forward.10} parent=31 // pred_check_branch
        %2683 = sbr.rel (%p2681) target = $region36
      $region35: #{unet_skip_block_forward.10} parent=31 // pred_region
        %p2684 = scmp.lt.s32.totalorder %s13, 1
        %s2685 = scalar_select %p2684, %s13, 1
        %s2686 = smul.addr %s2685, 32
        %s2687 = smul.addr %s2686, 4
        %s2688 = scalar_lea.vmem %s1, %s2687
      $region36: #{unet_skip_block_forward.10} parent=31 // pred_fallthru
        _
    $region32: #{unet_skip_block_forward.10} parent=5 // pred_fallthru
      _
  $region6: #{unet_skip_block_forward.10} parent=0 // loop_footer
    %s11 = sadd.s32 1, %s7
  $region7: #{unet_skip_block_forward.10} parent=0 // loop_footer_branch
    %6 = sbr.rel target = $region3
  $region8: #{unet_skip_block_forward.10} parent=0 // loop_exit
    _

// kernel: unet_skip_block_forward.13
$region0: #{unet_skip_block_forward.13}
  #allocation0 [shape = 'u32[]', space=smem, size = 0x4, offset = 0x4, fixed_abs, tag = 'smem constant byte address 0x4 - core index']
  #allocation1 [shape = 'u32[144,128]{1,0:T(1,128)}', space=vmem, size = 0x12000, scoped, tag = 'internal scratch']
  %s0 = inlined_call_operand.vmem [shape: bf16[512,64], index: 0, kind: input, shape index: {}]
  %s1 = inlined_call_operand.vmem [shape: bf16[64,16], index: 1, kind: input, shape index: {}]
  %s2 = inlined_call_operand.vmem [shape: f32[1,16], index: 2, kind: input, shape index: {}]
  %s3 = inlined_call_operand.vmem [shape: f32[512,16], index: 3, kind: input, shape index: {}]
  %s4 = inlined_call_operand.vmem [shape: f32[512,16], index: 4, kind: output, shape index: {}]
  %s5 = sld [smem:[#allocation0]]
  $region26: #{unet_skip_block_forward.13} parent=0
    _
  %s7 = ssub.s32 1, %s5
  %s8 = scalar_select 0, %s7, %s5
  // Predicated region
  $region2: #{unet_skip_block_forward.13} parent=0 // pred_check
    _
  $region3: #{unet_skip_block_forward.13} parent=0 // pred_check_branch
    %10 = sbr.rel (0) target = $region5
  $region4: #{unet_skip_block_forward.13} parent=0 // pred_region
    _
  $region5: #{unet_skip_block_forward.13} parent=0 // pred_fallthru
    _
  // Predicated region
  $region6: #{unet_skip_block_forward.13} parent=0 // pred_check
    _
  $region7: #{unet_skip_block_forward.13} parent=0 // pred_check_branch
    %12 = sbr.rel (0) target = $region9
  $region8: #{unet_skip_block_forward.13} parent=0 // pred_region
    _
  $region9: #{unet_skip_block_forward.13} parent=0 // pred_fallthru
    _
  // Predicated region
  $region10: #{unet_skip_block_forward.13} parent=0 // pred_check
    _
  $region11: #{unet_skip_block_forward.13} parent=0 // pred_check_branch
    %14 = sbr.rel (0) target = $region13
  $region12: #{unet_skip_block_forward.13} parent=0 // pred_region
    _
  $region13: #{unet_skip_block_forward.13} parent=0 // pred_fallthru
    _
  // Predicated region
  $region14: #{unet_skip_block_forward.13} parent=0 // pred_check
    _
  $region15: #{unet_skip_block_forward.13} parent=0 // pred_check_branch
    %16 = sbr.rel (0) target = $region17
  $region16: #{unet_skip_block_forward.13} parent=0 // pred_region
    _
  $region17: #{unet_skip_block_forward.13} parent=0 // pred_fallthru
    _
  %v18 = vld [vmem:[%s0] sm:$0xf]
  %v19 = vld [vmem:[%s0 + $0x4] sm:$0xf]
  %v20 = vld [vmem:[%s0 + $0x8] sm:$0xf]
  %v21 = vld [vmem:[%s0 + $0xc] sm:$0xf]
  %v22 = vld [vmem:[%s0 + $0x10] sm:$0xf]
  %v23 = vld [vmem:[%s0 + $0x14] sm:$0xf]
  %v24 = vld [vmem:[%s0 + $0x18] sm:$0xf]
  %v25 = vld [vmem:[%s0 + $0x1c] sm:$0xf]
  %v26 = vld [vmem:[%s0 + $0x20] sm:$0xf]
  %v27 = vld [vmem:[%s0 + $0x24] sm:$0xf]
  %v28 = vld [vmem:[%s0 + $0x28] sm:$0xf]
  %v29 = vld [vmem:[%s0 + $0x2c] sm:$0xf]
  %v30 = vld [vmem:[%s0 + $0x30] sm:$0xf]
  %v31 = vld [vmem:[%s0 + $0x34] sm:$0xf]
  %v32 = vld [vmem:[%s0 + $0x38] sm:$0xf]
  %v33 = vld [vmem:[%s0 + $0x3c] sm:$0xf]
  %v34 = vld [vmem:[%s0 + $0x40] sm:$0xf]
  %v35 = vld [vmem:[%s0 + $0x44] sm:$0xf]
  %v36 = vld [vmem:[%s0 + $0x48] sm:$0xf]
  %v37 = vld [vmem:[%s0 + $0x4c] sm:$0xf]
  %v38 = vld [vmem:[%s0 + $0x50] sm:$0xf]
  %v39 = vld [vmem:[%s0 + $0x54] sm:$0xf]
  %v40 = vld [vmem:[%s0 + $0x58] sm:$0xf]
  %v41 = vld [vmem:[%s0 + $0x5c] sm:$0xf]
  %v42 = vld [vmem:[%s0 + $0x60] sm:$0xf]
  %v43 = vld [vmem:[%s0 + $0x64] sm:$0xf]
  %v44 = vld [vmem:[%s0 + $0x68] sm:$0xf]
  %v45 = vld [vmem:[%s0 + $0x6c] sm:$0xf]
  %v46 = vld [vmem:[%s0 + $0x70] sm:$0xf]
  %v47 = vld [vmem:[%s0 + $0x74] sm:$0xf]
  %v48 = vld [vmem:[%s0 + $0x78] sm:$0xf]
  %v49 = vld [vmem:[%s0 + $0x7c] sm:$0xf]
  %v50 = vld [vmem:[%s0 + $0x80] sm:$0xf]
  %v51 = vld [vmem:[%s0 + $0x84] sm:$0xf]
  %v52 = vld [vmem:[%s0 + $0x88] sm:$0xf]
  %v53 = vld [vmem:[%s0 + $0x8c] sm:$0xf]
  %v54 = vld [vmem:[%s0 + $0x90] sm:$0xf]
  %v55 = vld [vmem:[%s0 + $0x94] sm:$0xf]
  %v56 = vld [vmem:[%s0 + $0x98] sm:$0xf]
  %v57 = vld [vmem:[%s0 + $0x9c] sm:$0xf]
  %v58 = vld [vmem:[%s0 + $0xa0] sm:$0xf]
  %v59 = vld [vmem:[%s0 + $0xa4] sm:$0xf]
  %v60 = vld [vmem:[%s0 + $0xa8] sm:$0xf]
  %v61 = vld [vmem:[%s0 + $0xac] sm:$0xf]
  %v62 = vld [vmem:[%s0 + $0xb0] sm:$0xf]
  %v63 = vld [vmem:[%s0 + $0xb4] sm:$0xf]
  %v64 = vld [vmem:[%s0 + $0xb8] sm:$0xf]
  %v65 = vld [vmem:[%s0 + $0xbc] sm:$0xf]
  %v66 = vld [vmem:[%s0 + $0xc0] sm:$0xf]
  %v67 = vld [vmem:[%s0 + $0xc4] sm:$0xf]
  %v68 = vld [vmem:[%s0 + $0xc8] sm:$0xf]
  %v69 = vld [vmem:[%s0 + $0xcc] sm:$0xf]
  %v70 = vld [vmem:[%s0 + $0xd0] sm:$0xf]
  %v71 = vld [vmem:[%s0 + $0xd4] sm:$0xf]
  %v72 = vld [vmem:[%s0 + $0xd8] sm:$0xf]
  %v73 = vld [vmem:[%s0 + $0xdc] sm:$0xf]
  %v74 = vld [vmem:[%s0 + $0xe0] sm:$0xf]
  %v75 = vld [vmem:[%s0 + $0xe4] sm:$0xf]
  %v76 = vld [vmem:[%s0 + $0xe8] sm:$0xf]
  %v77 = vld [vmem:[%s0 + $0xec] sm:$0xf]
  %v78 = vld [vmem:[%s0 + $0xf0] sm:$0xf]
  %v79 = vld [vmem:[%s0 + $0xf4] sm:$0xf]
  %v80 = vld [vmem:[%s0 + $0xf8] sm:$0xf]
  %v81 = vld [vmem:[%s0 + $0xfc] sm:$0xf]
  %v82 = vld [vmem:[%s1] sm:$0xf]
  %v83 = vld [vmem:[%s1 + $0x4] sm:$0xf]
  %v84 = vld [vmem:[%s1 + $0x8] sm:$0xf]
  %v85 = vld [vmem:[%s1 + $0xc] sm:$0xf]
  %v86 = vld [vmem:[%s1 + $0x10] sm:$0xf]
  %v87 = vld [vmem:[%s1 + $0x14] sm:$0xf]
  %v88 = vld [vmem:[%s1 + $0x18] sm:$0xf]
  %v89 = vld [vmem:[%s1 + $0x1c] sm:$0xf]
  %v90 = vld [vmem:[%s2] sm:$0x1]
  %v92 = vlaneseq
  %v93 = vshrl.u32 %v92, 7
  %v94 = vsub.s32 0, %v93
  %v95 = vrot.slane %v90, %v94
  %v161 = vunpack.c.l.b16 %v18
  %v162 = vunpack.c.l.b16 %v19
  %v163 = vunpack.c.l.b16 %v20
  %v164 = vunpack.c.l.b16 %v21
  %v165 = vunpack.c.l.b16 %v22
  %v166 = vunpack.c.l.b16 %v23
  %v167 = vunpack.c.l.b16 %v24
  %v168 = vunpack.c.l.b16 %v25
  %v169 = vunpack.c.l.b16 %v26
  %v170 = vunpack.c.l.b16 %v27
  %v171 = vunpack.c.l.b16 %v28
  %v172 = vunpack.c.l.b16 %v29
  %v173 = vunpack.c.l.b16 %v30
  %v174 = vunpack.c.l.b16 %v31
  %v175 = vunpack.c.l.b16 %v32
  %v176 = vunpack.c.l.b16 %v33
  %v177 = vunpack.c.l.b16 %v34
  %v178 = vunpack.c.l.b16 %v35
  %v179 = vunpack.c.l.b16 %v36
  %v180 = vunpack.c.l.b16 %v37
  %v181 = vunpack.c.l.b16 %v38
  %v182 = vunpack.c.l.b16 %v39
  %v183 = vunpack.c.l.b16 %v40
  %v184 = vunpack.c.l.b16 %v41
  %v185 = vunpack.c.l.b16 %v42
  %v186 = vunpack.c.l.b16 %v43
  %v187 = vunpack.c.l.b16 %v44
  %v188 = vunpack.c.l.b16 %v45
  %v189 = vunpack.c.l.b16 %v46
  %v190 = vunpack.c.l.b16 %v47
  %v191 = vunpack.c.l.b16 %v48
  %v192 = vunpack.c.l.b16 %v49
  %v193 = vunpack.c.l.b16 %v50
  %v194 = vunpack.c.l.b16 %v51
  %v195 = vunpack.c.l.b16 %v52
  %v196 = vunpack.c.l.b16 %v53
  %v197 = vunpack.c.l.b16 %v54
  %v198 = vunpack.c.l.b16 %v55
  %v199 = vunpack.c.l.b16 %v56
  %v200 = vunpack.c.l.b16 %v57
  %v201 = vunpack.c.l.b16 %v58
  %v202 = vunpack.c.l.b16 %v59
  %v203 = vunpack.c.l.b16 %v60
  %v204 = vunpack.c.l.b16 %v61
  %v205 = vunpack.c.l.b16 %v62
  %v206 = vunpack.c.l.b16 %v63
  %v207 = vunpack.c.l.b16 %v64
  %v208 = vunpack.c.l.b16 %v65
  %v209 = vunpack.c.l.b16 %v66
  %v210 = vunpack.c.l.b16 %v67
  %v211 = vunpack.c.l.b16 %v68
  %v212 = vunpack.c.l.b16 %v69
  %v213 = vunpack.c.l.b16 %v70
  %v214 = vunpack.c.l.b16 %v71
  %v215 = vunpack.c.l.b16 %v72
  %v216 = vunpack.c.l.b16 %v73
  %v217 = vunpack.c.l.b16 %v74
  %v218 = vunpack.c.l.b16 %v75
  %v219 = vunpack.c.l.b16 %v76
  %v220 = vunpack.c.l.b16 %v77
  %v221 = vunpack.c.l.b16 %v78
  %v222 = vunpack.c.l.b16 %v79
  %v223 = vunpack.c.l.b16 %v80
  %v224 = vunpack.c.l.b16 %v81
  %v225 = vpack.c.b16 %v162, %v161
  %v226 = vpack.c.b16 %v164, %v163
  %v227 = vpack.c.b16 %v166, %v165
  %v228 = vpack.c.b16 %v168, %v167
  %v229 = vpack.c.b16 %v170, %v169
  %v230 = vpack.c.b16 %v172, %v171
  %v231 = vpack.c.b16 %v174, %v173
  %v232 = vpack.c.b16 %v176, %v175
  %v233 = vpack.c.b16 %v178, %v177
  %v234 = vpack.c.b16 %v180, %v179
  %v235 = vpack.c.b16 %v182, %v181
  %v236 = vpack.c.b16 %v184, %v183
  %v237 = vpack.c.b16 %v186, %v185
  %v238 = vpack.c.b16 %v188, %v187
  %v239 = vpack.c.b16 %v190, %v189
  %v240 = vpack.c.b16 %v192, %v191
  %v241 = vpack.c.b16 %v194, %v193
  %v242 = vpack.c.b16 %v196, %v195
  %v243 = vpack.c.b16 %v198, %v197
  %v244 = vpack.c.b16 %v200, %v199
  %v245 = vpack.c.b16 %v202, %v201
  %v246 = vpack.c.b16 %v204, %v203
  %v247 = vpack.c.b16 %v206, %v205
  %v248 = vpack.c.b16 %v208, %v207
  %v249 = vpack.c.b16 %v210, %v209
  %v250 = vpack.c.b16 %v212, %v211
  %v251 = vpack.c.b16 %v214, %v213
  %v252 = vpack.c.b16 %v216, %v215
  %v253 = vpack.c.b16 %v218, %v217
  %v254 = vpack.c.b16 %v220, %v219
  %v255 = vpack.c.b16 %v222, %v221
  %v256 = vpack.c.b16 %v224, %v223
  %v265 = vunpack.c.l.b16 %v82
  %v266 = vunpack.c.l.b16 %v83
  %v267 = vunpack.c.l.b16 %v84
  %v268 = vunpack.c.l.b16 %v85
  %v269 = vunpack.c.l.b16 %v86
  %v270 = vunpack.c.l.b16 %v87
  %v271 = vunpack.c.l.b16 %v88
  %v272 = vunpack.c.l.b16 %v89
  %v273 = vpack.c.b16 %v266, %v265
  %v274 = vpack.c.b16 %v268, %v267
  %v275 = vpack.c.b16 %v270, %v269
  %v276 = vpack.c.b16 %v272, %v271
  %vm281 = vcmask 523264
  %v283 = vsel %vm281, %v225, 0
  %v286 = vsel %vm281, %v226, 0
  %v289 = vsel %vm281, %v227, 0
  %v292 = vsel %vm281, %v228, 0
  %v295 = vsel %vm281, %v229, 0
  %v298 = vsel %vm281, %v230, 0
  %v301 = vsel %vm281, %v231, 0
  %v304 = vsel %vm281, %v232, 0
  %v307 = vsel %vm281, %v233, 0
  %v310 = vsel %vm281, %v234, 0
  %v313 = vsel %vm281, %v235, 0
  %v316 = vsel %vm281, %v236, 0
  %v319 = vsel %vm281, %v237, 0
  %v322 = vsel %vm281, %v238, 0
  %v325 = vsel %vm281, %v239, 0
  %v328 = vsel %vm281, %v240, 0
  %v331 = vsel %vm281, %v241, 0
  %v334 = vsel %vm281, %v242, 0
  %v337 = vsel %vm281, %v243, 0
  %v340 = vsel %vm281, %v244, 0
  %v343 = vsel %vm281, %v245, 0
  %v346 = vsel %vm281, %v246, 0
  %v349 = vsel %vm281, %v247, 0
  %v352 = vsel %vm281, %v248, 0
  %v355 = vsel %vm281, %v249, 0
  %v358 = vsel %vm281, %v250, 0
  %v361 = vsel %vm281, %v251, 0
  %v364 = vsel %vm281, %v252, 0
  %v367 = vsel %vm281, %v253, 0
  %v370 = vsel %vm281, %v254, 0
  %v373 = vsel %vm281, %v255, 0
  %v376 = vsel %vm281, %v256, 0
  %378 = vmatprep.subr.bf16.mxu0 0
  %379 = vmatpush1.bf16.msra.mxu0 %v273
  %380 = vmatprep.subr.bf16.mxu0 0
  %381 = vmatpush1.bf16.msra.mxu0 %v274
  %382 = vmatprep.subr.bf16.mxu0 0
  %383 = vmatpush1.bf16.msra.mxu0 %v275
  %384 = vmatprep.subr.bf16.mxu0 0
  %385 = vmatpush1.bf16.msra.mxu0 %v276
  %386 = vmatprep.subr.bf16.mxu0 0
  %387 = vmatpush1.bf16.msra.mxu0 0
  %388 = vmatprep.subr.bf16.mxu0 0
  %389 = vmatpush1.bf16.msra.mxu0 0
  %390 = vmatprep.subr.bf16.mxu0 0
  %391 = vmatpush1.bf16.msra.mxu0 0
  %392 = vmatprep.subr.bf16.mxu0 0
  %393 = vmatpush1.bf16.msra.mxu0 0
  %394 = vmatprep.subr.bf16.mxu0 0
  %395 = vmatpush1.bf16.msra.mxu0 0
  %396 = vmatprep.subr.bf16.mxu0 0
  %397 = vmatpush1.bf16.msra.mxu0 0
  %398 = vmatprep.subr.bf16.mxu0 0
  %399 = vmatpush1.bf16.msra.mxu0 0
  %400 = vmatprep.subr.bf16.mxu0 0
  %401 = vmatpush1.bf16.msra.mxu0 0
  %402 = vmatprep.subr.bf16.mxu0 0
  %403 = vmatpush1.bf16.msra.mxu0 0
  %404 = vmatprep.subr.bf16.mxu0 0
  %405 = vmatpush1.bf16.msra.mxu0 0
  %406 = vmatprep.subr.bf16.mxu0 0
  %407 = vmatpush1.bf16.msra.mxu0 0
  %408 = vmatprep.subr.bf16.mxu0 0
  %409 = vmatpush1.bf16.msra.mxu0 0
  %410 = vmatprep.mubr.bf16.mxu0 0
  %411 = vmatmul.mubr.bf16.gmra.mrb[0].mxu0 %v283
  %v412 = vpop.f32.mrb[0].mxu0
  %v413 = vadd.f32 %v95, %v412
  %v414 = vpop.f32.mrb[0].mxu0
  %v415 = vpop.f32.mrb[0].mxu0
  %v416 = vadd.f32 %v95, %v415
  %v417 = vpop.f32.mrb[0].mxu0
  %418 = vmatprep.mubr.bf16.mxu0 0
  %419 = vmatmul.mubr.bf16.gmra.mrb[0].mxu0 %v286
  %v420 = vpop.f32.mrb[0].mxu0
  %v421 = vadd.f32 %v95, %v420
  %v422 = vpop.f32.mrb[0].mxu0
  %v423 = vpop.f32.mrb[0].mxu0
  %v424 = vadd.f32 %v95, %v423
  %v425 = vpop.f32.mrb[0].mxu0
  %426 = vmatprep.mubr.bf16.mxu0 0
  %427 = vmatmul.mubr.bf16.gmra.mrb[0].mxu0 %v289
  %v428 = vpop.f32.mrb[0].mxu0
  %v429 = vadd.f32 %v95, %v428
  %v430 = vpop.f32.mrb[0].mxu0
  %v431 = vpop.f32.mrb[0].mxu0
  %v432 = vadd.f32 %v95, %v431
  %v433 = vpop.f32.mrb[0].mxu0
  %434 = vmatprep.mubr.bf16.mxu0 0
  %435 = vmatmul.mubr.bf16.gmra.mrb[0].mxu0 %v292
  %v436 = vpop.f32.mrb[0].mxu0
  %v437 = vadd.f32 %v95, %v436
  %v438 = vpop.f32.mrb[0].mxu0
  %v439 = vpop.f32.mrb[0].mxu0
  %v440 = vadd.f32 %v95, %v439
  %v441 = vpop.f32.mrb[0].mxu0
  %442 = vmatprep.mubr.bf16.mxu0 0
  %443 = vmatmul.mubr.bf16.gmra.mrb[0].mxu0 %v295
  %v444 = vpop.f32.mrb[0].mxu0
  %v445 = vadd.f32 %v95, %v444
  %v446 = vpop.f32.mrb[0].mxu0
  %v447 = vpop.f32.mrb[0].mxu0
  %v448 = vadd.f32 %v95, %v447
  %v449 = vpop.f32.mrb[0].mxu0
  %450 = vmatprep.mubr.bf16.mxu0 0
  %451 = vmatmul.mubr.bf16.gmra.mrb[0].mxu0 %v298
  %v452 = vpop.f32.mrb[0].mxu0
  %v453 = vadd.f32 %v95, %v452
  %v454 = vpop.f32.mrb[0].mxu0
  %v455 = vpop.f32.mrb[0].mxu0
  %v456 = vadd.f32 %v95, %v455
  %v457 = vpop.f32.mrb[0].mxu0
  %458 = vmatprep.mubr.bf16.mxu0 0
  %459 = vmatmul.mubr.bf16.gmra.mrb[0].mxu0 %v301
  %v460 = vpop.f32.mrb[0].mxu0
  %v461 = vadd.f32 %v95, %v460
  %v462 = vpop.f32.mrb[0].mxu0
  %v463 = vpop.f32.mrb[0].mxu0
  %v464 = vadd.f32 %v95, %v463
  %v465 = vpop.f32.mrb[0].mxu0
  %466 = vmatprep.mubr.bf16.mxu0 0
  %467 = vmatmul.mubr.bf16.gmra.mrb[0].mxu0 %v304
  %v468 = vpop.f32.mrb[0].mxu0
  %v469 = vadd.f32 %v95, %v468
  %v470 = vpop.f32.mrb[0].mxu0
  %v471 = vpop.f32.mrb[0].mxu0
  %v472 = vadd.f32 %v95, %v471
  %v473 = vpop.f32.mrb[0].mxu0
  %474 = vmatprep.mubr.bf16.mxu0 0
  %475 = vmatmul.mubr.bf16.gmra.mrb[0].mxu0 %v307
  %v476 = vpop.f32.mrb[0].mxu0
  %v477 = vadd.f32 %v95, %v476
  %v478 = vpop.f32.mrb[0].mxu0
  %v479 = vpop.f32.mrb[0].mxu0
  %v480 = vadd.f32 %v95, %v479
  %v481 = vpop.f32.mrb[0].mxu0
  %482 = vmatprep.mubr.bf16.mxu0 0
  %483 = vmatmul.mubr.bf16.gmra.mrb[0].mxu0 %v310
  %v484 = vpop.f32.mrb[0].mxu0
  %v485 = vadd.f32 %v95, %v484
  %v486 = vpop.f32.mrb[0].mxu0
  %v487 = vpop.f32.mrb[0].mxu0
  %v488 = vadd.f32 %v95, %v487
  %v489 = vpop.f32.mrb[0].mxu0
  %490 = vmatprep.mubr.bf16.mxu0 0
  %491 = vmatmul.mubr.bf16.gmra.mrb[0].mxu0 %v313
  %v492 = vpop.f32.mrb[0].mxu0
  %v493 = vadd.f32 %v95, %v492
  %v494 = vpop.f32.mrb[0].mxu0
  %v495 = vpop.f32.mrb[0].mxu0
  %v496 = vadd.f32 %v95, %v495
  %v497 = vpop.f32.mrb[0].mxu0
  %498 = vmatprep.mubr.bf16.mxu0 0
  %499 = vmatmul.mubr.bf16.gmra.mrb[0].mxu0 %v316
  %v500 = vpop.f32.mrb[0].mxu0
  %v501 = vadd.f32 %v95, %v500
  %v502 = vpop.f32.mrb[0].mxu0
  %v503 = vpop.f32.mrb[0].mxu0
  %v504 = vadd.f32 %v95, %v503
  %v505 = vpop.f32.mrb[0].mxu0
  %506 = vmatprep.mubr.bf16.mxu0 0
  %507 = vmatmul.mubr.bf16.gmra.mrb[0].mxu0 %v319
  %v508 = vpop.f32.mrb[0].mxu0
  %v509 = vadd.f32 %v95, %v508
  %v510 = vpop.f32.mrb[0].mxu0
  %v511 = vpop.f32.mrb[0].mxu0
  %v512 = vadd.f32 %v95, %v511
  %v513 = vpop.f32.mrb[0].mxu0
  %514 = vmatprep.mubr.bf16.mxu0 0
  %515 = vmatmul.mubr.bf16.gmra.mrb[0].mxu0 %v322
  %v516 = vpop.f32.mrb[0].mxu0
  %v517 = vadd.f32 %v95, %v516
  %v518 = vpop.f32.mrb[0].mxu0
  %v519 = vpop.f32.mrb[0].mxu0
  %v520 = vadd.f32 %v95, %v519
  %v521 = vpop.f32.mrb[0].mxu0
  %522 = vmatprep.mubr.bf16.mxu0 0
  %523 = vmatmul.mubr.bf16.gmra.mrb[0].mxu0 %v325
  %v524 = vpop.f32.mrb[0].mxu0
  %v525 = vadd.f32 %v95, %v524
  %v526 = vpop.f32.mrb[0].mxu0
  %v527 = vpop.f32.mrb[0].mxu0
  %v528 = vadd.f32 %v95, %v527
  %v529 = vpop.f32.mrb[0].mxu0
  %530 = vmatprep.mubr.bf16.mxu0 0
  %531 = vmatmul.mubr.bf16.gmra.mrb[0].mxu0 %v328
  %v532 = vpop.f32.mrb[0].mxu0
  %v533 = vadd.f32 %v95, %v532
  %v534 = vpop.f32.mrb[0].mxu0
  %v535 = vpop.f32.mrb[0].mxu0
  %v536 = vadd.f32 %v95, %v535
  %v537 = vpop.f32.mrb[0].mxu0
  %538 = vmatprep.mubr.bf16.mxu0 0
  %539 = vmatmul.mubr.bf16.gmra.mrb[0].mxu0 %v331
  %v540 = vpop.f32.mrb[0].mxu0
  %v541 = vadd.f32 %v95, %v540
  %v542 = vpop.f32.mrb[0].mxu0
  %v543 = vpop.f32.mrb[0].mxu0
  %v544 = vadd.f32 %v95, %v543
  %v545 = vpop.f32.mrb[0].mxu0
  %546 = vmatprep.mubr.bf16.mxu0 0
  %547 = vmatmul.mubr.bf16.gmra.mrb[0].mxu0 %v334
  %v548 = vpop.f32.mrb[0].mxu0
  %v549 = vadd.f32 %v95, %v548
  %v550 = vpop.f32.mrb[0].mxu0
  %v551 = vpop.f32.mrb[0].mxu0
  %v552 = vadd.f32 %v95, %v551
  %v553 = vpop.f32.mrb[0].mxu0
  %554 = vmatprep.mubr.bf16.mxu0 0
  %555 = vmatmul.mubr.bf16.gmra.mrb[0].mxu0 %v337
  %v556 = vpop.f32.mrb[0].mxu0
  %v557 = vadd.f32 %v95, %v556
  %v558 = vpop.f32.mrb[0].mxu0
  %v559 = vpop.f32.mrb[0].mxu0
  %v560 = vadd.f32 %v95, %v559
  %v561 = vpop.f32.mrb[0].mxu0
  %562 = vmatprep.mubr.bf16.mxu0 0
  %563 = vmatmul.mubr.bf16.gmra.mrb[0].mxu0 %v340
  %v564 = vpop.f32.mrb[0].mxu0
  %v565 = vadd.f32 %v95, %v564
  %v566 = vpop.f32.mrb[0].mxu0
  %v567 = vpop.f32.mrb[0].mxu0
  %v568 = vadd.f32 %v95, %v567
  %v569 = vpop.f32.mrb[0].mxu0
  %570 = vmatprep.mubr.bf16.mxu0 0
  %571 = vmatmul.mubr.bf16.gmra.mrb[0].mxu0 %v343
  %v572 = vpop.f32.mrb[0].mxu0
  %v573 = vadd.f32 %v95, %v572
  %v574 = vpop.f32.mrb[0].mxu0
  %v575 = vpop.f32.mrb[0].mxu0
  %v576 = vadd.f32 %v95, %v575
  %v577 = vpop.f32.mrb[0].mxu0
  %578 = vmatprep.mubr.bf16.mxu0 0
  %579 = vmatmul.mubr.bf16.gmra.mrb[0].mxu0 %v346
  %v580 = vpop.f32.mrb[0].mxu0
  %v581 = vadd.f32 %v95, %v580
  %v582 = vpop.f32.mrb[0].mxu0
  %v583 = vpop.f32.mrb[0].mxu0
  %v584 = vadd.f32 %v95, %v583
  %v585 = vpop.f32.mrb[0].mxu0
  %586 = vmatprep.mubr.bf16.mxu0 0
  %587 = vmatmul.mubr.bf16.gmra.mrb[0].mxu0 %v349
  %v588 = vpop.f32.mrb[0].mxu0
  %v589 = vadd.f32 %v95, %v588
  %v590 = vpop.f32.mrb[0].mxu0
  %v591 = vpop.f32.mrb[0].mxu0
  %v592 = vadd.f32 %v95, %v591
  %v593 = vpop.f32.mrb[0].mxu0
  %594 = vmatprep.mubr.bf16.mxu0 0
  %595 = vmatmul.mubr.bf16.gmra.mrb[0].mxu0 %v352
  %v596 = vpop.f32.mrb[0].mxu0
  %v597 = vadd.f32 %v95, %v596
  %v598 = vpop.f32.mrb[0].mxu0
  %v599 = vpop.f32.mrb[0].mxu0
  %v600 = vadd.f32 %v95, %v599
  %v601 = vpop.f32.mrb[0].mxu0
  %602 = vmatprep.mubr.bf16.mxu0 0
  %603 = vmatmul.mubr.bf16.gmra.mrb[0].mxu0 %v355
  %v604 = vpop.f32.mrb[0].mxu0
  %v605 = vadd.f32 %v95, %v604
  %v606 = vpop.f32.mrb[0].mxu0
  %v607 = vpop.f32.mrb[0].mxu0
  %v608 = vadd.f32 %v95, %v607
  %v609 = vpop.f32.mrb[0].mxu0
  %610 = vmatprep.mubr.bf16.mxu0 0
  %611 = vmatmul.mubr.bf16.gmra.mrb[0].mxu0 %v358
  %v612 = vpop.f32.mrb[0].mxu0
  %v613 = vadd.f32 %v95, %v612
  %v614 = vpop.f32.mrb[0].mxu0
  %v615 = vpop.f32.mrb[0].mxu0
  %v616 = vadd.f32 %v95, %v615
  %v617 = vpop.f32.mrb[0].mxu0
  %618 = vmatprep.mubr.bf16.mxu0 0
  %619 = vmatmul.mubr.bf16.gmra.mrb[0].mxu0 %v361
  %v620 = vpop.f32.mrb[0].mxu0
  %v621 = vadd.f32 %v95, %v620
  %v622 = vpop.f32.mrb[0].mxu0
  %v623 = vpop.f32.mrb[0].mxu0
  %v624 = vadd.f32 %v95, %v623
  %v625 = vpop.f32.mrb[0].mxu0
  %626 = vmatprep.mubr.bf16.mxu0 0
  %627 = vmatmul.mubr.bf16.gmra.mrb[0].mxu0 %v364
  %v628 = vpop.f32.mrb[0].mxu0
  %v629 = vadd.f32 %v95, %v628
  %v630 = vpop.f32.mrb[0].mxu0
  %v631 = vpop.f32.mrb[0].mxu0
  %v632 = vadd.f32 %v95, %v631
  %v633 = vpop.f32.mrb[0].mxu0
  %634 = vmatprep.mubr.bf16.mxu0 0
  %635 = vmatmul.mubr.bf16.gmra.mrb[0].mxu0 %v367
  %v636 = vpop.f32.mrb[0].mxu0
  %v637 = vadd.f32 %v95, %v636
  %v638 = vpop.f32.mrb[0].mxu0
  %v639 = vpop.f32.mrb[0].mxu0
  %v640 = vadd.f32 %v95, %v639
  %v641 = vpop.f32.mrb[0].mxu0
  %642 = vmatprep.mubr.bf16.mxu0 0
  %643 = vmatmul.mubr.bf16.gmra.mrb[0].mxu0 %v370
  %v644 = vpop.f32.mrb[0].mxu0
  %v645 = vadd.f32 %v95, %v644
  %v646 = vpop.f32.mrb[0].mxu0
  %v647 = vpop.f32.mrb[0].mxu0
  %v648 = vadd.f32 %v95, %v647
  %v649 = vpop.f32.mrb[0].mxu0
  %650 = vmatprep.mubr.bf16.mxu0 0
  %651 = vmatmul.mubr.bf16.gmra.mrb[0].mxu0 %v373
  %v652 = vpop.f32.mrb[0].mxu0
  %v653 = vadd.f32 %v95, %v652
  %v654 = vpop.f32.mrb[0].mxu0
  %v655 = vpop.f32.mrb[0].mxu0
  %v656 = vadd.f32 %v95, %v655
  %v657 = vpop.f32.mrb[0].mxu0
  %658 = vmatprep.mubr.bf16.mxu0 0
  %659 = vmatmul.mubr.bf16.gmra.mrb[0].mxu0 %v376
  %v660 = vpop.f32.mrb[0].mxu0
  %v661 = vadd.f32 %v95, %v660
  %v662 = vpop.f32.mrb[0].mxu0
  %v663 = vpop.f32.mrb[0].mxu0
  %v664 = vadd.f32 %v95, %v663
  %v665 = vpop.f32.mrb[0].mxu0
  %666 = vdwg.mxu0
  %v667 = vld [vmem:[%s3] sm:$0xff]
  %v668 = vld [vmem:[%s3 + $0x8] sm:$0xff]
  %v669 = vld [vmem:[%s3 + $0x10] sm:$0xff]
  %v670 = vld [vmem:[%s3 + $0x18] sm:$0xff]
  %v671 = vld [vmem:[%s3 + $0x20] sm:$0xff]
  %v672 = vld [vmem:[%s3 + $0x28] sm:$0xff]
  %v673 = vld [vmem:[%s3 + $0x30] sm:$0xff]
  %v674 = vld [vmem:[%s3 + $0x38] sm:$0xff]
  %v675 = vld [vmem:[%s3 + $0x40] sm:$0xff]
  %v676 = vld [vmem:[%s3 + $0x48] sm:$0xff]
  %v677 = vld [vmem:[%s3 + $0x50] sm:$0xff]
  %v678 = vld [vmem:[%s3 + $0x58] sm:$0xff]
  %v679 = vld [vmem:[%s3 + $0x60] sm:$0xff]
  %v680 = vld [vmem:[%s3 + $0x68] sm:$0xff]
  %v681 = vld [vmem:[%s3 + $0x70] sm:$0xff]
  %v682 = vld [vmem:[%s3 + $0x78] sm:$0xff]
  %v683 = vld [vmem:[%s3 + $0x80] sm:$0xff]
  %v684 = vld [vmem:[%s3 + $0x88] sm:$0xff]
  %v685 = vld [vmem:[%s3 + $0x90] sm:$0xff]
  %v686 = vld [vmem:[%s3 + $0x98] sm:$0xff]
  %v687 = vld [vmem:[%s3 + $0xa0] sm:$0xff]
  %v688 = vld [vmem:[%s3 + $0xa8] sm:$0xff]
  %v689 = vld [vmem:[%s3 + $0xb0] sm:$0xff]
  %v690 = vld [vmem:[%s3 + $0xb8] sm:$0xff]
  %v691 = vld [vmem:[%s3 + $0xc0] sm:$0xff]
  %v692 = vld [vmem:[%s3 + $0xc8] sm:$0xff]
  %v693 = vld [vmem:[%s3 + $0xd0] sm:$0xff]
  %v694 = vld [vmem:[%s3 + $0xd8] sm:$0xff]
  %v695 = vld [vmem:[%s3 + $0xe0] sm:$0xff]
  %v696 = vld [vmem:[%s3 + $0xe8] sm:$0xff]
  %v697 = vld [vmem:[%s3 + $0xf0] sm:$0xff]
  %v698 = vld [vmem:[%s3 + $0xf8] sm:$0xff]
  %v699 = vld [vmem:[%s3 + $0x100] sm:$0xff]
  %v700 = vld [vmem:[%s3 + $0x108] sm:$0xff]
  %v701 = vld [vmem:[%s3 + $0x110] sm:$0xff]
  %v702 = vld [vmem:[%s3 + $0x118] sm:$0xff]
  %v703 = vld [vmem:[%s3 + $0x120] sm:$0xff]
  %v704 = vld [vmem:[%s3 + $0x128] sm:$0xff]
  %v705 = vld [vmem:[%s3 + $0x130] sm:$0xff]
  %v706 = vld [vmem:[%s3 + $0x138] sm:$0xff]
  %v707 = vld [vmem:[%s3 + $0x140] sm:$0xff]
  %v708 = vld [vmem:[%s3 + $0x148] sm:$0xff]
  %v709 = vld [vmem:[%s3 + $0x150] sm:$0xff]
  %v710 = vld [vmem:[%s3 + $0x158] sm:$0xff]
  %v711 = vld [vmem:[%s3 + $0x160] sm:$0xff]
  %v712 = vld [vmem:[%s3 + $0x168] sm:$0xff]
  %v713 = vld [vmem:[%s3 + $0x170] sm:$0xff]
  %v714 = vld [vmem:[%s3 + $0x178] sm:$0xff]
  %v715 = vld [vmem:[%s3 + $0x180] sm:$0xff]
  %v716 = vld [vmem:[%s3 + $0x188] sm:$0xff]
  %v717 = vld [vmem:[%s3 + $0x190] sm:$0xff]
  %v718 = vld [vmem:[%s3 + $0x198] sm:$0xff]
  %v719 = vld [vmem:[%s3 + $0x1a0] sm:$0xff]
  %v720 = vld [vmem:[%s3 + $0x1a8] sm:$0xff]
  %v721 = vld [vmem:[%s3 + $0x1b0] sm:$0xff]
  %v722 = vld [vmem:[%s3 + $0x1b8] sm:$0xff]
  %v723 = vld [vmem:[%s3 + $0x1c0] sm:$0xff]
  %v724 = vld [vmem:[%s3 + $0x1c8] sm:$0xff]
  %v725 = vld [vmem:[%s3 + $0x1d0] sm:$0xff]
  %v726 = vld [vmem:[%s3 + $0x1d8] sm:$0xff]
  %v727 = vld [vmem:[%s3 + $0x1e0] sm:$0xff]
  %v728 = vld [vmem:[%s3 + $0x1e8] sm:$0xff]
  %v729 = vld [vmem:[%s3 + $0x1f0] sm:$0xff]
  %v730 = vld [vmem:[%s3 + $0x1f8] sm:$0xff]
  %v731 = vadd.f32 %v413, %v667
  %v732 = vadd.f32 %v416, %v668
  %v733 = vadd.f32 %v421, %v669
  %v734 = vadd.f32 %v424, %v670
  %v735 = vadd.f32 %v429, %v671
  %v736 = vadd.f32 %v432, %v672
  %v737 = vadd.f32 %v437, %v673
  %v738 = vadd.f32 %v440, %v674
  %v739 = vadd.f32 %v445, %v675
  %v740 = vadd.f32 %v448, %v676
  %v741 = vadd.f32 %v453, %v677
  %v742 = vadd.f32 %v456, %v678
  %v743 = vadd.f32 %v461, %v679
  %v744 = vadd.f32 %v464, %v680
  %v745 = vadd.f32 %v469, %v681
  %v746 = vadd.f32 %v472, %v682
  %v747 = vadd.f32 %v477, %v683
  %v748 = vadd.f32 %v480, %v684
  %v749 = vadd.f32 %v485, %v685
  %v750 = vadd.f32 %v488, %v686
  %v751 = vadd.f32 %v493, %v687
  %v752 = vadd.f32 %v496, %v688
  %v753 = vadd.f32 %v501, %v689
  %v754 = vadd.f32 %v504, %v690
  %v755 = vadd.f32 %v509, %v691
  %v756 = vadd.f32 %v512, %v692
  %v757 = vadd.f32 %v517, %v693
  %v758 = vadd.f32 %v520, %v694
  %v759 = vadd.f32 %v525, %v695
  %v760 = vadd.f32 %v528, %v696
  %v761 = vadd.f32 %v533, %v697
  %v762 = vadd.f32 %v536, %v698
  %v763 = vadd.f32 %v541, %v699
  %v764 = vadd.f32 %v544, %v700
  %v765 = vadd.f32 %v549, %v701
  %v766 = vadd.f32 %v552, %v702
  %v767 = vadd.f32 %v557, %v703
  %v768 = vadd.f32 %v560, %v704
  %v769 = vadd.f32 %v565, %v705
  %v770 = vadd.f32 %v568, %v706
  %v771 = vadd.f32 %v573, %v707
  %v772 = vadd.f32 %v576, %v708
  %v773 = vadd.f32 %v581, %v709
  %v774 = vadd.f32 %v584, %v710
  %v775 = vadd.f32 %v589, %v711
  %v776 = vadd.f32 %v592, %v712
  %v777 = vadd.f32 %v597, %v713
  %v778 = vadd.f32 %v600, %v714
  %v779 = vadd.f32 %v605, %v715
  %v780 = vadd.f32 %v608, %v716
  %v781 = vadd.f32 %v613, %v717
  %v782 = vadd.f32 %v616, %v718
  %v783 = vadd.f32 %v621, %v719
  %v784 = vadd.f32 %v624, %v720
  %v785 = vadd.f32 %v629, %v721
  %v786 = vadd.f32 %v632, %v722
  %v787 = vadd.f32 %v637, %v723
  %v788 = vadd.f32 %v640, %v724
  %v789 = vadd.f32 %v645, %v725
  %v790 = vadd.f32 %v648, %v726
  %v791 = vadd.f32 %v653, %v727
  %v792 = vadd.f32 %v656, %v728
  %v793 = vadd.f32 %v661, %v729
  %v794 = vadd.f32 %v664, %v730
  %vm795 = vcmask 130048
  %796 = vst.msk [vmem:[%s4] sm:$0xff] %vm795, %v731
  %797 = vst.msk [vmem:[%s4 + $0x8] sm:$0xff] %vm795, %v732
  %798 = vst.msk [vmem:[%s4 + $0x10] sm:$0xff] %vm795, %v733
  %799 = vst.msk [vmem:[%s4 + $0x18] sm:$0xff] %vm795, %v734
  %800 = vst.msk [vmem:[%s4 + $0x20] sm:$0xff] %vm795, %v735
  %801 = vst.msk [vmem:[%s4 + $0x28] sm:$0xff] %vm795, %v736
  %802 = vst.msk [vmem:[%s4 + $0x30] sm:$0xff] %vm795, %v737
  %803 = vst.msk [vmem:[%s4 + $0x38] sm:$0xff] %vm795, %v738
  %804 = vst.msk [vmem:[%s4 + $0x40] sm:$0xff] %vm795, %v739
  %805 = vst.msk [vmem:[%s4 + $0x48] sm:$0xff] %vm795, %v740
  %806 = vst.msk [vmem:[%s4 + $0x50] sm:$0xff] %vm795, %v741
  %807 = vst.msk [vmem:[%s4 + $0x58] sm:$0xff] %vm795, %v742
  %808 = vst.msk [vmem:[%s4 + $0x60] sm:$0xff] %vm795, %v743
  %809 = vst.msk [vmem:[%s4 + $0x68] sm:$0xff] %vm795, %v744
  %810 = vst.msk [vmem:[%s4 + $0x70] sm:$0xff] %vm795, %v745
  %811 = vst.msk [vmem:[%s4 + $0x78] sm:$0xff] %vm795, %v746
  %812 = vst.msk [vmem:[%s4 + $0x80] sm:$0xff] %vm795, %v747
  %813 = vst.msk [vmem:[%s4 + $0x88] sm:$0xff] %vm795, %v748
  %814 = vst.msk [vmem:[%s4 + $0x90] sm:$0xff] %vm795, %v749
  %815 = vst.msk [vmem:[%s4 + $0x98] sm:$0xff] %vm795, %v750
  %816 = vst.msk [vmem:[%s4 + $0xa0] sm:$0xff] %vm795, %v751
  %817 = vst.msk [vmem:[%s4 + $0xa8] sm:$0xff] %vm795, %v752
  %818 = vst.msk [vmem:[%s4 + $0xb0] sm:$0xff] %vm795, %v753
  %819 = vst.msk [vmem:[%s4 + $0xb8] sm:$0xff] %vm795, %v754
  %820 = vst.msk [vmem:[%s4 + $0xc0] sm:$0xff] %vm795, %v755
  %821 = vst.msk [vmem:[%s4 + $0xc8] sm:$0xff] %vm795, %v756
  %822 = vst.msk [vmem:[%s4 + $0xd0] sm:$0xff] %vm795, %v757
  %823 = vst.msk [vmem:[%s4 + $0xd8] sm:$0xff] %vm795, %v758
  %824 = vst.msk [vmem:[%s4 + $0xe0] sm:$0xff] %vm795, %v759
  %825 = vst.msk [vmem:[%s4 + $0xe8] sm:$0xff] %vm795, %v760
  %826 = vst.msk [vmem:[%s4 + $0xf0] sm:$0xff] %vm795, %v761
  %827 = vst.msk [vmem:[%s4 + $0xf8] sm:$0xff] %vm795, %v762
  %828 = vst.msk [vmem:[%s4 + $0x100] sm:$0xff] %vm795, %v763
  %829 = vst.msk [vmem:[%s4 + $0x108] sm:$0xff] %vm795, %v764
  %830 = vst.msk [vmem:[%s4 + $0x110] sm:$0xff] %vm795, %v765
  %831 = vst.msk [vmem:[%s4 + $0x118] sm:$0xff] %vm795, %v766
  %832 = vst.msk [vmem:[%s4 + $0x120] sm:$0xff] %vm795, %v767
  %833 = vst.msk [vmem:[%s4 + $0x128] sm:$0xff] %vm795, %v768
  %834 = vst.msk [vmem:[%s4 + $0x130] sm:$0xff] %vm795, %v769
  %835 = vst.msk [vmem:[%s4 + $0x138] sm:$0xff] %vm795, %v770
  %836 = vst.msk [vmem:[%s4 + $0x140] sm:$0xff] %vm795, %v771
  %837 = vst.msk [vmem:[%s4 + $0x148] sm:$0xff] %vm795, %v772
  %838 = vst.msk [vmem:[%s4 + $0x150] sm:$0xff] %vm795, %v773
  %839 = vst.msk [vmem:[%s4 + $0x158] sm:$0xff] %vm795, %v774
  %840 = vst.msk [vmem:[%s4 + $0x160] sm:$0xff] %vm795, %v775
  %841 = vst.msk [vmem:[%s4 + $0x168] sm:$0xff] %vm795, %v776
  %842 = vst.msk [vmem:[%s4 + $0x170] sm:$0xff] %vm795, %v777
  %843 = vst.msk [vmem:[%s4 + $0x178] sm:$0xff] %vm795, %v778
  %844 = vst.msk [vmem:[%s4 + $0x180] sm:$0xff] %vm795, %v779
  %845 = vst.msk [vmem:[%s4 + $0x188] sm:$0xff] %vm795, %v780
  %846 = vst.msk [vmem:[%s4 + $0x190] sm:$0xff] %vm795, %v781
  %847 = vst.msk [vmem:[%s4 + $0x198] sm:$0xff] %vm795, %v782
  %848 = vst.msk [vmem:[%s4 + $0x1a0] sm:$0xff] %vm795, %v783
  %849 = vst.msk [vmem:[%s4 + $0x1a8] sm:$0xff] %vm795, %v784
  %850 = vst.msk [vmem:[%s4 + $0x1b0] sm:$0xff] %vm795, %v785
  %851 = vst.msk [vmem:[%s4 + $0x1b8] sm:$0xff] %vm795, %v786
  %852 = vst.msk [vmem:[%s4 + $0x1c0] sm:$0xff] %vm795, %v787
  %853 = vst.msk [vmem:[%s4 + $0x1c8] sm:$0xff] %vm795, %v788
  %854 = vst.msk [vmem:[%s4 + $0x1d0] sm:$0xff] %vm795, %v789
  %855 = vst.msk [vmem:[%s4 + $0x1d8] sm:$0xff] %vm795, %v790
  %856 = vst.msk [vmem:[%s4 + $0x1e0] sm:$0xff] %vm795, %v791
  %857 = vst.msk [vmem:[%s4 + $0x1e8] sm:$0xff] %vm795, %v792
  %858 = vst.msk [vmem:[%s4 + $0x1f0] sm:$0xff] %vm795, %v793
  %859 = vst.msk [vmem:[%s4 + $0x1f8] sm:$0xff] %vm795, %v794
  // Predicated region
  $region18: #{unet_skip_block_forward.13} parent=0 // pred_check
    _
  $region19: #{unet_skip_block_forward.13} parent=0 // pred_check_branch
    %861 = sbr.rel (0) target = $region21
  $region20: #{unet_skip_block_forward.13} parent=0 // pred_region
    _
  $region21: #{unet_skip_block_forward.13} parent=0 // pred_fallthru
    _
  // Predicated region
  $region22: #{unet_skip_block_forward.13} parent=0 // pred_check
    _
  $region23: #{unet_skip_block_forward.13} parent=0 // pred_check_branch
    %863 = sbr.rel (0) target = $region25
  $region24: #{unet_skip_block_forward.13} parent=0 // pred_region
    _
  $region25: #{unet_skip_block_forward.13} parent=0 // pred_fallthru
    _

// kernel: unet_skip_block_forward.12
$region0: #{unet_skip_block_forward.12}
  #allocation0 [shape = 'u32[]', space=smem, size = 0x4, offset = 0x4, fixed_abs, tag = 'smem constant byte address 0x4 - core index']
  #allocation1 [shape = 'u32[144,128]{1,0:T(1,128)}', space=vmem, size = 0x12000, scoped, tag = 'internal scratch']
  %s0 = inlined_call_operand.vmem [shape: f32[512,16], index: 0, kind: input, shape index: {}]
  %s1 = inlined_call_operand.vmem [shape: bf16[16,64], index: 1, kind: input, shape index: {}]
  %s2 = inlined_call_operand.vmem [shape: f32[1,16], index: 2, kind: input, shape index: {}]
  %s3 = inlined_call_operand.vmem [shape: f32[1,16], index: 3, kind: input, shape index: {}]
  %s4 = inlined_call_operand.vmem [shape: f32[1,64], index: 4, kind: input, shape index: {}]
  %s5 = inlined_call_operand.vmem [shape: bf16[512,64], index: 5, kind: output, shape index: {}]
  %s6 = sld [smem:[#allocation0]]
  $region30: #{unet_skip_block_forward.12} parent=0
    _
  %s8 = ssub.s32 1, %s6
  %s9 = scalar_select 0, %s8, %s6
  // Predicated region
  $region2: #{unet_skip_block_forward.12} parent=0 // pred_check
    _
  $region3: #{unet_skip_block_forward.12} parent=0 // pred_check_branch
    %11 = sbr.rel (0) target = $region5
  $region4: #{unet_skip_block_forward.12} parent=0 // pred_region
    _
  $region5: #{unet_skip_block_forward.12} parent=0 // pred_fallthru
    _
  // Predicated region
  $region6: #{unet_skip_block_forward.12} parent=0 // pred_check
    _
  $region7: #{unet_skip_block_forward.12} parent=0 // pred_check_branch
    %13 = sbr.rel (0) target = $region9
  $region8: #{unet_skip_block_forward.12} parent=0 // pred_region
    _
  $region9: #{unet_skip_block_forward.12} parent=0 // pred_fallthru
    _
  // Predicated region
  $region10: #{unet_skip_block_forward.12} parent=0 // pred_check
    _
  $region11: #{unet_skip_block_forward.12} parent=0 // pred_check_branch
    %15 = sbr.rel (0) target = $region13
  $region12: #{unet_skip_block_forward.12} parent=0 // pred_region
    _
  $region13: #{unet_skip_block_forward.12} parent=0 // pred_fallthru
    _
  // Predicated region
  $region14: #{unet_skip_block_forward.12} parent=0 // pred_check
    _
  $region15: #{unet_skip_block_forward.12} parent=0 // pred_check_branch
    %17 = sbr.rel (0) target = $region17
  $region16: #{unet_skip_block_forward.12} parent=0 // pred_region
    _
  $region17: #{unet_skip_block_forward.12} parent=0 // pred_fallthru
    _
  // Predicated region
  $region18: #{unet_skip_block_forward.12} parent=0 // pred_check
    _
  $region19: #{unet_skip_block_forward.12} parent=0 // pred_check_branch
    %19 = sbr.rel (0) target = $region21
  $region20: #{unet_skip_block_forward.12} parent=0 // pred_region
    _
  $region21: #{unet_skip_block_forward.12} parent=0 // pred_fallthru
    _
  %v21 = vld [vmem:[%s0] sm:$0xff]
  %v22 = vld [vmem:[%s0 + $0x8] sm:$0xff]
  %v23 = vld [vmem:[%s0 + $0x10] sm:$0xff]
  %v24 = vld [vmem:[%s0 + $0x18] sm:$0xff]
  %v25 = vld [vmem:[%s0 + $0x20] sm:$0xff]
  %v26 = vld [vmem:[%s0 + $0x28] sm:$0xff]
  %v27 = vld [vmem:[%s0 + $0x30] sm:$0xff]
  %v28 = vld [vmem:[%s0 + $0x38] sm:$0xff]
  %v29 = vld [vmem:[%s0 + $0x40] sm:$0xff]
  %v30 = vld [vmem:[%s0 + $0x48] sm:$0xff]
  %v31 = vld [vmem:[%s0 + $0x50] sm:$0xff]
  %v32 = vld [vmem:[%s0 + $0x58] sm:$0xff]
  %v33 = vld [vmem:[%s0 + $0x60] sm:$0xff]
  %v34 = vld [vmem:[%s0 + $0x68] sm:$0xff]
  %v35 = vld [vmem:[%s0 + $0x70] sm:$0xff]
  %v36 = vld [vmem:[%s0 + $0x78] sm:$0xff]
  %v37 = vld [vmem:[%s0 + $0x80] sm:$0xff]
  %v38 = vld [vmem:[%s0 + $0x88] sm:$0xff]
  %v39 = vld [vmem:[%s0 + $0x90] sm:$0xff]
  %v40 = vld [vmem:[%s0 + $0x98] sm:$0xff]
  %v41 = vld [vmem:[%s0 + $0xa0] sm:$0xff]
  %v42 = vld [vmem:[%s0 + $0xa8] sm:$0xff]
  %v43 = vld [vmem:[%s0 + $0xb0] sm:$0xff]
  %v44 = vld [vmem:[%s0 + $0xb8] sm:$0xff]
  %v45 = vld [vmem:[%s0 + $0xc0] sm:$0xff]
  %v46 = vld [vmem:[%s0 + $0xc8] sm:$0xff]
  %v47 = vld [vmem:[%s0 + $0xd0] sm:$0xff]
  %v48 = vld [vmem:[%s0 + $0xd8] sm:$0xff]
  %v49 = vld [vmem:[%s0 + $0xe0] sm:$0xff]
  %v50 = vld [vmem:[%s0 + $0xe8] sm:$0xff]
  %v51 = vld [vmem:[%s0 + $0xf0] sm:$0xff]
  %v52 = vld [vmem:[%s0 + $0xf8] sm:$0xff]
  %v53 = vld [vmem:[%s0 + $0x100] sm:$0xff]
  %v54 = vld [vmem:[%s0 + $0x108] sm:$0xff]
  %v55 = vld [vmem:[%s0 + $0x110] sm:$0xff]
  %v56 = vld [vmem:[%s0 + $0x118] sm:$0xff]
  %v57 = vld [vmem:[%s0 + $0x120] sm:$0xff]
  %v58 = vld [vmem:[%s0 + $0x128] sm:$0xff]
  %v59 = vld [vmem:[%s0 + $0x130] sm:$0xff]
  %v60 = vld [vmem:[%s0 + $0x138] sm:$0xff]
  %v61 = vld [vmem:[%s0 + $0x140] sm:$0xff]
  %v62 = vld [vmem:[%s0 + $0x148] sm:$0xff]
  %v63 = vld [vmem:[%s0 + $0x150] sm:$0xff]
  %v64 = vld [vmem:[%s0 + $0x158] sm:$0xff]
  %v65 = vld [vmem:[%s0 + $0x160] sm:$0xff]
  %v66 = vld [vmem:[%s0 + $0x168] sm:$0xff]
  %v67 = vld [vmem:[%s0 + $0x170] sm:$0xff]
  %v68 = vld [vmem:[%s0 + $0x178] sm:$0xff]
  %v69 = vld [vmem:[%s0 + $0x180] sm:$0xff]
  %v70 = vld [vmem:[%s0 + $0x188] sm:$0xff]
  %v71 = vld [vmem:[%s0 + $0x190] sm:$0xff]
  %v72 = vld [vmem:[%s0 + $0x198] sm:$0xff]
  %v73 = vld [vmem:[%s0 + $0x1a0] sm:$0xff]
  %v74 = vld [vmem:[%s0 + $0x1a8] sm:$0xff]
  %v75 = vld [vmem:[%s0 + $0x1b0] sm:$0xff]
  %v76 = vld [vmem:[%s0 + $0x1b8] sm:$0xff]
  %v77 = vld [vmem:[%s0 + $0x1c0] sm:$0xff]
  %v78 = vld [vmem:[%s0 + $0x1c8] sm:$0xff]
  %v79 = vld [vmem:[%s0 + $0x1d0] sm:$0xff]
  %v80 = vld [vmem:[%s0 + $0x1d8] sm:$0xff]
  %v81 = vld [vmem:[%s0 + $0x1e0] sm:$0xff]
  %v82 = vld [vmem:[%s0 + $0x1e8] sm:$0xff]
  %v83 = vld [vmem:[%s0 + $0x1f0] sm:$0xff]
  %v84 = vld [vmem:[%s0 + $0x1f8] sm:$0xff]
  %v85 = vld [vmem:[%s2] sm:$0x1]
  %v87 = vlaneseq
  %v88 = vshrl.u32 %v87, 7
  %v89 = vsub.s32 0, %v88
  %v90 = vrot.slane %v85, %v89
  %v92 = vmul.f32 %v21, %v90
  %v93 = vmul.f32 %v22, %v90
  %v94 = vmul.f32 %v23, %v90
  %v95 = vmul.f32 %v24, %v90
  %v96 = vmul.f32 %v25, %v90
  %v97 = vmul.f32 %v26, %v90
  %v98 = vmul.f32 %v27, %v90
  %v99 = vmul.f32 %v28, %v90
  %v100 = vmul.f32 %v29, %v90
  %v101 = vmul.f32 %v30, %v90
  %v102 = vmul.f32 %v31, %v90
  %v103 = vmul.f32 %v32, %v90
  %v104 = vmul.f32 %v33, %v90
  %v105 = vmul.f32 %v34, %v90
  %v106 = vmul.f32 %v35, %v90
  %v107 = vmul.f32 %v36, %v90
  %v108 = vmul.f32 %v37, %v90
  %v109 = vmul.f32 %v38, %v90
  %v110 = vmul.f32 %v39, %v90
  %v111 = vmul.f32 %v40, %v90
  %v112 = vmul.f32 %v41, %v90
  %v113 = vmul.f32 %v42, %v90
  %v114 = vmul.f32 %v43, %v90
  %v115 = vmul.f32 %v44, %v90
  %v116 = vmul.f32 %v45, %v90
  %v117 = vmul.f32 %v46, %v90
  %v118 = vmul.f32 %v47, %v90
  %v119 = vmul.f32 %v48, %v90
  %v120 = vmul.f32 %v49, %v90
  %v121 = vmul.f32 %v50, %v90
  %v122 = vmul.f32 %v51, %v90
  %v123 = vmul.f32 %v52, %v90
  %v124 = vmul.f32 %v53, %v90
  %v125 = vmul.f32 %v54, %v90
  %v126 = vmul.f32 %v55, %v90
  %v127 = vmul.f32 %v56, %v90
  %v128 = vmul.f32 %v57, %v90
  %v129 = vmul.f32 %v58, %v90
  %v130 = vmul.f32 %v59, %v90
  %v131 = vmul.f32 %v60, %v90
  %v132 = vmul.f32 %v61, %v90
  %v133 = vmul.f32 %v62, %v90
  %v134 = vmul.f32 %v63, %v90
  %v135 = vmul.f32 %v64, %v90
  %v136 = vmul.f32 %v65, %v90
  %v137 = vmul.f32 %v66, %v90
  %v138 = vmul.f32 %v67, %v90
  %v139 = vmul.f32 %v68, %v90
  %v140 = vmul.f32 %v69, %v90
  %v141 = vmul.f32 %v70, %v90
  %v142 = vmul.f32 %v71, %v90
  %v143 = vmul.f32 %v72, %v90
  %v144 = vmul.f32 %v73, %v90
  %v145 = vmul.f32 %v74, %v90
  %v146 = vmul.f32 %v75, %v90
  %v147 = vmul.f32 %v76, %v90
  %v148 = vmul.f32 %v77, %v90
  %v149 = vmul.f32 %v78, %v90
  %v150 = vmul.f32 %v79, %v90
  %v151 = vmul.f32 %v80, %v90
  %v152 = vmul.f32 %v81, %v90
  %v153 = vmul.f32 %v82, %v90
  %v154 = vmul.f32 %v83, %v90
  %v155 = vmul.f32 %v84, %v90
  %v156 = vld [vmem:[%s3] sm:$0x1]
  %v158 = vlaneseq
  %v159 = vshrl.u32 %v158, 7
  %v160 = vsub.s32 0, %v159
  %v161 = vrot.slane %v156, %v160
  %v163 = vadd.f32 %v92, %v161
  %v164 = vadd.f32 %v93, %v161
  %v165 = vadd.f32 %v94, %v161
  %v166 = vadd.f32 %v95, %v161
  %v167 = vadd.f32 %v96, %v161
  %v168 = vadd.f32 %v97, %v161
  %v169 = vadd.f32 %v98, %v161
  %v170 = vadd.f32 %v99, %v161
  %v171 = vadd.f32 %v100, %v161
  %v172 = vadd.f32 %v101, %v161
  %v173 = vadd.f32 %v102, %v161
  %v174 = vadd.f32 %v103, %v161
  %v175 = vadd.f32 %v104, %v161
  %v176 = vadd.f32 %v105, %v161
  %v177 = vadd.f32 %v106, %v161
  %v178 = vadd.f32 %v107, %v161
  %v179 = vadd.f32 %v108, %v161
  %v180 = vadd.f32 %v109, %v161
  %v181 = vadd.f32 %v110, %v161
  %v182 = vadd.f32 %v111, %v161
  %v183 = vadd.f32 %v112, %v161
  %v184 = vadd.f32 %v113, %v161
  %v185 = vadd.f32 %v114, %v161
  %v186 = vadd.f32 %v115, %v161
  %v187 = vadd.f32 %v116, %v161
  %v188 = vadd.f32 %v117, %v161
  %v189 = vadd.f32 %v118, %v161
  %v190 = vadd.f32 %v119, %v161
  %v191 = vadd.f32 %v120, %v161
  %v192 = vadd.f32 %v121, %v161
  %v193 = vadd.f32 %v122, %v161
  %v194 = vadd.f32 %v123, %v161
  %v195 = vadd.f32 %v124, %v161
  %v196 = vadd.f32 %v125, %v161
  %v197 = vadd.f32 %v126, %v161
  %v198 = vadd.f32 %v127, %v161
  %v199 = vadd.f32 %v128, %v161
  %v200 = vadd.f32 %v129, %v161
  %v201 = vadd.f32 %v130, %v161
  %v202 = vadd.f32 %v131, %v161
  %v203 = vadd.f32 %v132, %v161
  %v204 = vadd.f32 %v133, %v161
  %v205 = vadd.f32 %v134, %v161
  %v206 = vadd.f32 %v135, %v161
  %v207 = vadd.f32 %v136, %v161
  %v208 = vadd.f32 %v137, %v161
  %v209 = vadd.f32 %v138, %v161
  %v210 = vadd.f32 %v139, %v161
  %v211 = vadd.f32 %v140, %v161
  %v212 = vadd.f32 %v141, %v161
  %v213 = vadd.f32 %v142, %v161
  %v214 = vadd.f32 %v143, %v161
  %v215 = vadd.f32 %v144, %v161
  %v216 = vadd.f32 %v145, %v161
  %v217 = vadd.f32 %v146, %v161
  %v218 = vadd.f32 %v147, %v161
  %v219 = vadd.f32 %v148, %v161
  %v220 = vadd.f32 %v149, %v161
  %v221 = vadd.f32 %v150, %v161
  %v222 = vadd.f32 %v151, %v161
  %v223 = vadd.f32 %v152, %v161
  %v224 = vadd.f32 %v153, %v161
  %v225 = vadd.f32 %v154, %v161
  %v226 = vadd.f32 %v155, %v161
  %v227 = vpack.c.bf16 %v164, %v163
  %v228 = vpack.c.bf16 %v166, %v165
  %v229 = vpack.c.bf16 %v168, %v167
  %v230 = vpack.c.bf16 %v170, %v169
  %v231 = vpack.c.bf16 %v172, %v171
  %v232 = vpack.c.bf16 %v174, %v173
  %v233 = vpack.c.bf16 %v176, %v175
  %v234 = vpack.c.bf16 %v178, %v177
  %v235 = vpack.c.bf16 %v180, %v179
  %v236 = vpack.c.bf16 %v182, %v181
  %v237 = vpack.c.bf16 %v184, %v183
  %v238 = vpack.c.bf16 %v186, %v185
  %v239 = vpack.c.bf16 %v188, %v187
  %v240 = vpack.c.bf16 %v190, %v189
  %v241 = vpack.c.bf16 %v192, %v191
  %v242 = vpack.c.bf16 %v194, %v193
  %v243 = vpack.c.bf16 %v196, %v195
  %v244 = vpack.c.bf16 %v198, %v197
  %v245 = vpack.c.bf16 %v200, %v199
  %v246 = vpack.c.bf16 %v202, %v201
  %v247 = vpack.c.bf16 %v204, %v203
  %v248 = vpack.c.bf16 %v206, %v205
  %v249 = vpack.c.bf16 %v208, %v207
  %v250 = vpack.c.bf16 %v210, %v209
  %v251 = vpack.c.bf16 %v212, %v211
  %v252 = vpack.c.bf16 %v214, %v213
  %v253 = vpack.c.bf16 %v216, %v215
  %v254 = vpack.c.bf16 %v218, %v217
  %v255 = vpack.c.bf16 %v220, %v219
  %v256 = vpack.c.bf16 %v222, %v221
  %v257 = vpack.c.bf16 %v224, %v223
  %v258 = vpack.c.bf16 %v226, %v225
  %v259 = vld [vmem:[%s1] sm:$0xf]
  %v260 = vld [vmem:[%s1 + $0x4] sm:$0xf]
  %v261 = vld [vmem:[%s4] sm:$0x1]
  %v263 = vlaneseq
  %v264 = vshrl.u32 %v263, 7
  %v265 = vsub.s32 0, %v264
  %v266 = vrot.slane %v261, %v265
  %v270 = vunpack.c.l.b16 %v259
  %v271 = vunpack.c.l.b16 %v260
  %v272 = vpack.c.b16 %v271, %v270
  %vm274 = vcmask 130048
  %v276 = vsel %vm274, %v227, 0
  %v279 = vsel %vm274, %v228, 0
  %v282 = vsel %vm274, %v229, 0
  %v285 = vsel %vm274, %v230, 0
  %v288 = vsel %vm274, %v231, 0
  %v291 = vsel %vm274, %v232, 0
  %v294 = vsel %vm274, %v233, 0
  %v297 = vsel %vm274, %v234, 0
  %v300 = vsel %vm274, %v235, 0
  %v303 = vsel %vm274, %v236, 0
  %v306 = vsel %vm274, %v237, 0
  %v309 = vsel %vm274, %v238, 0
  %v312 = vsel %vm274, %v239, 0
  %v315 = vsel %vm274, %v240, 0
  %v318 = vsel %vm274, %v241, 0
  %v321 = vsel %vm274, %v242, 0
  %v324 = vsel %vm274, %v243, 0
  %v327 = vsel %vm274, %v244, 0
  %v330 = vsel %vm274, %v245, 0
  %v333 = vsel %vm274, %v246, 0
  %v336 = vsel %vm274, %v247, 0
  %v339 = vsel %vm274, %v248, 0
  %v342 = vsel %vm274, %v249, 0
  %v345 = vsel %vm274, %v250, 0
  %v348 = vsel %vm274, %v251, 0
  %v351 = vsel %vm274, %v252, 0
  %v354 = vsel %vm274, %v253, 0
  %v357 = vsel %vm274, %v254, 0
  %v360 = vsel %vm274, %v255, 0
  %v363 = vsel %vm274, %v256, 0
  %v366 = vsel %vm274, %v257, 0
  %v369 = vsel %vm274, %v258, 0
  %371 = vmatprep.subr.bf16.mxu0 0
  %372 = vmatpush1.bf16.msra.mxu0 %v272
  %373 = vmatprep.subr.bf16.mxu0 0
  %374 = vmatpush1.bf16.msra.mxu0 0
  %375 = vmatprep.subr.bf16.mxu0 0
  %376 = vmatpush1.bf16.msra.mxu0 0
  %377 = vmatprep.subr.bf16.mxu0 0
  %378 = vmatpush1.bf16.msra.mxu0 0
  %379 = vmatprep.subr.bf16.mxu0 0
  %380 = vmatpush1.bf16.msra.mxu0 0
  %381 = vmatprep.subr.bf16.mxu0 0
  %382 = vmatpush1.bf16.msra.mxu0 0
  %383 = vmatprep.subr.bf16.mxu0 0
  %384 = vmatpush1.bf16.msra.mxu0 0
  %385 = vmatprep.subr.bf16.mxu0 0
  %386 = vmatpush1.bf16.msra.mxu0 0
  %387 = vmatprep.subr.bf16.mxu0 0
  %388 = vmatpush1.bf16.msra.mxu0 0
  %389 = vmatprep.subr.bf16.mxu0 0
  %390 = vmatpush1.bf16.msra.mxu0 0
  %391 = vmatprep.subr.bf16.mxu0 0
  %392 = vmatpush1.bf16.msra.mxu0 0
  %393 = vmatprep.subr.bf16.mxu0 0
  %394 = vmatpush1.bf16.msra.mxu0 0
  %395 = vmatprep.subr.bf16.mxu0 0
  %396 = vmatpush1.bf16.msra.mxu0 0
  %397 = vmatprep.subr.bf16.mxu0 0
  %398 = vmatpush1.bf16.msra.mxu0 0
  %399 = vmatprep.subr.bf16.mxu0 0
  %400 = vmatpush1.bf16.msra.mxu0 0
  %401 = vmatprep.subr.bf16.mxu0 0
  %402 = vmatpush1.bf16.msra.mxu0 0
  %403 = vmatprep.mubr.bf16.mxu0 0
  %404 = vmatmul.mubr.bf16.gmra.mrb[0].mxu0 %v276
  %v405 = vpop.f32.mrb[0].mxu0
  %v406 = vadd.f32 %v266, %v405
  %v407 = vpop.f32.mrb[0].mxu0
  %v408 = vpop.f32.mrb[0].mxu0
  %v409 = vadd.f32 %v266, %v408
  %v410 = vpop.f32.mrb[0].mxu0
  %411 = vmatprep.mubr.bf16.mxu0 0
  %412 = vmatmul.mubr.bf16.gmra.mrb[0].mxu0 %v279
  %v413 = vpop.f32.mrb[0].mxu0
  %v414 = vadd.f32 %v266, %v413
  %v415 = vpop.f32.mrb[0].mxu0
  %v416 = vpop.f32.mrb[0].mxu0
  %v417 = vadd.f32 %v266, %v416
  %v418 = vpop.f32.mrb[0].mxu0
  %419 = vmatprep.mubr.bf16.mxu0 0
  %420 = vmatmul.mubr.bf16.gmra.mrb[0].mxu0 %v282
  %v421 = vpop.f32.mrb[0].mxu0
  %v422 = vadd.f32 %v266, %v421
  %v423 = vpop.f32.mrb[0].mxu0
  %v424 = vpop.f32.mrb[0].mxu0
  %v425 = vadd.f32 %v266, %v424
  %v426 = vpop.f32.mrb[0].mxu0
  %427 = vmatprep.mubr.bf16.mxu0 0
  %428 = vmatmul.mubr.bf16.gmra.mrb[0].mxu0 %v285
  %v429 = vpop.f32.mrb[0].mxu0
  %v430 = vadd.f32 %v266, %v429
  %v431 = vpop.f32.mrb[0].mxu0
  %v432 = vpop.f32.mrb[0].mxu0
  %v433 = vadd.f32 %v266, %v432
  %v434 = vpop.f32.mrb[0].mxu0
  %435 = vmatprep.mubr.bf16.mxu0 0
  %436 = vmatmul.mubr.bf16.gmra.mrb[0].mxu0 %v288
  %v437 = vpop.f32.mrb[0].mxu0
  %v438 = vadd.f32 %v266, %v437
  %v439 = vpop.f32.mrb[0].mxu0
  %v440 = vpop.f32.mrb[0].mxu0
  %v441 = vadd.f32 %v266, %v440
  %v442 = vpop.f32.mrb[0].mxu0
  %443 = vmatprep.mubr.bf16.mxu0 0
  %444 = vmatmul.mubr.bf16.gmra.mrb[0].mxu0 %v291
  %v445 = vpop.f32.mrb[0].mxu0
  %v446 = vadd.f32 %v266, %v445
  %v447 = vpop.f32.mrb[0].mxu0
  %v448 = vpop.f32.mrb[0].mxu0
  %v449 = vadd.f32 %v266, %v448
  %v450 = vpop.f32.mrb[0].mxu0
  %451 = vmatprep.mubr.bf16.mxu0 0
  %452 = vmatmul.mubr.bf16.gmra.mrb[0].mxu0 %v294
  %v453 = vpop.f32.mrb[0].mxu0
  %v454 = vadd.f32 %v266, %v453
  %v455 = vpop.f32.mrb[0].mxu0
  %v456 = vpop.f32.mrb[0].mxu0
  %v457 = vadd.f32 %v266, %v456
  %v458 = vpop.f32.mrb[0].mxu0
  %459 = vmatprep.mubr.bf16.mxu0 0
  %460 = vmatmul.mubr.bf16.gmra.mrb[0].mxu0 %v297
  %v461 = vpop.f32.mrb[0].mxu0
  %v462 = vadd.f32 %v266, %v461
  %v463 = vpop.f32.mrb[0].mxu0
  %v464 = vpop.f32.mrb[0].mxu0
  %v465 = vadd.f32 %v266, %v464
  %v466 = vpop.f32.mrb[0].mxu0
  %467 = vmatprep.mubr.bf16.mxu0 0
  %468 = vmatmul.mubr.bf16.gmra.mrb[0].mxu0 %v300
  %v469 = vpop.f32.mrb[0].mxu0
  %v470 = vadd.f32 %v266, %v469
  %v471 = vpop.f32.mrb[0].mxu0
  %v472 = vpop.f32.mrb[0].mxu0
  %v473 = vadd.f32 %v266, %v472
  %v474 = vpop.f32.mrb[0].mxu0
  %475 = vmatprep.mubr.bf16.mxu0 0
  %476 = vmatmul.mubr.bf16.gmra.mrb[0].mxu0 %v303
  %v477 = vpop.f32.mrb[0].mxu0
  %v478 = vadd.f32 %v266, %v477
  %v479 = vpop.f32.mrb[0].mxu0
  %v480 = vpop.f32.mrb[0].mxu0
  %v481 = vadd.f32 %v266, %v480
  %v482 = vpop.f32.mrb[0].mxu0
  %483 = vmatprep.mubr.bf16.mxu0 0
  %484 = vmatmul.mubr.bf16.gmra.mrb[0].mxu0 %v306
  %v485 = vpop.f32.mrb[0].mxu0
  %v486 = vadd.f32 %v266, %v485
  %v487 = vpop.f32.mrb[0].mxu0
  %v488 = vpop.f32.mrb[0].mxu0
  %v489 = vadd.f32 %v266, %v488
  %v490 = vpop.f32.mrb[0].mxu0
  %491 = vmatprep.mubr.bf16.mxu0 0
  %492 = vmatmul.mubr.bf16.gmra.mrb[0].mxu0 %v309
  %v493 = vpop.f32.mrb[0].mxu0
  %v494 = vadd.f32 %v266, %v493
  %v495 = vpop.f32.mrb[0].mxu0
  %v496 = vpop.f32.mrb[0].mxu0
  %v497 = vadd.f32 %v266, %v496
  %v498 = vpop.f32.mrb[0].mxu0
  %499 = vmatprep.mubr.bf16.mxu0 0
  %500 = vmatmul.mubr.bf16.gmra.mrb[0].mxu0 %v312
  %v501 = vpop.f32.mrb[0].mxu0
  %v502 = vadd.f32 %v266, %v501
  %v503 = vpop.f32.mrb[0].mxu0
  %v504 = vpop.f32.mrb[0].mxu0
  %v505 = vadd.f32 %v266, %v504
  %v506 = vpop.f32.mrb[0].mxu0
  %507 = vmatprep.mubr.bf16.mxu0 0
  %508 = vmatmul.mubr.bf16.gmra.mrb[0].mxu0 %v315
  %v509 = vpop.f32.mrb[0].mxu0
  %v510 = vadd.f32 %v266, %v509
  %v511 = vpop.f32.mrb[0].mxu0
  %v512 = vpop.f32.mrb[0].mxu0
  %v513 = vadd.f32 %v266, %v512
  %v514 = vpop.f32.mrb[0].mxu0
  %515 = vmatprep.mubr.bf16.mxu0 0
  %516 = vmatmul.mubr.bf16.gmra.mrb[0].mxu0 %v318
  %v517 = vpop.f32.mrb[0].mxu0
  %v518 = vadd.f32 %v266, %v517
  %v519 = vpop.f32.mrb[0].mxu0
  %v520 = vpop.f32.mrb[0].mxu0
  %v521 = vadd.f32 %v266, %v520
  %v522 = vpop.f32.mrb[0].mxu0
  %523 = vmatprep.mubr.bf16.mxu0 0
  %524 = vmatmul.mubr.bf16.gmra.mrb[0].mxu0 %v321
  %v525 = vpop.f32.mrb[0].mxu0
  %v526 = vadd.f32 %v266, %v525
  %v527 = vpop.f32.mrb[0].mxu0
  %v528 = vpop.f32.mrb[0].mxu0
  %v529 = vadd.f32 %v266, %v528
  %v530 = vpop.f32.mrb[0].mxu0
  %531 = vmatprep.mubr.bf16.mxu0 0
  %532 = vmatmul.mubr.bf16.gmra.mrb[0].mxu0 %v324
  %v533 = vpop.f32.mrb[0].mxu0
  %v534 = vadd.f32 %v266, %v533
  %v535 = vpop.f32.mrb[0].mxu0
  %v536 = vpop.f32.mrb[0].mxu0
  %v537 = vadd.f32 %v266, %v536
  %v538 = vpop.f32.mrb[0].mxu0
  %539 = vmatprep.mubr.bf16.mxu0 0
  %540 = vmatmul.mubr.bf16.gmra.mrb[0].mxu0 %v327
  %v541 = vpop.f32.mrb[0].mxu0
  %v542 = vadd.f32 %v266, %v541
  %v543 = vpop.f32.mrb[0].mxu0
  %v544 = vpop.f32.mrb[0].mxu0
  %v545 = vadd.f32 %v266, %v544
  %v546 = vpop.f32.mrb[0].mxu0
  %547 = vmatprep.mubr.bf16.mxu0 0
  %548 = vmatmul.mubr.bf16.gmra.mrb[0].mxu0 %v330
  %v549 = vpop.f32.mrb[0].mxu0
  %v550 = vadd.f32 %v266, %v549
  %v551 = vpop.f32.mrb[0].mxu0
  %v552 = vpop.f32.mrb[0].mxu0
  %v553 = vadd.f32 %v266, %v552
  %v554 = vpop.f32.mrb[0].mxu0
  %555 = vmatprep.mubr.bf16.mxu0 0
  %556 = vmatmul.mubr.bf16.gmra.mrb[0].mxu0 %v333
  %v557 = vpop.f32.mrb[0].mxu0
  %v558 = vadd.f32 %v266, %v557
  %v559 = vpop.f32.mrb[0].mxu0
  %v560 = vpop.f32.mrb[0].mxu0
  %v561 = vadd.f32 %v266, %v560
  %v562 = vpop.f32.mrb[0].mxu0
  %563 = vmatprep.mubr.bf16.mxu0 0
  %564 = vmatmul.mubr.bf16.gmra.mrb[0].mxu0 %v336
  %v565 = vpop.f32.mrb[0].mxu0
  %v566 = vadd.f32 %v266, %v565
  %v567 = vpop.f32.mrb[0].mxu0
  %v568 = vpop.f32.mrb[0].mxu0
  %v569 = vadd.f32 %v266, %v568
  %v570 = vpop.f32.mrb[0].mxu0
  %571 = vmatprep.mubr.bf16.mxu0 0
  %572 = vmatmul.mubr.bf16.gmra.mrb[0].mxu0 %v339
  %v573 = vpop.f32.mrb[0].mxu0
  %v574 = vadd.f32 %v266, %v573
  %v575 = vpop.f32.mrb[0].mxu0
  %v576 = vpop.f32.mrb[0].mxu0
  %v577 = vadd.f32 %v266, %v576
  %v578 = vpop.f32.mrb[0].mxu0
  %579 = vmatprep.mubr.bf16.mxu0 0
  %580 = vmatmul.mubr.bf16.gmra.mrb[0].mxu0 %v342
  %v581 = vpop.f32.mrb[0].mxu0
  %v582 = vadd.f32 %v266, %v581
  %v583 = vpop.f32.mrb[0].mxu0
  %v584 = vpop.f32.mrb[0].mxu0
  %v585 = vadd.f32 %v266, %v584
  %v586 = vpop.f32.mrb[0].mxu0
  %587 = vmatprep.mubr.bf16.mxu0 0
  %588 = vmatmul.mubr.bf16.gmra.mrb[0].mxu0 %v345
  %v589 = vpop.f32.mrb[0].mxu0
  %v590 = vadd.f32 %v266, %v589
  %v591 = vpop.f32.mrb[0].mxu0
  %v592 = vpop.f32.mrb[0].mxu0
  %v593 = vadd.f32 %v266, %v592
  %v594 = vpop.f32.mrb[0].mxu0
  %595 = vmatprep.mubr.bf16.mxu0 0
  %596 = vmatmul.mubr.bf16.gmra.mrb[0].mxu0 %v348
  %v597 = vpop.f32.mrb[0].mxu0
  %v598 = vadd.f32 %v266, %v597
  %v599 = vpop.f32.mrb[0].mxu0
  %v600 = vpop.f32.mrb[0].mxu0
  %v601 = vadd.f32 %v266, %v600
  %v602 = vpop.f32.mrb[0].mxu0
  %603 = vmatprep.mubr.bf16.mxu0 0
  %604 = vmatmul.mubr.bf16.gmra.mrb[0].mxu0 %v351
  %v605 = vpop.f32.mrb[0].mxu0
  %v606 = vadd.f32 %v266, %v605
  %v607 = vpop.f32.mrb[0].mxu0
  %v608 = vpop.f32.mrb[0].mxu0
  %v609 = vadd.f32 %v266, %v608
  %v610 = vpop.f32.mrb[0].mxu0
  %611 = vmatprep.mubr.bf16.mxu0 0
  %612 = vmatmul.mubr.bf16.gmra.mrb[0].mxu0 %v354
  %v613 = vpop.f32.mrb[0].mxu0
  %v614 = vadd.f32 %v266, %v613
  %v615 = vpop.f32.mrb[0].mxu0
  %v616 = vpop.f32.mrb[0].mxu0
  %v617 = vadd.f32 %v266, %v616
  %v618 = vpop.f32.mrb[0].mxu0
  %619 = vmatprep.mubr.bf16.mxu0 0
  %620 = vmatmul.mubr.bf16.gmra.mrb[0].mxu0 %v357
  %v621 = vpop.f32.mrb[0].mxu0
  %v622 = vadd.f32 %v266, %v621
  %v623 = vpop.f32.mrb[0].mxu0
  %v624 = vpop.f32.mrb[0].mxu0
  %v625 = vadd.f32 %v266, %v624
  %v626 = vpop.f32.mrb[0].mxu0
  %627 = vmatprep.mubr.bf16.mxu0 0
  %628 = vmatmul.mubr.bf16.gmra.mrb[0].mxu0 %v360
  %v629 = vpop.f32.mrb[0].mxu0
  %v630 = vadd.f32 %v266, %v629
  %v631 = vpop.f32.mrb[0].mxu0
  %v632 = vpop.f32.mrb[0].mxu0
  %v633 = vadd.f32 %v266, %v632
  %v634 = vpop.f32.mrb[0].mxu0
  %635 = vmatprep.mubr.bf16.mxu0 0
  %636 = vmatmul.mubr.bf16.gmra.mrb[0].mxu0 %v363
  %v637 = vpop.f32.mrb[0].mxu0
  %v638 = vadd.f32 %v266, %v637
  %v639 = vpop.f32.mrb[0].mxu0
  %v640 = vpop.f32.mrb[0].mxu0
  %v641 = vadd.f32 %v266, %v640
  %v642 = vpop.f32.mrb[0].mxu0
  %643 = vmatprep.mubr.bf16.mxu0 0
  %644 = vmatmul.mubr.bf16.gmra.mrb[0].mxu0 %v366
  %v645 = vpop.f32.mrb[0].mxu0
  %v646 = vadd.f32 %v266, %v645
  %v647 = vpop.f32.mrb[0].mxu0
  %v648 = vpop.f32.mrb[0].mxu0
  %v649 = vadd.f32 %v266, %v648
  %v650 = vpop.f32.mrb[0].mxu0
  %651 = vmatprep.mubr.bf16.mxu0 0
  %652 = vmatmul.mubr.bf16.gmra.mrb[0].mxu0 %v369
  %v653 = vpop.f32.mrb[0].mxu0
  %v654 = vadd.f32 %v266, %v653
  %v655 = vpop.f32.mrb[0].mxu0
  %v656 = vpop.f32.mrb[0].mxu0
  %v657 = vadd.f32 %v266, %v656
  %v658 = vpop.f32.mrb[0].mxu0
  %659 = vdwg.mxu0
  %v660 = vmul.f32 %v406, 0.044715
  %v661 = vmul.f32 %v409, 0.044715
  %v662 = vmul.f32 %v414, 0.044715
  %v663 = vmul.f32 %v417, 0.044715
  %v664 = vmul.f32 %v422, 0.044715
  %v665 = vmul.f32 %v425, 0.044715
  %v666 = vmul.f32 %v430, 0.044715
  %v667 = vmul.f32 %v433, 0.044715
  %v668 = vmul.f32 %v438, 0.044715
  %v669 = vmul.f32 %v441, 0.044715
  %v670 = vmul.f32 %v446, 0.044715
  %v671 = vmul.f32 %v449, 0.044715
  %v672 = vmul.f32 %v454, 0.044715
  %v673 = vmul.f32 %v457, 0.044715
  %v674 = vmul.f32 %v462, 0.044715
  %v675 = vmul.f32 %v465, 0.044715
  %v676 = vmul.f32 %v470, 0.044715
  %v677 = vmul.f32 %v473, 0.044715
  %v678 = vmul.f32 %v478, 0.044715
  %v679 = vmul.f32 %v481, 0.044715
  %v680 = vmul.f32 %v486, 0.044715
  %v681 = vmul.f32 %v489, 0.044715
  %v682 = vmul.f32 %v494, 0.044715
  %v683 = vmul.f32 %v497, 0.044715
  %v684 = vmul.f32 %v502, 0.044715
  %v685 = vmul.f32 %v505, 0.044715
  %v686 = vmul.f32 %v510, 0.044715
  %v687 = vmul.f32 %v513, 0.044715
  %v688 = vmul.f32 %v518, 0.044715
  %v689 = vmul.f32 %v521, 0.044715
  %v690 = vmul.f32 %v526, 0.044715
  %v691 = vmul.f32 %v529, 0.044715
  %v692 = vmul.f32 %v534, 0.044715
  %v693 = vmul.f32 %v537, 0.044715
  %v694 = vmul.f32 %v542, 0.044715
  %v695 = vmul.f32 %v545, 0.044715
  %v696 = vmul.f32 %v550, 0.044715
  %v697 = vmul.f32 %v553, 0.044715
  %v698 = vmul.f32 %v558, 0.044715
  %v699 = vmul.f32 %v561, 0.044715
  %v700 = vmul.f32 %v566, 0.044715
  %v701 = vmul.f32 %v569, 0.044715
  %v702 = vmul.f32 %v574, 0.044715
  %v703 = vmul.f32 %v577, 0.044715
  %v704 = vmul.f32 %v582, 0.044715
  %v705 = vmul.f32 %v585, 0.044715
  %v706 = vmul.f32 %v590, 0.044715
  %v707 = vmul.f32 %v593, 0.044715
  %v708 = vmul.f32 %v598, 0.044715
  %v709 = vmul.f32 %v601, 0.044715
  %v710 = vmul.f32 %v606, 0.044715
  %v711 = vmul.f32 %v609, 0.044715
  %v712 = vmul.f32 %v614, 0.044715
  %v713 = vmul.f32 %v617, 0.044715
  %v714 = vmul.f32 %v622, 0.044715
  %v715 = vmul.f32 %v625, 0.044715
  %v716 = vmul.f32 %v630, 0.044715
  %v717 = vmul.f32 %v633, 0.044715
  %v718 = vmul.f32 %v638, 0.044715
  %v719 = vmul.f32 %v641, 0.044715
  %v720 = vmul.f32 %v646, 0.044715
  %v721 = vmul.f32 %v649, 0.044715
  %v722 = vmul.f32 %v654, 0.044715
  %v723 = vmul.f32 %v657, 0.044715
  %v724 = vmul.f32 %v660, %v406
  %v725 = vmul.f32 %v661, %v409
  %v726 = vmul.f32 %v662, %v414
  %v727 = vmul.f32 %v663, %v417
  %v728 = vmul.f32 %v664, %v422
  %v729 = vmul.f32 %v665, %v425
  %v730 = vmul.f32 %v666, %v430
  %v731 = vmul.f32 %v667, %v433
  %v732 = vmul.f32 %v668, %v438
  %v733 = vmul.f32 %v669, %v441
  %v734 = vmul.f32 %v670, %v446
  %v735 = vmul.f32 %v671, %v449
  %v736 = vmul.f32 %v672, %v454
  %v737 = vmul.f32 %v673, %v457
  %v738 = vmul.f32 %v674, %v462
  %v739 = vmul.f32 %v675, %v465
  %v740 = vmul.f32 %v676, %v470
  %v741 = vmul.f32 %v677, %v473
  %v742 = vmul.f32 %v678, %v478
  %v743 = vmul.f32 %v679, %v481
  %v744 = vmul.f32 %v680, %v486
  %v745 = vmul.f32 %v681, %v489
  %v746 = vmul.f32 %v682, %v494
  %v747 = vmul.f32 %v683, %v497
  %v748 = vmul.f32 %v684, %v502
  %v749 = vmul.f32 %v685, %v505
  %v750 = vmul.f32 %v686, %v510
  %v751 = vmul.f32 %v687, %v513
  %v752 = vmul.f32 %v688, %v518
  %v753 = vmul.f32 %v689, %v521
  %v754 = vmul.f32 %v690, %v526
  %v755 = vmul.f32 %v691, %v529
  %v756 = vmul.f32 %v692, %v534
  %v757 = vmul.f32 %v693, %v537
  %v758 = vmul.f32 %v694, %v542
  %v759 = vmul.f32 %v695, %v545
  %v760 = vmul.f32 %v696, %v550
  %v761 = vmul.f32 %v697, %v553
  %v762 = vmul.f32 %v698, %v558
  %v763 = vmul.f32 %v699, %v561
  %v764 = vmul.f32 %v700, %v566
  %v765 = vmul.f32 %v701, %v569
  %v766 = vmul.f32 %v702, %v574
  %v767 = vmul.f32 %v703, %v577
  %v768 = vmul.f32 %v704, %v582
  %v769 = vmul.f32 %v705, %v585
  %v770 = vmul.f32 %v706, %v590
  %v771 = vmul.f32 %v707, %v593
  %v772 = vmul.f32 %v708, %v598
  %v773 = vmul.f32 %v709, %v601
  %v774 = vmul.f32 %v710, %v606
  %v775 = vmul.f32 %v711, %v609
  %v776 = vmul.f32 %v712, %v614
  %v777 = vmul.f32 %v713, %v617
  %v778 = vmul.f32 %v714, %v622
  %v779 = vmul.f32 %v715, %v625
  %v780 = vmul.f32 %v716, %v630
  %v781 = vmul.f32 %v717, %v633
  %v782 = vmul.f32 %v718, %v638
  %v783 = vmul.f32 %v719, %v641
  %v784 = vmul.f32 %v720, %v646
  %v785 = vmul.f32 %v721, %v649
  %v786 = vmul.f32 %v722, %v654
  %v787 = vmul.f32 %v723, %v657
  %v788 = vmul.f32 %v724, %v406
  %v789 = vmul.f32 %v725, %v409
  %v790 = vmul.f32 %v726, %v414
  %v791 = vmul.f32 %v727, %v417
  %v792 = vmul.f32 %v728, %v422
  %v793 = vmul.f32 %v729, %v425
  %v794 = vmul.f32 %v730, %v430
  %v795 = vmul.f32 %v731, %v433
  %v796 = vmul.f32 %v732, %v438
  %v797 = vmul.f32 %v733, %v441
  %v798 = vmul.f32 %v734, %v446
  %v799 = vmul.f32 %v735, %v449
  %v800 = vmul.f32 %v736, %v454
  %v801 = vmul.f32 %v737, %v457
  %v802 = vmul.f32 %v738, %v462
  %v803 = vmul.f32 %v739, %v465
  %v804 = vmul.f32 %v740, %v470
  %v805 = vmul.f32 %v741, %v473
  %v806 = vmul.f32 %v742, %v478
  %v807 = vmul.f32 %v743, %v481
  %v808 = vmul.f32 %v744, %v486
  %v809 = vmul.f32 %v745, %v489
  %v810 = vmul.f32 %v746, %v494
  %v811 = vmul.f32 %v747, %v497
  %v812 = vmul.f32 %v748, %v502
  %v813 = vmul.f32 %v749, %v505
  %v814 = vmul.f32 %v750, %v510
  %v815 = vmul.f32 %v751, %v513
  %v816 = vmul.f32 %v752, %v518
  %v817 = vmul.f32 %v753, %v521
  %v818 = vmul.f32 %v754, %v526
  %v819 = vmul.f32 %v755, %v529
  %v820 = vmul.f32 %v756, %v534
  %v821 = vmul.f32 %v757, %v537
  %v822 = vmul.f32 %v758, %v542
  %v823 = vmul.f32 %v759, %v545
  %v824 = vmul.f32 %v760, %v550
  %v825 = vmul.f32 %v761, %v553
  %v826 = vmul.f32 %v762, %v558
  %v827 = vmul.f32 %v763, %v561
  %v828 = vmul.f32 %v764, %v566
  %v829 = vmul.f32 %v765, %v569
  %v830 = vmul.f32 %v766, %v574
  %v831 = vmul.f32 %v767, %v577
  %v832 = vmul.f32 %v768, %v582
  %v833 = vmul.f32 %v769, %v585
  %v834 = vmul.f32 %v770, %v590
  %v835 = vmul.f32 %v771, %v593
  %v836 = vmul.f32 %v772, %v598
  %v837 = vmul.f32 %v773, %v601
  %v838 = vmul.f32 %v774, %v606
  %v839 = vmul.f32 %v775, %v609
  %v840 = vmul.f32 %v776, %v614
  %v841 = vmul.f32 %v777, %v617
  %v842 = vmul.f32 %v778, %v622
  %v843 = vmul.f32 %v779, %v625
  %v844 = vmul.f32 %v780, %v630
  %v845 = vmul.f32 %v781, %v633
  %v846 = vmul.f32 %v782, %v638
  %v847 = vmul.f32 %v783, %v641
  %v848 = vmul.f32 %v784, %v646
  %v849 = vmul.f32 %v785, %v649
  %v850 = vmul.f32 %v786, %v654
  %v851 = vmul.f32 %v787, %v657
  %v852 = vadd.f32 %v406, %v788
  %v853 = vadd.f32 %v409, %v789
  %v854 = vadd.f32 %v414, %v790
  %v855 = vadd.f32 %v417, %v791
  %v856 = vadd.f32 %v422, %v792
  %v857 = vadd.f32 %v425, %v793
  %v858 = vadd.f32 %v430, %v794
  %v859 = vadd.f32 %v433, %v795
  %v860 = vadd.f32 %v438, %v796
  %v861 = vadd.f32 %v441, %v797
  %v862 = vadd.f32 %v446, %v798
  %v863 = vadd.f32 %v449, %v799
  %v864 = vadd.f32 %v454, %v800
  %v865 = vadd.f32 %v457, %v801
  %v866 = vadd.f32 %v462, %v802
  %v867 = vadd.f32 %v465, %v803
  %v868 = vadd.f32 %v470, %v804
  %v869 = vadd.f32 %v473, %v805
  %v870 = vadd.f32 %v478, %v806
  %v871 = vadd.f32 %v481, %v807
  %v872 = vadd.f32 %v486, %v808
  %v873 = vadd.f32 %v489, %v809
  %v874 = vadd.f32 %v494, %v810
  %v875 = vadd.f32 %v497, %v811
  %v876 = vadd.f32 %v502, %v812
  %v877 = vadd.f32 %v505, %v813
  %v878 = vadd.f32 %v510, %v814
  %v879 = vadd.f32 %v513, %v815
  %v880 = vadd.f32 %v518, %v816
  %v881 = vadd.f32 %v521, %v817
  %v882 = vadd.f32 %v526, %v818
  %v883 = vadd.f32 %v529, %v819
  %v884 = vadd.f32 %v534, %v820
  %v885 = vadd.f32 %v537, %v821
  %v886 = vadd.f32 %v542, %v822
  %v887 = vadd.f32 %v545, %v823
  %v888 = vadd.f32 %v550, %v824
  %v889 = vadd.f32 %v553, %v825
  %v890 = vadd.f32 %v558, %v826
  %v891 = vadd.f32 %v561, %v827
  %v892 = vadd.f32 %v566, %v828
  %v893 = vadd.f32 %v569, %v829
  %v894 = vadd.f32 %v574, %v830
  %v895 = vadd.f32 %v577, %v831
  %v896 = vadd.f32 %v582, %v832
  %v897 = vadd.f32 %v585, %v833
  %v898 = vadd.f32 %v590, %v834
  %v899 = vadd.f32 %v593, %v835
  %v900 = vadd.f32 %v598, %v836
  %v901 = vadd.f32 %v601, %v837
  %v902 = vadd.f32 %v606, %v838
  %v903 = vadd.f32 %v609, %v839
  %v904 = vadd.f32 %v614, %v840
  %v905 = vadd.f32 %v617, %v841
  %v906 = vadd.f32 %v622, %v842
  %v907 = vadd.f32 %v625, %v843
  %v908 = vadd.f32 %v630, %v844
  %v909 = vadd.f32 %v633, %v845
  %v910 = vadd.f32 %v638, %v846
  %v911 = vadd.f32 %v641, %v847
  %v912 = vadd.f32 %v646, %v848
  %v913 = vadd.f32 %v649, %v849
  %v914 = vadd.f32 %v654, %v850
  %v915 = vadd.f32 %v657, %v851
  %v916 = vmul.f32 %v852, 0.7978846
  %v917 = vmul.f32 %v853, 0.7978846
  %v918 = vmul.f32 %v854, 0.7978846
  %v919 = vmul.f32 %v855, 0.7978846
  %v920 = vmul.f32 %v856, 0.7978846
  %v921 = vmul.f32 %v857, 0.7978846
  %v922 = vmul.f32 %v858, 0.7978846
  %v923 = vmul.f32 %v859, 0.7978846
  %v924 = vmul.f32 %v860, 0.7978846
  %v925 = vmul.f32 %v861, 0.7978846
  %v926 = vmul.f32 %v862, 0.7978846
  %v927 = vmul.f32 %v863, 0.7978846
  %v928 = vmul.f32 %v864, 0.7978846
  %v929 = vmul.f32 %v865, 0.7978846
  %v930 = vmul.f32 %v866, 0.7978846
  %v931 = vmul.f32 %v867, 0.7978846
  %v932 = vmul.f32 %v868, 0.7978846
  %v933 = vmul.f32 %v869, 0.7978846
  %v934 = vmul.f32 %v870, 0.7978846
  %v935 = vmul.f32 %v871, 0.7978846
  %v936 = vmul.f32 %v872, 0.7978846
  %v937 = vmul.f32 %v873, 0.7978846
  %v938 = vmul.f32 %v874, 0.7978846
  %v939 = vmul.f32 %v875, 0.7978846
  %v940 = vmul.f32 %v876, 0.7978846
  %v941 = vmul.f32 %v877, 0.7978846
  %v942 = vmul.f32 %v878, 0.7978846
  %v943 = vmul.f32 %v879, 0.7978846
  %v944 = vmul.f32 %v880, 0.7978846
  %v945 = vmul.f32 %v881, 0.7978846
  %v946 = vmul.f32 %v882, 0.7978846
  %v947 = vmul.f32 %v883, 0.7978846
  %v948 = vmul.f32 %v884, 0.7978846
  %v949 = vmul.f32 %v885, 0.7978846
  %v950 = vmul.f32 %v886, 0.7978846
  %v951 = vmul.f32 %v887, 0.7978846
  %v952 = vmul.f32 %v888, 0.7978846
  %v953 = vmul.f32 %v889, 0.7978846
  %v954 = vmul.f32 %v890, 0.7978846
  %v955 = vmul.f32 %v891, 0.7978846
  %v956 = vmul.f32 %v892, 0.7978846
  %v957 = vmul.f32 %v893, 0.7978846
  %v958 = vmul.f32 %v894, 0.7978846
  %v959 = vmul.f32 %v895, 0.7978846
  %v960 = vmul.f32 %v896, 0.7978846
  %v961 = vmul.f32 %v897, 0.7978846
  %v962 = vmul.f32 %v898, 0.7978846
  %v963 = vmul.f32 %v899, 0.7978846
  %v964 = vmul.f32 %v900, 0.7978846
  %v965 = vmul.f32 %v901, 0.7978846
  %v966 = vmul.f32 %v902, 0.7978846
  %v967 = vmul.f32 %v903, 0.7978846
  %v968 = vmul.f32 %v904, 0.7978846
  %v969 = vmul.f32 %v905, 0.7978846
  %v970 = vmul.f32 %v906, 0.7978846
  %v971 = vmul.f32 %v907, 0.7978846
  %v972 = vmul.f32 %v908, 0.7978846
  %v973 = vmul.f32 %v909, 0.7978846
  %v974 = vmul.f32 %v910, 0.7978846
  %v975 = vmul.f32 %v911, 0.7978846
  %v976 = vmul.f32 %v912, 0.7978846
  %v977 = vmul.f32 %v913, 0.7978846
  %v978 = vmul.f32 %v914, 0.7978846
  %v979 = vmul.f32 %v915, 0.7978846
  %v980 = vmul.f32 %v406, 0.5
  %v981 = vmul.f32 %v409, 0.5
  %v982 = vmul.f32 %v414, 0.5
  %v983 = vmul.f32 %v417, 0.5
  %v984 = vmul.f32 %v422, 0.5
  %v985 = vmul.f32 %v425, 0.5
  %v986 = vmul.f32 %v430, 0.5
  %v987 = vmul.f32 %v433, 0.5
  %v988 = vmul.f32 %v438, 0.5
  %v989 = vmul.f32 %v441, 0.5
  %v990 = vmul.f32 %v446, 0.5
  %v991 = vmul.f32 %v449, 0.5
  %v992 = vmul.f32 %v454, 0.5
  %v993 = vmul.f32 %v457, 0.5
  %v994 = vmul.f32 %v462, 0.5
  %v995 = vmul.f32 %v465, 0.5
  %v996 = vmul.f32 %v470, 0.5
  %v997 = vmul.f32 %v473, 0.5
  %v998 = vmul.f32 %v478, 0.5
  %v999 = vmul.f32 %v481, 0.5
  %v1000 = vmul.f32 %v486, 0.5
  %v1001 = vmul.f32 %v489, 0.5
  %v1002 = vmul.f32 %v494, 0.5
  %v1003 = vmul.f32 %v497, 0.5
  %v1004 = vmul.f32 %v502, 0.5
  %v1005 = vmul.f32 %v505, 0.5
  %v1006 = vmul.f32 %v510, 0.5
  %v1007 = vmul.f32 %v513, 0.5
  %v1008 = vmul.f32 %v518, 0.5
  %v1009 = vmul.f32 %v521, 0.5
  %v1010 = vmul.f32 %v526, 0.5
  %v1011 = vmul.f32 %v529, 0.5
  %v1012 = vmul.f32 %v534, 0.5
  %v1013 = vmul.f32 %v537, 0.5
  %v1014 = vmul.f32 %v542, 0.5
  %v1015 = vmul.f32 %v545, 0.5
  %v1016 = vmul.f32 %v550, 0.5
  %v1017 = vmul.f32 %v553, 0.5
  %v1018 = vmul.f32 %v558, 0.5
  %v1019 = vmul.f32 %v561, 0.5
  %v1020 = vmul.f32 %v566, 0.5
  %v1021 = vmul.f32 %v569, 0.5
  %v1022 = vmul.f32 %v574, 0.5
  %v1023 = vmul.f32 %v577, 0.5
  %v1024 = vmul.f32 %v582, 0.5
  %v1025 = vmul.f32 %v585, 0.5
  %v1026 = vmul.f32 %v590, 0.5
  %v1027 = vmul.f32 %v593, 0.5
  %v1028 = vmul.f32 %v598, 0.5
  %v1029 = vmul.f32 %v601, 0.5
  %v1030 = vmul.f32 %v606, 0.5
  %v1031 = vmul.f32 %v609, 0.5
  %v1032 = vmul.f32 %v614, 0.5
  %v1033 = vmul.f32 %v617, 0.5
  %v1034 = vmul.f32 %v622, 0.5
  %v1035 = vmul.f32 %v625, 0.5
  %v1036 = vmul.f32 %v630, 0.5
  %v1037 = vmul.f32 %v633, 0.5
  %v1038 = vmul.f32 %v638, 0.5
  %v1039 = vmul.f32 %v641, 0.5
  %v1040 = vmul.f32 %v646, 0.5
  %v1041 = vmul.f32 %v649, 0.5
  %v1042 = vmul.f32 %v654, 0.5
  %v1043 = vmul.f32 %v657, 0.5
  %v1044 = vtanh.pop %v916
  %v1045 = vtanh.pop %v917
  %v1046 = vtanh.pop %v918
  %v1047 = vtanh.pop %v919
  %v1048 = vtanh.pop %v920
  %v1049 = vtanh.pop %v921
  %v1050 = vtanh.pop %v922
  %v1051 = vtanh.pop %v923
  %v1052 = vtanh.pop %v924
  %v1053 = vtanh.pop %v925
  %v1054 = vtanh.pop %v926
  %v1055 = vtanh.pop %v927
  %v1056 = vtanh.pop %v928
  %v1057 = vtanh.pop %v929
  %v1058 = vtanh.pop %v930
  %v1059 = vtanh.pop %v931
  %v1060 = vtanh.pop %v932
  %v1061 = vtanh.pop %v933
  %v1062 = vtanh.pop %v934
  %v1063 = vtanh.pop %v935
  %v1064 = vtanh.pop %v936
  %v1065 = vtanh.pop %v937
  %v1066 = vtanh.pop %v938
  %v1067 = vtanh.pop %v939
  %v1068 = vtanh.pop %v940
  %v1069 = vtanh.pop %v941
  %v1070 = vtanh.pop %v942
  %v1071 = vtanh.pop %v943
  %v1072 = vtanh.pop %v944
  %v1073 = vtanh.pop %v945
  %v1074 = vtanh.pop %v946
  %v1075 = vtanh.pop %v947
  %v1076 = vtanh.pop %v948
  %v1077 = vtanh.pop %v949
  %v1078 = vtanh.pop %v950
  %v1079 = vtanh.pop %v951
  %v1080 = vtanh.pop %v952
  %v1081 = vtanh.pop %v953
  %v1082 = vtanh.pop %v954
  %v1083 = vtanh.pop %v955
  %v1084 = vtanh.pop %v956
  %v1085 = vtanh.pop %v957
  %v1086 = vtanh.pop %v958
  %v1087 = vtanh.pop %v959
  %v1088 = vtanh.pop %v960
  %v1089 = vtanh.pop %v961
  %v1090 = vtanh.pop %v962
  %v1091 = vtanh.pop %v963
  %v1092 = vtanh.pop %v964
  %v1093 = vtanh.pop %v965
  %v1094 = vtanh.pop %v966
  %v1095 = vtanh.pop %v967
  %v1096 = vtanh.pop %v968
  %v1097 = vtanh.pop %v969
  %v1098 = vtanh.pop %v970
  %v1099 = vtanh.pop %v971
  %v1100 = vtanh.pop %v972
  %v1101 = vtanh.pop %v973
  %v1102 = vtanh.pop %v974
  %v1103 = vtanh.pop %v975
  %v1104 = vtanh.pop %v976
  %v1105 = vtanh.pop %v977
  %v1106 = vtanh.pop %v978
  %v1107 = vtanh.pop %v979
  %v1108 = vadd.f32 %v1044, 1.0
  %v1109 = vadd.f32 %v1045, 1.0
  %v1110 = vadd.f32 %v1046, 1.0
  %v1111 = vadd.f32 %v1047, 1.0
  %v1112 = vadd.f32 %v1048, 1.0
  %v1113 = vadd.f32 %v1049, 1.0
  %v1114 = vadd.f32 %v1050, 1.0
  %v1115 = vadd.f32 %v1051, 1.0
  %v1116 = vadd.f32 %v1052, 1.0
  %v1117 = vadd.f32 %v1053, 1.0
  %v1118 = vadd.f32 %v1054, 1.0
  %v1119 = vadd.f32 %v1055, 1.0
  %v1120 = vadd.f32 %v1056, 1.0
  %v1121 = vadd.f32 %v1057, 1.0
  %v1122 = vadd.f32 %v1058, 1.0
  %v1123 = vadd.f32 %v1059, 1.0
  %v1124 = vadd.f32 %v1060, 1.0
  %v1125 = vadd.f32 %v1061, 1.0
  %v1126 = vadd.f32 %v1062, 1.0
  %v1127 = vadd.f32 %v1063, 1.0
  %v1128 = vadd.f32 %v1064, 1.0
  %v1129 = vadd.f32 %v1065, 1.0
  %v1130 = vadd.f32 %v1066, 1.0
  %v1131 = vadd.f32 %v1067, 1.0
  %v1132 = vadd.f32 %v1068, 1.0
  %v1133 = vadd.f32 %v1069, 1.0
  %v1134 = vadd.f32 %v1070, 1.0
  %v1135 = vadd.f32 %v1071, 1.0
  %v1136 = vadd.f32 %v1072, 1.0
  %v1137 = vadd.f32 %v1073, 1.0
  %v1138 = vadd.f32 %v1074, 1.0
  %v1139 = vadd.f32 %v1075, 1.0
  %v1140 = vadd.f32 %v1076, 1.0
  %v1141 = vadd.f32 %v1077, 1.0
  %v1142 = vadd.f32 %v1078, 1.0
  %v1143 = vadd.f32 %v1079, 1.0
  %v1144 = vadd.f32 %v1080, 1.0
  %v1145 = vadd.f32 %v1081, 1.0
  %v1146 = vadd.f32 %v1082, 1.0
  %v1147 = vadd.f32 %v1083, 1.0
  %v1148 = vadd.f32 %v1084, 1.0
  %v1149 = vadd.f32 %v1085, 1.0
  %v1150 = vadd.f32 %v1086, 1.0
  %v1151 = vadd.f32 %v1087, 1.0
  %v1152 = vadd.f32 %v1088, 1.0
  %v1153 = vadd.f32 %v1089, 1.0
  %v1154 = vadd.f32 %v1090, 1.0
  %v1155 = vadd.f32 %v1091, 1.0
  %v1156 = vadd.f32 %v1092, 1.0
  %v1157 = vadd.f32 %v1093, 1.0
  %v1158 = vadd.f32 %v1094, 1.0
  %v1159 = vadd.f32 %v1095, 1.0
  %v1160 = vadd.f32 %v1096, 1.0
  %v1161 = vadd.f32 %v1097, 1.0
  %v1162 = vadd.f32 %v1098, 1.0
  %v1163 = vadd.f32 %v1099, 1.0
  %v1164 = vadd.f32 %v1100, 1.0
  %v1165 = vadd.f32 %v1101, 1.0
  %v1166 = vadd.f32 %v1102, 1.0
  %v1167 = vadd.f32 %v1103, 1.0
  %v1168 = vadd.f32 %v1104, 1.0
  %v1169 = vadd.f32 %v1105, 1.0
  %v1170 = vadd.f32 %v1106, 1.0
  %v1171 = vadd.f32 %v1107, 1.0
  %v1172 = vmul.f32 %v980, %v1108
  %v1173 = vmul.f32 %v981, %v1109
  %v1174 = vmul.f32 %v982, %v1110
  %v1175 = vmul.f32 %v983, %v1111
  %v1176 = vmul.f32 %v984, %v1112
  %v1177 = vmul.f32 %v985, %v1113
  %v1178 = vmul.f32 %v986, %v1114
  %v1179 = vmul.f32 %v987, %v1115
  %v1180 = vmul.f32 %v988, %v1116
  %v1181 = vmul.f32 %v989, %v1117
  %v1182 = vmul.f32 %v990, %v1118
  %v1183 = vmul.f32 %v991, %v1119
  %v1184 = vmul.f32 %v992, %v1120
  %v1185 = vmul.f32 %v993, %v1121
  %v1186 = vmul.f32 %v994, %v1122
  %v1187 = vmul.f32 %v995, %v1123
  %v1188 = vmul.f32 %v996, %v1124
  %v1189 = vmul.f32 %v997, %v1125
  %v1190 = vmul.f32 %v998, %v1126
  %v1191 = vmul.f32 %v999, %v1127
  %v1192 = vmul.f32 %v1000, %v1128
  %v1193 = vmul.f32 %v1001, %v1129
  %v1194 = vmul.f32 %v1002, %v1130
  %v1195 = vmul.f32 %v1003, %v1131
  %v1196 = vmul.f32 %v1004, %v1132
  %v1197 = vmul.f32 %v1005, %v1133
  %v1198 = vmul.f32 %v1006, %v1134
  %v1199 = vmul.f32 %v1007, %v1135
  %v1200 = vmul.f32 %v1008, %v1136
  %v1201 = vmul.f32 %v1009, %v1137
  %v1202 = vmul.f32 %v1010, %v1138
  %v1203 = vmul.f32 %v1011, %v1139
  %v1204 = vmul.f32 %v1012, %v1140
  %v1205 = vmul.f32 %v1013, %v1141
  %v1206 = vmul.f32 %v1014, %v1142
  %v1207 = vmul.f32 %v1015, %v1143
  %v1208 = vmul.f32 %v1016, %v1144
  %v1209 = vmul.f32 %v1017, %v1145
  %v1210 = vmul.f32 %v1018, %v1146
  %v1211 = vmul.f32 %v1019, %v1147
  %v1212 = vmul.f32 %v1020, %v1148
  %v1213 = vmul.f32 %v1021, %v1149
  %v1214 = vmul.f32 %v1022, %v1150
  %v1215 = vmul.f32 %v1023, %v1151
  %v1216 = vmul.f32 %v1024, %v1152
  %v1217 = vmul.f32 %v1025, %v1153
  %v1218 = vmul.f32 %v1026, %v1154
  %v1219 = vmul.f32 %v1027, %v1155
  %v1220 = vmul.f32 %v1028, %v1156
  %v1221 = vmul.f32 %v1029, %v1157
  %v1222 = vmul.f32 %v1030, %v1158
  %v1223 = vmul.f32 %v1031, %v1159
  %v1224 = vmul.f32 %v1032, %v1160
  %v1225 = vmul.f32 %v1033, %v1161
  %v1226 = vmul.f32 %v1034, %v1162
  %v1227 = vmul.f32 %v1035, %v1163
  %v1228 = vmul.f32 %v1036, %v1164
  %v1229 = vmul.f32 %v1037, %v1165
  %v1230 = vmul.f32 %v1038, %v1166
  %v1231 = vmul.f32 %v1039, %v1167
  %v1232 = vmul.f32 %v1040, %v1168
  %v1233 = vmul.f32 %v1041, %v1169
  %v1234 = vmul.f32 %v1042, %v1170
  %v1235 = vmul.f32 %v1043, %v1171
  %v1236 = vpack.c.bf16 %v1173, %v1172
  %v1237 = vpack.c.bf16 %v1175, %v1174
  %v1238 = vpack.c.bf16 %v1177, %v1176
  %v1239 = vpack.c.bf16 %v1179, %v1178
  %v1240 = vpack.c.bf16 %v1181, %v1180
  %v1241 = vpack.c.bf16 %v1183, %v1182
  %v1242 = vpack.c.bf16 %v1185, %v1184
  %v1243 = vpack.c.bf16 %v1187, %v1186
  %v1244 = vpack.c.bf16 %v1189, %v1188
  %v1245 = vpack.c.bf16 %v1191, %v1190
  %v1246 = vpack.c.bf16 %v1193, %v1192
  %v1247 = vpack.c.bf16 %v1195, %v1194
  %v1248 = vpack.c.bf16 %v1197, %v1196
  %v1249 = vpack.c.bf16 %v1199, %v1198
  %v1250 = vpack.c.bf16 %v1201, %v1200
  %v1251 = vpack.c.bf16 %v1203, %v1202
  %v1252 = vpack.c.bf16 %v1205, %v1204
  %v1253 = vpack.c.bf16 %v1207, %v1206
  %v1254 = vpack.c.bf16 %v1209, %v1208
  %v1255 = vpack.c.bf16 %v1211, %v1210
  %v1256 = vpack.c.bf16 %v1213, %v1212
  %v1257 = vpack.c.bf16 %v1215, %v1214
  %v1258 = vpack.c.bf16 %v1217, %v1216
  %v1259 = vpack.c.bf16 %v1219, %v1218
  %v1260 = vpack.c.bf16 %v1221, %v1220
  %v1261 = vpack.c.bf16 %v1223, %v1222
  %v1262 = vpack.c.bf16 %v1225, %v1224
  %v1263 = vpack.c.bf16 %v1227, %v1226
  %v1264 = vpack.c.bf16 %v1229, %v1228
  %v1265 = vpack.c.bf16 %v1231, %v1230
  %v1266 = vpack.c.bf16 %v1233, %v1232
  %v1267 = vpack.c.bf16 %v1235, %v1234
  %v1300 = vunpack.c.l.b16 %v1236
  %v1301 = vunpack.c.h.b16 %v1236
  %v1302 = vunpack.c.l.b16 %v1237
  %v1303 = vunpack.c.h.b16 %v1237
  %v1304 = vunpack.c.l.b16 %v1238
  %v1305 = vunpack.c.h.b16 %v1238
  %v1306 = vunpack.c.l.b16 %v1239
  %v1307 = vunpack.c.h.b16 %v1239
  %v1308 = vunpack.c.l.b16 %v1240
  %v1309 = vunpack.c.h.b16 %v1240
  %v1310 = vunpack.c.l.b16 %v1241
  %v1311 = vunpack.c.h.b16 %v1241
  %v1312 = vunpack.c.l.b16 %v1242
  %v1313 = vunpack.c.h.b16 %v1242
  %v1314 = vunpack.c.l.b16 %v1243
  %v1315 = vunpack.c.h.b16 %v1243
  %v1316 = vunpack.c.l.b16 %v1244
  %v1317 = vunpack.c.h.b16 %v1244
  %v1318 = vunpack.c.l.b16 %v1245
  %v1319 = vunpack.c.h.b16 %v1245
  %v1320 = vunpack.c.l.b16 %v1246
  %v1321 = vunpack.c.h.b16 %v1246
  %v1322 = vunpack.c.l.b16 %v1247
  %v1323 = vunpack.c.h.b16 %v1247
  %v1324 = vunpack.c.l.b16 %v1248
  %v1325 = vunpack.c.h.b16 %v1248
  %v1326 = vunpack.c.l.b16 %v1249
  %v1327 = vunpack.c.h.b16 %v1249
  %v1328 = vunpack.c.l.b16 %v1250
  %v1329 = vunpack.c.h.b16 %v1250
  %v1330 = vunpack.c.l.b16 %v1251
  %v1331 = vunpack.c.h.b16 %v1251
  %v1332 = vunpack.c.l.b16 %v1252
  %v1333 = vunpack.c.h.b16 %v1252
  %v1334 = vunpack.c.l.b16 %v1253
  %v1335 = vunpack.c.h.b16 %v1253
  %v1336 = vunpack.c.l.b16 %v1254
  %v1337 = vunpack.c.h.b16 %v1254
  %v1338 = vunpack.c.l.b16 %v1255
  %v1339 = vunpack.c.h.b16 %v1255
  %v1340 = vunpack.c.l.b16 %v1256
  %v1341 = vunpack.c.h.b16 %v1256
  %v1342 = vunpack.c.l.b16 %v1257
  %v1343 = vunpack.c.h.b16 %v1257
  %v1344 = vunpack.c.l.b16 %v1258
  %v1345 = vunpack.c.h.b16 %v1258
  %v1346 = vunpack.c.l.b16 %v1259
  %v1347 = vunpack.c.h.b16 %v1259
  %v1348 = vunpack.c.l.b16 %v1260
  %v1349 = vunpack.c.h.b16 %v1260
  %v1350 = vunpack.c.l.b16 %v1261
  %v1351 = vunpack.c.h.b16 %v1261
  %v1352 = vunpack.c.l.b16 %v1262
  %v1353 = vunpack.c.h.b16 %v1262
  %v1354 = vunpack.c.l.b16 %v1263
  %v1355 = vunpack.c.h.b16 %v1263
  %v1356 = vunpack.c.l.b16 %v1264
  %v1357 = vunpack.c.h.b16 %v1264
  %v1358 = vunpack.c.l.b16 %v1265
  %v1359 = vunpack.c.h.b16 %v1265
  %v1360 = vunpack.c.l.b16 %v1266
  %v1361 = vunpack.c.h.b16 %v1266
  %v1362 = vunpack.c.l.b16 %v1267
  %v1363 = vunpack.c.h.b16 %v1267
  %v1364 = vpack.c.b16 %v1300, %v1300
  %v1365 = vpack.c.b16 %v1301, %v1301
  %v1366 = vpack.c.b16 %v1302, %v1302
  %v1367 = vpack.c.b16 %v1303, %v1303
  %v1368 = vpack.c.b16 %v1304, %v1304
  %v1369 = vpack.c.b16 %v1305, %v1305
  %v1370 = vpack.c.b16 %v1306, %v1306
  %v1371 = vpack.c.b16 %v1307, %v1307
  %v1372 = vpack.c.b16 %v1308, %v1308
  %v1373 = vpack.c.b16 %v1309, %v1309
  %v1374 = vpack.c.b16 %v1310, %v1310
  %v1375 = vpack.c.b16 %v1311, %v1311
  %v1376 = vpack.c.b16 %v1312, %v1312
  %v1377 = vpack.c.b16 %v1313, %v1313
  %v1378 = vpack.c.b16 %v1314, %v1314
  %v1379 = vpack.c.b16 %v1315, %v1315
  %v1380 = vpack.c.b16 %v1316, %v1316
  %v1381 = vpack.c.b16 %v1317, %v1317
  %v1382 = vpack.c.b16 %v1318, %v1318
  %v1383 = vpack.c.b16 %v1319, %v1319
  %v1384 = vpack.c.b16 %v1320, %v1320
  %v1385 = vpack.c.b16 %v1321, %v1321
  %v1386 = vpack.c.b16 %v1322, %v1322
  %v1387 = vpack.c.b16 %v1323, %v1323
  %v1388 = vpack.c.b16 %v1324, %v1324
  %v1389 = vpack.c.b16 %v1325, %v1325
  %v1390 = vpack.c.b16 %v1326, %v1326
  %v1391 = vpack.c.b16 %v1327, %v1327
  %v1392 = vpack.c.b16 %v1328, %v1328
  %v1393 = vpack.c.b16 %v1329, %v1329
  %v1394 = vpack.c.b16 %v1330, %v1330
  %v1395 = vpack.c.b16 %v1331, %v1331
  %v1396 = vpack.c.b16 %v1332, %v1332
  %v1397 = vpack.c.b16 %v1333, %v1333
  %v1398 = vpack.c.b16 %v1334, %v1334
  %v1399 = vpack.c.b16 %v1335, %v1335
  %v1400 = vpack.c.b16 %v1336, %v1336
  %v1401 = vpack.c.b16 %v1337, %v1337
  %v1402 = vpack.c.b16 %v1338, %v1338
  %v1403 = vpack.c.b16 %v1339, %v1339
  %v1404 = vpack.c.b16 %v1340, %v1340
  %v1405 = vpack.c.b16 %v1341, %v1341
  %v1406 = vpack.c.b16 %v1342, %v1342
  %v1407 = vpack.c.b16 %v1343, %v1343
  %v1408 = vpack.c.b16 %v1344, %v1344
  %v1409 = vpack.c.b16 %v1345, %v1345
  %v1410 = vpack.c.b16 %v1346, %v1346
  %v1411 = vpack.c.b16 %v1347, %v1347
  %v1412 = vpack.c.b16 %v1348, %v1348
  %v1413 = vpack.c.b16 %v1349, %v1349
  %v1414 = vpack.c.b16 %v1350, %v1350
  %v1415 = vpack.c.b16 %v1351, %v1351
  %v1416 = vpack.c.b16 %v1352, %v1352
  %v1417 = vpack.c.b16 %v1353, %v1353
  %v1418 = vpack.c.b16 %v1354, %v1354
  %v1419 = vpack.c.b16 %v1355, %v1355
  %v1420 = vpack.c.b16 %v1356, %v1356
  %v1421 = vpack.c.b16 %v1357, %v1357
  %v1422 = vpack.c.b16 %v1358, %v1358
  %v1423 = vpack.c.b16 %v1359, %v1359
  %v1424 = vpack.c.b16 %v1360, %v1360
  %v1425 = vpack.c.b16 %v1361, %v1361
  %v1426 = vpack.c.b16 %v1362, %v1362
  %v1427 = vpack.c.b16 %v1363, %v1363
  %vm1492 = vcmask 519168
  %1493 = vst.msk [vmem:[%s5] sm:$0xf] %vm1492, %v1364
  %1494 = vst.msk [vmem:[%s5 + $0x4] sm:$0xf] %vm1492, %v1365
  %1495 = vst.msk [vmem:[%s5 + $0x8] sm:$0xf] %vm1492, %v1366
  %1496 = vst.msk [vmem:[%s5 + $0xc] sm:$0xf] %vm1492, %v1367
  %1497 = vst.msk [vmem:[%s5 + $0x10] sm:$0xf] %vm1492, %v1368
  %1498 = vst.msk [vmem:[%s5 + $0x14] sm:$0xf] %vm1492, %v1369
  %1499 = vst.msk [vmem:[%s5 + $0x18] sm:$0xf] %vm1492, %v1370
  %1500 = vst.msk [vmem:[%s5 + $0x1c] sm:$0xf] %vm1492, %v1371
  %1501 = vst.msk [vmem:[%s5 + $0x20] sm:$0xf] %vm1492, %v1372
  %1502 = vst.msk [vmem:[%s5 + $0x24] sm:$0xf] %vm1492, %v1373
  %1503 = vst.msk [vmem:[%s5 + $0x28] sm:$0xf] %vm1492, %v1374
  %1504 = vst.msk [vmem:[%s5 + $0x2c] sm:$0xf] %vm1492, %v1375
  %1505 = vst.msk [vmem:[%s5 + $0x30] sm:$0xf] %vm1492, %v1376
  %1506 = vst.msk [vmem:[%s5 + $0x34] sm:$0xf] %vm1492, %v1377
  %1507 = vst.msk [vmem:[%s5 + $0x38] sm:$0xf] %vm1492, %v1378
  %1508 = vst.msk [vmem:[%s5 + $0x3c] sm:$0xf] %vm1492, %v1379
  %1509 = vst.msk [vmem:[%s5 + $0x40] sm:$0xf] %vm1492, %v1380
  %1510 = vst.msk [vmem:[%s5 + $0x44] sm:$0xf] %vm1492, %v1381
  %1511 = vst.msk [vmem:[%s5 + $0x48] sm:$0xf] %vm1492, %v1382
  %1512 = vst.msk [vmem:[%s5 + $0x4c] sm:$0xf] %vm1492, %v1383
  %1513 = vst.msk [vmem:[%s5 + $0x50] sm:$0xf] %vm1492, %v1384
  %1514 = vst.msk [vmem:[%s5 + $0x54] sm:$0xf] %vm1492, %v1385
  %1515 = vst.msk [vmem:[%s5 + $0x58] sm:$0xf] %vm1492, %v1386
  %1516 = vst.msk [vmem:[%s5 + $0x5c] sm:$0xf] %vm1492, %v1387
  %1517 = vst.msk [vmem:[%s5 + $0x60] sm:$0xf] %vm1492, %v1388
  %1518 = vst.msk [vmem:[%s5 + $0x64] sm:$0xf] %vm1492, %v1389
  %1519 = vst.msk [vmem:[%s5 + $0x68] sm:$0xf] %vm1492, %v1390
  %1520 = vst.msk [vmem:[%s5 + $0x6c] sm:$0xf] %vm1492, %v1391
  %1521 = vst.msk [vmem:[%s5 + $0x70] sm:$0xf] %vm1492, %v1392
  %1522 = vst.msk [vmem:[%s5 + $0x74] sm:$0xf] %vm1492, %v1393
  %1523 = vst.msk [vmem:[%s5 + $0x78] sm:$0xf] %vm1492, %v1394
  %1524 = vst.msk [vmem:[%s5 + $0x7c] sm:$0xf] %vm1492, %v1395
  %1525 = vst.msk [vmem:[%s5 + $0x80] sm:$0xf] %vm1492, %v1396
  %1526 = vst.msk [vmem:[%s5 + $0x84] sm:$0xf] %vm1492, %v1397
  %1527 = vst.msk [vmem:[%s5 + $0x88] sm:$0xf] %vm1492, %v1398
  %1528 = vst.msk [vmem:[%s5 + $0x8c] sm:$0xf] %vm1492, %v1399
  %1529 = vst.msk [vmem:[%s5 + $0x90] sm:$0xf] %vm1492, %v1400
  %1530 = vst.msk [vmem:[%s5 + $0x94] sm:$0xf] %vm1492, %v1401
  %1531 = vst.msk [vmem:[%s5 + $0x98] sm:$0xf] %vm1492, %v1402
  %1532 = vst.msk [vmem:[%s5 + $0x9c] sm:$0xf] %vm1492, %v1403
  %1533 = vst.msk [vmem:[%s5 + $0xa0] sm:$0xf] %vm1492, %v1404
  %1534 = vst.msk [vmem:[%s5 + $0xa4] sm:$0xf] %vm1492, %v1405
  %1535 = vst.msk [vmem:[%s5 + $0xa8] sm:$0xf] %vm1492, %v1406
  %1536 = vst.msk [vmem:[%s5 + $0xac] sm:$0xf] %vm1492, %v1407
  %1537 = vst.msk [vmem:[%s5 + $0xb0] sm:$0xf] %vm1492, %v1408
  %1538 = vst.msk [vmem:[%s5 + $0xb4] sm:$0xf] %vm1492, %v1409
  %1539 = vst.msk [vmem:[%s5 + $0xb8] sm:$0xf] %vm1492, %v1410
  %1540 = vst.msk [vmem:[%s5 + $0xbc] sm:$0xf] %vm1492, %v1411
  %1541 = vst.msk [vmem:[%s5 + $0xc0] sm:$0xf] %vm1492, %v1412
  %1542 = vst.msk [vmem:[%s5 + $0xc4] sm:$0xf] %vm1492, %v1413
  %1543 = vst.msk [vmem:[%s5 + $0xc8] sm:$0xf] %vm1492, %v1414
  %1544 = vst.msk [vmem:[%s5 + $0xcc] sm:$0xf] %vm1492, %v1415
  %1545 = vst.msk [vmem:[%s5 + $0xd0] sm:$0xf] %vm1492, %v1416
  %1546 = vst.msk [vmem:[%s5 + $0xd4] sm:$0xf] %vm1492, %v1417
  %1547 = vst.msk [vmem:[%s5 + $0xd8] sm:$0xf] %vm1492, %v1418
  %1548 = vst.msk [vmem:[%s5 + $0xdc] sm:$0xf] %vm1492, %v1419
  %1549 = vst.msk [vmem:[%s5 + $0xe0] sm:$0xf] %vm1492, %v1420
  %1550 = vst.msk [vmem:[%s5 + $0xe4] sm:$0xf] %vm1492, %v1421
  %1551 = vst.msk [vmem:[%s5 + $0xe8] sm:$0xf] %vm1492, %v1422
  %1552 = vst.msk [vmem:[%s5 + $0xec] sm:$0xf] %vm1492, %v1423
  %1553 = vst.msk [vmem:[%s5 + $0xf0] sm:$0xf] %vm1492, %v1424
  %1554 = vst.msk [vmem:[%s5 + $0xf4] sm:$0xf] %vm1492, %v1425
  %1555 = vst.msk [vmem:[%s5 + $0xf8] sm:$0xf] %vm1492, %v1426
  %1556 = vst.msk [vmem:[%s5 + $0xfc] sm:$0xf] %vm1492, %v1427
  // Predicated region
  $region22: #{unet_skip_block_forward.12} parent=0 // pred_check
    _
  $region23: #{unet_skip_block_forward.12} parent=0 // pred_check_branch
    %1558 = sbr.rel (0) target = $region25
  $region24: #{unet_skip_block_forward.12} parent=0 // pred_region
    _
  $region25: #{unet_skip_block_forward.12} parent=0 // pred_fallthru
    _
  // Predicated region
  $region26: #{unet_skip_block_forward.12} parent=0 // pred_check
    _
  $region27: #{unet_skip_block_forward.12} parent=0 // pred_check_branch
    %1560 = sbr.rel (0) target = $region29
  $region28: #{unet_skip_block_forward.12} parent=0 // pred_region
    _
  $region29: #{unet_skip_block_forward.12} parent=0 // pred_fallthru
    _

</llo_original>
